<compile_context>
chip_gen: v7x
topology: tpu7x:2x2x1
jax: 0.10.0
libtpu: 0.0.40
codegen_flags: <defaults>
</compile_context>

<pallas_src>
import functools

import numpy as np
import jax
import jax.numpy as jnp
from jax.experimental import pallas as pl
from jax.experimental.pallas import tpu as pltpu


# ----------------------------------------------------------------------------- in-kernel helpers
def _im2col_s2p1(y):
    """3x3 / stride-2 / pad-1 patch extraction for a (H, W, B, C) activation.

    H and W must be even.  Returns (H//2, W//2, B, 9*C) with the 9 taps laid out
    tap-major / channel-minor along the lane axis, matching the (9*Cin, Cout)
    weight layout, so each conv becomes ONE wide-K matmul.  Only leading-dim
    reshapes, static slices and concatenates are used (no selector matmuls, no
    strided sublane gathers).
    """
    H, W, B, C = y.shape
    Ho, Wo = H // 2, W // 2
    zr = jnp.zeros((1, W, B, C), y.dtype)
    yp = jnp.concatenate([zr, y, zr], axis=0)               # (H+2, W,   B, C)
    zc = jnp.zeros((H + 2, 1, B, C), y.dtype)
    yp = jnp.concatenate([zc, yp, zc], axis=1)               # (H+2, W+2, B, C)
    # Split padded rows into (index, parity): padded row 2*i + ki  ->  static slice.
    yr = yp.reshape(Ho + 1, 2, W + 2, B, C)
    row_taps = (yr[0:Ho, 0], yr[0:Ho, 1], yr[1:Ho + 1, 0])   # ki = 0, 1, 2
    taps = []
    for ki in range(3):
        rc = row_taps[ki].reshape(Ho, Wo + 1, 2, B, C)       # same trick for cols
        col_taps = (rc[:, 0:Wo, 0], rc[:, 0:Wo, 1], rc[:, 1:Wo + 1, 0])  # kj = 0,1,2
        for kj in range(3):
            taps.append(col_taps[kj])                        # (Ho, Wo, B, C)
    return jnp.concatenate(taps, axis=-1)                    # (Ho, Wo, B, 9*C)


def _conv_block(y, w_ref, b_ref, scale_ref, shift_ref):
    """Conv2d(3, s=2, p=1) + LeakyReLU(0.2) + Dropout2d(eval: identity) + folded BN."""
    H, W, B, C = y.shape
    Ho, Wo = H // 2, W // 2
    c_out = w_ref.shape[-1]
    p = _im2col_s2p1(y).reshape(Ho * Wo * B, 9 * C)          # wide-K LHS (M, 9*Cin)
    z = jnp.dot(p, w_ref[...], preferred_element_type=jnp.float32)   # one MXU push
    z = z + b_ref[...]                                       # conv bias      (f32)
    z = jnp.where(z > 0, z, 0.2 * z)                         # LeakyReLU(0.2) (f32)
    z = z * scale_ref[...] + shift_ref[...]                  # folded BatchNorm (eval)
    return z.astype(jnp.bfloat16).reshape(Ho, Wo, B, c_out)  # next block's operand


# ----------------------------------------------------------------------------- kernel
def _fused_disc_kernel(
    x_ref,
    w1_ref, b1_ref, g1_ref, t1_ref,
    w2_ref, b2_ref, g2_ref, t2_ref,
    w3_ref, b3_ref, g3_ref, t3_ref,
    w4_ref, b4_ref, g4_ref, t4_ref,
    hw_ref, hb_ref,
    o_ref,
    *, n_classes,
):
    """Whole discriminator forward for a tile of B_TILE images (one grid step).

    x_ref  : (H, W, B_TILE, Cin)   bf16   image tile, batch on sublanes
    w*_ref : (9*Cin, Cout)         bf16   conv weights, tap-major / channel-minor rows
    b*/g*/t*: (1, Cout)            f32    conv bias / folded-BN scale / shift
    hw_ref : (ds*ds*128, d_pad)    bf16   fused + flatten-permuted head weights
    hb_ref : (1, d_pad)            f32    fused head bias
    o_ref  : (B_TILE, d_pad)       f32    fused head outputs (lane-dense, full (8,128) tile)
    """
    y = x_ref[...]                                           # (H, W, B, Cin) bf16
    y = _conv_block(y, w1_ref, b1_ref, g1_ref, t1_ref)
    y = _conv_block(y, w2_ref, b2_ref, g2_ref, t2_ref)
    y = _conv_block(y, w3_ref, b3_ref, g3_ref, t3_ref)
    y = _conv_block(y, w4_ref, b4_ref, g4_ref, t4_ref)       # (ds, ds, B, 128)

    ds_h, ds_w, batch, cf = y.shape
    d_pad = o_ref.shape[-1]
    feat = y.reshape(ds_h * ds_w, batch, cf)

    # Fused heads adv | disc | code_P | code_G, output padded to 128 lanes.
    # For ds == 1 (the common case) this is a single (B,128)@(128,d_pad) matmul;
    # torch's NCHW flatten is folded into the head-weight row permutation.
    acc = jnp.dot(feat[0], hw_ref[0:cf, :], preferred_element_type=jnp.float32)
    for s in range(1, ds_h * ds_w):
        acc = acc + jnp.dot(feat[s], hw_ref[s * cf:(s + 1) * cf, :],
                            preferred_element_type=jnp.float32)
    z = acc + hb_ref[...]                                    # (B, d_pad) f32

    # softmax over the disc columns [1, 1 + n_classes) only; other heads raw.
    col = jax.lax.broadcasted_iota(jnp.int32, z.shape, 1)
    is_cls = (col >= 1) & (col < 1 + n_classes)
    logits = jnp.where(is_cls, z, -1e30)
    m = jnp.max(logits, axis=-1, keepdims=True)
    e = jnp.where(is_cls, jnp.exp(logits - m), 0.0)
    sm = e / jnp.sum(e, axis=-1, keepdims=True)              # exact reciprocal (torch parity)
    o_ref[...] = jnp.where(is_cls, sm, z).astype(o_ref.dtype)


# ----------------------------------------------------------------------------- host glue / params
def init_params(args, key):
    """Deterministic synthetic parameters (shapes follow the PyTorch module)."""
    eps = 0.8  # nn.BatchNorm2d(out_channels, 0.8) -> eps = 0.8
    keys = iter(jax.random.split(key, 64))
    chans = [args["channels"], 16, 32, 64, 128]

    blocks = []
    for li in range(4):
        cin, cout = chans[li], chans[li + 1]
        w = jax.random.normal(next(keys), (cout, cin, 3, 3), jnp.float32) * 0.1  # OIHW
        b = jax.random.normal(next(keys), (cout,), jnp.float32) * 0.1
        if li == 0:  # first block has no BatchNorm
            scale = jnp.ones((cout,), jnp.float32)
            shift = jnp.zeros((cout,), jnp.float32)
        else:
            gamma = 1.0 + 0.1 * jax.random.normal(next(keys), (cout,), jnp.float32)
            beta = 0.1 * jax.random.normal(next(keys), (cout,), jnp.float32)
            rmean = 0.1 * jax.random.normal(next(keys), (cout,), jnp.float32)
            rvar = 1.0 + 0.1 * jax.random.uniform(next(keys), (cout,), jnp.float32)
            scale = gamma / jnp.sqrt(rvar + eps)
            shift = beta - rmean * scale
        # OIHW -> (KH, KW, Cin, Cout) -> (9*Cin, Cout): row = (ki*3 + kj)*Cin + c
        w_k = jnp.transpose(w, (2, 3, 1, 0)).reshape(9 * cin, cout).astype(jnp.bfloat16)
        blocks.append(dict(w=w_k, b=b.reshape(1, cout),
                           scale=scale.reshape(1, cout), shift=shift.reshape(1, cout)))

    ds = args["img_size"] // (2 ** 4)
    feat_dim = 128 * ds * ds
    d_heads = [1, args["n_classes"], args["code_P_dim"], args["code_G_dim"]]
    D = sum(d_heads)
    d_pad = ((D + 127) // 128) * 128

    w_heads = [jax.random.normal(next(keys), (feat_dim, d), jnp.float32) * 0.1 for d in d_heads]
    b_heads = [jax.random.normal(next(keys), (d,), jnp.float32) * 0.1 for d in d_heads]
    head_w = jnp.concatenate(w_heads, axis=1)                 # rows in torch order c*ds*ds + s
    head_b = jnp.concatenate(b_heads)
    head_w = jnp.pad(head_w, ((0, 0), (0, d_pad - D)))        # lane-dense padded output
    head_b = jnp.pad(head_b, (0, d_pad - D)).reshape(1, d_pad)
    # fold torch's NCHW flatten into a row permutation: (c*ds*ds + s) -> (s*128 + c)
    head_w = head_w.reshape(128, ds * ds, d_pad).transpose(1, 0, 2).reshape(ds * ds * 128, d_pad)
    head_w = head_w.astype(jnp.bfloat16)

    return dict(conv_blocks=blocks, head_w=head_w, head_b=head_b)


def discriminator_forward(params, img_nchw, config, b_tile=8):
    """img_nchw: (N, C, H, W) float32, like the PyTorch module's input."""
    N, C, H, W = img_nchw.shape
    assert H == W and H % 16 == 0, "img_size must be a multiple of 16"
    assert b_tile % 8 == 0
    n_cls = config["n_classes"]
    cP, cG = config["code_P_dim"], config["code_G_dim"]

    head_w, head_b = params["head_w"], params["head_b"]
    d_pad = head_w.shape[1]

    # Batch tiling: pad N to a multiple of b_tile; batch goes on the sublane axis.
    n_pad = -(-N // b_tile) * b_tile
    x = jnp.transpose(img_nchw, (2, 3, 0, 1)).astype(jnp.bfloat16)  # (H, W, N, C) bf16
    if n_pad != N:
        x = jnp.pad(x, ((0, 0), (0, 0), (0, n_pad - N), (0, 0)))

    def const(a):  # full-array block, same weights every grid step
        return pl.BlockSpec(a.shape, lambda n, _z=(0,) * a.ndim: _z)

    in_specs = [pl.BlockSpec((H, W, b_tile, C), lambda n: (0, 0, n, 0))]
    flat_args = [x]
    for blk in params["conv_blocks"]:
        for name in ("w", "b", "scale", "shift"):
            in_specs.append(const(blk[name]))
            flat_args.append(blk[name])
    in_specs += [const(head_w), const(head_b)]
    flat_args += [head_w, head_b]

    out = pl.pallas_call(
        functools.partial(_fused_disc_kernel, n_classes=n_cls),
        out_shape=jax.ShapeDtypeStruct((n_pad, d_pad), jnp.float32),
        grid=(n_pad // b_tile,),
        in_specs=in_specs,
        out_specs=pl.BlockSpec((b_tile, d_pad), lambda n: (n, 0)),
        compiler_params=pltpu.CompilerParams(dimension_semantics=("parallel",)),
    )(*flat_args)

    out = out[:N]
    reality = out[:, 0:1]
    pred_label = out[:, 1:1 + n_cls]
    pred_code_P = out[:, 1 + n_cls:1 + n_cls + cP]
    pred_code_G = out[:, 1 + n_cls + cP:1 + n_cls + cP + cG]
    return reality, pred_label, pred_code_P, pred_code_G


# ----------------------------------------------------------------------------- pure-JAX reference
def _reference_forward(params, img_nchw, config):
    """XLA reference with the same bf16 weights / bf16 inter-block activations."""
    x = jnp.transpose(img_nchw, (0, 2, 3, 1)).astype(jnp.bfloat16)   # NHWC
    for blk in params["conv_blocks"]:
        cout = blk["w"].shape[-1]
        w_hwio = blk["w"].reshape(3, 3, -1, cout)
        z = jax.lax.conv_general_dilated(
            x, w_hwio, window_strides=(2, 2), padding=((1, 1), (1, 1)),
            dimension_numbers=("NHWC", "HWIO", "NHWC"),
            preferred_element_type=jnp.float32)
        z = z + blk["b"]
        z = jnp.where(z > 0, z, 0.2 * z)
        z = z * blk["scale"] + blk["shift"]
        x = z.astype(jnp.bfloat16)
    N = x.shape[0]
    feat = x.reshape(N, -1)                 # (i, j, c) order == head_w row order (s*128 + c)
    y = jnp.dot(feat, params["head_w"], preferred_element_type=jnp.float32) + params["head_b"]
    n_cls = config["n_classes"]
    cP, cG = config["code_P_dim"], config["code_G_dim"]
    return (y[:, 0:1],
            jax.nn.softmax(y[:, 1:1 + n_cls], axis=-1),
            y[:, 1 + n_cls:1 + n_cls + cP],
            y[:, 1 + n_cls + cP:1 + n_cls + cP + cG])


# ----------------------------------------------------------------------------- main
if __name__ == "__main__":
    args = {"channels": 4, "img_size": 16, "n_classes": 10, "code_P_dim": 8, "code_G_dim": 8}

    key = jax.random.PRNGKey(0)
    k_params, k_img = jax.random.split(key)
    params = init_params(args, k_params)

    N = 16  # 2 grid steps of 8 images each -> even grid keeps both v7x TensorCores busy
    img = jax.random.normal(
        k_img, (N, args["channels"], args["img_size"], args["img_size"]), jnp.float32
    )

    fwd = jax.jit(functools.partial(discriminator_forward, config=args))
    outs = jax.block_until_ready(fwd(params, img))
    reality, pred_label, pred_code_P, pred_code_G = outs

    assert reality.shape == (N, 1)
    assert pred_label.shape == (N, args["n_classes"])
    assert pred_code_P.shape == (N, args["code_P_dim"])
    assert pred_code_G.shape == (N, args["code_G_dim"])
    for o in outs:
        assert bool(jnp.all(jnp.isfinite(o)))
    # softmax rows sum to 1 (exact division in-kernel)
    assert bool(jnp.all(jnp.abs(jnp.sum(pred_label, axis=-1) - 1.0) < 1e-3))

    # correctness vs a pure-JAX (XLA conv) reference using the same bf16 precision
    ref = _reference_forward(params, img, args)
    for got, want in zip(outs, ref):
        np.testing.assert_allclose(np.asarray(got), np.asarray(want), atol=3e-2, rtol=3e-2)

    print("KERNEL_OK")
</pallas_src>

<mosaic_0001>
module attributes {stable_mosaic.version = 11 : i64} {
  func.func @_fused_disc_kernel(%arg0: i32, %arg1: memref<16x16x8x4xbf16, #tpu.memory_space<vmem>>, %arg2: memref<36x16xbf16, #tpu.memory_space<vmem>>, %arg3: memref<1x16xf32, #tpu.memory_space<vmem>>, %arg4: memref<1x16xf32, #tpu.memory_space<vmem>>, %arg5: memref<1x16xf32, #tpu.memory_space<vmem>>, %arg6: memref<144x32xbf16, #tpu.memory_space<vmem>>, %arg7: memref<1x32xf32, #tpu.memory_space<vmem>>, %arg8: memref<1x32xf32, #tpu.memory_space<vmem>>, %arg9: memref<1x32xf32, #tpu.memory_space<vmem>>, %arg10: memref<288x64xbf16, #tpu.memory_space<vmem>>, %arg11: memref<1x64xf32, #tpu.memory_space<vmem>>, %arg12: memref<1x64xf32, #tpu.memory_space<vmem>>, %arg13: memref<1x64xf32, #tpu.memory_space<vmem>>, %arg14: memref<576x128xbf16, #tpu.memory_space<vmem>>, %arg15: memref<1x128xf32, #tpu.memory_space<vmem>>, %arg16: memref<1x128xf32, #tpu.memory_space<vmem>>, %arg17: memref<1x128xf32, #tpu.memory_space<vmem>>, %arg18: memref<128x128xbf16, #tpu.memory_space<vmem>>, %arg19: memref<1x128xf32, #tpu.memory_space<vmem>>, %arg20: memref<8x128xf32, #tpu.memory_space<vmem>>) attributes {dimension_semantics = [#tpu.dimension_semantics<parallel>], iteration_bounds = array<i64: 2>, scalar_prefetch = 0 : i64, scratch_operands = 0 : i64, tpu.core_type = #tpu.core_type<tc>, window_params = [{transform_indices = @transform_0, window_bounds = array<i64: 16, 16, 8, 4>}, {pipeline_mode = #tpu.pipeline_mode<synchronous>, transform_indices = @transform_1, window_bounds = array<i64: 36, 16>}, {pipeline_mode = #tpu.pipeline_mode<synchronous>, transform_indices = @transform_2, window_bounds = array<i64: 1, 16>}, {pipeline_mode = #tpu.pipeline_mode<synchronous>, transform_indices = @transform_3, window_bounds = array<i64: 1, 16>}, {pipeline_mode = #tpu.pipeline_mode<synchronous>, transform_indices = @transform_4, window_bounds = array<i64: 1, 16>}, {pipeline_mode = #tpu.pipeline_mode<synchronous>, transform_indices = @transform_5, window_bounds = array<i64: 144, 32>}, {pipeline_mode = #tpu.pipeline_mode<synchronous>, transform_indices = @transform_6, window_bounds = array<i64: 1, 32>}, {pipeline_mode = #tpu.pipeline_mode<synchronous>, transform_indices = @transform_7, window_bounds = array<i64: 1, 32>}, {pipeline_mode = #tpu.pipeline_mode<synchronous>, transform_indices = @transform_8, window_bounds = array<i64: 1, 32>}, {pipeline_mode = #tpu.pipeline_mode<synchronous>, transform_indices = @transform_9, window_bounds = array<i64: 288, 64>}, {pipeline_mode = #tpu.pipeline_mode<synchronous>, transform_indices = @transform_10, window_bounds = array<i64: 1, 64>}, {pipeline_mode = #tpu.pipeline_mode<synchronous>, transform_indices = @transform_11, window_bounds = array<i64: 1, 64>}, {pipeline_mode = #tpu.pipeline_mode<synchronous>, transform_indices = @transform_12, window_bounds = array<i64: 1, 64>}, {pipeline_mode = #tpu.pipeline_mode<synchronous>, transform_indices = @transform_13, window_bounds = array<i64: 576, 128>}, {pipeline_mode = #tpu.pipeline_mode<synchronous>, transform_indices = @transform_14, window_bounds = array<i64: 1, 128>}, {pipeline_mode = #tpu.pipeline_mode<synchronous>, transform_indices = @transform_15, window_bounds = array<i64: 1, 128>}, {pipeline_mode = #tpu.pipeline_mode<synchronous>, transform_indices = @transform_16, window_bounds = array<i64: 1, 128>}, {pipeline_mode = #tpu.pipeline_mode<synchronous>, transform_indices = @transform_17, window_bounds = array<i64: 128, 128>}, {pipeline_mode = #tpu.pipeline_mode<synchronous>, transform_indices = @transform_18, window_bounds = array<i64: 1, 128>}, {transform_indices = @transform_19, window_bounds = array<i64: 8, 128>}]} {
    %c0 = arith.constant 0 : index
    %c0_0 = arith.constant 0 : index
    %c0_1 = arith.constant 0 : index
    %c0_2 = arith.constant 0 : index
    %0 = vector.load %arg1[%c0, %c0_0, %c0_1, %c0_2] : memref<16x16x8x4xbf16, #tpu.memory_space<vmem>>, vector<16x16x8x4xbf16>
    %cst = arith.constant 0.000000e+00 : bf16
    %1 = vector.broadcast %cst : bf16 to vector<1x16x8x4xbf16>
    %2 = tpu.concatenate %1, %0, %1 in 0 : vector<1x16x8x4xbf16>, vector<16x16x8x4xbf16>, vector<1x16x8x4xbf16> -> vector<18x16x8x4xbf16>
    %cst_3 = arith.constant 0.000000e+00 : bf16
    %3 = vector.broadcast %cst_3 : bf16 to vector<18x1x8x4xbf16>
    %4 = tpu.concatenate %3, %2, %3 in 1 : vector<18x1x8x4xbf16>, vector<18x16x8x4xbf16>, vector<18x1x8x4xbf16> -> vector<18x18x8x4xbf16>
    %5 = vector.shape_cast %4 : vector<18x18x8x4xbf16> to vector<9x2x18x8x4xbf16>
    %6 = vector.extract_strided_slice %5 {offsets = [0, 0, 0, 0, 0], sizes = [8, 1, 18, 8, 4], strides = [1, 1, 1, 1, 1]} : vector<9x2x18x8x4xbf16> to vector<8x1x18x8x4xbf16>
    %7 = vector.shape_cast %6 : vector<8x1x18x8x4xbf16> to vector<8x18x8x4xbf16>
    %8 = vector.extract_strided_slice %5 {offsets = [0, 1, 0, 0, 0], sizes = [8, 1, 18, 8, 4], strides = [1, 1, 1, 1, 1]} : vector<9x2x18x8x4xbf16> to vector<8x1x18x8x4xbf16>
    %9 = vector.shape_cast %8 : vector<8x1x18x8x4xbf16> to vector<8x18x8x4xbf16>
    %10 = vector.extract_strided_slice %5 {offsets = [1, 0, 0, 0, 0], sizes = [8, 1, 18, 8, 4], strides = [1, 1, 1, 1, 1]} : vector<9x2x18x8x4xbf16> to vector<8x1x18x8x4xbf16>
    %11 = vector.shape_cast %10 : vector<8x1x18x8x4xbf16> to vector<8x18x8x4xbf16>
    %12 = vector.shape_cast %7 : vector<8x18x8x4xbf16> to vector<8x9x2x8x4xbf16>
    %13 = vector.extract_strided_slice %12 {offsets = [0, 0, 0, 0, 0], sizes = [8, 8, 1, 8, 4], strides = [1, 1, 1, 1, 1]} : vector<8x9x2x8x4xbf16> to vector<8x8x1x8x4xbf16>
    %14 = vector.shape_cast %13 : vector<8x8x1x8x4xbf16> to vector<8x8x8x4xbf16>
    %15 = vector.extract_strided_slice %12 {offsets = [0, 0, 1, 0, 0], sizes = [8, 8, 1, 8, 4], strides = [1, 1, 1, 1, 1]} : vector<8x9x2x8x4xbf16> to vector<8x8x1x8x4xbf16>
    %16 = vector.shape_cast %15 : vector<8x8x1x8x4xbf16> to vector<8x8x8x4xbf16>
    %17 = vector.extract_strided_slice %12 {offsets = [0, 1, 0, 0, 0], sizes = [8, 8, 1, 8, 4], strides = [1, 1, 1, 1, 1]} : vector<8x9x2x8x4xbf16> to vector<8x8x1x8x4xbf16>
    %18 = vector.shape_cast %17 : vector<8x8x1x8x4xbf16> to vector<8x8x8x4xbf16>
    %19 = vector.shape_cast %9 : vector<8x18x8x4xbf16> to vector<8x9x2x8x4xbf16>
    %20 = vector.extract_strided_slice %19 {offsets = [0, 0, 0, 0, 0], sizes = [8, 8, 1, 8, 4], strides = [1, 1, 1, 1, 1]} : vector<8x9x2x8x4xbf16> to vector<8x8x1x8x4xbf16>
    %21 = vector.shape_cast %20 : vector<8x8x1x8x4xbf16> to vector<8x8x8x4xbf16>
    %22 = vector.extract_strided_slice %19 {offsets = [0, 0, 1, 0, 0], sizes = [8, 8, 1, 8, 4], strides = [1, 1, 1, 1, 1]} : vector<8x9x2x8x4xbf16> to vector<8x8x1x8x4xbf16>
    %23 = vector.shape_cast %22 : vector<8x8x1x8x4xbf16> to vector<8x8x8x4xbf16>
    %24 = vector.extract_strided_slice %19 {offsets = [0, 1, 0, 0, 0], sizes = [8, 8, 1, 8, 4], strides = [1, 1, 1, 1, 1]} : vector<8x9x2x8x4xbf16> to vector<8x8x1x8x4xbf16>
    %25 = vector.shape_cast %24 : vector<8x8x1x8x4xbf16> to vector<8x8x8x4xbf16>
    %26 = vector.shape_cast %11 : vector<8x18x8x4xbf16> to vector<8x9x2x8x4xbf16>
    %27 = vector.extract_strided_slice %26 {offsets = [0, 0, 0, 0, 0], sizes = [8, 8, 1, 8, 4], strides = [1, 1, 1, 1, 1]} : vector<8x9x2x8x4xbf16> to vector<8x8x1x8x4xbf16>
    %28 = vector.shape_cast %27 : vector<8x8x1x8x4xbf16> to vector<8x8x8x4xbf16>
    %29 = vector.extract_strided_slice %26 {offsets = [0, 0, 1, 0, 0], sizes = [8, 8, 1, 8, 4], strides = [1, 1, 1, 1, 1]} : vector<8x9x2x8x4xbf16> to vector<8x8x1x8x4xbf16>
    %30 = vector.shape_cast %29 : vector<8x8x1x8x4xbf16> to vector<8x8x8x4xbf16>
    %31 = vector.extract_strided_slice %26 {offsets = [0, 1, 0, 0, 0], sizes = [8, 8, 1, 8, 4], strides = [1, 1, 1, 1, 1]} : vector<8x9x2x8x4xbf16> to vector<8x8x1x8x4xbf16>
    %32 = vector.shape_cast %31 : vector<8x8x1x8x4xbf16> to vector<8x8x8x4xbf16>
    %33 = tpu.concatenate %14, %16, %18, %21, %23, %25, %28, %30, %32 in 3 : vector<8x8x8x4xbf16>, vector<8x8x8x4xbf16>, vector<8x8x8x4xbf16>, vector<8x8x8x4xbf16>, vector<8x8x8x4xbf16>, vector<8x8x8x4xbf16>, vector<8x8x8x4xbf16>, vector<8x8x8x4xbf16>, vector<8x8x8x4xbf16> -> vector<8x8x8x36xbf16>
    %34 = vector.shape_cast %33 : vector<8x8x8x36xbf16> to vector<512x36xbf16>
    %c0_4 = arith.constant 0 : index
    %c0_5 = arith.constant 0 : index
    %35 = vector.load %arg2[%c0_4, %c0_5] : memref<36x16xbf16, #tpu.memory_space<vmem>>, vector<36x16xbf16>
    %cst_6 = arith.constant dense<0.000000e+00> : vector<512x16xf32>
    %36 = tpu.matmul %34, %35, %cst_6 {dimension_numbers = #tpu.dot_dimension_numbers<[1], [0], [0], [1], [0, 0, 1, 1], [], []>} : vector<512x36xbf16>, vector<36x16xbf16>, vector<512x16xf32> -> vector<512x16xf32>
    %c0_7 = arith.constant 0 : index
    %c0_8 = arith.constant 0 : index
    %37 = vector.load %arg3[%c0_7, %c0_8] : memref<1x16xf32, #tpu.memory_space<vmem>>, vector<1x16xf32>
    %38 = vector.broadcast %37 : vector<1x16xf32> to vector<512x16xf32>
    %39 = arith.addf %36, %38 : vector<512x16xf32>
    %cst_9 = arith.constant 0.000000e+00 : f32
    %40 = vector.broadcast %cst_9 : f32 to vector<512x16xf32>
    %41 = arith.cmpf ogt, %39, %40 : vector<512x16xf32>
    %cst_10 = arith.constant 2.000000e-01 : f32
    %42 = vector.broadcast %cst_10 : f32 to vector<512x16xf32>
    %43 = arith.mulf %42, %39 : vector<512x16xf32>
    %44 = arith.select %41, %39, %43 : vector<512x16xi1>, vector<512x16xf32>
    %c0_11 = arith.constant 0 : index
    %c0_12 = arith.constant 0 : index
    %45 = vector.load %arg4[%c0_11, %c0_12] : memref<1x16xf32, #tpu.memory_space<vmem>>, vector<1x16xf32>
    %46 = vector.broadcast %45 : vector<1x16xf32> to vector<512x16xf32>
    %47 = arith.mulf %44, %46 : vector<512x16xf32>
    %c0_13 = arith.constant 0 : index
    %c0_14 = arith.constant 0 : index
    %48 = vector.load %arg5[%c0_13, %c0_14] : memref<1x16xf32, #tpu.memory_space<vmem>>, vector<1x16xf32>
    %49 = vector.broadcast %48 : vector<1x16xf32> to vector<512x16xf32>
    %50 = arith.addf %47, %49 : vector<512x16xf32>
    %51 = arith.truncf %50 : vector<512x16xf32> to vector<512x16xbf16>
    %52 = vector.shape_cast %51 : vector<512x16xbf16> to vector<8x8x8x16xbf16>
    %cst_15 = arith.constant 0.000000e+00 : bf16
    %53 = vector.broadcast %cst_15 : bf16 to vector<1x8x8x16xbf16>
    %54 = tpu.concatenate %53, %52, %53 in 0 : vector<1x8x8x16xbf16>, vector<8x8x8x16xbf16>, vector<1x8x8x16xbf16> -> vector<10x8x8x16xbf16>
    %cst_16 = arith.constant 0.000000e+00 : bf16
    %55 = vector.broadcast %cst_16 : bf16 to vector<10x1x8x16xbf16>
    %56 = tpu.concatenate %55, %54, %55 in 1 : vector<10x1x8x16xbf16>, vector<10x8x8x16xbf16>, vector<10x1x8x16xbf16> -> vector<10x10x8x16xbf16>
    %57 = vector.shape_cast %56 : vector<10x10x8x16xbf16> to vector<5x2x10x8x16xbf16>
    %58 = vector.extract_strided_slice %57 {offsets = [0, 0, 0, 0, 0], sizes = [4, 1, 10, 8, 16], strides = [1, 1, 1, 1, 1]} : vector<5x2x10x8x16xbf16> to vector<4x1x10x8x16xbf16>
    %59 = vector.shape_cast %58 : vector<4x1x10x8x16xbf16> to vector<4x10x8x16xbf16>
    %60 = vector.extract_strided_slice %57 {offsets = [0, 1, 0, 0, 0], sizes = [4, 1, 10, 8, 16], strides = [1, 1, 1, 1, 1]} : vector<5x2x10x8x16xbf16> to vector<4x1x10x8x16xbf16>
    %61 = vector.shape_cast %60 : vector<4x1x10x8x16xbf16> to vector<4x10x8x16xbf16>
    %62 = vector.extract_strided_slice %57 {offsets = [1, 0, 0, 0, 0], sizes = [4, 1, 10, 8, 16], strides = [1, 1, 1, 1, 1]} : vector<5x2x10x8x16xbf16> to vector<4x1x10x8x16xbf16>
    %63 = vector.shape_cast %62 : vector<4x1x10x8x16xbf16> to vector<4x10x8x16xbf16>
    %64 = vector.shape_cast %59 : vector<4x10x8x16xbf16> to vector<4x5x2x8x16xbf16>
    %65 = vector.extract_strided_slice %64 {offsets = [0, 0, 0, 0, 0], sizes = [4, 4, 1, 8, 16], strides = [1, 1, 1, 1, 1]} : vector<4x5x2x8x16xbf16> to vector<4x4x1x8x16xbf16>
    %66 = vector.shape_cast %65 : vector<4x4x1x8x16xbf16> to vector<4x4x8x16xbf16>
    %67 = vector.extract_strided_slice %64 {offsets = [0, 0, 1, 0, 0], sizes = [4, 4, 1, 8, 16], strides = [1, 1, 1, 1, 1]} : vector<4x5x2x8x16xbf16> to vector<4x4x1x8x16xbf16>
    %68 = vector.shape_cast %67 : vector<4x4x1x8x16xbf16> to vector<4x4x8x16xbf16>
    %69 = vector.extract_strided_slice %64 {offsets = [0, 1, 0, 0, 0], sizes = [4, 4, 1, 8, 16], strides = [1, 1, 1, 1, 1]} : vector<4x5x2x8x16xbf16> to vector<4x4x1x8x16xbf16>
    %70 = vector.shape_cast %69 : vector<4x4x1x8x16xbf16> to vector<4x4x8x16xbf16>
    %71 = vector.shape_cast %61 : vector<4x10x8x16xbf16> to vector<4x5x2x8x16xbf16>
    %72 = vector.extract_strided_slice %71 {offsets = [0, 0, 0, 0, 0], sizes = [4, 4, 1, 8, 16], strides = [1, 1, 1, 1, 1]} : vector<4x5x2x8x16xbf16> to vector<4x4x1x8x16xbf16>
    %73 = vector.shape_cast %72 : vector<4x4x1x8x16xbf16> to vector<4x4x8x16xbf16>
    %74 = vector.extract_strided_slice %71 {offsets = [0, 0, 1, 0, 0], sizes = [4, 4, 1, 8, 16], strides = [1, 1, 1, 1, 1]} : vector<4x5x2x8x16xbf16> to vector<4x4x1x8x16xbf16>
    %75 = vector.shape_cast %74 : vector<4x4x1x8x16xbf16> to vector<4x4x8x16xbf16>
    %76 = vector.extract_strided_slice %71 {offsets = [0, 1, 0, 0, 0], sizes = [4, 4, 1, 8, 16], strides = [1, 1, 1, 1, 1]} : vector<4x5x2x8x16xbf16> to vector<4x4x1x8x16xbf16>
    %77 = vector.shape_cast %76 : vector<4x4x1x8x16xbf16> to vector<4x4x8x16xbf16>
    %78 = vector.shape_cast %63 : vector<4x10x8x16xbf16> to vector<4x5x2x8x16xbf16>
    %79 = vector.extract_strided_slice %78 {offsets = [0, 0, 0, 0, 0], sizes = [4, 4, 1, 8, 16], strides = [1, 1, 1, 1, 1]} : vector<4x5x2x8x16xbf16> to vector<4x4x1x8x16xbf16>
    %80 = vector.shape_cast %79 : vector<4x4x1x8x16xbf16> to vector<4x4x8x16xbf16>
    %81 = vector.extract_strided_slice %78 {offsets = [0, 0, 1, 0, 0], sizes = [4, 4, 1, 8, 16], strides = [1, 1, 1, 1, 1]} : vector<4x5x2x8x16xbf16> to vector<4x4x1x8x16xbf16>
    %82 = vector.shape_cast %81 : vector<4x4x1x8x16xbf16> to vector<4x4x8x16xbf16>
    %83 = vector.extract_strided_slice %78 {offsets = [0, 1, 0, 0, 0], sizes = [4, 4, 1, 8, 16], strides = [1, 1, 1, 1, 1]} : vector<4x5x2x8x16xbf16> to vector<4x4x1x8x16xbf16>
    %84 = vector.shape_cast %83 : vector<4x4x1x8x16xbf16> to vector<4x4x8x16xbf16>
    %85 = tpu.concatenate %66, %68, %70, %73, %75, %77, %80, %82, %84 in 3 : vector<4x4x8x16xbf16>, vector<4x4x8x16xbf16>, vector<4x4x8x16xbf16>, vector<4x4x8x16xbf16>, vector<4x4x8x16xbf16>, vector<4x4x8x16xbf16>, vector<4x4x8x16xbf16>, vector<4x4x8x16xbf16>, vector<4x4x8x16xbf16> -> vector<4x4x8x144xbf16>
    %86 = vector.shape_cast %85 : vector<4x4x8x144xbf16> to vector<128x144xbf16>
    %c0_17 = arith.constant 0 : index
    %c0_18 = arith.constant 0 : index
    %87 = vector.load %arg6[%c0_17, %c0_18] : memref<144x32xbf16, #tpu.memory_space<vmem>>, vector<144x32xbf16>
    %cst_19 = arith.constant dense<0.000000e+00> : vector<128x32xf32>
    %88 = tpu.matmul %86, %87, %cst_19 {dimension_numbers = #tpu.dot_dimension_numbers<[1], [0], [0], [1], [0, 0, 1, 1], [], []>} : vector<128x144xbf16>, vector<144x32xbf16>, vector<128x32xf32> -> vector<128x32xf32>
    %c0_20 = arith.constant 0 : index
    %c0_21 = arith.constant 0 : index
    %89 = vector.load %arg7[%c0_20, %c0_21] : memref<1x32xf32, #tpu.memory_space<vmem>>, vector<1x32xf32>
    %90 = vector.broadcast %89 : vector<1x32xf32> to vector<128x32xf32>
    %91 = arith.addf %88, %90 : vector<128x32xf32>
    %cst_22 = arith.constant 0.000000e+00 : f32
    %92 = vector.broadcast %cst_22 : f32 to vector<128x32xf32>
    %93 = arith.cmpf ogt, %91, %92 : vector<128x32xf32>
    %cst_23 = arith.constant 2.000000e-01 : f32
    %94 = vector.broadcast %cst_23 : f32 to vector<128x32xf32>
    %95 = arith.mulf %94, %91 : vector<128x32xf32>
    %96 = arith.select %93, %91, %95 : vector<128x32xi1>, vector<128x32xf32>
    %c0_24 = arith.constant 0 : index
    %c0_25 = arith.constant 0 : index
    %97 = vector.load %arg8[%c0_24, %c0_25] : memref<1x32xf32, #tpu.memory_space<vmem>>, vector<1x32xf32>
    %98 = vector.broadcast %97 : vector<1x32xf32> to vector<128x32xf32>
    %99 = arith.mulf %96, %98 : vector<128x32xf32>
    %c0_26 = arith.constant 0 : index
    %c0_27 = arith.constant 0 : index
    %100 = vector.load %arg9[%c0_26, %c0_27] : memref<1x32xf32, #tpu.memory_space<vmem>>, vector<1x32xf32>
    %101 = vector.broadcast %100 : vector<1x32xf32> to vector<128x32xf32>
    %102 = arith.addf %99, %101 : vector<128x32xf32>
    %103 = arith.truncf %102 : vector<128x32xf32> to vector<128x32xbf16>
    %104 = vector.shape_cast %103 : vector<128x32xbf16> to vector<4x4x8x32xbf16>
    %cst_28 = arith.constant 0.000000e+00 : bf16
    %105 = vector.broadcast %cst_28 : bf16 to vector<1x4x8x32xbf16>
    %106 = tpu.concatenate %105, %104, %105 in 0 : vector<1x4x8x32xbf16>, vector<4x4x8x32xbf16>, vector<1x4x8x32xbf16> -> vector<6x4x8x32xbf16>
    %cst_29 = arith.constant 0.000000e+00 : bf16
    %107 = vector.broadcast %cst_29 : bf16 to vector<6x1x8x32xbf16>
    %108 = tpu.concatenate %107, %106, %107 in 1 : vector<6x1x8x32xbf16>, vector<6x4x8x32xbf16>, vector<6x1x8x32xbf16> -> vector<6x6x8x32xbf16>
    %109 = vector.shape_cast %108 : vector<6x6x8x32xbf16> to vector<3x2x6x8x32xbf16>
    %110 = vector.extract_strided_slice %109 {offsets = [0, 0, 0, 0, 0], sizes = [2, 1, 6, 8, 32], strides = [1, 1, 1, 1, 1]} : vector<3x2x6x8x32xbf16> to vector<2x1x6x8x32xbf16>
    %111 = vector.shape_cast %110 : vector<2x1x6x8x32xbf16> to vector<2x6x8x32xbf16>
    %112 = vector.extract_strided_slice %109 {offsets = [0, 1, 0, 0, 0], sizes = [2, 1, 6, 8, 32], strides = [1, 1, 1, 1, 1]} : vector<3x2x6x8x32xbf16> to vector<2x1x6x8x32xbf16>
    %113 = vector.shape_cast %112 : vector<2x1x6x8x32xbf16> to vector<2x6x8x32xbf16>
    %114 = vector.extract_strided_slice %109 {offsets = [1, 0, 0, 0, 0], sizes = [2, 1, 6, 8, 32], strides = [1, 1, 1, 1, 1]} : vector<3x2x6x8x32xbf16> to vector<2x1x6x8x32xbf16>
    %115 = vector.shape_cast %114 : vector<2x1x6x8x32xbf16> to vector<2x6x8x32xbf16>
    %116 = vector.shape_cast %111 : vector<2x6x8x32xbf16> to vector<2x3x2x8x32xbf16>
    %117 = vector.extract_strided_slice %116 {offsets = [0, 0, 0, 0, 0], sizes = [2, 2, 1, 8, 32], strides = [1, 1, 1, 1, 1]} : vector<2x3x2x8x32xbf16> to vector<2x2x1x8x32xbf16>
    %118 = vector.shape_cast %117 : vector<2x2x1x8x32xbf16> to vector<2x2x8x32xbf16>
    %119 = vector.extract_strided_slice %116 {offsets = [0, 0, 1, 0, 0], sizes = [2, 2, 1, 8, 32], strides = [1, 1, 1, 1, 1]} : vector<2x3x2x8x32xbf16> to vector<2x2x1x8x32xbf16>
    %120 = vector.shape_cast %119 : vector<2x2x1x8x32xbf16> to vector<2x2x8x32xbf16>
    %121 = vector.extract_strided_slice %116 {offsets = [0, 1, 0, 0, 0], sizes = [2, 2, 1, 8, 32], strides = [1, 1, 1, 1, 1]} : vector<2x3x2x8x32xbf16> to vector<2x2x1x8x32xbf16>
    %122 = vector.shape_cast %121 : vector<2x2x1x8x32xbf16> to vector<2x2x8x32xbf16>
    %123 = vector.shape_cast %113 : vector<2x6x8x32xbf16> to vector<2x3x2x8x32xbf16>
    %124 = vector.extract_strided_slice %123 {offsets = [0, 0, 0, 0, 0], sizes = [2, 2, 1, 8, 32], strides = [1, 1, 1, 1, 1]} : vector<2x3x2x8x32xbf16> to vector<2x2x1x8x32xbf16>
    %125 = vector.shape_cast %124 : vector<2x2x1x8x32xbf16> to vector<2x2x8x32xbf16>
    %126 = vector.extract_strided_slice %123 {offsets = [0, 0, 1, 0, 0], sizes = [2, 2, 1, 8, 32], strides = [1, 1, 1, 1, 1]} : vector<2x3x2x8x32xbf16> to vector<2x2x1x8x32xbf16>
    %127 = vector.shape_cast %126 : vector<2x2x1x8x32xbf16> to vector<2x2x8x32xbf16>
    %128 = vector.extract_strided_slice %123 {offsets = [0, 1, 0, 0, 0], sizes = [2, 2, 1, 8, 32], strides = [1, 1, 1, 1, 1]} : vector<2x3x2x8x32xbf16> to vector<2x2x1x8x32xbf16>
    %129 = vector.shape_cast %128 : vector<2x2x1x8x32xbf16> to vector<2x2x8x32xbf16>
    %130 = vector.shape_cast %115 : vector<2x6x8x32xbf16> to vector<2x3x2x8x32xbf16>
    %131 = vector.extract_strided_slice %130 {offsets = [0, 0, 0, 0, 0], sizes = [2, 2, 1, 8, 32], strides = [1, 1, 1, 1, 1]} : vector<2x3x2x8x32xbf16> to vector<2x2x1x8x32xbf16>
    %132 = vector.shape_cast %131 : vector<2x2x1x8x32xbf16> to vector<2x2x8x32xbf16>
    %133 = vector.extract_strided_slice %130 {offsets = [0, 0, 1, 0, 0], sizes = [2, 2, 1, 8, 32], strides = [1, 1, 1, 1, 1]} : vector<2x3x2x8x32xbf16> to vector<2x2x1x8x32xbf16>
    %134 = vector.shape_cast %133 : vector<2x2x1x8x32xbf16> to vector<2x2x8x32xbf16>
    %135 = vector.extract_strided_slice %130 {offsets = [0, 1, 0, 0, 0], sizes = [2, 2, 1, 8, 32], strides = [1, 1, 1, 1, 1]} : vector<2x3x2x8x32xbf16> to vector<2x2x1x8x32xbf16>
    %136 = vector.shape_cast %135 : vector<2x2x1x8x32xbf16> to vector<2x2x8x32xbf16>
    %137 = tpu.concatenate %118, %120, %122, %125, %127, %129, %132, %134, %136 in 3 : vector<2x2x8x32xbf16>, vector<2x2x8x32xbf16>, vector<2x2x8x32xbf16>, vector<2x2x8x32xbf16>, vector<2x2x8x32xbf16>, vector<2x2x8x32xbf16>, vector<2x2x8x32xbf16>, vector<2x2x8x32xbf16>, vector<2x2x8x32xbf16> -> vector<2x2x8x288xbf16>
    %138 = vector.shape_cast %137 : vector<2x2x8x288xbf16> to vector<32x288xbf16>
    %c0_30 = arith.constant 0 : index
    %c0_31 = arith.constant 0 : index
    %139 = vector.load %arg10[%c0_30, %c0_31] : memref<288x64xbf16, #tpu.memory_space<vmem>>, vector<288x64xbf16>
    %cst_32 = arith.constant dense<0.000000e+00> : vector<32x64xf32>
    %140 = tpu.matmul %138, %139, %cst_32 {dimension_numbers = #tpu.dot_dimension_numbers<[1], [0], [0], [1], [0, 0, 1, 1], [], []>} : vector<32x288xbf16>, vector<288x64xbf16>, vector<32x64xf32> -> vector<32x64xf32>
    %c0_33 = arith.constant 0 : index
    %c0_34 = arith.constant 0 : index
    %141 = vector.load %arg11[%c0_33, %c0_34] : memref<1x64xf32, #tpu.memory_space<vmem>>, vector<1x64xf32>
    %142 = vector.broadcast %141 : vector<1x64xf32> to vector<32x64xf32>
    %143 = arith.addf %140, %142 : vector<32x64xf32>
    %cst_35 = arith.constant 0.000000e+00 : f32
    %144 = vector.broadcast %cst_35 : f32 to vector<32x64xf32>
    %145 = arith.cmpf ogt, %143, %144 : vector<32x64xf32>
    %cst_36 = arith.constant 2.000000e-01 : f32
    %146 = vector.broadcast %cst_36 : f32 to vector<32x64xf32>
    %147 = arith.mulf %146, %143 : vector<32x64xf32>
    %148 = arith.select %145, %143, %147 : vector<32x64xi1>, vector<32x64xf32>
    %c0_37 = arith.constant 0 : index
    %c0_38 = arith.constant 0 : index
    %149 = vector.load %arg12[%c0_37, %c0_38] : memref<1x64xf32, #tpu.memory_space<vmem>>, vector<1x64xf32>
    %150 = vector.broadcast %149 : vector<1x64xf32> to vector<32x64xf32>
    %151 = arith.mulf %148, %150 : vector<32x64xf32>
    %c0_39 = arith.constant 0 : index
    %c0_40 = arith.constant 0 : index
    %152 = vector.load %arg13[%c0_39, %c0_40] : memref<1x64xf32, #tpu.memory_space<vmem>>, vector<1x64xf32>
    %153 = vector.broadcast %152 : vector<1x64xf32> to vector<32x64xf32>
    %154 = arith.addf %151, %153 : vector<32x64xf32>
    %155 = arith.truncf %154 : vector<32x64xf32> to vector<32x64xbf16>
    %156 = vector.shape_cast %155 : vector<32x64xbf16> to vector<2x2x8x64xbf16>
    %cst_41 = arith.constant 0.000000e+00 : bf16
    %157 = vector.broadcast %cst_41 : bf16 to vector<1x2x8x64xbf16>
    %158 = tpu.concatenate %157, %156, %157 in 0 : vector<1x2x8x64xbf16>, vector<2x2x8x64xbf16>, vector<1x2x8x64xbf16> -> vector<4x2x8x64xbf16>
    %cst_42 = arith.constant 0.000000e+00 : bf16
    %159 = vector.broadcast %cst_42 : bf16 to vector<4x1x8x64xbf16>
    %160 = tpu.concatenate %159, %158, %159 in 1 : vector<4x1x8x64xbf16>, vector<4x2x8x64xbf16>, vector<4x1x8x64xbf16> -> vector<4x4x8x64xbf16>
    %161 = vector.shape_cast %160 : vector<4x4x8x64xbf16> to vector<2x2x4x8x64xbf16>
    %162 = vector.extract_strided_slice %161 {offsets = [0, 0, 0, 0, 0], sizes = [1, 1, 4, 8, 64], strides = [1, 1, 1, 1, 1]} : vector<2x2x4x8x64xbf16> to vector<1x1x4x8x64xbf16>
    %163 = vector.shape_cast %162 : vector<1x1x4x8x64xbf16> to vector<1x4x8x64xbf16>
    %164 = vector.extract_strided_slice %161 {offsets = [0, 1, 0, 0, 0], sizes = [1, 1, 4, 8, 64], strides = [1, 1, 1, 1, 1]} : vector<2x2x4x8x64xbf16> to vector<1x1x4x8x64xbf16>
    %165 = vector.shape_cast %164 : vector<1x1x4x8x64xbf16> to vector<1x4x8x64xbf16>
    %166 = vector.extract_strided_slice %161 {offsets = [1, 0, 0, 0, 0], sizes = [1, 1, 4, 8, 64], strides = [1, 1, 1, 1, 1]} : vector<2x2x4x8x64xbf16> to vector<1x1x4x8x64xbf16>
    %167 = vector.shape_cast %166 : vector<1x1x4x8x64xbf16> to vector<1x4x8x64xbf16>
    %168 = vector.shape_cast %163 : vector<1x4x8x64xbf16> to vector<1x2x2x8x64xbf16>
    %169 = vector.extract_strided_slice %168 {offsets = [0, 0, 0, 0, 0], sizes = [1, 1, 1, 8, 64], strides = [1, 1, 1, 1, 1]} : vector<1x2x2x8x64xbf16> to vector<1x1x1x8x64xbf16>
    %170 = vector.shape_cast %169 : vector<1x1x1x8x64xbf16> to vector<1x1x8x64xbf16>
    %171 = vector.extract_strided_slice %168 {offsets = [0, 0, 1, 0, 0], sizes = [1, 1, 1, 8, 64], strides = [1, 1, 1, 1, 1]} : vector<1x2x2x8x64xbf16> to vector<1x1x1x8x64xbf16>
    %172 = vector.shape_cast %171 : vector<1x1x1x8x64xbf16> to vector<1x1x8x64xbf16>
    %173 = vector.extract_strided_slice %168 {offsets = [0, 1, 0, 0, 0], sizes = [1, 1, 1, 8, 64], strides = [1, 1, 1, 1, 1]} : vector<1x2x2x8x64xbf16> to vector<1x1x1x8x64xbf16>
    %174 = vector.shape_cast %173 : vector<1x1x1x8x64xbf16> to vector<1x1x8x64xbf16>
    %175 = vector.shape_cast %165 : vector<1x4x8x64xbf16> to vector<1x2x2x8x64xbf16>
    %176 = vector.extract_strided_slice %175 {offsets = [0, 0, 0, 0, 0], sizes = [1, 1, 1, 8, 64], strides = [1, 1, 1, 1, 1]} : vector<1x2x2x8x64xbf16> to vector<1x1x1x8x64xbf16>
    %177 = vector.shape_cast %176 : vector<1x1x1x8x64xbf16> to vector<1x1x8x64xbf16>
    %178 = vector.extract_strided_slice %175 {offsets = [0, 0, 1, 0, 0], sizes = [1, 1, 1, 8, 64], strides = [1, 1, 1, 1, 1]} : vector<1x2x2x8x64xbf16> to vector<1x1x1x8x64xbf16>
    %179 = vector.shape_cast %178 : vector<1x1x1x8x64xbf16> to vector<1x1x8x64xbf16>
    %180 = vector.extract_strided_slice %175 {offsets = [0, 1, 0, 0, 0], sizes = [1, 1, 1, 8, 64], strides = [1, 1, 1, 1, 1]} : vector<1x2x2x8x64xbf16> to vector<1x1x1x8x64xbf16>
    %181 = vector.shape_cast %180 : vector<1x1x1x8x64xbf16> to vector<1x1x8x64xbf16>
    %182 = vector.shape_cast %167 : vector<1x4x8x64xbf16> to vector<1x2x2x8x64xbf16>
    %183 = vector.extract_strided_slice %182 {offsets = [0, 0, 0, 0, 0], sizes = [1, 1, 1, 8, 64], strides = [1, 1, 1, 1, 1]} : vector<1x2x2x8x64xbf16> to vector<1x1x1x8x64xbf16>
    %184 = vector.shape_cast %183 : vector<1x1x1x8x64xbf16> to vector<1x1x8x64xbf16>
    %185 = vector.extract_strided_slice %182 {offsets = [0, 0, 1, 0, 0], sizes = [1, 1, 1, 8, 64], strides = [1, 1, 1, 1, 1]} : vector<1x2x2x8x64xbf16> to vector<1x1x1x8x64xbf16>
    %186 = vector.shape_cast %185 : vector<1x1x1x8x64xbf16> to vector<1x1x8x64xbf16>
    %187 = vector.extract_strided_slice %182 {offsets = [0, 1, 0, 0, 0], sizes = [1, 1, 1, 8, 64], strides = [1, 1, 1, 1, 1]} : vector<1x2x2x8x64xbf16> to vector<1x1x1x8x64xbf16>
    %188 = vector.shape_cast %187 : vector<1x1x1x8x64xbf16> to vector<1x1x8x64xbf16>
    %189 = tpu.concatenate %170, %172, %174, %177, %179, %181, %184, %186, %188 in 3 : vector<1x1x8x64xbf16>, vector<1x1x8x64xbf16>, vector<1x1x8x64xbf16>, vector<1x1x8x64xbf16>, vector<1x1x8x64xbf16>, vector<1x1x8x64xbf16>, vector<1x1x8x64xbf16>, vector<1x1x8x64xbf16>, vector<1x1x8x64xbf16> -> vector<1x1x8x576xbf16>
    %190 = vector.shape_cast %189 : vector<1x1x8x576xbf16> to vector<8x576xbf16>
    %c0_43 = arith.constant 0 : index
    %c0_44 = arith.constant 0 : index
    %191 = vector.load %arg14[%c0_43, %c0_44] : memref<576x128xbf16, #tpu.memory_space<vmem>>, vector<576x128xbf16>
    %cst_45 = arith.constant dense<0.000000e+00> : vector<8x128xf32>
    %192 = tpu.matmul %190, %191, %cst_45 {dimension_numbers = #tpu.dot_dimension_numbers<[1], [0], [0], [1], [0, 0, 1, 1], [], []>} : vector<8x576xbf16>, vector<576x128xbf16>, vector<8x128xf32> -> vector<8x128xf32>
    %c0_46 = arith.constant 0 : index
    %c0_47 = arith.constant 0 : index
    %193 = vector.load %arg15[%c0_46, %c0_47] : memref<1x128xf32, #tpu.memory_space<vmem>>, vector<1x128xf32>
    %194 = vector.broadcast %193 : vector<1x128xf32> to vector<8x128xf32>
    %195 = arith.addf %192, %194 : vector<8x128xf32>
    %cst_48 = arith.constant 0.000000e+00 : f32
    %196 = vector.broadcast %cst_48 : f32 to vector<8x128xf32>
    %197 = arith.cmpf ogt, %195, %196 : vector<8x128xf32>
    %cst_49 = arith.constant 2.000000e-01 : f32
    %198 = vector.broadcast %cst_49 : f32 to vector<8x128xf32>
    %199 = arith.mulf %198, %195 : vector<8x128xf32>
    %200 = arith.select %197, %195, %199 : vector<8x128xi1>, vector<8x128xf32>
    %c0_50 = arith.constant 0 : index
    %c0_51 = arith.constant 0 : index
    %201 = vector.load %arg16[%c0_50, %c0_51] : memref<1x128xf32, #tpu.memory_space<vmem>>, vector<1x128xf32>
    %202 = vector.broadcast %201 : vector<1x128xf32> to vector<8x128xf32>
    %203 = arith.mulf %200, %202 : vector<8x128xf32>
    %c0_52 = arith.constant 0 : index
    %c0_53 = arith.constant 0 : index
    %204 = vector.load %arg17[%c0_52, %c0_53] : memref<1x128xf32, #tpu.memory_space<vmem>>, vector<1x128xf32>
    %205 = vector.broadcast %204 : vector<1x128xf32> to vector<8x128xf32>
    %206 = arith.addf %203, %205 : vector<8x128xf32>
    %207 = arith.truncf %206 : vector<8x128xf32> to vector<8x128xbf16>
    %208 = vector.shape_cast %207 : vector<8x128xbf16> to vector<1x1x8x128xbf16>
    %209 = vector.shape_cast %208 : vector<1x1x8x128xbf16> to vector<1x8x128xbf16>
    %210 = vector.shape_cast %209 : vector<1x8x128xbf16> to vector<8x128xbf16>
    %c0_54 = arith.constant 0 : index
    %c0_55 = arith.constant 0 : index
    %211 = vector.load %arg18[%c0_54, %c0_55] : memref<128x128xbf16, #tpu.memory_space<vmem>>, vector<128x128xbf16>
    %cst_56 = arith.constant dense<0.000000e+00> : vector<8x128xf32>
    %212 = tpu.matmul %210, %211, %cst_56 {dimension_numbers = #tpu.dot_dimension_numbers<[1], [0], [0], [1], [0, 0, 1, 1], [], []>} : vector<8x128xbf16>, vector<128x128xbf16>, vector<8x128xf32> -> vector<8x128xf32>
    %c0_57 = arith.constant 0 : index
    %c0_58 = arith.constant 0 : index
    %213 = vector.load %arg19[%c0_57, %c0_58] : memref<1x128xf32, #tpu.memory_space<vmem>>, vector<1x128xf32>
    %214 = vector.broadcast %213 : vector<1x128xf32> to vector<8x128xf32>
    %215 = arith.addf %212, %214 : vector<8x128xf32>
    %216 = tpu.iota {dimensions = array<i32: 1>} : vector<8x128xi32>
    %c1_i32 = arith.constant 1 : i32
    %217 = vector.broadcast %c1_i32 : i32 to vector<8x128xi32>
    %218 = arith.cmpi sge, %216, %217 : vector<8x128xi32>
    %c11_i32 = arith.constant 11 : i32
    %219 = vector.broadcast %c11_i32 : i32 to vector<8x128xi32>
    %220 = arith.cmpi slt, %216, %219 : vector<8x128xi32>
    %221 = arith.andi %218, %220 : vector<8x128xi1>
    %cst_59 = arith.constant -1.000000e+30 : f32
    %222 = vector.broadcast %cst_59 : f32 to vector<8x128xf32>
    %223 = arith.select %221, %215, %222 : vector<8x128xi1>, vector<8x128xf32>
    %cst_60 = arith.constant dense<0xFF800000> : vector<8xf32>
    %224 = vector.multi_reduction <maximumf>, %223, %cst_60 [1] : vector<8x128xf32> to vector<8xf32>
    %225 = vector.shape_cast %224 : vector<8xf32> to vector<8x1xf32>
    %226 = vector.broadcast %225 : vector<8x1xf32> to vector<8x128xf32>
    %227 = arith.subf %223, %226 : vector<8x128xf32>
    %228 = math.exp %227 : vector<8x128xf32>
    %cst_61 = arith.constant 0.000000e+00 : f32
    %229 = vector.broadcast %cst_61 : f32 to vector<8x128xf32>
    %230 = arith.select %221, %228, %229 : vector<8x128xi1>, vector<8x128xf32>
    %cst_62 = arith.constant dense<0.000000e+00> : vector<8xf32>
    %231 = vector.multi_reduction <add>, %230, %cst_62 [1] : vector<8x128xf32> to vector<8xf32>
    %232 = vector.shape_cast %231 : vector<8xf32> to vector<8x1xf32>
    %233 = vector.broadcast %232 : vector<8x1xf32> to vector<8x128xf32>
    %234 = arith.divf %230, %233 : vector<8x128xf32>
    %235 = arith.select %221, %234, %215 : vector<8x128xi1>, vector<8x128xf32>
    %c0_63 = arith.constant 0 : index
    %c0_64 = arith.constant 0 : index
    %236 = vector.load %arg20[%c0_63, %c0_64] : memref<8x128xf32, #tpu.memory_space<vmem>>, vector<8x128xf32>
    tpu.vector_store %arg20[%c0_63, %c0_64], %235 {strides = array<i32>} : memref<8x128xf32, #tpu.memory_space<vmem>>, vector<8x128xf32>,
    return
  }
  func.func @transform_0(%arg0: i32) -> (i32, i32, i32, i32) {
    %c0_i32 = arith.constant 0 : i32
    %c0_i32_0 = arith.constant 0 : i32
    %c0_i32_1 = arith.constant 0 : i32
    %c0_i32_2 = arith.constant 0 : i32
    return %c0_i32, %c0_i32_0, %arg0, %c0_i32_1 : i32, i32, i32, i32
  }
  func.func @transform_1(%arg0: i32) -> (i32, i32) {
    %c0_i32 = arith.constant 0 : i32
    %c0_i32_0 = arith.constant 0 : i32
    %c0_i32_1 = arith.constant 0 : i32
    return %c0_i32, %c0_i32_0 : i32, i32
  }
  func.func @transform_2(%arg0: i32) -> (i32, i32) {
    %c0_i32 = arith.constant 0 : i32
    %c0_i32_0 = arith.constant 0 : i32
    %c0_i32_1 = arith.constant 0 : i32
    return %c0_i32, %c0_i32_0 : i32, i32
  }
  func.func @transform_3(%arg0: i32) -> (i32, i32) {
    %c0_i32 = arith.constant 0 : i32
    %c0_i32_0 = arith.constant 0 : i32
    %c0_i32_1 = arith.constant 0 : i32
    return %c0_i32, %c0_i32_0 : i32, i32
  }
  func.func @transform_4(%arg0: i32) -> (i32, i32) {
    %c0_i32 = arith.constant 0 : i32
    %c0_i32_0 = arith.constant 0 : i32
    %c0_i32_1 = arith.constant 0 : i32
    return %c0_i32, %c0_i32_0 : i32, i32
  }
  func.func @transform_5(%arg0: i32) -> (i32, i32) {
    %c0_i32 = arith.constant 0 : i32
    %c0_i32_0 = arith.constant 0 : i32
    %c0_i32_1 = arith.constant 0 : i32
    return %c0_i32, %c0_i32_0 : i32, i32
  }
  func.func @transform_6(%arg0: i32) -> (i32, i32) {
    %c0_i32 = arith.constant 0 : i32
    %c0_i32_0 = arith.constant 0 : i32
    %c0_i32_1 = arith.constant 0 : i32
    return %c0_i32, %c0_i32_0 : i32, i32
  }
  func.func @transform_7(%arg0: i32) -> (i32, i32) {
    %c0_i32 = arith.constant 0 : i32
    %c0_i32_0 = arith.constant 0 : i32
    %c0_i32_1 = arith.constant 0 : i32
    return %c0_i32, %c0_i32_0 : i32, i32
  }
  func.func @transform_8(%arg0: i32) -> (i32, i32) {
    %c0_i32 = arith.constant 0 : i32
    %c0_i32_0 = arith.constant 0 : i32
    %c0_i32_1 = arith.constant 0 : i32
    return %c0_i32, %c0_i32_0 : i32, i32
  }
  func.func @transform_9(%arg0: i32) -> (i32, i32) {
    %c0_i32 = arith.constant 0 : i32
    %c0_i32_0 = arith.constant 0 : i32
    %c0_i32_1 = arith.constant 0 : i32
    return %c0_i32, %c0_i32_0 : i32, i32
  }
  func.func @transform_10(%arg0: i32) -> (i32, i32) {
    %c0_i32 = arith.constant 0 : i32
    %c0_i32_0 = arith.constant 0 : i32
    %c0_i32_1 = arith.constant 0 : i32
    return %c0_i32, %c0_i32_0 : i32, i32
  }
  func.func @transform_11(%arg0: i32) -> (i32, i32) {
    %c0_i32 = arith.constant 0 : i32
    %c0_i32_0 = arith.constant 0 : i32
    %c0_i32_1 = arith.constant 0 : i32
    return %c0_i32, %c0_i32_0 : i32, i32
  }
  func.func @transform_12(%arg0: i32) -> (i32, i32) {
    %c0_i32 = arith.constant 0 : i32
    %c0_i32_0 = arith.constant 0 : i32
    %c0_i32_1 = arith.constant 0 : i32
    return %c0_i32, %c0_i32_0 : i32, i32
  }
  func.func @transform_13(%arg0: i32) -> (i32, i32) {
    %c0_i32 = arith.constant 0 : i32
    %c0_i32_0 = arith.constant 0 : i32
    %c0_i32_1 = arith.constant 0 : i32
    return %c0_i32, %c0_i32_0 : i32, i32
  }
  func.func @transform_14(%arg0: i32) -> (i32, i32) {
    %c0_i32 = arith.constant 0 : i32
    %c0_i32_0 = arith.constant 0 : i32
    %c0_i32_1 = arith.constant 0 : i32
    return %c0_i32, %c0_i32_0 : i32, i32
  }
  func.func @transform_15(%arg0: i32) -> (i32, i32) {
    %c0_i32 = arith.constant 0 : i32
    %c0_i32_0 = arith.constant 0 : i32
    %c0_i32_1 = arith.constant 0 : i32
    return %c0_i32, %c0_i32_0 : i32, i32
  }
  func.func @transform_16(%arg0: i32) -> (i32, i32) {
    %c0_i32 = arith.constant 0 : i32
    %c0_i32_0 = arith.constant 0 : i32
    %c0_i32_1 = arith.constant 0 : i32
    return %c0_i32, %c0_i32_0 : i32, i32
  }
  func.func @transform_17(%arg0: i32) -> (i32, i32) {
    %c0_i32 = arith.constant 0 : i32
    %c0_i32_0 = arith.constant 0 : i32
    %c0_i32_1 = arith.constant 0 : i32
    return %c0_i32, %c0_i32_0 : i32, i32
  }
  func.func @transform_18(%arg0: i32) -> (i32, i32) {
    %c0_i32 = arith.constant 0 : i32
    %c0_i32_0 = arith.constant 0 : i32
    %c0_i32_1 = arith.constant 0 : i32
    return %c0_i32, %c0_i32_0 : i32, i32
  }
  func.func @transform_19(%arg0: i32) -> (i32, i32) {
    %c0_i32 = arith.constant 0 : i32
    %c0_i32_0 = arith.constant 0 : i32
    return %arg0, %c0_i32 : i32, i32
  }
}

</mosaic_0001>

<llo_original>
// kernel: discriminator_forward.1
$region0: #{discriminator_forward.1}
  #allocation0 [shape = 'u32[]', space=smem, size = 0x4, offset = 0x4, fixed_abs, tag = 'smem constant byte address 0x4 - core index']
  #allocation1 [shape = 'u32[144,128]{1,0:T(1,128)}', space=vmem, size = 0x12000, scoped, tag = 'internal scratch']
  %s0 = inlined_call_operand.vmem [shape: bf16[16,16,16,4], index: 0, kind: input, shape index: {}]
  %s1 = inlined_call_operand.vmem [shape: bf16[36,16], index: 1, kind: input, shape index: {}]
  %s2 = inlined_call_operand.vmem [shape: f32[1,16], index: 2, kind: input, shape index: {}]
  %s3 = inlined_call_operand.vmem [shape: f32[1,16], index: 3, kind: input, shape index: {}]
  %s4 = inlined_call_operand.vmem [shape: f32[1,16], index: 4, kind: input, shape index: {}]
  %s5 = inlined_call_operand.vmem [shape: bf16[144,32], index: 5, kind: input, shape index: {}]
  %s6 = inlined_call_operand.vmem [shape: f32[1,32], index: 6, kind: input, shape index: {}]
  %s7 = inlined_call_operand.vmem [shape: f32[1,32], index: 7, kind: input, shape index: {}]
  %s8 = inlined_call_operand.vmem [shape: f32[1,32], index: 8, kind: input, shape index: {}]
  %s9 = inlined_call_operand.vmem [shape: bf16[288,64], index: 9, kind: input, shape index: {}]
  %s10 = inlined_call_operand.vmem [shape: f32[1,64], index: 10, kind: input, shape index: {}]
  %s11 = inlined_call_operand.vmem [shape: f32[1,64], index: 11, kind: input, shape index: {}]
  %s12 = inlined_call_operand.vmem [shape: f32[1,64], index: 12, kind: input, shape index: {}]
  %s13 = inlined_call_operand.vmem [shape: bf16[576,128], index: 13, kind: input, shape index: {}]
  %s14 = inlined_call_operand.vmem [shape: f32[1,128], index: 14, kind: input, shape index: {}]
  %s15 = inlined_call_operand.vmem [shape: f32[1,128], index: 15, kind: input, shape index: {}]
  %s16 = inlined_call_operand.vmem [shape: f32[1,128], index: 16, kind: input, shape index: {}]
  %s17 = inlined_call_operand.vmem [shape: bf16[128,128], index: 17, kind: input, shape index: {}]
  %s18 = inlined_call_operand.vmem [shape: f32[1,128], index: 18, kind: input, shape index: {}]
  %s19 = inlined_call_operand.vmem [shape: f32[16,128], index: 19, kind: output, shape index: {}]
  %s20 = sld [smem:[#allocation0]]
  $region150: #{discriminator_forward.1} parent=0
    _
  %s22 = ssub.s32 1, %s20
  %s23 = scalar_select 0, %s22, %s20
  $region1: #{discriminator_forward.1} parent=0
    #allocation2 [shape = 'u8[1048576]{0}', space=vmem, size = 0x100000, scoped, tag = 'input window, operand 0']
    loop: start=0, step=1, limit=4
    $region2: #{discriminator_forward.1} parent=1 // loop_pre_header
      _
    $region3: #{discriminator_forward.1} parent=1 // loop_header
      %s25 = sphi 0, %s29
      %p26 = scmp.ge.s32.totalorder %s25, 4
      %s35 = sphi 0, %s37
      %s38 = sphi 0, %s35
      %s39 = sphi 0, %s38
      %s55 = sphi 0, %s39
      %s59 = sphi 0, %s59
      %s61 = sphi 0, %s59
      %s62 = sphi 0, %s61
      %s76 = sphi 0, %s62
      %s80 = sphi 0, %s80
      %s82 = sphi 0, %s80
      %s83 = sphi 0, %s82
      %s97 = sphi 0, %s83
      %s101 = sphi 0, %s101
      %s103 = sphi 0, %s101
      %s104 = sphi 0, %s103
      %s118 = sphi 0, %s104
      %s122 = sphi 0, %s122
      %s124 = sphi 0, %s122
      %s125 = sphi 0, %s124
      %s139 = sphi 0, %s125
      %s143 = sphi 0, %s143
      %s145 = sphi 0, %s143
      %s146 = sphi 0, %s145
      %s160 = sphi 0, %s146
      %s164 = sphi 0, %s164
      %s166 = sphi 0, %s164
      %s167 = sphi 0, %s166
      %s181 = sphi 0, %s167
      %s185 = sphi 0, %s185
      %s187 = sphi 0, %s185
      %s188 = sphi 0, %s187
      %s202 = sphi 0, %s188
      %s206 = sphi 0, %s206
      %s208 = sphi 0, %s206
      %s209 = sphi 0, %s208
      %s223 = sphi 0, %s209
      %s227 = sphi 0, %s227
      %s229 = sphi 0, %s227
      %s230 = sphi 0, %s229
      %s244 = sphi 0, %s230
      %s248 = sphi 0, %s248
      %s250 = sphi 0, %s248
      %s251 = sphi 0, %s250
      %s265 = sphi 0, %s251
      %s269 = sphi 0, %s269
      %s271 = sphi 0, %s269
      %s272 = sphi 0, %s271
      %s286 = sphi 0, %s272
      %s290 = sphi 0, %s290
      %s292 = sphi 0, %s290
      %s293 = sphi 0, %s292
      %s307 = sphi 0, %s293
      %s311 = sphi 0, %s311
      %s313 = sphi 0, %s311
      %s314 = sphi 0, %s313
      %s328 = sphi 0, %s314
      %s332 = sphi 0, %s332
      %s334 = sphi 0, %s332
      %s335 = sphi 0, %s334
      %s349 = sphi 0, %s335
      %s353 = sphi 0, %s353
      %s355 = sphi 0, %s353
      %s356 = sphi 0, %s355
      %s370 = sphi 0, %s356
      %s374 = sphi 0, %s374
      %s376 = sphi 0, %s374
      %s377 = sphi 0, %s376
      %s391 = sphi 0, %s377
      %s395 = sphi 0, %s395
      %s397 = sphi 0, %s395
      %s398 = sphi 0, %s397
      %s412 = sphi 0, %s398
      %s416 = sphi 0, %s416
      %s418 = sphi 0, %s416
      %s419 = sphi 0, %s418
      %s433 = sphi 0, %s419
      %s439 = sphi 0, %s441
      %s442 = sphi 0, %s439
      %s443 = sphi 0, %s442
      %s459 = sphi 0, %s443
    $region4: #{discriminator_forward.1} parent=1 // loop_header_branch
      %28 = sbr.rel (%p26) target = $region8
    $region5: #{discriminator_forward.1} parent=1 // loop_body
      %s30 = ssub.s32 %s25, 1
      %s31 = ssub.s32 %s25, 2
      %s32 = sadd.s32 %s25, 1
      %s33 = ssub.s32 %s25, %s32
      %p34 = scmp.eq.s32.totalorder %s33, 0
      %s36 = sadd.s32 %s35, 1
      %s37 = scalar_select %p34, %s35, %s36
      %p40 = pneg %p34
      %p41 = scmp.eq.s32.totalorder %s25, 1
      %p42 = por %p40, %p41
      %p43 = scmp.ne.s32.totalorder %s35, %s38
      %p44 = scmp.eq.s32.totalorder %s25, 0
      %p45 = por %p43, %p44
      %p46 = scmp.ne.s32.totalorder %s35, %s38
      %p47 = scmp.eq.s32.totalorder %s30, 1
      %p48 = por %p46, %p47
      %p49 = scmp.ne.s32.totalorder %s38, %s39
      %p50 = scmp.eq.s32.totalorder %s30, 0
      %p51 = por %p49, %p50
      %p52 = scmp.ne.s32.totalorder %s38, %s39
      %p53 = scmp.eq.s32.totalorder %s31, 1
      %p54 = por %p52, %p53
      %p56 = scmp.ne.s32.totalorder %s39, %s55
      %p57 = scmp.eq.s32.totalorder %s31, 0
      %p58 = por %p56, %p57
      %s60 = sadd.s32 %s59, 1
      %p63 = scmp.eq.s32.totalorder %s25, 1
      %p64 = scmp.ne.s32.totalorder %s59, %s61
      %p65 = scmp.eq.s32.totalorder %s25, 0
      %p66 = por %p64, %p65
      %p67 = scmp.ne.s32.totalorder %s59, %s61
      %p68 = scmp.eq.s32.totalorder %s30, 1
      %p69 = por %p67, %p68
      %p70 = scmp.ne.s32.totalorder %s61, %s62
      %p71 = scmp.eq.s32.totalorder %s30, 0
      %p72 = por %p70, %p71
      %p73 = scmp.ne.s32.totalorder %s61, %s62
      %p74 = scmp.eq.s32.totalorder %s31, 1
      %p75 = por %p73, %p74
      %p77 = scmp.ne.s32.totalorder %s62, %s76
      %p78 = scmp.eq.s32.totalorder %s31, 0
      %p79 = por %p77, %p78
      %s81 = sadd.s32 %s80, 1
      %p84 = scmp.eq.s32.totalorder %s25, 1
      %p85 = scmp.ne.s32.totalorder %s80, %s82
      %p86 = scmp.eq.s32.totalorder %s25, 0
      %p87 = por %p85, %p86
      %p88 = scmp.ne.s32.totalorder %s80, %s82
      %p89 = scmp.eq.s32.totalorder %s30, 1
      %p90 = por %p88, %p89
      %p91 = scmp.ne.s32.totalorder %s82, %s83
      %p92 = scmp.eq.s32.totalorder %s30, 0
      %p93 = por %p91, %p92
      %p94 = scmp.ne.s32.totalorder %s82, %s83
      %p95 = scmp.eq.s32.totalorder %s31, 1
      %p96 = por %p94, %p95
      %p98 = scmp.ne.s32.totalorder %s83, %s97
      %p99 = scmp.eq.s32.totalorder %s31, 0
      %p100 = por %p98, %p99
      %s102 = sadd.s32 %s101, 1
      %p105 = scmp.eq.s32.totalorder %s25, 1
      %p106 = scmp.ne.s32.totalorder %s101, %s103
      %p107 = scmp.eq.s32.totalorder %s25, 0
      %p108 = por %p106, %p107
      %p109 = scmp.ne.s32.totalorder %s101, %s103
      %p110 = scmp.eq.s32.totalorder %s30, 1
      %p111 = por %p109, %p110
      %p112 = scmp.ne.s32.totalorder %s103, %s104
      %p113 = scmp.eq.s32.totalorder %s30, 0
      %p114 = por %p112, %p113
      %p115 = scmp.ne.s32.totalorder %s103, %s104
      %p116 = scmp.eq.s32.totalorder %s31, 1
      %p117 = por %p115, %p116
      %p119 = scmp.ne.s32.totalorder %s104, %s118
      %p120 = scmp.eq.s32.totalorder %s31, 0
      %p121 = por %p119, %p120
      %s123 = sadd.s32 %s122, 1
      %p126 = scmp.eq.s32.totalorder %s25, 1
      %p127 = scmp.ne.s32.totalorder %s122, %s124
      %p128 = scmp.eq.s32.totalorder %s25, 0
      %p129 = por %p127, %p128
      %p130 = scmp.ne.s32.totalorder %s122, %s124
      %p131 = scmp.eq.s32.totalorder %s30, 1
      %p132 = por %p130, %p131
      %p133 = scmp.ne.s32.totalorder %s124, %s125
      %p134 = scmp.eq.s32.totalorder %s30, 0
      %p135 = por %p133, %p134
      %p136 = scmp.ne.s32.totalorder %s124, %s125
      %p137 = scmp.eq.s32.totalorder %s31, 1
      %p138 = por %p136, %p137
      %p140 = scmp.ne.s32.totalorder %s125, %s139
      %p141 = scmp.eq.s32.totalorder %s31, 0
      %p142 = por %p140, %p141
      %s144 = sadd.s32 %s143, 1
      %p147 = scmp.eq.s32.totalorder %s25, 1
      %p148 = scmp.ne.s32.totalorder %s143, %s145
      %p149 = scmp.eq.s32.totalorder %s25, 0
      %p150 = por %p148, %p149
      %p151 = scmp.ne.s32.totalorder %s143, %s145
      %p152 = scmp.eq.s32.totalorder %s30, 1
      %p153 = por %p151, %p152
      %p154 = scmp.ne.s32.totalorder %s145, %s146
      %p155 = scmp.eq.s32.totalorder %s30, 0
      %p156 = por %p154, %p155
      %p157 = scmp.ne.s32.totalorder %s145, %s146
      %p158 = scmp.eq.s32.totalorder %s31, 1
      %p159 = por %p157, %p158
      %p161 = scmp.ne.s32.totalorder %s146, %s160
      %p162 = scmp.eq.s32.totalorder %s31, 0
      %p163 = por %p161, %p162
      %s165 = sadd.s32 %s164, 1
      %p168 = scmp.eq.s32.totalorder %s25, 1
      %p169 = scmp.ne.s32.totalorder %s164, %s166
      %p170 = scmp.eq.s32.totalorder %s25, 0
      %p171 = por %p169, %p170
      %p172 = scmp.ne.s32.totalorder %s164, %s166
      %p173 = scmp.eq.s32.totalorder %s30, 1
      %p174 = por %p172, %p173
      %p175 = scmp.ne.s32.totalorder %s166, %s167
      %p176 = scmp.eq.s32.totalorder %s30, 0
      %p177 = por %p175, %p176
      %p178 = scmp.ne.s32.totalorder %s166, %s167
      %p179 = scmp.eq.s32.totalorder %s31, 1
      %p180 = por %p178, %p179
      %p182 = scmp.ne.s32.totalorder %s167, %s181
      %p183 = scmp.eq.s32.totalorder %s31, 0
      %p184 = por %p182, %p183
      %s186 = sadd.s32 %s185, 1
      %p189 = scmp.eq.s32.totalorder %s25, 1
      %p190 = scmp.ne.s32.totalorder %s185, %s187
      %p191 = scmp.eq.s32.totalorder %s25, 0
      %p192 = por %p190, %p191
      %p193 = scmp.ne.s32.totalorder %s185, %s187
      %p194 = scmp.eq.s32.totalorder %s30, 1
      %p195 = por %p193, %p194
      %p196 = scmp.ne.s32.totalorder %s187, %s188
      %p197 = scmp.eq.s32.totalorder %s30, 0
      %p198 = por %p196, %p197
      %p199 = scmp.ne.s32.totalorder %s187, %s188
      %p200 = scmp.eq.s32.totalorder %s31, 1
      %p201 = por %p199, %p200
      %p203 = scmp.ne.s32.totalorder %s188, %s202
      %p204 = scmp.eq.s32.totalorder %s31, 0
      %p205 = por %p203, %p204
      %s207 = sadd.s32 %s206, 1
      %p210 = scmp.eq.s32.totalorder %s25, 1
      %p211 = scmp.ne.s32.totalorder %s206, %s208
      %p212 = scmp.eq.s32.totalorder %s25, 0
      %p213 = por %p211, %p212
      %p214 = scmp.ne.s32.totalorder %s206, %s208
      %p215 = scmp.eq.s32.totalorder %s30, 1
      %p216 = por %p214, %p215
      %p217 = scmp.ne.s32.totalorder %s208, %s209
      %p218 = scmp.eq.s32.totalorder %s30, 0
      %p219 = por %p217, %p218
      %p220 = scmp.ne.s32.totalorder %s208, %s209
      %p221 = scmp.eq.s32.totalorder %s31, 1
      %p222 = por %p220, %p221
      %p224 = scmp.ne.s32.totalorder %s209, %s223
      %p225 = scmp.eq.s32.totalorder %s31, 0
      %p226 = por %p224, %p225
      %s228 = sadd.s32 %s227, 1
      %p231 = scmp.eq.s32.totalorder %s25, 1
      %p232 = scmp.ne.s32.totalorder %s227, %s229
      %p233 = scmp.eq.s32.totalorder %s25, 0
      %p234 = por %p232, %p233
      %p235 = scmp.ne.s32.totalorder %s227, %s229
      %p236 = scmp.eq.s32.totalorder %s30, 1
      %p237 = por %p235, %p236
      %p238 = scmp.ne.s32.totalorder %s229, %s230
      %p239 = scmp.eq.s32.totalorder %s30, 0
      %p240 = por %p238, %p239
      %p241 = scmp.ne.s32.totalorder %s229, %s230
      %p242 = scmp.eq.s32.totalorder %s31, 1
      %p243 = por %p241, %p242
      %p245 = scmp.ne.s32.totalorder %s230, %s244
      %p246 = scmp.eq.s32.totalorder %s31, 0
      %p247 = por %p245, %p246
      %s249 = sadd.s32 %s248, 1
      %p252 = scmp.eq.s32.totalorder %s25, 1
      %p253 = scmp.ne.s32.totalorder %s248, %s250
      %p254 = scmp.eq.s32.totalorder %s25, 0
      %p255 = por %p253, %p254
      %p256 = scmp.ne.s32.totalorder %s248, %s250
      %p257 = scmp.eq.s32.totalorder %s30, 1
      %p258 = por %p256, %p257
      %p259 = scmp.ne.s32.totalorder %s250, %s251
      %p260 = scmp.eq.s32.totalorder %s30, 0
      %p261 = por %p259, %p260
      %p262 = scmp.ne.s32.totalorder %s250, %s251
      %p263 = scmp.eq.s32.totalorder %s31, 1
      %p264 = por %p262, %p263
      %p266 = scmp.ne.s32.totalorder %s251, %s265
      %p267 = scmp.eq.s32.totalorder %s31, 0
      %p268 = por %p266, %p267
      %s270 = sadd.s32 %s269, 1
      %p273 = scmp.eq.s32.totalorder %s25, 1
      %p274 = scmp.ne.s32.totalorder %s269, %s271
      %p275 = scmp.eq.s32.totalorder %s25, 0
      %p276 = por %p274, %p275
      %p277 = scmp.ne.s32.totalorder %s269, %s271
      %p278 = scmp.eq.s32.totalorder %s30, 1
      %p279 = por %p277, %p278
      %p280 = scmp.ne.s32.totalorder %s271, %s272
      %p281 = scmp.eq.s32.totalorder %s30, 0
      %p282 = por %p280, %p281
      %p283 = scmp.ne.s32.totalorder %s271, %s272
      %p284 = scmp.eq.s32.totalorder %s31, 1
      %p285 = por %p283, %p284
      %p287 = scmp.ne.s32.totalorder %s272, %s286
      %p288 = scmp.eq.s32.totalorder %s31, 0
      %p289 = por %p287, %p288
      %s291 = sadd.s32 %s290, 1
      %p294 = scmp.eq.s32.totalorder %s25, 1
      %p295 = scmp.ne.s32.totalorder %s290, %s292
      %p296 = scmp.eq.s32.totalorder %s25, 0
      %p297 = por %p295, %p296
      %p298 = scmp.ne.s32.totalorder %s290, %s292
      %p299 = scmp.eq.s32.totalorder %s30, 1
      %p300 = por %p298, %p299
      %p301 = scmp.ne.s32.totalorder %s292, %s293
      %p302 = scmp.eq.s32.totalorder %s30, 0
      %p303 = por %p301, %p302
      %p304 = scmp.ne.s32.totalorder %s292, %s293
      %p305 = scmp.eq.s32.totalorder %s31, 1
      %p306 = por %p304, %p305
      %p308 = scmp.ne.s32.totalorder %s293, %s307
      %p309 = scmp.eq.s32.totalorder %s31, 0
      %p310 = por %p308, %p309
      %s312 = sadd.s32 %s311, 1
      %p315 = scmp.eq.s32.totalorder %s25, 1
      %p316 = scmp.ne.s32.totalorder %s311, %s313
      %p317 = scmp.eq.s32.totalorder %s25, 0
      %p318 = por %p316, %p317
      %p319 = scmp.ne.s32.totalorder %s311, %s313
      %p320 = scmp.eq.s32.totalorder %s30, 1
      %p321 = por %p319, %p320
      %p322 = scmp.ne.s32.totalorder %s313, %s314
      %p323 = scmp.eq.s32.totalorder %s30, 0
      %p324 = por %p322, %p323
      %p325 = scmp.ne.s32.totalorder %s313, %s314
      %p326 = scmp.eq.s32.totalorder %s31, 1
      %p327 = por %p325, %p326
      %p329 = scmp.ne.s32.totalorder %s314, %s328
      %p330 = scmp.eq.s32.totalorder %s31, 0
      %p331 = por %p329, %p330
      %s333 = sadd.s32 %s332, 1
      %p336 = scmp.eq.s32.totalorder %s25, 1
      %p337 = scmp.ne.s32.totalorder %s332, %s334
      %p338 = scmp.eq.s32.totalorder %s25, 0
      %p339 = por %p337, %p338
      %p340 = scmp.ne.s32.totalorder %s332, %s334
      %p341 = scmp.eq.s32.totalorder %s30, 1
      %p342 = por %p340, %p341
      %p343 = scmp.ne.s32.totalorder %s334, %s335
      %p344 = scmp.eq.s32.totalorder %s30, 0
      %p345 = por %p343, %p344
      %p346 = scmp.ne.s32.totalorder %s334, %s335
      %p347 = scmp.eq.s32.totalorder %s31, 1
      %p348 = por %p346, %p347
      %p350 = scmp.ne.s32.totalorder %s335, %s349
      %p351 = scmp.eq.s32.totalorder %s31, 0
      %p352 = por %p350, %p351
      %s354 = sadd.s32 %s353, 1
      %p357 = scmp.eq.s32.totalorder %s25, 1
      %p358 = scmp.ne.s32.totalorder %s353, %s355
      %p359 = scmp.eq.s32.totalorder %s25, 0
      %p360 = por %p358, %p359
      %p361 = scmp.ne.s32.totalorder %s353, %s355
      %p362 = scmp.eq.s32.totalorder %s30, 1
      %p363 = por %p361, %p362
      %p364 = scmp.ne.s32.totalorder %s355, %s356
      %p365 = scmp.eq.s32.totalorder %s30, 0
      %p366 = por %p364, %p365
      %p367 = scmp.ne.s32.totalorder %s355, %s356
      %p368 = scmp.eq.s32.totalorder %s31, 1
      %p369 = por %p367, %p368
      %p371 = scmp.ne.s32.totalorder %s356, %s370
      %p372 = scmp.eq.s32.totalorder %s31, 0
      %p373 = por %p371, %p372
      %s375 = sadd.s32 %s374, 1
      %p378 = scmp.eq.s32.totalorder %s25, 1
      %p379 = scmp.ne.s32.totalorder %s374, %s376
      %p380 = scmp.eq.s32.totalorder %s25, 0
      %p381 = por %p379, %p380
      %p382 = scmp.ne.s32.totalorder %s374, %s376
      %p383 = scmp.eq.s32.totalorder %s30, 1
      %p384 = por %p382, %p383
      %p385 = scmp.ne.s32.totalorder %s376, %s377
      %p386 = scmp.eq.s32.totalorder %s30, 0
      %p387 = por %p385, %p386
      %p388 = scmp.ne.s32.totalorder %s376, %s377
      %p389 = scmp.eq.s32.totalorder %s31, 1
      %p390 = por %p388, %p389
      %p392 = scmp.ne.s32.totalorder %s377, %s391
      %p393 = scmp.eq.s32.totalorder %s31, 0
      %p394 = por %p392, %p393
      %s396 = sadd.s32 %s395, 1
      %p399 = scmp.eq.s32.totalorder %s25, 1
      %p400 = scmp.ne.s32.totalorder %s395, %s397
      %p401 = scmp.eq.s32.totalorder %s25, 0
      %p402 = por %p400, %p401
      %p403 = scmp.ne.s32.totalorder %s395, %s397
      %p404 = scmp.eq.s32.totalorder %s30, 1
      %p405 = por %p403, %p404
      %p406 = scmp.ne.s32.totalorder %s397, %s398
      %p407 = scmp.eq.s32.totalorder %s30, 0
      %p408 = por %p406, %p407
      %p409 = scmp.ne.s32.totalorder %s397, %s398
      %p410 = scmp.eq.s32.totalorder %s31, 1
      %p411 = por %p409, %p410
      %p413 = scmp.ne.s32.totalorder %s398, %s412
      %p414 = scmp.eq.s32.totalorder %s31, 0
      %p415 = por %p413, %p414
      %s417 = sadd.s32 %s416, 1
      %p420 = scmp.eq.s32.totalorder %s25, 1
      %p421 = scmp.ne.s32.totalorder %s416, %s418
      %p422 = scmp.eq.s32.totalorder %s25, 0
      %p423 = por %p421, %p422
      %p424 = scmp.ne.s32.totalorder %s416, %s418
      %p425 = scmp.eq.s32.totalorder %s30, 1
      %p426 = por %p424, %p425
      %p427 = scmp.ne.s32.totalorder %s418, %s419
      %p428 = scmp.eq.s32.totalorder %s30, 0
      %p429 = por %p427, %p428
      %p430 = scmp.ne.s32.totalorder %s418, %s419
      %p431 = scmp.eq.s32.totalorder %s31, 1
      %p432 = por %p430, %p431
      %p434 = scmp.ne.s32.totalorder %s419, %s433
      %p435 = scmp.eq.s32.totalorder %s31, 0
      %p436 = por %p434, %p435
      %s437 = ssub.s32 %s25, %s32
      %p438 = scmp.eq.s32.totalorder %s437, 0
      %s440 = sadd.s32 %s439, 1
      %s441 = scalar_select %p438, %s439, %s440
      %p444 = pneg %p438
      %p445 = scmp.eq.s32.totalorder %s25, 1
      %p446 = por %p444, %p445
      %p447 = scmp.ne.s32.totalorder %s439, %s442
      %p448 = scmp.eq.s32.totalorder %s25, 0
      %p449 = por %p447, %p448
      %p450 = scmp.ne.s32.totalorder %s439, %s442
      %p451 = scmp.eq.s32.totalorder %s30, 1
      %p452 = por %p450, %p451
      %p453 = scmp.ne.s32.totalorder %s442, %s443
      %p454 = scmp.eq.s32.totalorder %s30, 0
      %p455 = por %p453, %p454
      %p456 = scmp.ne.s32.totalorder %s442, %s443
      %p457 = scmp.eq.s32.totalorder %s31, 1
      %p458 = por %p456, %p457
      %p460 = scmp.ne.s32.totalorder %s443, %s459
      %p461 = scmp.eq.s32.totalorder %s31, 0
      %p462 = por %p460, %p461
      %p463 = scmp.le.s32.totalorder 1, %s25
      %p464 = scmp.lt.s32.totalorder %s25, 3
      %p465 = pnand %p463, %p464
      %p466 = pneg %p465
      // Predicated region
      $region9: #{discriminator_forward.1} parent=5 // pred_check
        _
      $region10: #{discriminator_forward.1} parent=5 // pred_check_branch
        %468 = sbr.rel (%p465) target = $region12
      $region11: #{discriminator_forward.1} parent=5 // pred_region
        %s469 = ssub.s32 %s25, 1
        // Predicated region
        $region13: #{discriminator_forward.1} parent=11 // pred_check
          %p470 = pneg %p72
        $region14: #{discriminator_forward.1} parent=11 // pred_check_branch
          %472 = sbr.rel (%p470) target = $region16
        $region15: #{discriminator_forward.1} parent=11 // pred_region
          _
        $region16: #{discriminator_forward.1} parent=11 // pred_fallthru
          _
        // Predicated region
        $region17: #{discriminator_forward.1} parent=11 // pred_check
          %p473 = pneg %p93
        $region18: #{discriminator_forward.1} parent=11 // pred_check_branch
          %475 = sbr.rel (%p473) target = $region20
        $region19: #{discriminator_forward.1} parent=11 // pred_region
          _
        $region20: #{discriminator_forward.1} parent=11 // pred_fallthru
          _
        // Predicated region
        $region21: #{discriminator_forward.1} parent=11 // pred_check
          %p476 = pneg %p114
        $region22: #{discriminator_forward.1} parent=11 // pred_check_branch
          %478 = sbr.rel (%p476) target = $region24
        $region23: #{discriminator_forward.1} parent=11 // pred_region
          _
        $region24: #{discriminator_forward.1} parent=11 // pred_fallthru
          _
        // Predicated region
        $region25: #{discriminator_forward.1} parent=11 // pred_check
          %p479 = pneg %p135
        $region26: #{discriminator_forward.1} parent=11 // pred_check_branch
          %481 = sbr.rel (%p479) target = $region28
        $region27: #{discriminator_forward.1} parent=11 // pred_region
          _
        $region28: #{discriminator_forward.1} parent=11 // pred_fallthru
          _
        // Predicated region
        $region29: #{discriminator_forward.1} parent=11 // pred_check
          %p482 = pneg %p156
        $region30: #{discriminator_forward.1} parent=11 // pred_check_branch
          %484 = sbr.rel (%p482) target = $region32
        $region31: #{discriminator_forward.1} parent=11 // pred_region
          _
        $region32: #{discriminator_forward.1} parent=11 // pred_fallthru
          _
        // Predicated region
        $region33: #{discriminator_forward.1} parent=11 // pred_check
          %p485 = pneg %p177
        $region34: #{discriminator_forward.1} parent=11 // pred_check_branch
          %487 = sbr.rel (%p485) target = $region36
        $region35: #{discriminator_forward.1} parent=11 // pred_region
          _
        $region36: #{discriminator_forward.1} parent=11 // pred_fallthru
          _
        // Predicated region
        $region37: #{discriminator_forward.1} parent=11 // pred_check
          %p488 = pneg %p198
        $region38: #{discriminator_forward.1} parent=11 // pred_check_branch
          %490 = sbr.rel (%p488) target = $region40
        $region39: #{discriminator_forward.1} parent=11 // pred_region
          _
        $region40: #{discriminator_forward.1} parent=11 // pred_fallthru
          _
        // Predicated region
        $region41: #{discriminator_forward.1} parent=11 // pred_check
          %p491 = pneg %p219
        $region42: #{discriminator_forward.1} parent=11 // pred_check_branch
          %493 = sbr.rel (%p491) target = $region44
        $region43: #{discriminator_forward.1} parent=11 // pred_region
          _
        $region44: #{discriminator_forward.1} parent=11 // pred_fallthru
          _
        // Predicated region
        $region45: #{discriminator_forward.1} parent=11 // pred_check
          %p494 = pneg %p240
        $region46: #{discriminator_forward.1} parent=11 // pred_check_branch
          %496 = sbr.rel (%p494) target = $region48
        $region47: #{discriminator_forward.1} parent=11 // pred_region
          _
        $region48: #{discriminator_forward.1} parent=11 // pred_fallthru
          _
        // Predicated region
        $region49: #{discriminator_forward.1} parent=11 // pred_check
          %p497 = pneg %p261
        $region50: #{discriminator_forward.1} parent=11 // pred_check_branch
          %499 = sbr.rel (%p497) target = $region52
        $region51: #{discriminator_forward.1} parent=11 // pred_region
          _
        $region52: #{discriminator_forward.1} parent=11 // pred_fallthru
          _
        // Predicated region
        $region53: #{discriminator_forward.1} parent=11 // pred_check
          %p500 = pneg %p282
        $region54: #{discriminator_forward.1} parent=11 // pred_check_branch
          %502 = sbr.rel (%p500) target = $region56
        $region55: #{discriminator_forward.1} parent=11 // pred_region
          _
        $region56: #{discriminator_forward.1} parent=11 // pred_fallthru
          _
        // Predicated region
        $region57: #{discriminator_forward.1} parent=11 // pred_check
          %p503 = pneg %p303
        $region58: #{discriminator_forward.1} parent=11 // pred_check_branch
          %505 = sbr.rel (%p503) target = $region60
        $region59: #{discriminator_forward.1} parent=11 // pred_region
          _
        $region60: #{discriminator_forward.1} parent=11 // pred_fallthru
          _
        // Predicated region
        $region61: #{discriminator_forward.1} parent=11 // pred_check
          %p506 = pneg %p324
        $region62: #{discriminator_forward.1} parent=11 // pred_check_branch
          %508 = sbr.rel (%p506) target = $region64
        $region63: #{discriminator_forward.1} parent=11 // pred_region
          _
        $region64: #{discriminator_forward.1} parent=11 // pred_fallthru
          _
        // Predicated region
        $region65: #{discriminator_forward.1} parent=11 // pred_check
          %p509 = pneg %p345
        $region66: #{discriminator_forward.1} parent=11 // pred_check_branch
          %511 = sbr.rel (%p509) target = $region68
        $region67: #{discriminator_forward.1} parent=11 // pred_region
          _
        $region68: #{discriminator_forward.1} parent=11 // pred_fallthru
          _
        // Predicated region
        $region69: #{discriminator_forward.1} parent=11 // pred_check
          %p512 = pneg %p366
        $region70: #{discriminator_forward.1} parent=11 // pred_check_branch
          %514 = sbr.rel (%p512) target = $region72
        $region71: #{discriminator_forward.1} parent=11 // pred_region
          _
        $region72: #{discriminator_forward.1} parent=11 // pred_fallthru
          _
        // Predicated region
        $region73: #{discriminator_forward.1} parent=11 // pred_check
          %p515 = pneg %p387
        $region74: #{discriminator_forward.1} parent=11 // pred_check_branch
          %517 = sbr.rel (%p515) target = $region76
        $region75: #{discriminator_forward.1} parent=11 // pred_region
          _
        $region76: #{discriminator_forward.1} parent=11 // pred_fallthru
          _
        // Predicated region
        $region77: #{discriminator_forward.1} parent=11 // pred_check
          %p518 = pneg %p408
        $region78: #{discriminator_forward.1} parent=11 // pred_check_branch
          %520 = sbr.rel (%p518) target = $region80
        $region79: #{discriminator_forward.1} parent=11 // pred_region
          _
        $region80: #{discriminator_forward.1} parent=11 // pred_fallthru
          _
        // Predicated region
        $region81: #{discriminator_forward.1} parent=11 // pred_check
          %p521 = pneg %p429
        $region82: #{discriminator_forward.1} parent=11 // pred_check_branch
          %523 = sbr.rel (%p521) target = $region84
        $region83: #{discriminator_forward.1} parent=11 // pred_region
          _
        $region84: #{discriminator_forward.1} parent=11 // pred_fallthru
          _
      $region12: #{discriminator_forward.1} parent=5 // pred_fallthru
        _
      %p524 = scmp.lt.s32.totalorder %s25, 2
      // Predicated region
      $region85: #{discriminator_forward.1} parent=5 // pred_check
        %p525 = pneg %p524
      $region86: #{discriminator_forward.1} parent=5 // pred_check_branch
        %527 = sbr.rel (%p525) target = $region88
      $region87: #{discriminator_forward.1} parent=5 // pred_region
        // Predicated region
        $region89: #{discriminator_forward.1} parent=87 // pred_check
          %p528 = pneg %p45
        $region90: #{discriminator_forward.1} parent=87 // pred_check_branch
          %530 = sbr.rel (%p528) target = $region92
        $region91: #{discriminator_forward.1} parent=87 // pred_region
          %s531 = sand.u32 %s35, 1
          %s532 = sand.u32 %s35, 1
          %s533 = smul.addr %s532, 1024
          %s534 = scalar_lea.vmem [#allocation2], %s533
          %s535 = smul.addr %s25, 4
          %s536 = scalar_lea.vmem %s0, %s535
          // Predicated region
          $region93: #{discriminator_forward.1} parent=91 // pred_check
            _
          $region94: #{discriminator_forward.1} parent=91 // pred_check_branch
            %538 = sbr.rel (0) target = $region96
          $region95: #{discriminator_forward.1} parent=91 // pred_region
            // Predicated region
            $region97: #{discriminator_forward.1} parent=95 // pred_check
              _
            $region98: #{discriminator_forward.1} parent=95 // pred_check_branch
              %540 = sbr.rel target = $region100
            $region99: #{discriminator_forward.1} parent=95 // pred_region
              // Predicated region
              $region112: #{discriminator_forward.1} parent=99 // pred_check
                _
              $region113: #{discriminator_forward.1} parent=99 // pred_check_branch
                %1065 = sbr.rel (0) target = $region115
              $region114: #{discriminator_forward.1} parent=99 // pred_region
                loop: start=0, step=1, limit=1
                $region116: #{discriminator_forward.1} parent=114 // loop_pre_header
                  _
                $region117: #{discriminator_forward.1} parent=114 // loop_header
                  %s1067 = sphi 0, %s1071
                  %p1068 = scmp.ge.s32.totalorder %s1067, 1
                  %s1072 = sphi %s536, %s536
                  %s1073 = sphi %s534, %s534
                $region118: #{discriminator_forward.1} parent=114 // loop_header_branch
                  %1070 = sbr.rel (%p1068) target = $region122
                $region119: #{discriminator_forward.1} parent=114 // loop_body
                  _
                $region120: #{discriminator_forward.1} parent=114 // loop_footer
                  %s1071 = sadd.s32 1, %s1067
                $region121: #{discriminator_forward.1} parent=114 // loop_footer_branch
                  %1066 = sbr.rel target = $region117
                $region122: #{discriminator_forward.1} parent=114 // loop_exit
                  _
                loop: start=0, step=1, limit=1
                $region123: #{discriminator_forward.1} parent=114 // loop_pre_header
                  _
                $region124: #{discriminator_forward.1} parent=114 // loop_header
                  %s1076 = sphi 0, %s1080
                  %p1077 = scmp.ge.s32.totalorder %s1076, 1
                  %s1081 = sphi %s536, %s536
                  %s1082 = sphi %s534, %s534
                $region125: #{discriminator_forward.1} parent=114 // loop_header_branch
                  %1079 = sbr.rel (%p1077) target = $region129
                $region126: #{discriminator_forward.1} parent=114 // loop_body
                  %v1083 = vld [vmem:[%s1081] sm:$0xf]
                  %1084 = vst [vmem:[%s1082] sm:$0xf] %v1083
                  %v1085 = vld [vmem:[%s1081 + $0x8] sm:$0xf]
                  %1086 = vst [vmem:[%s1082 + $0x4] sm:$0xf] %v1085
                  %v1087 = vld [vmem:[%s1081 + $0x10] sm:$0xf]
                  %1088 = vst [vmem:[%s1082 + $0x8] sm:$0xf] %v1087
                  %v1089 = vld [vmem:[%s1081 + $0x18] sm:$0xf]
                  %1090 = vst [vmem:[%s1082 + $0xc] sm:$0xf] %v1089
                  %v1091 = vld [vmem:[%s1081 + $0x20] sm:$0xf]
                  %1092 = vst [vmem:[%s1082 + $0x10] sm:$0xf] %v1091
                  %v1093 = vld [vmem:[%s1081 + $0x28] sm:$0xf]
                  %1094 = vst [vmem:[%s1082 + $0x14] sm:$0xf] %v1093
                  %v1095 = vld [vmem:[%s1081 + $0x30] sm:$0xf]
                  %1096 = vst [vmem:[%s1082 + $0x18] sm:$0xf] %v1095
                  %v1097 = vld [vmem:[%s1081 + $0x38] sm:$0xf]
                  %1098 = vst [vmem:[%s1082 + $0x1c] sm:$0xf] %v1097
                  %v1099 = vld [vmem:[%s1081 + $0x40] sm:$0xf]
                  %1100 = vst [vmem:[%s1082 + $0x20] sm:$0xf] %v1099
                  %v1101 = vld [vmem:[%s1081 + $0x48] sm:$0xf]
                  %1102 = vst [vmem:[%s1082 + $0x24] sm:$0xf] %v1101
                  %v1103 = vld [vmem:[%s1081 + $0x50] sm:$0xf]
                  %1104 = vst [vmem:[%s1082 + $0x28] sm:$0xf] %v1103
                  %v1105 = vld [vmem:[%s1081 + $0x58] sm:$0xf]
                  %1106 = vst [vmem:[%s1082 + $0x2c] sm:$0xf] %v1105
                  %v1107 = vld [vmem:[%s1081 + $0x60] sm:$0xf]
                  %1108 = vst [vmem:[%s1082 + $0x30] sm:$0xf] %v1107
                  %v1109 = vld [vmem:[%s1081 + $0x68] sm:$0xf]
                  %1110 = vst [vmem:[%s1082 + $0x34] sm:$0xf] %v1109
                  %v1111 = vld [vmem:[%s1081 + $0x70] sm:$0xf]
                  %1112 = vst [vmem:[%s1082 + $0x38] sm:$0xf] %v1111
                  %v1113 = vld [vmem:[%s1081 + $0x78] sm:$0xf]
                  %1114 = vst [vmem:[%s1082 + $0x3c] sm:$0xf] %v1113
                  %v1115 = vld [vmem:[%s1081 + $0x80] sm:$0xf]
                  %1116 = vst [vmem:[%s1082 + $0x40] sm:$0xf] %v1115
                  %v1117 = vld [vmem:[%s1081 + $0x88] sm:$0xf]
                  %1118 = vst [vmem:[%s1082 + $0x44] sm:$0xf] %v1117
                  %v1119 = vld [vmem:[%s1081 + $0x90] sm:$0xf]
                  %1120 = vst [vmem:[%s1082 + $0x48] sm:$0xf] %v1119
                  %v1121 = vld [vmem:[%s1081 + $0x98] sm:$0xf]
                  %1122 = vst [vmem:[%s1082 + $0x4c] sm:$0xf] %v1121
                  %v1123 = vld [vmem:[%s1081 + $0xa0] sm:$0xf]
                  %1124 = vst [vmem:[%s1082 + $0x50] sm:$0xf] %v1123
                  %v1125 = vld [vmem:[%s1081 + $0xa8] sm:$0xf]
                  %1126 = vst [vmem:[%s1082 + $0x54] sm:$0xf] %v1125
                  %v1127 = vld [vmem:[%s1081 + $0xb0] sm:$0xf]
                  %1128 = vst [vmem:[%s1082 + $0x58] sm:$0xf] %v1127
                  %v1129 = vld [vmem:[%s1081 + $0xb8] sm:$0xf]
                  %1130 = vst [vmem:[%s1082 + $0x5c] sm:$0xf] %v1129
                  %v1131 = vld [vmem:[%s1081 + $0xc0] sm:$0xf]
                  %1132 = vst [vmem:[%s1082 + $0x60] sm:$0xf] %v1131
                  %v1133 = vld [vmem:[%s1081 + $0xc8] sm:$0xf]
                  %1134 = vst [vmem:[%s1082 + $0x64] sm:$0xf] %v1133
                  %v1135 = vld [vmem:[%s1081 + $0xd0] sm:$0xf]
                  %1136 = vst [vmem:[%s1082 + $0x68] sm:$0xf] %v1135
                  %v1137 = vld [vmem:[%s1081 + $0xd8] sm:$0xf]
                  %1138 = vst [vmem:[%s1082 + $0x6c] sm:$0xf] %v1137
                  %v1139 = vld [vmem:[%s1081 + $0xe0] sm:$0xf]
                  %1140 = vst [vmem:[%s1082 + $0x70] sm:$0xf] %v1139
                  %v1141 = vld [vmem:[%s1081 + $0xe8] sm:$0xf]
                  %1142 = vst [vmem:[%s1082 + $0x74] sm:$0xf] %v1141
                  %v1143 = vld [vmem:[%s1081 + $0xf0] sm:$0xf]
                  %1144 = vst [vmem:[%s1082 + $0x78] sm:$0xf] %v1143
                  %v1145 = vld [vmem:[%s1081 + $0xf8] sm:$0xf]
                  %1146 = vst [vmem:[%s1082 + $0x7c] sm:$0xf] %v1145
                  %v1147 = vld [vmem:[%s1081 + $0x100] sm:$0xf]
                  %1148 = vst [vmem:[%s1082 + $0x80] sm:$0xf] %v1147
                  %v1149 = vld [vmem:[%s1081 + $0x108] sm:$0xf]
                  %1150 = vst [vmem:[%s1082 + $0x84] sm:$0xf] %v1149
                  %v1151 = vld [vmem:[%s1081 + $0x110] sm:$0xf]
                  %1152 = vst [vmem:[%s1082 + $0x88] sm:$0xf] %v1151
                  %v1153 = vld [vmem:[%s1081 + $0x118] sm:$0xf]
                  %1154 = vst [vmem:[%s1082 + $0x8c] sm:$0xf] %v1153
                  %v1155 = vld [vmem:[%s1081 + $0x120] sm:$0xf]
                  %1156 = vst [vmem:[%s1082 + $0x90] sm:$0xf] %v1155
                  %v1157 = vld [vmem:[%s1081 + $0x128] sm:$0xf]
                  %1158 = vst [vmem:[%s1082 + $0x94] sm:$0xf] %v1157
                  %v1159 = vld [vmem:[%s1081 + $0x130] sm:$0xf]
                  %1160 = vst [vmem:[%s1082 + $0x98] sm:$0xf] %v1159
                  %v1161 = vld [vmem:[%s1081 + $0x138] sm:$0xf]
                  %1162 = vst [vmem:[%s1082 + $0x9c] sm:$0xf] %v1161
                  %v1163 = vld [vmem:[%s1081 + $0x140] sm:$0xf]
                  %1164 = vst [vmem:[%s1082 + $0xa0] sm:$0xf] %v1163
                  %v1165 = vld [vmem:[%s1081 + $0x148] sm:$0xf]
                  %1166 = vst [vmem:[%s1082 + $0xa4] sm:$0xf] %v1165
                  %v1167 = vld [vmem:[%s1081 + $0x150] sm:$0xf]
                  %1168 = vst [vmem:[%s1082 + $0xa8] sm:$0xf] %v1167
                  %v1169 = vld [vmem:[%s1081 + $0x158] sm:$0xf]
                  %1170 = vst [vmem:[%s1082 + $0xac] sm:$0xf] %v1169
                  %v1171 = vld [vmem:[%s1081 + $0x160] sm:$0xf]
                  %1172 = vst [vmem:[%s1082 + $0xb0] sm:$0xf] %v1171
                  %v1173 = vld [vmem:[%s1081 + $0x168] sm:$0xf]
                  %1174 = vst [vmem:[%s1082 + $0xb4] sm:$0xf] %v1173
                  %v1175 = vld [vmem:[%s1081 + $0x170] sm:$0xf]
                  %1176 = vst [vmem:[%s1082 + $0xb8] sm:$0xf] %v1175
                  %v1177 = vld [vmem:[%s1081 + $0x178] sm:$0xf]
                  %1178 = vst [vmem:[%s1082 + $0xbc] sm:$0xf] %v1177
                  %v1179 = vld [vmem:[%s1081 + $0x180] sm:$0xf]
                  %1180 = vst [vmem:[%s1082 + $0xc0] sm:$0xf] %v1179
                  %v1181 = vld [vmem:[%s1081 + $0x188] sm:$0xf]
                  %1182 = vst [vmem:[%s1082 + $0xc4] sm:$0xf] %v1181
                  %v1183 = vld [vmem:[%s1081 + $0x190] sm:$0xf]
                  %1184 = vst [vmem:[%s1082 + $0xc8] sm:$0xf] %v1183
                  %v1185 = vld [vmem:[%s1081 + $0x198] sm:$0xf]
                  %1186 = vst [vmem:[%s1082 + $0xcc] sm:$0xf] %v1185
                  %v1187 = vld [vmem:[%s1081 + $0x1a0] sm:$0xf]
                  %1188 = vst [vmem:[%s1082 + $0xd0] sm:$0xf] %v1187
                  %v1189 = vld [vmem:[%s1081 + $0x1a8] sm:$0xf]
                  %1190 = vst [vmem:[%s1082 + $0xd4] sm:$0xf] %v1189
                  %v1191 = vld [vmem:[%s1081 + $0x1b0] sm:$0xf]
                  %1192 = vst [vmem:[%s1082 + $0xd8] sm:$0xf] %v1191
                  %v1193 = vld [vmem:[%s1081 + $0x1b8] sm:$0xf]
                  %1194 = vst [vmem:[%s1082 + $0xdc] sm:$0xf] %v1193
                  %v1195 = vld [vmem:[%s1081 + $0x1c0] sm:$0xf]
                  %1196 = vst [vmem:[%s1082 + $0xe0] sm:$0xf] %v1195
                  %v1197 = vld [vmem:[%s1081 + $0x1c8] sm:$0xf]
                  %1198 = vst [vmem:[%s1082 + $0xe4] sm:$0xf] %v1197
                  %v1199 = vld [vmem:[%s1081 + $0x1d0] sm:$0xf]
                  %1200 = vst [vmem:[%s1082 + $0xe8] sm:$0xf] %v1199
                  %v1201 = vld [vmem:[%s1081 + $0x1d8] sm:$0xf]
                  %1202 = vst [vmem:[%s1082 + $0xec] sm:$0xf] %v1201
                  %v1203 = vld [vmem:[%s1081 + $0x1e0] sm:$0xf]
                  %1204 = vst [vmem:[%s1082 + $0xf0] sm:$0xf] %v1203
                  %v1205 = vld [vmem:[%s1081 + $0x1e8] sm:$0xf]
                  %1206 = vst [vmem:[%s1082 + $0xf4] sm:$0xf] %v1205
                  %v1207 = vld [vmem:[%s1081 + $0x1f0] sm:$0xf]
                  %1208 = vst [vmem:[%s1082 + $0xf8] sm:$0xf] %v1207
                  %v1209 = vld [vmem:[%s1081 + $0x1f8] sm:$0xf]
                  %1210 = vst [vmem:[%s1082 + $0xfc] sm:$0xf] %v1209
                  %v1211 = vld [vmem:[%s1081 + $0x200] sm:$0xf]
                  %1212 = vst [vmem:[%s1082 + $0x100] sm:$0xf] %v1211
                  %v1213 = vld [vmem:[%s1081 + $0x208] sm:$0xf]
                  %1214 = vst [vmem:[%s1082 + $0x104] sm:$0xf] %v1213
                  %v1215 = vld [vmem:[%s1081 + $0x210] sm:$0xf]
                  %1216 = vst [vmem:[%s1082 + $0x108] sm:$0xf] %v1215
                  %v1217 = vld [vmem:[%s1081 + $0x218] sm:$0xf]
                  %1218 = vst [vmem:[%s1082 + $0x10c] sm:$0xf] %v1217
                  %v1219 = vld [vmem:[%s1081 + $0x220] sm:$0xf]
                  %1220 = vst [vmem:[%s1082 + $0x110] sm:$0xf] %v1219
                  %v1221 = vld [vmem:[%s1081 + $0x228] sm:$0xf]
                  %1222 = vst [vmem:[%s1082 + $0x114] sm:$0xf] %v1221
                  %v1223 = vld [vmem:[%s1081 + $0x230] sm:$0xf]
                  %1224 = vst [vmem:[%s1082 + $0x118] sm:$0xf] %v1223
                  %v1225 = vld [vmem:[%s1081 + $0x238] sm:$0xf]
                  %1226 = vst [vmem:[%s1082 + $0x11c] sm:$0xf] %v1225
                  %v1227 = vld [vmem:[%s1081 + $0x240] sm:$0xf]
                  %1228 = vst [vmem:[%s1082 + $0x120] sm:$0xf] %v1227
                  %v1229 = vld [vmem:[%s1081 + $0x248] sm:$0xf]
                  %1230 = vst [vmem:[%s1082 + $0x124] sm:$0xf] %v1229
                  %v1231 = vld [vmem:[%s1081 + $0x250] sm:$0xf]
                  %1232 = vst [vmem:[%s1082 + $0x128] sm:$0xf] %v1231
                  %v1233 = vld [vmem:[%s1081 + $0x258] sm:$0xf]
                  %1234 = vst [vmem:[%s1082 + $0x12c] sm:$0xf] %v1233
                  %v1235 = vld [vmem:[%s1081 + $0x260] sm:$0xf]
                  %1236 = vst [vmem:[%s1082 + $0x130] sm:$0xf] %v1235
                  %v1237 = vld [vmem:[%s1081 + $0x268] sm:$0xf]
                  %1238 = vst [vmem:[%s1082 + $0x134] sm:$0xf] %v1237
                  %v1239 = vld [vmem:[%s1081 + $0x270] sm:$0xf]
                  %1240 = vst [vmem:[%s1082 + $0x138] sm:$0xf] %v1239
                  %v1241 = vld [vmem:[%s1081 + $0x278] sm:$0xf]
                  %1242 = vst [vmem:[%s1082 + $0x13c] sm:$0xf] %v1241
                  %v1243 = vld [vmem:[%s1081 + $0x280] sm:$0xf]
                  %1244 = vst [vmem:[%s1082 + $0x140] sm:$0xf] %v1243
                  %v1245 = vld [vmem:[%s1081 + $0x288] sm:$0xf]
                  %1246 = vst [vmem:[%s1082 + $0x144] sm:$0xf] %v1245
                  %v1247 = vld [vmem:[%s1081 + $0x290] sm:$0xf]
                  %1248 = vst [vmem:[%s1082 + $0x148] sm:$0xf] %v1247
                  %v1249 = vld [vmem:[%s1081 + $0x298] sm:$0xf]
                  %1250 = vst [vmem:[%s1082 + $0x14c] sm:$0xf] %v1249
                  %v1251 = vld [vmem:[%s1081 + $0x2a0] sm:$0xf]
                  %1252 = vst [vmem:[%s1082 + $0x150] sm:$0xf] %v1251
                  %v1253 = vld [vmem:[%s1081 + $0x2a8] sm:$0xf]
                  %1254 = vst [vmem:[%s1082 + $0x154] sm:$0xf] %v1253
                  %v1255 = vld [vmem:[%s1081 + $0x2b0] sm:$0xf]
                  %1256 = vst [vmem:[%s1082 + $0x158] sm:$0xf] %v1255
                  %v1257 = vld [vmem:[%s1081 + $0x2b8] sm:$0xf]
                  %1258 = vst [vmem:[%s1082 + $0x15c] sm:$0xf] %v1257
                  %v1259 = vld [vmem:[%s1081 + $0x2c0] sm:$0xf]
                  %1260 = vst [vmem:[%s1082 + $0x160] sm:$0xf] %v1259
                  %v1261 = vld [vmem:[%s1081 + $0x2c8] sm:$0xf]
                  %1262 = vst [vmem:[%s1082 + $0x164] sm:$0xf] %v1261
                  %v1263 = vld [vmem:[%s1081 + $0x2d0] sm:$0xf]
                  %1264 = vst [vmem:[%s1082 + $0x168] sm:$0xf] %v1263
                  %v1265 = vld [vmem:[%s1081 + $0x2d8] sm:$0xf]
                  %1266 = vst [vmem:[%s1082 + $0x16c] sm:$0xf] %v1265
                  %v1267 = vld [vmem:[%s1081 + $0x2e0] sm:$0xf]
                  %1268 = vst [vmem:[%s1082 + $0x170] sm:$0xf] %v1267
                  %v1269 = vld [vmem:[%s1081 + $0x2e8] sm:$0xf]
                  %1270 = vst [vmem:[%s1082 + $0x174] sm:$0xf] %v1269
                  %v1271 = vld [vmem:[%s1081 + $0x2f0] sm:$0xf]
                  %1272 = vst [vmem:[%s1082 + $0x178] sm:$0xf] %v1271
                  %v1273 = vld [vmem:[%s1081 + $0x2f8] sm:$0xf]
                  %1274 = vst [vmem:[%s1082 + $0x17c] sm:$0xf] %v1273
                  %v1275 = vld [vmem:[%s1081 + $0x300] sm:$0xf]
                  %1276 = vst [vmem:[%s1082 + $0x180] sm:$0xf] %v1275
                  %v1277 = vld [vmem:[%s1081 + $0x308] sm:$0xf]
                  %1278 = vst [vmem:[%s1082 + $0x184] sm:$0xf] %v1277
                  %v1279 = vld [vmem:[%s1081 + $0x310] sm:$0xf]
                  %1280 = vst [vmem:[%s1082 + $0x188] sm:$0xf] %v1279
                  %v1281 = vld [vmem:[%s1081 + $0x318] sm:$0xf]
                  %1282 = vst [vmem:[%s1082 + $0x18c] sm:$0xf] %v1281
                  %v1283 = vld [vmem:[%s1081 + $0x320] sm:$0xf]
                  %1284 = vst [vmem:[%s1082 + $0x190] sm:$0xf] %v1283
                  %v1285 = vld [vmem:[%s1081 + $0x328] sm:$0xf]
                  %1286 = vst [vmem:[%s1082 + $0x194] sm:$0xf] %v1285
                  %v1287 = vld [vmem:[%s1081 + $0x330] sm:$0xf]
                  %1288 = vst [vmem:[%s1082 + $0x198] sm:$0xf] %v1287
                  %v1289 = vld [vmem:[%s1081 + $0x338] sm:$0xf]
                  %1290 = vst [vmem:[%s1082 + $0x19c] sm:$0xf] %v1289
                  %v1291 = vld [vmem:[%s1081 + $0x340] sm:$0xf]
                  %1292 = vst [vmem:[%s1082 + $0x1a0] sm:$0xf] %v1291
                  %v1293 = vld [vmem:[%s1081 + $0x348] sm:$0xf]
                  %1294 = vst [vmem:[%s1082 + $0x1a4] sm:$0xf] %v1293
                  %v1295 = vld [vmem:[%s1081 + $0x350] sm:$0xf]
                  %1296 = vst [vmem:[%s1082 + $0x1a8] sm:$0xf] %v1295
                  %v1297 = vld [vmem:[%s1081 + $0x358] sm:$0xf]
                  %1298 = vst [vmem:[%s1082 + $0x1ac] sm:$0xf] %v1297
                  %v1299 = vld [vmem:[%s1081 + $0x360] sm:$0xf]
                  %1300 = vst [vmem:[%s1082 + $0x1b0] sm:$0xf] %v1299
                  %v1301 = vld [vmem:[%s1081 + $0x368] sm:$0xf]
                  %1302 = vst [vmem:[%s1082 + $0x1b4] sm:$0xf] %v1301
                  %v1303 = vld [vmem:[%s1081 + $0x370] sm:$0xf]
                  %1304 = vst [vmem:[%s1082 + $0x1b8] sm:$0xf] %v1303
                  %v1305 = vld [vmem:[%s1081 + $0x378] sm:$0xf]
                  %1306 = vst [vmem:[%s1082 + $0x1bc] sm:$0xf] %v1305
                  %v1307 = vld [vmem:[%s1081 + $0x380] sm:$0xf]
                  %1308 = vst [vmem:[%s1082 + $0x1c0] sm:$0xf] %v1307
                  %v1309 = vld [vmem:[%s1081 + $0x388] sm:$0xf]
                  %1310 = vst [vmem:[%s1082 + $0x1c4] sm:$0xf] %v1309
                  %v1311 = vld [vmem:[%s1081 + $0x390] sm:$0xf]
                  %1312 = vst [vmem:[%s1082 + $0x1c8] sm:$0xf] %v1311
                  %v1313 = vld [vmem:[%s1081 + $0x398] sm:$0xf]
                  %1314 = vst [vmem:[%s1082 + $0x1cc] sm:$0xf] %v1313
                  %v1315 = vld [vmem:[%s1081 + $0x3a0] sm:$0xf]
                  %1316 = vst [vmem:[%s1082 + $0x1d0] sm:$0xf] %v1315
                  %v1317 = vld [vmem:[%s1081 + $0x3a8] sm:$0xf]
                  %1318 = vst [vmem:[%s1082 + $0x1d4] sm:$0xf] %v1317
                  %v1319 = vld [vmem:[%s1081 + $0x3b0] sm:$0xf]
                  %1320 = vst [vmem:[%s1082 + $0x1d8] sm:$0xf] %v1319
                  %v1321 = vld [vmem:[%s1081 + $0x3b8] sm:$0xf]
                  %1322 = vst [vmem:[%s1082 + $0x1dc] sm:$0xf] %v1321
                  %v1323 = vld [vmem:[%s1081 + $0x3c0] sm:$0xf]
                  %1324 = vst [vmem:[%s1082 + $0x1e0] sm:$0xf] %v1323
                  %v1325 = vld [vmem:[%s1081 + $0x3c8] sm:$0xf]
                  %1326 = vst [vmem:[%s1082 + $0x1e4] sm:$0xf] %v1325
                  %v1327 = vld [vmem:[%s1081 + $0x3d0] sm:$0xf]
                  %1328 = vst [vmem:[%s1082 + $0x1e8] sm:$0xf] %v1327
                  %v1329 = vld [vmem:[%s1081 + $0x3d8] sm:$0xf]
                  %1330 = vst [vmem:[%s1082 + $0x1ec] sm:$0xf] %v1329
                  %v1331 = vld [vmem:[%s1081 + $0x3e0] sm:$0xf]
                  %1332 = vst [vmem:[%s1082 + $0x1f0] sm:$0xf] %v1331
                  %v1333 = vld [vmem:[%s1081 + $0x3e8] sm:$0xf]
                  %1334 = vst [vmem:[%s1082 + $0x1f4] sm:$0xf] %v1333
                  %v1335 = vld [vmem:[%s1081 + $0x3f0] sm:$0xf]
                  %1336 = vst [vmem:[%s1082 + $0x1f8] sm:$0xf] %v1335
                  %v1337 = vld [vmem:[%s1081 + $0x3f8] sm:$0xf]
                  %1338 = vst [vmem:[%s1082 + $0x1fc] sm:$0xf] %v1337
                  %v1339 = vld [vmem:[%s1081 + $0x400] sm:$0xf]
                  %1340 = vst [vmem:[%s1082 + $0x200] sm:$0xf] %v1339
                  %v1341 = vld [vmem:[%s1081 + $0x408] sm:$0xf]
                  %1342 = vst [vmem:[%s1082 + $0x204] sm:$0xf] %v1341
                  %v1343 = vld [vmem:[%s1081 + $0x410] sm:$0xf]
                  %1344 = vst [vmem:[%s1082 + $0x208] sm:$0xf] %v1343
                  %v1345 = vld [vmem:[%s1081 + $0x418] sm:$0xf]
                  %1346 = vst [vmem:[%s1082 + $0x20c] sm:$0xf] %v1345
                  %v1347 = vld [vmem:[%s1081 + $0x420] sm:$0xf]
                  %1348 = vst [vmem:[%s1082 + $0x210] sm:$0xf] %v1347
                  %v1349 = vld [vmem:[%s1081 + $0x428] sm:$0xf]
                  %1350 = vst [vmem:[%s1082 + $0x214] sm:$0xf] %v1349
                  %v1351 = vld [vmem:[%s1081 + $0x430] sm:$0xf]
                  %1352 = vst [vmem:[%s1082 + $0x218] sm:$0xf] %v1351
                  %v1353 = vld [vmem:[%s1081 + $0x438] sm:$0xf]
                  %1354 = vst [vmem:[%s1082 + $0x21c] sm:$0xf] %v1353
                  %v1355 = vld [vmem:[%s1081 + $0x440] sm:$0xf]
                  %1356 = vst [vmem:[%s1082 + $0x220] sm:$0xf] %v1355
                  %v1357 = vld [vmem:[%s1081 + $0x448] sm:$0xf]
                  %1358 = vst [vmem:[%s1082 + $0x224] sm:$0xf] %v1357
                  %v1359 = vld [vmem:[%s1081 + $0x450] sm:$0xf]
                  %1360 = vst [vmem:[%s1082 + $0x228] sm:$0xf] %v1359
                  %v1361 = vld [vmem:[%s1081 + $0x458] sm:$0xf]
                  %1362 = vst [vmem:[%s1082 + $0x22c] sm:$0xf] %v1361
                  %v1363 = vld [vmem:[%s1081 + $0x460] sm:$0xf]
                  %1364 = vst [vmem:[%s1082 + $0x230] sm:$0xf] %v1363
                  %v1365 = vld [vmem:[%s1081 + $0x468] sm:$0xf]
                  %1366 = vst [vmem:[%s1082 + $0x234] sm:$0xf] %v1365
                  %v1367 = vld [vmem:[%s1081 + $0x470] sm:$0xf]
                  %1368 = vst [vmem:[%s1082 + $0x238] sm:$0xf] %v1367
                  %v1369 = vld [vmem:[%s1081 + $0x478] sm:$0xf]
                  %1370 = vst [vmem:[%s1082 + $0x23c] sm:$0xf] %v1369
                  %v1371 = vld [vmem:[%s1081 + $0x480] sm:$0xf]
                  %1372 = vst [vmem:[%s1082 + $0x240] sm:$0xf] %v1371
                  %v1373 = vld [vmem:[%s1081 + $0x488] sm:$0xf]
                  %1374 = vst [vmem:[%s1082 + $0x244] sm:$0xf] %v1373
                  %v1375 = vld [vmem:[%s1081 + $0x490] sm:$0xf]
                  %1376 = vst [vmem:[%s1082 + $0x248] sm:$0xf] %v1375
                  %v1377 = vld [vmem:[%s1081 + $0x498] sm:$0xf]
                  %1378 = vst [vmem:[%s1082 + $0x24c] sm:$0xf] %v1377
                  %v1379 = vld [vmem:[%s1081 + $0x4a0] sm:$0xf]
                  %1380 = vst [vmem:[%s1082 + $0x250] sm:$0xf] %v1379
                  %v1381 = vld [vmem:[%s1081 + $0x4a8] sm:$0xf]
                  %1382 = vst [vmem:[%s1082 + $0x254] sm:$0xf] %v1381
                  %v1383 = vld [vmem:[%s1081 + $0x4b0] sm:$0xf]
                  %1384 = vst [vmem:[%s1082 + $0x258] sm:$0xf] %v1383
                  %v1385 = vld [vmem:[%s1081 + $0x4b8] sm:$0xf]
                  %1386 = vst [vmem:[%s1082 + $0x25c] sm:$0xf] %v1385
                  %v1387 = vld [vmem:[%s1081 + $0x4c0] sm:$0xf]
                  %1388 = vst [vmem:[%s1082 + $0x260] sm:$0xf] %v1387
                  %v1389 = vld [vmem:[%s1081 + $0x4c8] sm:$0xf]
                  %1390 = vst [vmem:[%s1082 + $0x264] sm:$0xf] %v1389
                  %v1391 = vld [vmem:[%s1081 + $0x4d0] sm:$0xf]
                  %1392 = vst [vmem:[%s1082 + $0x268] sm:$0xf] %v1391
                  %v1393 = vld [vmem:[%s1081 + $0x4d8] sm:$0xf]
                  %1394 = vst [vmem:[%s1082 + $0x26c] sm:$0xf] %v1393
                  %v1395 = vld [vmem:[%s1081 + $0x4e0] sm:$0xf]
                  %1396 = vst [vmem:[%s1082 + $0x270] sm:$0xf] %v1395
                  %v1397 = vld [vmem:[%s1081 + $0x4e8] sm:$0xf]
                  %1398 = vst [vmem:[%s1082 + $0x274] sm:$0xf] %v1397
                  %v1399 = vld [vmem:[%s1081 + $0x4f0] sm:$0xf]
                  %1400 = vst [vmem:[%s1082 + $0x278] sm:$0xf] %v1399
                  %v1401 = vld [vmem:[%s1081 + $0x4f8] sm:$0xf]
                  %1402 = vst [vmem:[%s1082 + $0x27c] sm:$0xf] %v1401
                  %v1403 = vld [vmem:[%s1081 + $0x500] sm:$0xf]
                  %1404 = vst [vmem:[%s1082 + $0x280] sm:$0xf] %v1403
                  %v1405 = vld [vmem:[%s1081 + $0x508] sm:$0xf]
                  %1406 = vst [vmem:[%s1082 + $0x284] sm:$0xf] %v1405
                  %v1407 = vld [vmem:[%s1081 + $0x510] sm:$0xf]
                  %1408 = vst [vmem:[%s1082 + $0x288] sm:$0xf] %v1407
                  %v1409 = vld [vmem:[%s1081 + $0x518] sm:$0xf]
                  %1410 = vst [vmem:[%s1082 + $0x28c] sm:$0xf] %v1409
                  %v1411 = vld [vmem:[%s1081 + $0x520] sm:$0xf]
                  %1412 = vst [vmem:[%s1082 + $0x290] sm:$0xf] %v1411
                  %v1413 = vld [vmem:[%s1081 + $0x528] sm:$0xf]
                  %1414 = vst [vmem:[%s1082 + $0x294] sm:$0xf] %v1413
                  %v1415 = vld [vmem:[%s1081 + $0x530] sm:$0xf]
                  %1416 = vst [vmem:[%s1082 + $0x298] sm:$0xf] %v1415
                  %v1417 = vld [vmem:[%s1081 + $0x538] sm:$0xf]
                  %1418 = vst [vmem:[%s1082 + $0x29c] sm:$0xf] %v1417
                  %v1419 = vld [vmem:[%s1081 + $0x540] sm:$0xf]
                  %1420 = vst [vmem:[%s1082 + $0x2a0] sm:$0xf] %v1419
                  %v1421 = vld [vmem:[%s1081 + $0x548] sm:$0xf]
                  %1422 = vst [vmem:[%s1082 + $0x2a4] sm:$0xf] %v1421
                  %v1423 = vld [vmem:[%s1081 + $0x550] sm:$0xf]
                  %1424 = vst [vmem:[%s1082 + $0x2a8] sm:$0xf] %v1423
                  %v1425 = vld [vmem:[%s1081 + $0x558] sm:$0xf]
                  %1426 = vst [vmem:[%s1082 + $0x2ac] sm:$0xf] %v1425
                  %v1427 = vld [vmem:[%s1081 + $0x560] sm:$0xf]
                  %1428 = vst [vmem:[%s1082 + $0x2b0] sm:$0xf] %v1427
                  %v1429 = vld [vmem:[%s1081 + $0x568] sm:$0xf]
                  %1430 = vst [vmem:[%s1082 + $0x2b4] sm:$0xf] %v1429
                  %v1431 = vld [vmem:[%s1081 + $0x570] sm:$0xf]
                  %1432 = vst [vmem:[%s1082 + $0x2b8] sm:$0xf] %v1431
                  %v1433 = vld [vmem:[%s1081 + $0x578] sm:$0xf]
                  %1434 = vst [vmem:[%s1082 + $0x2bc] sm:$0xf] %v1433
                  %v1435 = vld [vmem:[%s1081 + $0x580] sm:$0xf]
                  %1436 = vst [vmem:[%s1082 + $0x2c0] sm:$0xf] %v1435
                  %v1437 = vld [vmem:[%s1081 + $0x588] sm:$0xf]
                  %1438 = vst [vmem:[%s1082 + $0x2c4] sm:$0xf] %v1437
                  %v1439 = vld [vmem:[%s1081 + $0x590] sm:$0xf]
                  %1440 = vst [vmem:[%s1082 + $0x2c8] sm:$0xf] %v1439
                  %v1441 = vld [vmem:[%s1081 + $0x598] sm:$0xf]
                  %1442 = vst [vmem:[%s1082 + $0x2cc] sm:$0xf] %v1441
                  %v1443 = vld [vmem:[%s1081 + $0x5a0] sm:$0xf]
                  %1444 = vst [vmem:[%s1082 + $0x2d0] sm:$0xf] %v1443
                  %v1445 = vld [vmem:[%s1081 + $0x5a8] sm:$0xf]
                  %1446 = vst [vmem:[%s1082 + $0x2d4] sm:$0xf] %v1445
                  %v1447 = vld [vmem:[%s1081 + $0x5b0] sm:$0xf]
                  %1448 = vst [vmem:[%s1082 + $0x2d8] sm:$0xf] %v1447
                  %v1449 = vld [vmem:[%s1081 + $0x5b8] sm:$0xf]
                  %1450 = vst [vmem:[%s1082 + $0x2dc] sm:$0xf] %v1449
                  %v1451 = vld [vmem:[%s1081 + $0x5c0] sm:$0xf]
                  %1452 = vst [vmem:[%s1082 + $0x2e0] sm:$0xf] %v1451
                  %v1453 = vld [vmem:[%s1081 + $0x5c8] sm:$0xf]
                  %1454 = vst [vmem:[%s1082 + $0x2e4] sm:$0xf] %v1453
                  %v1455 = vld [vmem:[%s1081 + $0x5d0] sm:$0xf]
                  %1456 = vst [vmem:[%s1082 + $0x2e8] sm:$0xf] %v1455
                  %v1457 = vld [vmem:[%s1081 + $0x5d8] sm:$0xf]
                  %1458 = vst [vmem:[%s1082 + $0x2ec] sm:$0xf] %v1457
                  %v1459 = vld [vmem:[%s1081 + $0x5e0] sm:$0xf]
                  %1460 = vst [vmem:[%s1082 + $0x2f0] sm:$0xf] %v1459
                  %v1461 = vld [vmem:[%s1081 + $0x5e8] sm:$0xf]
                  %1462 = vst [vmem:[%s1082 + $0x2f4] sm:$0xf] %v1461
                  %v1463 = vld [vmem:[%s1081 + $0x5f0] sm:$0xf]
                  %1464 = vst [vmem:[%s1082 + $0x2f8] sm:$0xf] %v1463
                  %v1465 = vld [vmem:[%s1081 + $0x5f8] sm:$0xf]
                  %1466 = vst [vmem:[%s1082 + $0x2fc] sm:$0xf] %v1465
                  %v1467 = vld [vmem:[%s1081 + $0x600] sm:$0xf]
                  %1468 = vst [vmem:[%s1082 + $0x300] sm:$0xf] %v1467
                  %v1469 = vld [vmem:[%s1081 + $0x608] sm:$0xf]
                  %1470 = vst [vmem:[%s1082 + $0x304] sm:$0xf] %v1469
                  %v1471 = vld [vmem:[%s1081 + $0x610] sm:$0xf]
                  %1472 = vst [vmem:[%s1082 + $0x308] sm:$0xf] %v1471
                  %v1473 = vld [vmem:[%s1081 + $0x618] sm:$0xf]
                  %1474 = vst [vmem:[%s1082 + $0x30c] sm:$0xf] %v1473
                  %v1475 = vld [vmem:[%s1081 + $0x620] sm:$0xf]
                  %1476 = vst [vmem:[%s1082 + $0x310] sm:$0xf] %v1475
                  %v1477 = vld [vmem:[%s1081 + $0x628] sm:$0xf]
                  %1478 = vst [vmem:[%s1082 + $0x314] sm:$0xf] %v1477
                  %v1479 = vld [vmem:[%s1081 + $0x630] sm:$0xf]
                  %1480 = vst [vmem:[%s1082 + $0x318] sm:$0xf] %v1479
                  %v1481 = vld [vmem:[%s1081 + $0x638] sm:$0xf]
                  %1482 = vst [vmem:[%s1082 + $0x31c] sm:$0xf] %v1481
                  %v1483 = vld [vmem:[%s1081 + $0x640] sm:$0xf]
                  %1484 = vst [vmem:[%s1082 + $0x320] sm:$0xf] %v1483
                  %v1485 = vld [vmem:[%s1081 + $0x648] sm:$0xf]
                  %1486 = vst [vmem:[%s1082 + $0x324] sm:$0xf] %v1485
                  %v1487 = vld [vmem:[%s1081 + $0x650] sm:$0xf]
                  %1488 = vst [vmem:[%s1082 + $0x328] sm:$0xf] %v1487
                  %v1489 = vld [vmem:[%s1081 + $0x658] sm:$0xf]
                  %1490 = vst [vmem:[%s1082 + $0x32c] sm:$0xf] %v1489
                  %v1491 = vld [vmem:[%s1081 + $0x660] sm:$0xf]
                  %1492 = vst [vmem:[%s1082 + $0x330] sm:$0xf] %v1491
                  %v1493 = vld [vmem:[%s1081 + $0x668] sm:$0xf]
                  %1494 = vst [vmem:[%s1082 + $0x334] sm:$0xf] %v1493
                  %v1495 = vld [vmem:[%s1081 + $0x670] sm:$0xf]
                  %1496 = vst [vmem:[%s1082 + $0x338] sm:$0xf] %v1495
                  %v1497 = vld [vmem:[%s1081 + $0x678] sm:$0xf]
                  %1498 = vst [vmem:[%s1082 + $0x33c] sm:$0xf] %v1497
                  %v1499 = vld [vmem:[%s1081 + $0x680] sm:$0xf]
                  %1500 = vst [vmem:[%s1082 + $0x340] sm:$0xf] %v1499
                  %v1501 = vld [vmem:[%s1081 + $0x688] sm:$0xf]
                  %1502 = vst [vmem:[%s1082 + $0x344] sm:$0xf] %v1501
                  %v1503 = vld [vmem:[%s1081 + $0x690] sm:$0xf]
                  %1504 = vst [vmem:[%s1082 + $0x348] sm:$0xf] %v1503
                  %v1505 = vld [vmem:[%s1081 + $0x698] sm:$0xf]
                  %1506 = vst [vmem:[%s1082 + $0x34c] sm:$0xf] %v1505
                  %v1507 = vld [vmem:[%s1081 + $0x6a0] sm:$0xf]
                  %1508 = vst [vmem:[%s1082 + $0x350] sm:$0xf] %v1507
                  %v1509 = vld [vmem:[%s1081 + $0x6a8] sm:$0xf]
                  %1510 = vst [vmem:[%s1082 + $0x354] sm:$0xf] %v1509
                  %v1511 = vld [vmem:[%s1081 + $0x6b0] sm:$0xf]
                  %1512 = vst [vmem:[%s1082 + $0x358] sm:$0xf] %v1511
                  %v1513 = vld [vmem:[%s1081 + $0x6b8] sm:$0xf]
                  %1514 = vst [vmem:[%s1082 + $0x35c] sm:$0xf] %v1513
                  %v1515 = vld [vmem:[%s1081 + $0x6c0] sm:$0xf]
                  %1516 = vst [vmem:[%s1082 + $0x360] sm:$0xf] %v1515
                  %v1517 = vld [vmem:[%s1081 + $0x6c8] sm:$0xf]
                  %1518 = vst [vmem:[%s1082 + $0x364] sm:$0xf] %v1517
                  %v1519 = vld [vmem:[%s1081 + $0x6d0] sm:$0xf]
                  %1520 = vst [vmem:[%s1082 + $0x368] sm:$0xf] %v1519
                  %v1521 = vld [vmem:[%s1081 + $0x6d8] sm:$0xf]
                  %1522 = vst [vmem:[%s1082 + $0x36c] sm:$0xf] %v1521
                  %v1523 = vld [vmem:[%s1081 + $0x6e0] sm:$0xf]
                  %1524 = vst [vmem:[%s1082 + $0x370] sm:$0xf] %v1523
                  %v1525 = vld [vmem:[%s1081 + $0x6e8] sm:$0xf]
                  %1526 = vst [vmem:[%s1082 + $0x374] sm:$0xf] %v1525
                  %v1527 = vld [vmem:[%s1081 + $0x6f0] sm:$0xf]
                  %1528 = vst [vmem:[%s1082 + $0x378] sm:$0xf] %v1527
                  %v1529 = vld [vmem:[%s1081 + $0x6f8] sm:$0xf]
                  %1530 = vst [vmem:[%s1082 + $0x37c] sm:$0xf] %v1529
                  %v1531 = vld [vmem:[%s1081 + $0x700] sm:$0xf]
                  %1532 = vst [vmem:[%s1082 + $0x380] sm:$0xf] %v1531
                  %v1533 = vld [vmem:[%s1081 + $0x708] sm:$0xf]
                  %1534 = vst [vmem:[%s1082 + $0x384] sm:$0xf] %v1533
                  %v1535 = vld [vmem:[%s1081 + $0x710] sm:$0xf]
                  %1536 = vst [vmem:[%s1082 + $0x388] sm:$0xf] %v1535
                  %v1537 = vld [vmem:[%s1081 + $0x718] sm:$0xf]
                  %1538 = vst [vmem:[%s1082 + $0x38c] sm:$0xf] %v1537
                  %v1539 = vld [vmem:[%s1081 + $0x720] sm:$0xf]
                  %1540 = vst [vmem:[%s1082 + $0x390] sm:$0xf] %v1539
                  %v1541 = vld [vmem:[%s1081 + $0x728] sm:$0xf]
                  %1542 = vst [vmem:[%s1082 + $0x394] sm:$0xf] %v1541
                  %v1543 = vld [vmem:[%s1081 + $0x730] sm:$0xf]
                  %1544 = vst [vmem:[%s1082 + $0x398] sm:$0xf] %v1543
                  %v1545 = vld [vmem:[%s1081 + $0x738] sm:$0xf]
                  %1546 = vst [vmem:[%s1082 + $0x39c] sm:$0xf] %v1545
                  %v1547 = vld [vmem:[%s1081 + $0x740] sm:$0xf]
                  %1548 = vst [vmem:[%s1082 + $0x3a0] sm:$0xf] %v1547
                  %v1549 = vld [vmem:[%s1081 + $0x748] sm:$0xf]
                  %1550 = vst [vmem:[%s1082 + $0x3a4] sm:$0xf] %v1549
                  %v1551 = vld [vmem:[%s1081 + $0x750] sm:$0xf]
                  %1552 = vst [vmem:[%s1082 + $0x3a8] sm:$0xf] %v1551
                  %v1553 = vld [vmem:[%s1081 + $0x758] sm:$0xf]
                  %1554 = vst [vmem:[%s1082 + $0x3ac] sm:$0xf] %v1553
                  %v1555 = vld [vmem:[%s1081 + $0x760] sm:$0xf]
                  %1556 = vst [vmem:[%s1082 + $0x3b0] sm:$0xf] %v1555
                  %v1557 = vld [vmem:[%s1081 + $0x768] sm:$0xf]
                  %1558 = vst [vmem:[%s1082 + $0x3b4] sm:$0xf] %v1557
                  %v1559 = vld [vmem:[%s1081 + $0x770] sm:$0xf]
                  %1560 = vst [vmem:[%s1082 + $0x3b8] sm:$0xf] %v1559
                  %v1561 = vld [vmem:[%s1081 + $0x778] sm:$0xf]
                  %1562 = vst [vmem:[%s1082 + $0x3bc] sm:$0xf] %v1561
                  %v1563 = vld [vmem:[%s1081 + $0x780] sm:$0xf]
                  %1564 = vst [vmem:[%s1082 + $0x3c0] sm:$0xf] %v1563
                  %v1565 = vld [vmem:[%s1081 + $0x788] sm:$0xf]
                  %1566 = vst [vmem:[%s1082 + $0x3c4] sm:$0xf] %v1565
                  %v1567 = vld [vmem:[%s1081 + $0x790] sm:$0xf]
                  %1568 = vst [vmem:[%s1082 + $0x3c8] sm:$0xf] %v1567
                  %v1569 = vld [vmem:[%s1081 + $0x798] sm:$0xf]
                  %1570 = vst [vmem:[%s1082 + $0x3cc] sm:$0xf] %v1569
                  %v1571 = vld [vmem:[%s1081 + $0x7a0] sm:$0xf]
                  %1572 = vst [vmem:[%s1082 + $0x3d0] sm:$0xf] %v1571
                  %v1573 = vld [vmem:[%s1081 + $0x7a8] sm:$0xf]
                  %1574 = vst [vmem:[%s1082 + $0x3d4] sm:$0xf] %v1573
                  %v1575 = vld [vmem:[%s1081 + $0x7b0] sm:$0xf]
                  %1576 = vst [vmem:[%s1082 + $0x3d8] sm:$0xf] %v1575
                  %v1577 = vld [vmem:[%s1081 + $0x7b8] sm:$0xf]
                  %1578 = vst [vmem:[%s1082 + $0x3dc] sm:$0xf] %v1577
                  %v1579 = vld [vmem:[%s1081 + $0x7c0] sm:$0xf]
                  %1580 = vst [vmem:[%s1082 + $0x3e0] sm:$0xf] %v1579
                  %v1581 = vld [vmem:[%s1081 + $0x7c8] sm:$0xf]
                  %1582 = vst [vmem:[%s1082 + $0x3e4] sm:$0xf] %v1581
                  %v1583 = vld [vmem:[%s1081 + $0x7d0] sm:$0xf]
                  %1584 = vst [vmem:[%s1082 + $0x3e8] sm:$0xf] %v1583
                  %v1585 = vld [vmem:[%s1081 + $0x7d8] sm:$0xf]
                  %1586 = vst [vmem:[%s1082 + $0x3ec] sm:$0xf] %v1585
                  %v1587 = vld [vmem:[%s1081 + $0x7e0] sm:$0xf]
                  %1588 = vst [vmem:[%s1082 + $0x3f0] sm:$0xf] %v1587
                  %v1589 = vld [vmem:[%s1081 + $0x7e8] sm:$0xf]
                  %1590 = vst [vmem:[%s1082 + $0x3f4] sm:$0xf] %v1589
                  %v1591 = vld [vmem:[%s1081 + $0x7f0] sm:$0xf]
                  %1592 = vst [vmem:[%s1082 + $0x3f8] sm:$0xf] %v1591
                  %v1593 = vld [vmem:[%s1081 + $0x7f8] sm:$0xf]
                  %1594 = vst [vmem:[%s1082 + $0x3fc] sm:$0xf] %v1593
                $region127: #{discriminator_forward.1} parent=114 // loop_footer
                  %s1080 = sadd.s32 1, %s1076
                $region128: #{discriminator_forward.1} parent=114 // loop_footer_branch
                  %1075 = sbr.rel target = $region124
                $region129: #{discriminator_forward.1} parent=114 // loop_exit
                  _
              $region115: #{discriminator_forward.1} parent=99 // pred_fallthru
                _
            $region100: #{discriminator_forward.1} parent=95 // pred_fallthru
              _
            // Predicated region
            $region101: #{discriminator_forward.1} parent=95 // pred_check
              _
            $region102: #{discriminator_forward.1} parent=95 // pred_check_branch
              %542 = sbr.rel (0) target = $region104
            $region103: #{discriminator_forward.1} parent=95 // pred_region
              loop: start=0, step=1, limit=1
              $region105: #{discriminator_forward.1} parent=103 // loop_pre_header
                _
              $region106: #{discriminator_forward.1} parent=103 // loop_header
                %s545 = sphi 0, %s549
                %p546 = scmp.ge.s32.totalorder %s545, 1
                %s550 = sphi %s536, %s536
                %s551 = sphi %s534, %s534
              $region107: #{discriminator_forward.1} parent=103 // loop_header_branch
                %548 = sbr.rel (%p546) target = $region111
              $region108: #{discriminator_forward.1} parent=103 // loop_body
                %v552 = vld [vmem:[%s550] sm:$0xf]
                %553 = vst [vmem:[%s551] sm:$0xf] %v552
                %v554 = vld [vmem:[%s550 + $0x8] sm:$0xf]
                %555 = vst [vmem:[%s551 + $0x4] sm:$0xf] %v554
                %v556 = vld [vmem:[%s550 + $0x10] sm:$0xf]
                %557 = vst [vmem:[%s551 + $0x8] sm:$0xf] %v556
                %v558 = vld [vmem:[%s550 + $0x18] sm:$0xf]
                %559 = vst [vmem:[%s551 + $0xc] sm:$0xf] %v558
                %v560 = vld [vmem:[%s550 + $0x20] sm:$0xf]
                %561 = vst [vmem:[%s551 + $0x10] sm:$0xf] %v560
                %v562 = vld [vmem:[%s550 + $0x28] sm:$0xf]
                %563 = vst [vmem:[%s551 + $0x14] sm:$0xf] %v562
                %v564 = vld [vmem:[%s550 + $0x30] sm:$0xf]
                %565 = vst [vmem:[%s551 + $0x18] sm:$0xf] %v564
                %v566 = vld [vmem:[%s550 + $0x38] sm:$0xf]
                %567 = vst [vmem:[%s551 + $0x1c] sm:$0xf] %v566
                %v568 = vld [vmem:[%s550 + $0x40] sm:$0xf]
                %569 = vst [vmem:[%s551 + $0x20] sm:$0xf] %v568
                %v570 = vld [vmem:[%s550 + $0x48] sm:$0xf]
                %571 = vst [vmem:[%s551 + $0x24] sm:$0xf] %v570
                %v572 = vld [vmem:[%s550 + $0x50] sm:$0xf]
                %573 = vst [vmem:[%s551 + $0x28] sm:$0xf] %v572
                %v574 = vld [vmem:[%s550 + $0x58] sm:$0xf]
                %575 = vst [vmem:[%s551 + $0x2c] sm:$0xf] %v574
                %v576 = vld [vmem:[%s550 + $0x60] sm:$0xf]
                %577 = vst [vmem:[%s551 + $0x30] sm:$0xf] %v576
                %v578 = vld [vmem:[%s550 + $0x68] sm:$0xf]
                %579 = vst [vmem:[%s551 + $0x34] sm:$0xf] %v578
                %v580 = vld [vmem:[%s550 + $0x70] sm:$0xf]
                %581 = vst [vmem:[%s551 + $0x38] sm:$0xf] %v580
                %v582 = vld [vmem:[%s550 + $0x78] sm:$0xf]
                %583 = vst [vmem:[%s551 + $0x3c] sm:$0xf] %v582
                %v584 = vld [vmem:[%s550 + $0x80] sm:$0xf]
                %585 = vst [vmem:[%s551 + $0x40] sm:$0xf] %v584
                %v586 = vld [vmem:[%s550 + $0x88] sm:$0xf]
                %587 = vst [vmem:[%s551 + $0x44] sm:$0xf] %v586
                %v588 = vld [vmem:[%s550 + $0x90] sm:$0xf]
                %589 = vst [vmem:[%s551 + $0x48] sm:$0xf] %v588
                %v590 = vld [vmem:[%s550 + $0x98] sm:$0xf]
                %591 = vst [vmem:[%s551 + $0x4c] sm:$0xf] %v590
                %v592 = vld [vmem:[%s550 + $0xa0] sm:$0xf]
                %593 = vst [vmem:[%s551 + $0x50] sm:$0xf] %v592
                %v594 = vld [vmem:[%s550 + $0xa8] sm:$0xf]
                %595 = vst [vmem:[%s551 + $0x54] sm:$0xf] %v594
                %v596 = vld [vmem:[%s550 + $0xb0] sm:$0xf]
                %597 = vst [vmem:[%s551 + $0x58] sm:$0xf] %v596
                %v598 = vld [vmem:[%s550 + $0xb8] sm:$0xf]
                %599 = vst [vmem:[%s551 + $0x5c] sm:$0xf] %v598
                %v600 = vld [vmem:[%s550 + $0xc0] sm:$0xf]
                %601 = vst [vmem:[%s551 + $0x60] sm:$0xf] %v600
                %v602 = vld [vmem:[%s550 + $0xc8] sm:$0xf]
                %603 = vst [vmem:[%s551 + $0x64] sm:$0xf] %v602
                %v604 = vld [vmem:[%s550 + $0xd0] sm:$0xf]
                %605 = vst [vmem:[%s551 + $0x68] sm:$0xf] %v604
                %v606 = vld [vmem:[%s550 + $0xd8] sm:$0xf]
                %607 = vst [vmem:[%s551 + $0x6c] sm:$0xf] %v606
                %v608 = vld [vmem:[%s550 + $0xe0] sm:$0xf]
                %609 = vst [vmem:[%s551 + $0x70] sm:$0xf] %v608
                %v610 = vld [vmem:[%s550 + $0xe8] sm:$0xf]
                %611 = vst [vmem:[%s551 + $0x74] sm:$0xf] %v610
                %v612 = vld [vmem:[%s550 + $0xf0] sm:$0xf]
                %613 = vst [vmem:[%s551 + $0x78] sm:$0xf] %v612
                %v614 = vld [vmem:[%s550 + $0xf8] sm:$0xf]
                %615 = vst [vmem:[%s551 + $0x7c] sm:$0xf] %v614
                %v616 = vld [vmem:[%s550 + $0x100] sm:$0xf]
                %617 = vst [vmem:[%s551 + $0x80] sm:$0xf] %v616
                %v618 = vld [vmem:[%s550 + $0x108] sm:$0xf]
                %619 = vst [vmem:[%s551 + $0x84] sm:$0xf] %v618
                %v620 = vld [vmem:[%s550 + $0x110] sm:$0xf]
                %621 = vst [vmem:[%s551 + $0x88] sm:$0xf] %v620
                %v622 = vld [vmem:[%s550 + $0x118] sm:$0xf]
                %623 = vst [vmem:[%s551 + $0x8c] sm:$0xf] %v622
                %v624 = vld [vmem:[%s550 + $0x120] sm:$0xf]
                %625 = vst [vmem:[%s551 + $0x90] sm:$0xf] %v624
                %v626 = vld [vmem:[%s550 + $0x128] sm:$0xf]
                %627 = vst [vmem:[%s551 + $0x94] sm:$0xf] %v626
                %v628 = vld [vmem:[%s550 + $0x130] sm:$0xf]
                %629 = vst [vmem:[%s551 + $0x98] sm:$0xf] %v628
                %v630 = vld [vmem:[%s550 + $0x138] sm:$0xf]
                %631 = vst [vmem:[%s551 + $0x9c] sm:$0xf] %v630
                %v632 = vld [vmem:[%s550 + $0x140] sm:$0xf]
                %633 = vst [vmem:[%s551 + $0xa0] sm:$0xf] %v632
                %v634 = vld [vmem:[%s550 + $0x148] sm:$0xf]
                %635 = vst [vmem:[%s551 + $0xa4] sm:$0xf] %v634
                %v636 = vld [vmem:[%s550 + $0x150] sm:$0xf]
                %637 = vst [vmem:[%s551 + $0xa8] sm:$0xf] %v636
                %v638 = vld [vmem:[%s550 + $0x158] sm:$0xf]
                %639 = vst [vmem:[%s551 + $0xac] sm:$0xf] %v638
                %v640 = vld [vmem:[%s550 + $0x160] sm:$0xf]
                %641 = vst [vmem:[%s551 + $0xb0] sm:$0xf] %v640
                %v642 = vld [vmem:[%s550 + $0x168] sm:$0xf]
                %643 = vst [vmem:[%s551 + $0xb4] sm:$0xf] %v642
                %v644 = vld [vmem:[%s550 + $0x170] sm:$0xf]
                %645 = vst [vmem:[%s551 + $0xb8] sm:$0xf] %v644
                %v646 = vld [vmem:[%s550 + $0x178] sm:$0xf]
                %647 = vst [vmem:[%s551 + $0xbc] sm:$0xf] %v646
                %v648 = vld [vmem:[%s550 + $0x180] sm:$0xf]
                %649 = vst [vmem:[%s551 + $0xc0] sm:$0xf] %v648
                %v650 = vld [vmem:[%s550 + $0x188] sm:$0xf]
                %651 = vst [vmem:[%s551 + $0xc4] sm:$0xf] %v650
                %v652 = vld [vmem:[%s550 + $0x190] sm:$0xf]
                %653 = vst [vmem:[%s551 + $0xc8] sm:$0xf] %v652
                %v654 = vld [vmem:[%s550 + $0x198] sm:$0xf]
                %655 = vst [vmem:[%s551 + $0xcc] sm:$0xf] %v654
                %v656 = vld [vmem:[%s550 + $0x1a0] sm:$0xf]
                %657 = vst [vmem:[%s551 + $0xd0] sm:$0xf] %v656
                %v658 = vld [vmem:[%s550 + $0x1a8] sm:$0xf]
                %659 = vst [vmem:[%s551 + $0xd4] sm:$0xf] %v658
                %v660 = vld [vmem:[%s550 + $0x1b0] sm:$0xf]
                %661 = vst [vmem:[%s551 + $0xd8] sm:$0xf] %v660
                %v662 = vld [vmem:[%s550 + $0x1b8] sm:$0xf]
                %663 = vst [vmem:[%s551 + $0xdc] sm:$0xf] %v662
                %v664 = vld [vmem:[%s550 + $0x1c0] sm:$0xf]
                %665 = vst [vmem:[%s551 + $0xe0] sm:$0xf] %v664
                %v666 = vld [vmem:[%s550 + $0x1c8] sm:$0xf]
                %667 = vst [vmem:[%s551 + $0xe4] sm:$0xf] %v666
                %v668 = vld [vmem:[%s550 + $0x1d0] sm:$0xf]
                %669 = vst [vmem:[%s551 + $0xe8] sm:$0xf] %v668
                %v670 = vld [vmem:[%s550 + $0x1d8] sm:$0xf]
                %671 = vst [vmem:[%s551 + $0xec] sm:$0xf] %v670
                %v672 = vld [vmem:[%s550 + $0x1e0] sm:$0xf]
                %673 = vst [vmem:[%s551 + $0xf0] sm:$0xf] %v672
                %v674 = vld [vmem:[%s550 + $0x1e8] sm:$0xf]
                %675 = vst [vmem:[%s551 + $0xf4] sm:$0xf] %v674
                %v676 = vld [vmem:[%s550 + $0x1f0] sm:$0xf]
                %677 = vst [vmem:[%s551 + $0xf8] sm:$0xf] %v676
                %v678 = vld [vmem:[%s550 + $0x1f8] sm:$0xf]
                %679 = vst [vmem:[%s551 + $0xfc] sm:$0xf] %v678
                %v680 = vld [vmem:[%s550 + $0x200] sm:$0xf]
                %681 = vst [vmem:[%s551 + $0x100] sm:$0xf] %v680
                %v682 = vld [vmem:[%s550 + $0x208] sm:$0xf]
                %683 = vst [vmem:[%s551 + $0x104] sm:$0xf] %v682
                %v684 = vld [vmem:[%s550 + $0x210] sm:$0xf]
                %685 = vst [vmem:[%s551 + $0x108] sm:$0xf] %v684
                %v686 = vld [vmem:[%s550 + $0x218] sm:$0xf]
                %687 = vst [vmem:[%s551 + $0x10c] sm:$0xf] %v686
                %v688 = vld [vmem:[%s550 + $0x220] sm:$0xf]
                %689 = vst [vmem:[%s551 + $0x110] sm:$0xf] %v688
                %v690 = vld [vmem:[%s550 + $0x228] sm:$0xf]
                %691 = vst [vmem:[%s551 + $0x114] sm:$0xf] %v690
                %v692 = vld [vmem:[%s550 + $0x230] sm:$0xf]
                %693 = vst [vmem:[%s551 + $0x118] sm:$0xf] %v692
                %v694 = vld [vmem:[%s550 + $0x238] sm:$0xf]
                %695 = vst [vmem:[%s551 + $0x11c] sm:$0xf] %v694
                %v696 = vld [vmem:[%s550 + $0x240] sm:$0xf]
                %697 = vst [vmem:[%s551 + $0x120] sm:$0xf] %v696
                %v698 = vld [vmem:[%s550 + $0x248] sm:$0xf]
                %699 = vst [vmem:[%s551 + $0x124] sm:$0xf] %v698
                %v700 = vld [vmem:[%s550 + $0x250] sm:$0xf]
                %701 = vst [vmem:[%s551 + $0x128] sm:$0xf] %v700
                %v702 = vld [vmem:[%s550 + $0x258] sm:$0xf]
                %703 = vst [vmem:[%s551 + $0x12c] sm:$0xf] %v702
                %v704 = vld [vmem:[%s550 + $0x260] sm:$0xf]
                %705 = vst [vmem:[%s551 + $0x130] sm:$0xf] %v704
                %v706 = vld [vmem:[%s550 + $0x268] sm:$0xf]
                %707 = vst [vmem:[%s551 + $0x134] sm:$0xf] %v706
                %v708 = vld [vmem:[%s550 + $0x270] sm:$0xf]
                %709 = vst [vmem:[%s551 + $0x138] sm:$0xf] %v708
                %v710 = vld [vmem:[%s550 + $0x278] sm:$0xf]
                %711 = vst [vmem:[%s551 + $0x13c] sm:$0xf] %v710
                %v712 = vld [vmem:[%s550 + $0x280] sm:$0xf]
                %713 = vst [vmem:[%s551 + $0x140] sm:$0xf] %v712
                %v714 = vld [vmem:[%s550 + $0x288] sm:$0xf]
                %715 = vst [vmem:[%s551 + $0x144] sm:$0xf] %v714
                %v716 = vld [vmem:[%s550 + $0x290] sm:$0xf]
                %717 = vst [vmem:[%s551 + $0x148] sm:$0xf] %v716
                %v718 = vld [vmem:[%s550 + $0x298] sm:$0xf]
                %719 = vst [vmem:[%s551 + $0x14c] sm:$0xf] %v718
                %v720 = vld [vmem:[%s550 + $0x2a0] sm:$0xf]
                %721 = vst [vmem:[%s551 + $0x150] sm:$0xf] %v720
                %v722 = vld [vmem:[%s550 + $0x2a8] sm:$0xf]
                %723 = vst [vmem:[%s551 + $0x154] sm:$0xf] %v722
                %v724 = vld [vmem:[%s550 + $0x2b0] sm:$0xf]
                %725 = vst [vmem:[%s551 + $0x158] sm:$0xf] %v724
                %v726 = vld [vmem:[%s550 + $0x2b8] sm:$0xf]
                %727 = vst [vmem:[%s551 + $0x15c] sm:$0xf] %v726
                %v728 = vld [vmem:[%s550 + $0x2c0] sm:$0xf]
                %729 = vst [vmem:[%s551 + $0x160] sm:$0xf] %v728
                %v730 = vld [vmem:[%s550 + $0x2c8] sm:$0xf]
                %731 = vst [vmem:[%s551 + $0x164] sm:$0xf] %v730
                %v732 = vld [vmem:[%s550 + $0x2d0] sm:$0xf]
                %733 = vst [vmem:[%s551 + $0x168] sm:$0xf] %v732
                %v734 = vld [vmem:[%s550 + $0x2d8] sm:$0xf]
                %735 = vst [vmem:[%s551 + $0x16c] sm:$0xf] %v734
                %v736 = vld [vmem:[%s550 + $0x2e0] sm:$0xf]
                %737 = vst [vmem:[%s551 + $0x170] sm:$0xf] %v736
                %v738 = vld [vmem:[%s550 + $0x2e8] sm:$0xf]
                %739 = vst [vmem:[%s551 + $0x174] sm:$0xf] %v738
                %v740 = vld [vmem:[%s550 + $0x2f0] sm:$0xf]
                %741 = vst [vmem:[%s551 + $0x178] sm:$0xf] %v740
                %v742 = vld [vmem:[%s550 + $0x2f8] sm:$0xf]
                %743 = vst [vmem:[%s551 + $0x17c] sm:$0xf] %v742
                %v744 = vld [vmem:[%s550 + $0x300] sm:$0xf]
                %745 = vst [vmem:[%s551 + $0x180] sm:$0xf] %v744
                %v746 = vld [vmem:[%s550 + $0x308] sm:$0xf]
                %747 = vst [vmem:[%s551 + $0x184] sm:$0xf] %v746
                %v748 = vld [vmem:[%s550 + $0x310] sm:$0xf]
                %749 = vst [vmem:[%s551 + $0x188] sm:$0xf] %v748
                %v750 = vld [vmem:[%s550 + $0x318] sm:$0xf]
                %751 = vst [vmem:[%s551 + $0x18c] sm:$0xf] %v750
                %v752 = vld [vmem:[%s550 + $0x320] sm:$0xf]
                %753 = vst [vmem:[%s551 + $0x190] sm:$0xf] %v752
                %v754 = vld [vmem:[%s550 + $0x328] sm:$0xf]
                %755 = vst [vmem:[%s551 + $0x194] sm:$0xf] %v754
                %v756 = vld [vmem:[%s550 + $0x330] sm:$0xf]
                %757 = vst [vmem:[%s551 + $0x198] sm:$0xf] %v756
                %v758 = vld [vmem:[%s550 + $0x338] sm:$0xf]
                %759 = vst [vmem:[%s551 + $0x19c] sm:$0xf] %v758
                %v760 = vld [vmem:[%s550 + $0x340] sm:$0xf]
                %761 = vst [vmem:[%s551 + $0x1a0] sm:$0xf] %v760
                %v762 = vld [vmem:[%s550 + $0x348] sm:$0xf]
                %763 = vst [vmem:[%s551 + $0x1a4] sm:$0xf] %v762
                %v764 = vld [vmem:[%s550 + $0x350] sm:$0xf]
                %765 = vst [vmem:[%s551 + $0x1a8] sm:$0xf] %v764
                %v766 = vld [vmem:[%s550 + $0x358] sm:$0xf]
                %767 = vst [vmem:[%s551 + $0x1ac] sm:$0xf] %v766
                %v768 = vld [vmem:[%s550 + $0x360] sm:$0xf]
                %769 = vst [vmem:[%s551 + $0x1b0] sm:$0xf] %v768
                %v770 = vld [vmem:[%s550 + $0x368] sm:$0xf]
                %771 = vst [vmem:[%s551 + $0x1b4] sm:$0xf] %v770
                %v772 = vld [vmem:[%s550 + $0x370] sm:$0xf]
                %773 = vst [vmem:[%s551 + $0x1b8] sm:$0xf] %v772
                %v774 = vld [vmem:[%s550 + $0x378] sm:$0xf]
                %775 = vst [vmem:[%s551 + $0x1bc] sm:$0xf] %v774
                %v776 = vld [vmem:[%s550 + $0x380] sm:$0xf]
                %777 = vst [vmem:[%s551 + $0x1c0] sm:$0xf] %v776
                %v778 = vld [vmem:[%s550 + $0x388] sm:$0xf]
                %779 = vst [vmem:[%s551 + $0x1c4] sm:$0xf] %v778
                %v780 = vld [vmem:[%s550 + $0x390] sm:$0xf]
                %781 = vst [vmem:[%s551 + $0x1c8] sm:$0xf] %v780
                %v782 = vld [vmem:[%s550 + $0x398] sm:$0xf]
                %783 = vst [vmem:[%s551 + $0x1cc] sm:$0xf] %v782
                %v784 = vld [vmem:[%s550 + $0x3a0] sm:$0xf]
                %785 = vst [vmem:[%s551 + $0x1d0] sm:$0xf] %v784
                %v786 = vld [vmem:[%s550 + $0x3a8] sm:$0xf]
                %787 = vst [vmem:[%s551 + $0x1d4] sm:$0xf] %v786
                %v788 = vld [vmem:[%s550 + $0x3b0] sm:$0xf]
                %789 = vst [vmem:[%s551 + $0x1d8] sm:$0xf] %v788
                %v790 = vld [vmem:[%s550 + $0x3b8] sm:$0xf]
                %791 = vst [vmem:[%s551 + $0x1dc] sm:$0xf] %v790
                %v792 = vld [vmem:[%s550 + $0x3c0] sm:$0xf]
                %793 = vst [vmem:[%s551 + $0x1e0] sm:$0xf] %v792
                %v794 = vld [vmem:[%s550 + $0x3c8] sm:$0xf]
                %795 = vst [vmem:[%s551 + $0x1e4] sm:$0xf] %v794
                %v796 = vld [vmem:[%s550 + $0x3d0] sm:$0xf]
                %797 = vst [vmem:[%s551 + $0x1e8] sm:$0xf] %v796
                %v798 = vld [vmem:[%s550 + $0x3d8] sm:$0xf]
                %799 = vst [vmem:[%s551 + $0x1ec] sm:$0xf] %v798
                %v800 = vld [vmem:[%s550 + $0x3e0] sm:$0xf]
                %801 = vst [vmem:[%s551 + $0x1f0] sm:$0xf] %v800
                %v802 = vld [vmem:[%s550 + $0x3e8] sm:$0xf]
                %803 = vst [vmem:[%s551 + $0x1f4] sm:$0xf] %v802
                %v804 = vld [vmem:[%s550 + $0x3f0] sm:$0xf]
                %805 = vst [vmem:[%s551 + $0x1f8] sm:$0xf] %v804
                %v806 = vld [vmem:[%s550 + $0x3f8] sm:$0xf]
                %807 = vst [vmem:[%s551 + $0x1fc] sm:$0xf] %v806
                %v808 = vld [vmem:[%s550 + $0x400] sm:$0xf]
                %809 = vst [vmem:[%s551 + $0x200] sm:$0xf] %v808
                %v810 = vld [vmem:[%s550 + $0x408] sm:$0xf]
                %811 = vst [vmem:[%s551 + $0x204] sm:$0xf] %v810
                %v812 = vld [vmem:[%s550 + $0x410] sm:$0xf]
                %813 = vst [vmem:[%s551 + $0x208] sm:$0xf] %v812
                %v814 = vld [vmem:[%s550 + $0x418] sm:$0xf]
                %815 = vst [vmem:[%s551 + $0x20c] sm:$0xf] %v814
                %v816 = vld [vmem:[%s550 + $0x420] sm:$0xf]
                %817 = vst [vmem:[%s551 + $0x210] sm:$0xf] %v816
                %v818 = vld [vmem:[%s550 + $0x428] sm:$0xf]
                %819 = vst [vmem:[%s551 + $0x214] sm:$0xf] %v818
                %v820 = vld [vmem:[%s550 + $0x430] sm:$0xf]
                %821 = vst [vmem:[%s551 + $0x218] sm:$0xf] %v820
                %v822 = vld [vmem:[%s550 + $0x438] sm:$0xf]
                %823 = vst [vmem:[%s551 + $0x21c] sm:$0xf] %v822
                %v824 = vld [vmem:[%s550 + $0x440] sm:$0xf]
                %825 = vst [vmem:[%s551 + $0x220] sm:$0xf] %v824
                %v826 = vld [vmem:[%s550 + $0x448] sm:$0xf]
                %827 = vst [vmem:[%s551 + $0x224] sm:$0xf] %v826
                %v828 = vld [vmem:[%s550 + $0x450] sm:$0xf]
                %829 = vst [vmem:[%s551 + $0x228] sm:$0xf] %v828
                %v830 = vld [vmem:[%s550 + $0x458] sm:$0xf]
                %831 = vst [vmem:[%s551 + $0x22c] sm:$0xf] %v830
                %v832 = vld [vmem:[%s550 + $0x460] sm:$0xf]
                %833 = vst [vmem:[%s551 + $0x230] sm:$0xf] %v832
                %v834 = vld [vmem:[%s550 + $0x468] sm:$0xf]
                %835 = vst [vmem:[%s551 + $0x234] sm:$0xf] %v834
                %v836 = vld [vmem:[%s550 + $0x470] sm:$0xf]
                %837 = vst [vmem:[%s551 + $0x238] sm:$0xf] %v836
                %v838 = vld [vmem:[%s550 + $0x478] sm:$0xf]
                %839 = vst [vmem:[%s551 + $0x23c] sm:$0xf] %v838
                %v840 = vld [vmem:[%s550 + $0x480] sm:$0xf]
                %841 = vst [vmem:[%s551 + $0x240] sm:$0xf] %v840
                %v842 = vld [vmem:[%s550 + $0x488] sm:$0xf]
                %843 = vst [vmem:[%s551 + $0x244] sm:$0xf] %v842
                %v844 = vld [vmem:[%s550 + $0x490] sm:$0xf]
                %845 = vst [vmem:[%s551 + $0x248] sm:$0xf] %v844
                %v846 = vld [vmem:[%s550 + $0x498] sm:$0xf]
                %847 = vst [vmem:[%s551 + $0x24c] sm:$0xf] %v846
                %v848 = vld [vmem:[%s550 + $0x4a0] sm:$0xf]
                %849 = vst [vmem:[%s551 + $0x250] sm:$0xf] %v848
                %v850 = vld [vmem:[%s550 + $0x4a8] sm:$0xf]
                %851 = vst [vmem:[%s551 + $0x254] sm:$0xf] %v850
                %v852 = vld [vmem:[%s550 + $0x4b0] sm:$0xf]
                %853 = vst [vmem:[%s551 + $0x258] sm:$0xf] %v852
                %v854 = vld [vmem:[%s550 + $0x4b8] sm:$0xf]
                %855 = vst [vmem:[%s551 + $0x25c] sm:$0xf] %v854
                %v856 = vld [vmem:[%s550 + $0x4c0] sm:$0xf]
                %857 = vst [vmem:[%s551 + $0x260] sm:$0xf] %v856
                %v858 = vld [vmem:[%s550 + $0x4c8] sm:$0xf]
                %859 = vst [vmem:[%s551 + $0x264] sm:$0xf] %v858
                %v860 = vld [vmem:[%s550 + $0x4d0] sm:$0xf]
                %861 = vst [vmem:[%s551 + $0x268] sm:$0xf] %v860
                %v862 = vld [vmem:[%s550 + $0x4d8] sm:$0xf]
                %863 = vst [vmem:[%s551 + $0x26c] sm:$0xf] %v862
                %v864 = vld [vmem:[%s550 + $0x4e0] sm:$0xf]
                %865 = vst [vmem:[%s551 + $0x270] sm:$0xf] %v864
                %v866 = vld [vmem:[%s550 + $0x4e8] sm:$0xf]
                %867 = vst [vmem:[%s551 + $0x274] sm:$0xf] %v866
                %v868 = vld [vmem:[%s550 + $0x4f0] sm:$0xf]
                %869 = vst [vmem:[%s551 + $0x278] sm:$0xf] %v868
                %v870 = vld [vmem:[%s550 + $0x4f8] sm:$0xf]
                %871 = vst [vmem:[%s551 + $0x27c] sm:$0xf] %v870
                %v872 = vld [vmem:[%s550 + $0x500] sm:$0xf]
                %873 = vst [vmem:[%s551 + $0x280] sm:$0xf] %v872
                %v874 = vld [vmem:[%s550 + $0x508] sm:$0xf]
                %875 = vst [vmem:[%s551 + $0x284] sm:$0xf] %v874
                %v876 = vld [vmem:[%s550 + $0x510] sm:$0xf]
                %877 = vst [vmem:[%s551 + $0x288] sm:$0xf] %v876
                %v878 = vld [vmem:[%s550 + $0x518] sm:$0xf]
                %879 = vst [vmem:[%s551 + $0x28c] sm:$0xf] %v878
                %v880 = vld [vmem:[%s550 + $0x520] sm:$0xf]
                %881 = vst [vmem:[%s551 + $0x290] sm:$0xf] %v880
                %v882 = vld [vmem:[%s550 + $0x528] sm:$0xf]
                %883 = vst [vmem:[%s551 + $0x294] sm:$0xf] %v882
                %v884 = vld [vmem:[%s550 + $0x530] sm:$0xf]
                %885 = vst [vmem:[%s551 + $0x298] sm:$0xf] %v884
                %v886 = vld [vmem:[%s550 + $0x538] sm:$0xf]
                %887 = vst [vmem:[%s551 + $0x29c] sm:$0xf] %v886
                %v888 = vld [vmem:[%s550 + $0x540] sm:$0xf]
                %889 = vst [vmem:[%s551 + $0x2a0] sm:$0xf] %v888
                %v890 = vld [vmem:[%s550 + $0x548] sm:$0xf]
                %891 = vst [vmem:[%s551 + $0x2a4] sm:$0xf] %v890
                %v892 = vld [vmem:[%s550 + $0x550] sm:$0xf]
                %893 = vst [vmem:[%s551 + $0x2a8] sm:$0xf] %v892
                %v894 = vld [vmem:[%s550 + $0x558] sm:$0xf]
                %895 = vst [vmem:[%s551 + $0x2ac] sm:$0xf] %v894
                %v896 = vld [vmem:[%s550 + $0x560] sm:$0xf]
                %897 = vst [vmem:[%s551 + $0x2b0] sm:$0xf] %v896
                %v898 = vld [vmem:[%s550 + $0x568] sm:$0xf]
                %899 = vst [vmem:[%s551 + $0x2b4] sm:$0xf] %v898
                %v900 = vld [vmem:[%s550 + $0x570] sm:$0xf]
                %901 = vst [vmem:[%s551 + $0x2b8] sm:$0xf] %v900
                %v902 = vld [vmem:[%s550 + $0x578] sm:$0xf]
                %903 = vst [vmem:[%s551 + $0x2bc] sm:$0xf] %v902
                %v904 = vld [vmem:[%s550 + $0x580] sm:$0xf]
                %905 = vst [vmem:[%s551 + $0x2c0] sm:$0xf] %v904
                %v906 = vld [vmem:[%s550 + $0x588] sm:$0xf]
                %907 = vst [vmem:[%s551 + $0x2c4] sm:$0xf] %v906
                %v908 = vld [vmem:[%s550 + $0x590] sm:$0xf]
                %909 = vst [vmem:[%s551 + $0x2c8] sm:$0xf] %v908
                %v910 = vld [vmem:[%s550 + $0x598] sm:$0xf]
                %911 = vst [vmem:[%s551 + $0x2cc] sm:$0xf] %v910
                %v912 = vld [vmem:[%s550 + $0x5a0] sm:$0xf]
                %913 = vst [vmem:[%s551 + $0x2d0] sm:$0xf] %v912
                %v914 = vld [vmem:[%s550 + $0x5a8] sm:$0xf]
                %915 = vst [vmem:[%s551 + $0x2d4] sm:$0xf] %v914
                %v916 = vld [vmem:[%s550 + $0x5b0] sm:$0xf]
                %917 = vst [vmem:[%s551 + $0x2d8] sm:$0xf] %v916
                %v918 = vld [vmem:[%s550 + $0x5b8] sm:$0xf]
                %919 = vst [vmem:[%s551 + $0x2dc] sm:$0xf] %v918
                %v920 = vld [vmem:[%s550 + $0x5c0] sm:$0xf]
                %921 = vst [vmem:[%s551 + $0x2e0] sm:$0xf] %v920
                %v922 = vld [vmem:[%s550 + $0x5c8] sm:$0xf]
                %923 = vst [vmem:[%s551 + $0x2e4] sm:$0xf] %v922
                %v924 = vld [vmem:[%s550 + $0x5d0] sm:$0xf]
                %925 = vst [vmem:[%s551 + $0x2e8] sm:$0xf] %v924
                %v926 = vld [vmem:[%s550 + $0x5d8] sm:$0xf]
                %927 = vst [vmem:[%s551 + $0x2ec] sm:$0xf] %v926
                %v928 = vld [vmem:[%s550 + $0x5e0] sm:$0xf]
                %929 = vst [vmem:[%s551 + $0x2f0] sm:$0xf] %v928
                %v930 = vld [vmem:[%s550 + $0x5e8] sm:$0xf]
                %931 = vst [vmem:[%s551 + $0x2f4] sm:$0xf] %v930
                %v932 = vld [vmem:[%s550 + $0x5f0] sm:$0xf]
                %933 = vst [vmem:[%s551 + $0x2f8] sm:$0xf] %v932
                %v934 = vld [vmem:[%s550 + $0x5f8] sm:$0xf]
                %935 = vst [vmem:[%s551 + $0x2fc] sm:$0xf] %v934
                %v936 = vld [vmem:[%s550 + $0x600] sm:$0xf]
                %937 = vst [vmem:[%s551 + $0x300] sm:$0xf] %v936
                %v938 = vld [vmem:[%s550 + $0x608] sm:$0xf]
                %939 = vst [vmem:[%s551 + $0x304] sm:$0xf] %v938
                %v940 = vld [vmem:[%s550 + $0x610] sm:$0xf]
                %941 = vst [vmem:[%s551 + $0x308] sm:$0xf] %v940
                %v942 = vld [vmem:[%s550 + $0x618] sm:$0xf]
                %943 = vst [vmem:[%s551 + $0x30c] sm:$0xf] %v942
                %v944 = vld [vmem:[%s550 + $0x620] sm:$0xf]
                %945 = vst [vmem:[%s551 + $0x310] sm:$0xf] %v944
                %v946 = vld [vmem:[%s550 + $0x628] sm:$0xf]
                %947 = vst [vmem:[%s551 + $0x314] sm:$0xf] %v946
                %v948 = vld [vmem:[%s550 + $0x630] sm:$0xf]
                %949 = vst [vmem:[%s551 + $0x318] sm:$0xf] %v948
                %v950 = vld [vmem:[%s550 + $0x638] sm:$0xf]
                %951 = vst [vmem:[%s551 + $0x31c] sm:$0xf] %v950
                %v952 = vld [vmem:[%s550 + $0x640] sm:$0xf]
                %953 = vst [vmem:[%s551 + $0x320] sm:$0xf] %v952
                %v954 = vld [vmem:[%s550 + $0x648] sm:$0xf]
                %955 = vst [vmem:[%s551 + $0x324] sm:$0xf] %v954
                %v956 = vld [vmem:[%s550 + $0x650] sm:$0xf]
                %957 = vst [vmem:[%s551 + $0x328] sm:$0xf] %v956
                %v958 = vld [vmem:[%s550 + $0x658] sm:$0xf]
                %959 = vst [vmem:[%s551 + $0x32c] sm:$0xf] %v958
                %v960 = vld [vmem:[%s550 + $0x660] sm:$0xf]
                %961 = vst [vmem:[%s551 + $0x330] sm:$0xf] %v960
                %v962 = vld [vmem:[%s550 + $0x668] sm:$0xf]
                %963 = vst [vmem:[%s551 + $0x334] sm:$0xf] %v962
                %v964 = vld [vmem:[%s550 + $0x670] sm:$0xf]
                %965 = vst [vmem:[%s551 + $0x338] sm:$0xf] %v964
                %v966 = vld [vmem:[%s550 + $0x678] sm:$0xf]
                %967 = vst [vmem:[%s551 + $0x33c] sm:$0xf] %v966
                %v968 = vld [vmem:[%s550 + $0x680] sm:$0xf]
                %969 = vst [vmem:[%s551 + $0x340] sm:$0xf] %v968
                %v970 = vld [vmem:[%s550 + $0x688] sm:$0xf]
                %971 = vst [vmem:[%s551 + $0x344] sm:$0xf] %v970
                %v972 = vld [vmem:[%s550 + $0x690] sm:$0xf]
                %973 = vst [vmem:[%s551 + $0x348] sm:$0xf] %v972
                %v974 = vld [vmem:[%s550 + $0x698] sm:$0xf]
                %975 = vst [vmem:[%s551 + $0x34c] sm:$0xf] %v974
                %v976 = vld [vmem:[%s550 + $0x6a0] sm:$0xf]
                %977 = vst [vmem:[%s551 + $0x350] sm:$0xf] %v976
                %v978 = vld [vmem:[%s550 + $0x6a8] sm:$0xf]
                %979 = vst [vmem:[%s551 + $0x354] sm:$0xf] %v978
                %v980 = vld [vmem:[%s550 + $0x6b0] sm:$0xf]
                %981 = vst [vmem:[%s551 + $0x358] sm:$0xf] %v980
                %v982 = vld [vmem:[%s550 + $0x6b8] sm:$0xf]
                %983 = vst [vmem:[%s551 + $0x35c] sm:$0xf] %v982
                %v984 = vld [vmem:[%s550 + $0x6c0] sm:$0xf]
                %985 = vst [vmem:[%s551 + $0x360] sm:$0xf] %v984
                %v986 = vld [vmem:[%s550 + $0x6c8] sm:$0xf]
                %987 = vst [vmem:[%s551 + $0x364] sm:$0xf] %v986
                %v988 = vld [vmem:[%s550 + $0x6d0] sm:$0xf]
                %989 = vst [vmem:[%s551 + $0x368] sm:$0xf] %v988
                %v990 = vld [vmem:[%s550 + $0x6d8] sm:$0xf]
                %991 = vst [vmem:[%s551 + $0x36c] sm:$0xf] %v990
                %v992 = vld [vmem:[%s550 + $0x6e0] sm:$0xf]
                %993 = vst [vmem:[%s551 + $0x370] sm:$0xf] %v992
                %v994 = vld [vmem:[%s550 + $0x6e8] sm:$0xf]
                %995 = vst [vmem:[%s551 + $0x374] sm:$0xf] %v994
                %v996 = vld [vmem:[%s550 + $0x6f0] sm:$0xf]
                %997 = vst [vmem:[%s551 + $0x378] sm:$0xf] %v996
                %v998 = vld [vmem:[%s550 + $0x6f8] sm:$0xf]
                %999 = vst [vmem:[%s551 + $0x37c] sm:$0xf] %v998
                %v1000 = vld [vmem:[%s550 + $0x700] sm:$0xf]
                %1001 = vst [vmem:[%s551 + $0x380] sm:$0xf] %v1000
                %v1002 = vld [vmem:[%s550 + $0x708] sm:$0xf]
                %1003 = vst [vmem:[%s551 + $0x384] sm:$0xf] %v1002
                %v1004 = vld [vmem:[%s550 + $0x710] sm:$0xf]
                %1005 = vst [vmem:[%s551 + $0x388] sm:$0xf] %v1004
                %v1006 = vld [vmem:[%s550 + $0x718] sm:$0xf]
                %1007 = vst [vmem:[%s551 + $0x38c] sm:$0xf] %v1006
                %v1008 = vld [vmem:[%s550 + $0x720] sm:$0xf]
                %1009 = vst [vmem:[%s551 + $0x390] sm:$0xf] %v1008
                %v1010 = vld [vmem:[%s550 + $0x728] sm:$0xf]
                %1011 = vst [vmem:[%s551 + $0x394] sm:$0xf] %v1010
                %v1012 = vld [vmem:[%s550 + $0x730] sm:$0xf]
                %1013 = vst [vmem:[%s551 + $0x398] sm:$0xf] %v1012
                %v1014 = vld [vmem:[%s550 + $0x738] sm:$0xf]
                %1015 = vst [vmem:[%s551 + $0x39c] sm:$0xf] %v1014
                %v1016 = vld [vmem:[%s550 + $0x740] sm:$0xf]
                %1017 = vst [vmem:[%s551 + $0x3a0] sm:$0xf] %v1016
                %v1018 = vld [vmem:[%s550 + $0x748] sm:$0xf]
                %1019 = vst [vmem:[%s551 + $0x3a4] sm:$0xf] %v1018
                %v1020 = vld [vmem:[%s550 + $0x750] sm:$0xf]
                %1021 = vst [vmem:[%s551 + $0x3a8] sm:$0xf] %v1020
                %v1022 = vld [vmem:[%s550 + $0x758] sm:$0xf]
                %1023 = vst [vmem:[%s551 + $0x3ac] sm:$0xf] %v1022
                %v1024 = vld [vmem:[%s550 + $0x760] sm:$0xf]
                %1025 = vst [vmem:[%s551 + $0x3b0] sm:$0xf] %v1024
                %v1026 = vld [vmem:[%s550 + $0x768] sm:$0xf]
                %1027 = vst [vmem:[%s551 + $0x3b4] sm:$0xf] %v1026
                %v1028 = vld [vmem:[%s550 + $0x770] sm:$0xf]
                %1029 = vst [vmem:[%s551 + $0x3b8] sm:$0xf] %v1028
                %v1030 = vld [vmem:[%s550 + $0x778] sm:$0xf]
                %1031 = vst [vmem:[%s551 + $0x3bc] sm:$0xf] %v1030
                %v1032 = vld [vmem:[%s550 + $0x780] sm:$0xf]
                %1033 = vst [vmem:[%s551 + $0x3c0] sm:$0xf] %v1032
                %v1034 = vld [vmem:[%s550 + $0x788] sm:$0xf]
                %1035 = vst [vmem:[%s551 + $0x3c4] sm:$0xf] %v1034
                %v1036 = vld [vmem:[%s550 + $0x790] sm:$0xf]
                %1037 = vst [vmem:[%s551 + $0x3c8] sm:$0xf] %v1036
                %v1038 = vld [vmem:[%s550 + $0x798] sm:$0xf]
                %1039 = vst [vmem:[%s551 + $0x3cc] sm:$0xf] %v1038
                %v1040 = vld [vmem:[%s550 + $0x7a0] sm:$0xf]
                %1041 = vst [vmem:[%s551 + $0x3d0] sm:$0xf] %v1040
                %v1042 = vld [vmem:[%s550 + $0x7a8] sm:$0xf]
                %1043 = vst [vmem:[%s551 + $0x3d4] sm:$0xf] %v1042
                %v1044 = vld [vmem:[%s550 + $0x7b0] sm:$0xf]
                %1045 = vst [vmem:[%s551 + $0x3d8] sm:$0xf] %v1044
                %v1046 = vld [vmem:[%s550 + $0x7b8] sm:$0xf]
                %1047 = vst [vmem:[%s551 + $0x3dc] sm:$0xf] %v1046
                %v1048 = vld [vmem:[%s550 + $0x7c0] sm:$0xf]
                %1049 = vst [vmem:[%s551 + $0x3e0] sm:$0xf] %v1048
                %v1050 = vld [vmem:[%s550 + $0x7c8] sm:$0xf]
                %1051 = vst [vmem:[%s551 + $0x3e4] sm:$0xf] %v1050
                %v1052 = vld [vmem:[%s550 + $0x7d0] sm:$0xf]
                %1053 = vst [vmem:[%s551 + $0x3e8] sm:$0xf] %v1052
                %v1054 = vld [vmem:[%s550 + $0x7d8] sm:$0xf]
                %1055 = vst [vmem:[%s551 + $0x3ec] sm:$0xf] %v1054
                %v1056 = vld [vmem:[%s550 + $0x7e0] sm:$0xf]
                %1057 = vst [vmem:[%s551 + $0x3f0] sm:$0xf] %v1056
                %v1058 = vld [vmem:[%s550 + $0x7e8] sm:$0xf]
                %1059 = vst [vmem:[%s551 + $0x3f4] sm:$0xf] %v1058
                %v1060 = vld [vmem:[%s550 + $0x7f0] sm:$0xf]
                %1061 = vst [vmem:[%s551 + $0x3f8] sm:$0xf] %v1060
                %v1062 = vld [vmem:[%s550 + $0x7f8] sm:$0xf]
                %1063 = vst [vmem:[%s551 + $0x3fc] sm:$0xf] %v1062
              $region109: #{discriminator_forward.1} parent=103 // loop_footer
                %s549 = sadd.s32 1, %s545
              $region110: #{discriminator_forward.1} parent=103 // loop_footer_branch
                %544 = sbr.rel target = $region106
              $region111: #{discriminator_forward.1} parent=103 // loop_exit
                _
            $region104: #{discriminator_forward.1} parent=95 // pred_fallthru
              _
          $region96: #{discriminator_forward.1} parent=91 // pred_fallthru
            _
          %1595 = vnop
        $region92: #{discriminator_forward.1} parent=87 // pred_fallthru
          _
      $region88: #{discriminator_forward.1} parent=5 // pred_fallthru
        _
      %p1596 = scmp.le.s32.totalorder 1, %s25
      %p1597 = scmp.lt.s32.totalorder %s25, 3
      %p1598 = pnand %p1596, %p1597
      %p1599 = pneg %p1598
      // Predicated region
      $region130: #{discriminator_forward.1} parent=5 // pred_check
        _
      $region131: #{discriminator_forward.1} parent=5 // pred_check_branch
        %1601 = sbr.rel (%p1598) target = $region133
      $region132: #{discriminator_forward.1} parent=5 // pred_region
        %s1602 = ssub.s32 %s25, 1
        %s1603 = sand.u32 %s38, 1
        %s1604 = sand.u32 %s38, 1
        %s1605 = smul.addr %s1604, 1024
        %s1606 = scalar_lea.vmem [#allocation2], %s1605
        // Predicated region
        $region134: #{discriminator_forward.1} parent=132 // pred_check
          %p1607 = pneg %p51
        $region135: #{discriminator_forward.1} parent=132 // pred_check_branch
          %1609 = sbr.rel (%p1607) target = $region137
        $region136: #{discriminator_forward.1} parent=132 // pred_region
          _
        $region137: #{discriminator_forward.1} parent=132 // pred_fallthru
          _
        %s1610 = sand.u32 %s38, 1
        %s1611 = sand.u32 %s38, 1
        %s1612 = smul.addr %s1611, 1024
        %s1613 = scalar_lea.vmem [#allocation2], %s1612
        %p1614 = pneg %p51
        %p1615 = pneg %p48
        %p1616 = pneg %p72
        %p1617 = pneg %p69
        %p1618 = pneg %p93
        %p1619 = pneg %p90
        %p1620 = pneg %p114
        %p1621 = pneg %p111
        %p1622 = pneg %p135
        %p1623 = pneg %p132
        %p1624 = pneg %p156
        %p1625 = pneg %p153
        %p1626 = pneg %p177
        %p1627 = pneg %p174
        %p1628 = pneg %p198
        %p1629 = pneg %p195
        %p1630 = pneg %p219
        %p1631 = pneg %p216
        %p1632 = pneg %p240
        %p1633 = pneg %p237
        %p1634 = pneg %p261
        %p1635 = pneg %p258
        %p1636 = pneg %p282
        %p1637 = pneg %p279
        %p1638 = pneg %p303
        %p1639 = pneg %p300
        %p1640 = pneg %p324
        %p1641 = pneg %p321
        %p1642 = pneg %p345
        %p1643 = pneg %p342
        %p1644 = pneg %p366
        %p1645 = pneg %p363
        %p1646 = pneg %p387
        %p1647 = pneg %p384
        %p1648 = pneg %p408
        %p1649 = pneg %p405
        %p1650 = pneg %p429
        %p1651 = pneg %p426
        %p1652 = pneg %p455
        %p1653 = pneg %p452
        %p1654 = scmp.lt.s32.totalorder %s30, 1
        %s1655 = scalar_select %p1654, %s30, 1
        %s1656 = smul.addr %s1655, 8
        %s1657 = scalar_lea.vmem %s19, %s1656
        %p1658 = scmp.lt.s32.totalorder %s30, 1
        %s1659 = scalar_select %p1658, %s30, 1
        %s1660 = smul.addr %s1659, 8
        %s1661 = scalar_lea.vmem %s19, %s1660
        %v1663 = vld [vmem:[%s1606] sm:$0xf]
        %v1664 = vld [vmem:[%s1606 + $0x4] sm:$0xf]
        %v1665 = vld [vmem:[%s1606 + $0x8] sm:$0xf]
        %v1666 = vld [vmem:[%s1606 + $0xc] sm:$0xf]
        %v1667 = vld [vmem:[%s1606 + $0x10] sm:$0xf]
        %v1668 = vld [vmem:[%s1606 + $0x14] sm:$0xf]
        %v1669 = vld [vmem:[%s1606 + $0x18] sm:$0xf]
        %v1670 = vld [vmem:[%s1606 + $0x1c] sm:$0xf]
        %v1671 = vld [vmem:[%s1606 + $0x20] sm:$0xf]
        %v1672 = vld [vmem:[%s1606 + $0x24] sm:$0xf]
        %v1673 = vld [vmem:[%s1606 + $0x28] sm:$0xf]
        %v1674 = vld [vmem:[%s1606 + $0x2c] sm:$0xf]
        %v1675 = vld [vmem:[%s1606 + $0x30] sm:$0xf]
        %v1676 = vld [vmem:[%s1606 + $0x34] sm:$0xf]
        %v1677 = vld [vmem:[%s1606 + $0x38] sm:$0xf]
        %v1678 = vld [vmem:[%s1606 + $0x3c] sm:$0xf]
        %v1679 = vld [vmem:[%s1606 + $0x40] sm:$0xf]
        %v1680 = vld [vmem:[%s1606 + $0x44] sm:$0xf]
        %v1681 = vld [vmem:[%s1606 + $0x48] sm:$0xf]
        %v1682 = vld [vmem:[%s1606 + $0x4c] sm:$0xf]
        %v1683 = vld [vmem:[%s1606 + $0x50] sm:$0xf]
        %v1684 = vld [vmem:[%s1606 + $0x54] sm:$0xf]
        %v1685 = vld [vmem:[%s1606 + $0x58] sm:$0xf]
        %v1686 = vld [vmem:[%s1606 + $0x5c] sm:$0xf]
        %v1687 = vld [vmem:[%s1606 + $0x60] sm:$0xf]
        %v1688 = vld [vmem:[%s1606 + $0x64] sm:$0xf]
        %v1689 = vld [vmem:[%s1606 + $0x68] sm:$0xf]
        %v1690 = vld [vmem:[%s1606 + $0x6c] sm:$0xf]
        %v1691 = vld [vmem:[%s1606 + $0x70] sm:$0xf]
        %v1692 = vld [vmem:[%s1606 + $0x74] sm:$0xf]
        %v1693 = vld [vmem:[%s1606 + $0x78] sm:$0xf]
        %v1694 = vld [vmem:[%s1606 + $0x7c] sm:$0xf]
        %v1695 = vld [vmem:[%s1606 + $0x80] sm:$0xf]
        %v1696 = vld [vmem:[%s1606 + $0x84] sm:$0xf]
        %v1697 = vld [vmem:[%s1606 + $0x88] sm:$0xf]
        %v1698 = vld [vmem:[%s1606 + $0x8c] sm:$0xf]
        %v1699 = vld [vmem:[%s1606 + $0x90] sm:$0xf]
        %v1700 = vld [vmem:[%s1606 + $0x94] sm:$0xf]
        %v1701 = vld [vmem:[%s1606 + $0x98] sm:$0xf]
        %v1702 = vld [vmem:[%s1606 + $0x9c] sm:$0xf]
        %v1703 = vld [vmem:[%s1606 + $0xa0] sm:$0xf]
        %v1704 = vld [vmem:[%s1606 + $0xa4] sm:$0xf]
        %v1705 = vld [vmem:[%s1606 + $0xa8] sm:$0xf]
        %v1706 = vld [vmem:[%s1606 + $0xac] sm:$0xf]
        %v1707 = vld [vmem:[%s1606 + $0xb0] sm:$0xf]
        %v1708 = vld [vmem:[%s1606 + $0xb4] sm:$0xf]
        %v1709 = vld [vmem:[%s1606 + $0xb8] sm:$0xf]
        %v1710 = vld [vmem:[%s1606 + $0xbc] sm:$0xf]
        %v1711 = vld [vmem:[%s1606 + $0xc0] sm:$0xf]
        %v1712 = vld [vmem:[%s1606 + $0xc4] sm:$0xf]
        %v1713 = vld [vmem:[%s1606 + $0xc8] sm:$0xf]
        %v1714 = vld [vmem:[%s1606 + $0xcc] sm:$0xf]
        %v1715 = vld [vmem:[%s1606 + $0xd0] sm:$0xf]
        %v1716 = vld [vmem:[%s1606 + $0xd4] sm:$0xf]
        %v1717 = vld [vmem:[%s1606 + $0xd8] sm:$0xf]
        %v1718 = vld [vmem:[%s1606 + $0xdc] sm:$0xf]
        %v1719 = vld [vmem:[%s1606 + $0xe0] sm:$0xf]
        %v1720 = vld [vmem:[%s1606 + $0xe4] sm:$0xf]
        %v1721 = vld [vmem:[%s1606 + $0xe8] sm:$0xf]
        %v1722 = vld [vmem:[%s1606 + $0xec] sm:$0xf]
        %v1723 = vld [vmem:[%s1606 + $0xf0] sm:$0xf]
        %v1724 = vld [vmem:[%s1606 + $0xf4] sm:$0xf]
        %v1725 = vld [vmem:[%s1606 + $0xf8] sm:$0xf]
        %v1726 = vld [vmem:[%s1606 + $0xfc] sm:$0xf]
        %v1727 = vld [vmem:[%s1606 + $0x100] sm:$0xf]
        %v1728 = vld [vmem:[%s1606 + $0x104] sm:$0xf]
        %v1729 = vld [vmem:[%s1606 + $0x108] sm:$0xf]
        %v1730 = vld [vmem:[%s1606 + $0x10c] sm:$0xf]
        %v1731 = vld [vmem:[%s1606 + $0x110] sm:$0xf]
        %v1732 = vld [vmem:[%s1606 + $0x114] sm:$0xf]
        %v1733 = vld [vmem:[%s1606 + $0x118] sm:$0xf]
        %v1734 = vld [vmem:[%s1606 + $0x11c] sm:$0xf]
        %v1735 = vld [vmem:[%s1606 + $0x120] sm:$0xf]
        %v1736 = vld [vmem:[%s1606 + $0x124] sm:$0xf]
        %v1737 = vld [vmem:[%s1606 + $0x128] sm:$0xf]
        %v1738 = vld [vmem:[%s1606 + $0x12c] sm:$0xf]
        %v1739 = vld [vmem:[%s1606 + $0x130] sm:$0xf]
        %v1740 = vld [vmem:[%s1606 + $0x134] sm:$0xf]
        %v1741 = vld [vmem:[%s1606 + $0x138] sm:$0xf]
        %v1742 = vld [vmem:[%s1606 + $0x13c] sm:$0xf]
        %v1743 = vld [vmem:[%s1606 + $0x140] sm:$0xf]
        %v1744 = vld [vmem:[%s1606 + $0x144] sm:$0xf]
        %v1745 = vld [vmem:[%s1606 + $0x148] sm:$0xf]
        %v1746 = vld [vmem:[%s1606 + $0x14c] sm:$0xf]
        %v1747 = vld [vmem:[%s1606 + $0x150] sm:$0xf]
        %v1748 = vld [vmem:[%s1606 + $0x154] sm:$0xf]
        %v1749 = vld [vmem:[%s1606 + $0x158] sm:$0xf]
        %v1750 = vld [vmem:[%s1606 + $0x15c] sm:$0xf]
        %v1751 = vld [vmem:[%s1606 + $0x160] sm:$0xf]
        %v1752 = vld [vmem:[%s1606 + $0x164] sm:$0xf]
        %v1753 = vld [vmem:[%s1606 + $0x168] sm:$0xf]
        %v1754 = vld [vmem:[%s1606 + $0x16c] sm:$0xf]
        %v1755 = vld [vmem:[%s1606 + $0x170] sm:$0xf]
        %v1756 = vld [vmem:[%s1606 + $0x174] sm:$0xf]
        %v1757 = vld [vmem:[%s1606 + $0x178] sm:$0xf]
        %v1758 = vld [vmem:[%s1606 + $0x17c] sm:$0xf]
        %v1759 = vld [vmem:[%s1606 + $0x180] sm:$0xf]
        %v1760 = vld [vmem:[%s1606 + $0x184] sm:$0xf]
        %v1761 = vld [vmem:[%s1606 + $0x188] sm:$0xf]
        %v1762 = vld [vmem:[%s1606 + $0x18c] sm:$0xf]
        %v1763 = vld [vmem:[%s1606 + $0x190] sm:$0xf]
        %v1764 = vld [vmem:[%s1606 + $0x194] sm:$0xf]
        %v1765 = vld [vmem:[%s1606 + $0x198] sm:$0xf]
        %v1766 = vld [vmem:[%s1606 + $0x19c] sm:$0xf]
        %v1767 = vld [vmem:[%s1606 + $0x1a0] sm:$0xf]
        %v1768 = vld [vmem:[%s1606 + $0x1a4] sm:$0xf]
        %v1769 = vld [vmem:[%s1606 + $0x1a8] sm:$0xf]
        %v1770 = vld [vmem:[%s1606 + $0x1ac] sm:$0xf]
        %v1771 = vld [vmem:[%s1606 + $0x1b0] sm:$0xf]
        %v1772 = vld [vmem:[%s1606 + $0x1b4] sm:$0xf]
        %v1773 = vld [vmem:[%s1606 + $0x1b8] sm:$0xf]
        %v1774 = vld [vmem:[%s1606 + $0x1bc] sm:$0xf]
        %v1775 = vld [vmem:[%s1606 + $0x1c0] sm:$0xf]
        %v1776 = vld [vmem:[%s1606 + $0x1c4] sm:$0xf]
        %v1777 = vld [vmem:[%s1606 + $0x1c8] sm:$0xf]
        %v1778 = vld [vmem:[%s1606 + $0x1cc] sm:$0xf]
        %v1779 = vld [vmem:[%s1606 + $0x1d0] sm:$0xf]
        %v1780 = vld [vmem:[%s1606 + $0x1d4] sm:$0xf]
        %v1781 = vld [vmem:[%s1606 + $0x1d8] sm:$0xf]
        %v1782 = vld [vmem:[%s1606 + $0x1dc] sm:$0xf]
        %v1783 = vld [vmem:[%s1606 + $0x1e0] sm:$0xf]
        %v1784 = vld [vmem:[%s1606 + $0x1e4] sm:$0xf]
        %v1785 = vld [vmem:[%s1606 + $0x1e8] sm:$0xf]
        %v1786 = vld [vmem:[%s1606 + $0x1ec] sm:$0xf]
        %v1787 = vld [vmem:[%s1606 + $0x1f0] sm:$0xf]
        %v1788 = vld [vmem:[%s1606 + $0x1f4] sm:$0xf]
        %v1789 = vld [vmem:[%s1606 + $0x1f8] sm:$0xf]
        %v1790 = vld [vmem:[%s1606 + $0x1fc] sm:$0xf]
        %v1791 = vld [vmem:[%s1606 + $0x200] sm:$0xf]
        %v1792 = vld [vmem:[%s1606 + $0x204] sm:$0xf]
        %v1793 = vld [vmem:[%s1606 + $0x208] sm:$0xf]
        %v1794 = vld [vmem:[%s1606 + $0x20c] sm:$0xf]
        %v1795 = vld [vmem:[%s1606 + $0x210] sm:$0xf]
        %v1796 = vld [vmem:[%s1606 + $0x214] sm:$0xf]
        %v1797 = vld [vmem:[%s1606 + $0x218] sm:$0xf]
        %v1798 = vld [vmem:[%s1606 + $0x21c] sm:$0xf]
        %v1799 = vld [vmem:[%s1606 + $0x220] sm:$0xf]
        %v1800 = vld [vmem:[%s1606 + $0x224] sm:$0xf]
        %v1801 = vld [vmem:[%s1606 + $0x228] sm:$0xf]
        %v1802 = vld [vmem:[%s1606 + $0x22c] sm:$0xf]
        %v1803 = vld [vmem:[%s1606 + $0x230] sm:$0xf]
        %v1804 = vld [vmem:[%s1606 + $0x234] sm:$0xf]
        %v1805 = vld [vmem:[%s1606 + $0x238] sm:$0xf]
        %v1806 = vld [vmem:[%s1606 + $0x23c] sm:$0xf]
        %v1807 = vld [vmem:[%s1606 + $0x240] sm:$0xf]
        %v1808 = vld [vmem:[%s1606 + $0x244] sm:$0xf]
        %v1809 = vld [vmem:[%s1606 + $0x248] sm:$0xf]
        %v1810 = vld [vmem:[%s1606 + $0x24c] sm:$0xf]
        %v1811 = vld [vmem:[%s1606 + $0x250] sm:$0xf]
        %v1812 = vld [vmem:[%s1606 + $0x254] sm:$0xf]
        %v1813 = vld [vmem:[%s1606 + $0x258] sm:$0xf]
        %v1814 = vld [vmem:[%s1606 + $0x25c] sm:$0xf]
        %v1815 = vld [vmem:[%s1606 + $0x260] sm:$0xf]
        %v1816 = vld [vmem:[%s1606 + $0x264] sm:$0xf]
        %v1817 = vld [vmem:[%s1606 + $0x268] sm:$0xf]
        %v1818 = vld [vmem:[%s1606 + $0x26c] sm:$0xf]
        %v1819 = vld [vmem:[%s1606 + $0x270] sm:$0xf]
        %v1820 = vld [vmem:[%s1606 + $0x274] sm:$0xf]
        %v1821 = vld [vmem:[%s1606 + $0x278] sm:$0xf]
        %v1822 = vld [vmem:[%s1606 + $0x27c] sm:$0xf]
        %v1823 = vld [vmem:[%s1606 + $0x280] sm:$0xf]
        %v1824 = vld [vmem:[%s1606 + $0x284] sm:$0xf]
        %v1825 = vld [vmem:[%s1606 + $0x288] sm:$0xf]
        %v1826 = vld [vmem:[%s1606 + $0x28c] sm:$0xf]
        %v1827 = vld [vmem:[%s1606 + $0x290] sm:$0xf]
        %v1828 = vld [vmem:[%s1606 + $0x294] sm:$0xf]
        %v1829 = vld [vmem:[%s1606 + $0x298] sm:$0xf]
        %v1830 = vld [vmem:[%s1606 + $0x29c] sm:$0xf]
        %v1831 = vld [vmem:[%s1606 + $0x2a0] sm:$0xf]
        %v1832 = vld [vmem:[%s1606 + $0x2a4] sm:$0xf]
        %v1833 = vld [vmem:[%s1606 + $0x2a8] sm:$0xf]
        %v1834 = vld [vmem:[%s1606 + $0x2ac] sm:$0xf]
        %v1835 = vld [vmem:[%s1606 + $0x2b0] sm:$0xf]
        %v1836 = vld [vmem:[%s1606 + $0x2b4] sm:$0xf]
        %v1837 = vld [vmem:[%s1606 + $0x2b8] sm:$0xf]
        %v1838 = vld [vmem:[%s1606 + $0x2bc] sm:$0xf]
        %v1839 = vld [vmem:[%s1606 + $0x2c0] sm:$0xf]
        %v1840 = vld [vmem:[%s1606 + $0x2c4] sm:$0xf]
        %v1841 = vld [vmem:[%s1606 + $0x2c8] sm:$0xf]
        %v1842 = vld [vmem:[%s1606 + $0x2cc] sm:$0xf]
        %v1843 = vld [vmem:[%s1606 + $0x2d0] sm:$0xf]
        %v1844 = vld [vmem:[%s1606 + $0x2d4] sm:$0xf]
        %v1845 = vld [vmem:[%s1606 + $0x2d8] sm:$0xf]
        %v1846 = vld [vmem:[%s1606 + $0x2dc] sm:$0xf]
        %v1847 = vld [vmem:[%s1606 + $0x2e0] sm:$0xf]
        %v1848 = vld [vmem:[%s1606 + $0x2e4] sm:$0xf]
        %v1849 = vld [vmem:[%s1606 + $0x2e8] sm:$0xf]
        %v1850 = vld [vmem:[%s1606 + $0x2ec] sm:$0xf]
        %v1851 = vld [vmem:[%s1606 + $0x2f0] sm:$0xf]
        %v1852 = vld [vmem:[%s1606 + $0x2f4] sm:$0xf]
        %v1853 = vld [vmem:[%s1606 + $0x2f8] sm:$0xf]
        %v1854 = vld [vmem:[%s1606 + $0x2fc] sm:$0xf]
        %v1855 = vld [vmem:[%s1606 + $0x300] sm:$0xf]
        %v1856 = vld [vmem:[%s1606 + $0x304] sm:$0xf]
        %v1857 = vld [vmem:[%s1606 + $0x308] sm:$0xf]
        %v1858 = vld [vmem:[%s1606 + $0x30c] sm:$0xf]
        %v1859 = vld [vmem:[%s1606 + $0x310] sm:$0xf]
        %v1860 = vld [vmem:[%s1606 + $0x314] sm:$0xf]
        %v1861 = vld [vmem:[%s1606 + $0x318] sm:$0xf]
        %v1862 = vld [vmem:[%s1606 + $0x31c] sm:$0xf]
        %v1863 = vld [vmem:[%s1606 + $0x320] sm:$0xf]
        %v1864 = vld [vmem:[%s1606 + $0x324] sm:$0xf]
        %v1865 = vld [vmem:[%s1606 + $0x328] sm:$0xf]
        %v1866 = vld [vmem:[%s1606 + $0x32c] sm:$0xf]
        %v1867 = vld [vmem:[%s1606 + $0x330] sm:$0xf]
        %v1868 = vld [vmem:[%s1606 + $0x334] sm:$0xf]
        %v1869 = vld [vmem:[%s1606 + $0x338] sm:$0xf]
        %v1870 = vld [vmem:[%s1606 + $0x33c] sm:$0xf]
        %v1871 = vld [vmem:[%s1606 + $0x340] sm:$0xf]
        %v1872 = vld [vmem:[%s1606 + $0x344] sm:$0xf]
        %v1873 = vld [vmem:[%s1606 + $0x348] sm:$0xf]
        %v1874 = vld [vmem:[%s1606 + $0x34c] sm:$0xf]
        %v1875 = vld [vmem:[%s1606 + $0x350] sm:$0xf]
        %v1876 = vld [vmem:[%s1606 + $0x354] sm:$0xf]
        %v1877 = vld [vmem:[%s1606 + $0x358] sm:$0xf]
        %v1878 = vld [vmem:[%s1606 + $0x35c] sm:$0xf]
        %v1879 = vld [vmem:[%s1606 + $0x360] sm:$0xf]
        %v1880 = vld [vmem:[%s1606 + $0x364] sm:$0xf]
        %v1881 = vld [vmem:[%s1606 + $0x368] sm:$0xf]
        %v1882 = vld [vmem:[%s1606 + $0x36c] sm:$0xf]
        %v1883 = vld [vmem:[%s1606 + $0x370] sm:$0xf]
        %v1884 = vld [vmem:[%s1606 + $0x374] sm:$0xf]
        %v1885 = vld [vmem:[%s1606 + $0x378] sm:$0xf]
        %v1886 = vld [vmem:[%s1606 + $0x37c] sm:$0xf]
        %v1887 = vld [vmem:[%s1606 + $0x380] sm:$0xf]
        %v1888 = vld [vmem:[%s1606 + $0x384] sm:$0xf]
        %v1889 = vld [vmem:[%s1606 + $0x388] sm:$0xf]
        %v1890 = vld [vmem:[%s1606 + $0x38c] sm:$0xf]
        %v1891 = vld [vmem:[%s1606 + $0x390] sm:$0xf]
        %v1892 = vld [vmem:[%s1606 + $0x394] sm:$0xf]
        %v1893 = vld [vmem:[%s1606 + $0x398] sm:$0xf]
        %v1894 = vld [vmem:[%s1606 + $0x39c] sm:$0xf]
        %v1895 = vld [vmem:[%s1606 + $0x3a0] sm:$0xf]
        %v1896 = vld [vmem:[%s1606 + $0x3a4] sm:$0xf]
        %v1897 = vld [vmem:[%s1606 + $0x3a8] sm:$0xf]
        %v1898 = vld [vmem:[%s1606 + $0x3ac] sm:$0xf]
        %v1899 = vld [vmem:[%s1606 + $0x3b0] sm:$0xf]
        %v1900 = vld [vmem:[%s1606 + $0x3b4] sm:$0xf]
        %v1901 = vld [vmem:[%s1606 + $0x3b8] sm:$0xf]
        %v1902 = vld [vmem:[%s1606 + $0x3bc] sm:$0xf]
        %v1903 = vld [vmem:[%s1606 + $0x3c0] sm:$0xf]
        %v1904 = vld [vmem:[%s1606 + $0x3c4] sm:$0xf]
        %v1905 = vld [vmem:[%s1606 + $0x3c8] sm:$0xf]
        %v1906 = vld [vmem:[%s1606 + $0x3cc] sm:$0xf]
        %v1907 = vld [vmem:[%s1606 + $0x3d0] sm:$0xf]
        %v1908 = vld [vmem:[%s1606 + $0x3d4] sm:$0xf]
        %v1909 = vld [vmem:[%s1606 + $0x3d8] sm:$0xf]
        %v1910 = vld [vmem:[%s1606 + $0x3dc] sm:$0xf]
        %v1911 = vld [vmem:[%s1606 + $0x3e0] sm:$0xf]
        %v1912 = vld [vmem:[%s1606 + $0x3e4] sm:$0xf]
        %v1913 = vld [vmem:[%s1606 + $0x3e8] sm:$0xf]
        %v1914 = vld [vmem:[%s1606 + $0x3ec] sm:$0xf]
        %v1915 = vld [vmem:[%s1606 + $0x3f0] sm:$0xf]
        %v1916 = vld [vmem:[%s1606 + $0x3f4] sm:$0xf]
        %v1917 = vld [vmem:[%s1606 + $0x3f8] sm:$0xf]
        %v1918 = vld [vmem:[%s1606 + $0x3fc] sm:$0xf]
        %1976 = vrot.lane.b32.xlu0 0, 4
        %v1977 = vpop.permute.xlu0 %1976
        %1978 = vrot.lane.b32.xlu0 %v1679, 4
        %v1979 = vpop.permute.xlu0 %1978
        %1980 = vrot.lane.b32.xlu0 %v1681, 4
        %v1981 = vpop.permute.xlu0 %1980
        %1982 = vrot.lane.b32.xlu0 %v1683, 4
        %v1983 = vpop.permute.xlu0 %1982
        %1984 = vrot.lane.b32.xlu0 %v1685, 4
        %v1985 = vpop.permute.xlu0 %1984
        %1986 = vrot.lane.b32.xlu0 %v1687, 4
        %v1987 = vpop.permute.xlu0 %1986
        %1988 = vrot.lane.b32.xlu0 %v1689, 4
        %v1989 = vpop.permute.xlu0 %1988
        %1990 = vrot.lane.b32.xlu0 %v1691, 4
        %v1991 = vpop.permute.xlu0 %1990
        %1992 = vrot.lane.b32.xlu0 %v1693, 4
        %v1993 = vpop.permute.xlu0 %1992
        %1994 = vrot.lane.b32.xlu0 %v1711, 4
        %v1995 = vpop.permute.xlu0 %1994
        %1996 = vrot.lane.b32.xlu0 %v1713, 4
        %v1997 = vpop.permute.xlu0 %1996
        %1998 = vrot.lane.b32.xlu0 %v1715, 4
        %v1999 = vpop.permute.xlu0 %1998
        %2000 = vrot.lane.b32.xlu0 %v1717, 4
        %v2001 = vpop.permute.xlu0 %2000
        %2002 = vrot.lane.b32.xlu0 %v1719, 4
        %v2003 = vpop.permute.xlu0 %2002
        %2004 = vrot.lane.b32.xlu0 %v1721, 4
        %v2005 = vpop.permute.xlu0 %2004
        %2006 = vrot.lane.b32.xlu0 %v1723, 4
        %v2007 = vpop.permute.xlu0 %2006
        %2008 = vrot.lane.b32.xlu0 %v1725, 4
        %v2009 = vpop.permute.xlu0 %2008
        %2010 = vrot.lane.b32.xlu0 %v1743, 4
        %v2011 = vpop.permute.xlu0 %2010
        %2012 = vrot.lane.b32.xlu0 %v1745, 4
        %v2013 = vpop.permute.xlu0 %2012
        %2014 = vrot.lane.b32.xlu0 %v1747, 4
        %v2015 = vpop.permute.xlu0 %2014
        %2016 = vrot.lane.b32.xlu0 %v1749, 4
        %v2017 = vpop.permute.xlu0 %2016
        %2018 = vrot.lane.b32.xlu0 %v1751, 4
        %v2019 = vpop.permute.xlu0 %2018
        %2020 = vrot.lane.b32.xlu0 %v1753, 4
        %v2021 = vpop.permute.xlu0 %2020
        %2022 = vrot.lane.b32.xlu0 %v1755, 4
        %v2023 = vpop.permute.xlu0 %2022
        %2024 = vrot.lane.b32.xlu0 %v1757, 4
        %v2025 = vpop.permute.xlu0 %2024
        %2026 = vrot.lane.b32.xlu0 %v1775, 4
        %v2027 = vpop.permute.xlu0 %2026
        %2028 = vrot.lane.b32.xlu0 %v1777, 4
        %v2029 = vpop.permute.xlu0 %2028
        %2030 = vrot.lane.b32.xlu0 %v1779, 4
        %v2031 = vpop.permute.xlu0 %2030
        %2032 = vrot.lane.b32.xlu0 %v1781, 4
        %v2033 = vpop.permute.xlu0 %2032
        %2034 = vrot.lane.b32.xlu0 %v1783, 4
        %v2035 = vpop.permute.xlu0 %2034
        %2036 = vrot.lane.b32.xlu0 %v1785, 4
        %v2037 = vpop.permute.xlu0 %2036
        %2038 = vrot.lane.b32.xlu0 %v1787, 4
        %v2039 = vpop.permute.xlu0 %2038
        %2040 = vrot.lane.b32.xlu0 %v1789, 4
        %v2041 = vpop.permute.xlu0 %2040
        %2042 = vrot.lane.b32.xlu0 %v1807, 4
        %v2043 = vpop.permute.xlu0 %2042
        %2044 = vrot.lane.b32.xlu0 %v1809, 4
        %v2045 = vpop.permute.xlu0 %2044
        %2046 = vrot.lane.b32.xlu0 %v1811, 4
        %v2047 = vpop.permute.xlu0 %2046
        %2048 = vrot.lane.b32.xlu0 %v1813, 4
        %v2049 = vpop.permute.xlu0 %2048
        %2050 = vrot.lane.b32.xlu0 %v1815, 4
        %v2051 = vpop.permute.xlu0 %2050
        %2052 = vrot.lane.b32.xlu0 %v1817, 4
        %v2053 = vpop.permute.xlu0 %2052
        %2054 = vrot.lane.b32.xlu0 %v1819, 4
        %v2055 = vpop.permute.xlu0 %2054
        %2056 = vrot.lane.b32.xlu0 %v1821, 4
        %v2057 = vpop.permute.xlu0 %2056
        %2058 = vrot.lane.b32.xlu0 %v1839, 4
        %v2059 = vpop.permute.xlu0 %2058
        %2060 = vrot.lane.b32.xlu0 %v1841, 4
        %v2061 = vpop.permute.xlu0 %2060
        %2062 = vrot.lane.b32.xlu0 %v1843, 4
        %v2063 = vpop.permute.xlu0 %2062
        %2064 = vrot.lane.b32.xlu0 %v1845, 4
        %v2065 = vpop.permute.xlu0 %2064
        %2066 = vrot.lane.b32.xlu0 %v1847, 4
        %v2067 = vpop.permute.xlu0 %2066
        %2068 = vrot.lane.b32.xlu0 %v1849, 4
        %v2069 = vpop.permute.xlu0 %2068
        %2070 = vrot.lane.b32.xlu0 %v1851, 4
        %v2071 = vpop.permute.xlu0 %2070
        %2072 = vrot.lane.b32.xlu0 %v1853, 4
        %v2073 = vpop.permute.xlu0 %2072
        %2074 = vrot.lane.b32.xlu0 %v1871, 4
        %v2075 = vpop.permute.xlu0 %2074
        %2076 = vrot.lane.b32.xlu0 %v1873, 4
        %v2077 = vpop.permute.xlu0 %2076
        %2078 = vrot.lane.b32.xlu0 %v1875, 4
        %v2079 = vpop.permute.xlu0 %2078
        %2080 = vrot.lane.b32.xlu0 %v1877, 4
        %v2081 = vpop.permute.xlu0 %2080
        %2082 = vrot.lane.b32.xlu0 %v1879, 4
        %v2083 = vpop.permute.xlu0 %2082
        %2084 = vrot.lane.b32.xlu0 %v1881, 4
        %v2085 = vpop.permute.xlu0 %2084
        %2086 = vrot.lane.b32.xlu0 %v1883, 4
        %v2087 = vpop.permute.xlu0 %2086
        %2088 = vrot.lane.b32.xlu0 %v1885, 4
        %v2089 = vpop.permute.xlu0 %2088
        %2146 = vrot.lane.b32.xlu0 0, 8
        %v2147 = vpop.permute.xlu0 %2146
        %2148 = vrot.lane.b32.xlu0 %v1680, 8
        %v2149 = vpop.permute.xlu0 %2148
        %2150 = vrot.lane.b32.xlu0 %v1682, 8
        %v2151 = vpop.permute.xlu0 %2150
        %2152 = vrot.lane.b32.xlu0 %v1684, 8
        %v2153 = vpop.permute.xlu0 %2152
        %2154 = vrot.lane.b32.xlu0 %v1686, 8
        %v2155 = vpop.permute.xlu0 %2154
        %2156 = vrot.lane.b32.xlu0 %v1688, 8
        %v2157 = vpop.permute.xlu0 %2156
        %2158 = vrot.lane.b32.xlu0 %v1690, 8
        %v2159 = vpop.permute.xlu0 %2158
        %2160 = vrot.lane.b32.xlu0 %v1692, 8
        %v2161 = vpop.permute.xlu0 %2160
        %2162 = vrot.lane.b32.xlu0 %v1694, 8
        %v2163 = vpop.permute.xlu0 %2162
        %2164 = vrot.lane.b32.xlu0 %v1712, 8
        %v2165 = vpop.permute.xlu0 %2164
        %2166 = vrot.lane.b32.xlu0 %v1714, 8
        %v2167 = vpop.permute.xlu0 %2166
        %2168 = vrot.lane.b32.xlu0 %v1716, 8
        %v2169 = vpop.permute.xlu0 %2168
        %2170 = vrot.lane.b32.xlu0 %v1718, 8
        %v2171 = vpop.permute.xlu0 %2170
        %2172 = vrot.lane.b32.xlu0 %v1720, 8
        %v2173 = vpop.permute.xlu0 %2172
        %2174 = vrot.lane.b32.xlu0 %v1722, 8
        %v2175 = vpop.permute.xlu0 %2174
        %2176 = vrot.lane.b32.xlu0 %v1724, 8
        %v2177 = vpop.permute.xlu0 %2176
        %2178 = vrot.lane.b32.xlu0 %v1726, 8
        %v2179 = vpop.permute.xlu0 %2178
        %2180 = vrot.lane.b32.xlu0 %v1744, 8
        %v2181 = vpop.permute.xlu0 %2180
        %2182 = vrot.lane.b32.xlu0 %v1746, 8
        %v2183 = vpop.permute.xlu0 %2182
        %2184 = vrot.lane.b32.xlu0 %v1748, 8
        %v2185 = vpop.permute.xlu0 %2184
        %2186 = vrot.lane.b32.xlu0 %v1750, 8
        %v2187 = vpop.permute.xlu0 %2186
        %2188 = vrot.lane.b32.xlu0 %v1752, 8
        %v2189 = vpop.permute.xlu0 %2188
        %2190 = vrot.lane.b32.xlu0 %v1754, 8
        %v2191 = vpop.permute.xlu0 %2190
        %2192 = vrot.lane.b32.xlu0 %v1756, 8
        %v2193 = vpop.permute.xlu0 %2192
        %2194 = vrot.lane.b32.xlu0 %v1758, 8
        %v2195 = vpop.permute.xlu0 %2194
        %2196 = vrot.lane.b32.xlu0 %v1776, 8
        %v2197 = vpop.permute.xlu0 %2196
        %2198 = vrot.lane.b32.xlu0 %v1778, 8
        %v2199 = vpop.permute.xlu0 %2198
        %2200 = vrot.lane.b32.xlu0 %v1780, 8
        %v2201 = vpop.permute.xlu0 %2200
        %2202 = vrot.lane.b32.xlu0 %v1782, 8
        %v2203 = vpop.permute.xlu0 %2202
        %2204 = vrot.lane.b32.xlu0 %v1784, 8
        %v2205 = vpop.permute.xlu0 %2204
        %2206 = vrot.lane.b32.xlu0 %v1786, 8
        %v2207 = vpop.permute.xlu0 %2206
        %2208 = vrot.lane.b32.xlu0 %v1788, 8
        %v2209 = vpop.permute.xlu0 %2208
        %2210 = vrot.lane.b32.xlu0 %v1790, 8
        %v2211 = vpop.permute.xlu0 %2210
        %2212 = vrot.lane.b32.xlu0 %v1808, 8
        %v2213 = vpop.permute.xlu0 %2212
        %2214 = vrot.lane.b32.xlu0 %v1810, 8
        %v2215 = vpop.permute.xlu0 %2214
        %2216 = vrot.lane.b32.xlu0 %v1812, 8
        %v2217 = vpop.permute.xlu0 %2216
        %2218 = vrot.lane.b32.xlu0 %v1814, 8
        %v2219 = vpop.permute.xlu0 %2218
        %2220 = vrot.lane.b32.xlu0 %v1816, 8
        %v2221 = vpop.permute.xlu0 %2220
        %2222 = vrot.lane.b32.xlu0 %v1818, 8
        %v2223 = vpop.permute.xlu0 %2222
        %2224 = vrot.lane.b32.xlu0 %v1820, 8
        %v2225 = vpop.permute.xlu0 %2224
        %2226 = vrot.lane.b32.xlu0 %v1822, 8
        %v2227 = vpop.permute.xlu0 %2226
        %2228 = vrot.lane.b32.xlu0 %v1840, 8
        %v2229 = vpop.permute.xlu0 %2228
        %2230 = vrot.lane.b32.xlu0 %v1842, 8
        %v2231 = vpop.permute.xlu0 %2230
        %2232 = vrot.lane.b32.xlu0 %v1844, 8
        %v2233 = vpop.permute.xlu0 %2232
        %2234 = vrot.lane.b32.xlu0 %v1846, 8
        %v2235 = vpop.permute.xlu0 %2234
        %2236 = vrot.lane.b32.xlu0 %v1848, 8
        %v2237 = vpop.permute.xlu0 %2236
        %2238 = vrot.lane.b32.xlu0 %v1850, 8
        %v2239 = vpop.permute.xlu0 %2238
        %2240 = vrot.lane.b32.xlu0 %v1852, 8
        %v2241 = vpop.permute.xlu0 %2240
        %2242 = vrot.lane.b32.xlu0 %v1854, 8
        %v2243 = vpop.permute.xlu0 %2242
        %2244 = vrot.lane.b32.xlu0 %v1872, 8
        %v2245 = vpop.permute.xlu0 %2244
        %2246 = vrot.lane.b32.xlu0 %v1874, 8
        %v2247 = vpop.permute.xlu0 %2246
        %2248 = vrot.lane.b32.xlu0 %v1876, 8
        %v2249 = vpop.permute.xlu0 %2248
        %2250 = vrot.lane.b32.xlu0 %v1878, 8
        %v2251 = vpop.permute.xlu0 %2250
        %2252 = vrot.lane.b32.xlu0 %v1880, 8
        %v2253 = vpop.permute.xlu0 %2252
        %2254 = vrot.lane.b32.xlu0 %v1882, 8
        %v2255 = vpop.permute.xlu0 %2254
        %2256 = vrot.lane.b32.xlu0 %v1884, 8
        %v2257 = vpop.permute.xlu0 %2256
        %2258 = vrot.lane.b32.xlu0 %v1886, 8
        %v2259 = vpop.permute.xlu0 %2258
        %2316 = vrot.lane.b32.xlu0 0, 12
        %v2317 = vpop.permute.xlu0 %2316
        %2318 = vrot.lane.b32.xlu0 %v1664, 12
        %v2319 = vpop.permute.xlu0 %2318
        %2320 = vrot.lane.b32.xlu0 %v1666, 12
        %v2321 = vpop.permute.xlu0 %2320
        %2322 = vrot.lane.b32.xlu0 %v1668, 12
        %v2323 = vpop.permute.xlu0 %2322
        %2324 = vrot.lane.b32.xlu0 %v1670, 12
        %v2325 = vpop.permute.xlu0 %2324
        %2326 = vrot.lane.b32.xlu0 %v1672, 12
        %v2327 = vpop.permute.xlu0 %2326
        %2328 = vrot.lane.b32.xlu0 %v1674, 12
        %v2329 = vpop.permute.xlu0 %2328
        %2330 = vrot.lane.b32.xlu0 %v1676, 12
        %v2331 = vpop.permute.xlu0 %2330
        %2332 = vrot.lane.b32.xlu0 %v1696, 12
        %v2333 = vpop.permute.xlu0 %2332
        %2334 = vrot.lane.b32.xlu0 %v1698, 12
        %v2335 = vpop.permute.xlu0 %2334
        %2336 = vrot.lane.b32.xlu0 %v1700, 12
        %v2337 = vpop.permute.xlu0 %2336
        %2338 = vrot.lane.b32.xlu0 %v1702, 12
        %v2339 = vpop.permute.xlu0 %2338
        %2340 = vrot.lane.b32.xlu0 %v1704, 12
        %v2341 = vpop.permute.xlu0 %2340
        %2342 = vrot.lane.b32.xlu0 %v1706, 12
        %v2343 = vpop.permute.xlu0 %2342
        %2344 = vrot.lane.b32.xlu0 %v1708, 12
        %v2345 = vpop.permute.xlu0 %2344
        %2346 = vrot.lane.b32.xlu0 %v1728, 12
        %v2347 = vpop.permute.xlu0 %2346
        %2348 = vrot.lane.b32.xlu0 %v1730, 12
        %v2349 = vpop.permute.xlu0 %2348
        %2350 = vrot.lane.b32.xlu0 %v1732, 12
        %v2351 = vpop.permute.xlu0 %2350
        %2352 = vrot.lane.b32.xlu0 %v1734, 12
        %v2353 = vpop.permute.xlu0 %2352
        %2354 = vrot.lane.b32.xlu0 %v1736, 12
        %v2355 = vpop.permute.xlu0 %2354
        %2356 = vrot.lane.b32.xlu0 %v1738, 12
        %v2357 = vpop.permute.xlu0 %2356
        %2358 = vrot.lane.b32.xlu0 %v1740, 12
        %v2359 = vpop.permute.xlu0 %2358
        %2360 = vrot.lane.b32.xlu0 %v1760, 12
        %v2361 = vpop.permute.xlu0 %2360
        %2362 = vrot.lane.b32.xlu0 %v1762, 12
        %v2363 = vpop.permute.xlu0 %2362
        %2364 = vrot.lane.b32.xlu0 %v1764, 12
        %v2365 = vpop.permute.xlu0 %2364
        %2366 = vrot.lane.b32.xlu0 %v1766, 12
        %v2367 = vpop.permute.xlu0 %2366
        %2368 = vrot.lane.b32.xlu0 %v1768, 12
        %v2369 = vpop.permute.xlu0 %2368
        %2370 = vrot.lane.b32.xlu0 %v1770, 12
        %v2371 = vpop.permute.xlu0 %2370
        %2372 = vrot.lane.b32.xlu0 %v1772, 12
        %v2373 = vpop.permute.xlu0 %2372
        %2374 = vrot.lane.b32.xlu0 %v1792, 12
        %v2375 = vpop.permute.xlu0 %2374
        %2376 = vrot.lane.b32.xlu0 %v1794, 12
        %v2377 = vpop.permute.xlu0 %2376
        %2378 = vrot.lane.b32.xlu0 %v1796, 12
        %v2379 = vpop.permute.xlu0 %2378
        %2380 = vrot.lane.b32.xlu0 %v1798, 12
        %v2381 = vpop.permute.xlu0 %2380
        %2382 = vrot.lane.b32.xlu0 %v1800, 12
        %v2383 = vpop.permute.xlu0 %2382
        %2384 = vrot.lane.b32.xlu0 %v1802, 12
        %v2385 = vpop.permute.xlu0 %2384
        %2386 = vrot.lane.b32.xlu0 %v1804, 12
        %v2387 = vpop.permute.xlu0 %2386
        %2388 = vrot.lane.b32.xlu0 %v1824, 12
        %v2389 = vpop.permute.xlu0 %2388
        %2390 = vrot.lane.b32.xlu0 %v1826, 12
        %v2391 = vpop.permute.xlu0 %2390
        %2392 = vrot.lane.b32.xlu0 %v1828, 12
        %v2393 = vpop.permute.xlu0 %2392
        %2394 = vrot.lane.b32.xlu0 %v1830, 12
        %v2395 = vpop.permute.xlu0 %2394
        %2396 = vrot.lane.b32.xlu0 %v1832, 12
        %v2397 = vpop.permute.xlu0 %2396
        %2398 = vrot.lane.b32.xlu0 %v1834, 12
        %v2399 = vpop.permute.xlu0 %2398
        %2400 = vrot.lane.b32.xlu0 %v1836, 12
        %v2401 = vpop.permute.xlu0 %2400
        %2402 = vrot.lane.b32.xlu0 %v1856, 12
        %v2403 = vpop.permute.xlu0 %2402
        %2404 = vrot.lane.b32.xlu0 %v1858, 12
        %v2405 = vpop.permute.xlu0 %2404
        %2406 = vrot.lane.b32.xlu0 %v1860, 12
        %v2407 = vpop.permute.xlu0 %2406
        %2408 = vrot.lane.b32.xlu0 %v1862, 12
        %v2409 = vpop.permute.xlu0 %2408
        %2410 = vrot.lane.b32.xlu0 %v1864, 12
        %v2411 = vpop.permute.xlu0 %2410
        %2412 = vrot.lane.b32.xlu0 %v1866, 12
        %v2413 = vpop.permute.xlu0 %2412
        %2414 = vrot.lane.b32.xlu0 %v1868, 12
        %v2415 = vpop.permute.xlu0 %2414
        %2416 = vrot.lane.b32.xlu0 %v1888, 12
        %v2417 = vpop.permute.xlu0 %2416
        %2418 = vrot.lane.b32.xlu0 %v1890, 12
        %v2419 = vpop.permute.xlu0 %2418
        %2420 = vrot.lane.b32.xlu0 %v1892, 12
        %v2421 = vpop.permute.xlu0 %2420
        %2422 = vrot.lane.b32.xlu0 %v1894, 12
        %v2423 = vpop.permute.xlu0 %2422
        %2424 = vrot.lane.b32.xlu0 %v1896, 12
        %v2425 = vpop.permute.xlu0 %2424
        %2426 = vrot.lane.b32.xlu0 %v1898, 12
        %v2427 = vpop.permute.xlu0 %2426
        %2428 = vrot.lane.b32.xlu0 %v1900, 12
        %v2429 = vpop.permute.xlu0 %2428
        %2494 = vrot.lane.b32.xlu0 %v1663, 16
        %v2495 = vpop.permute.xlu0 %2494
        %2496 = vrot.lane.b32.xlu0 %v1665, 16
        %v2497 = vpop.permute.xlu0 %2496
        %2498 = vrot.lane.b32.xlu0 %v1667, 16
        %v2499 = vpop.permute.xlu0 %2498
        %2500 = vrot.lane.b32.xlu0 %v1669, 16
        %v2501 = vpop.permute.xlu0 %2500
        %2502 = vrot.lane.b32.xlu0 %v1671, 16
        %v2503 = vpop.permute.xlu0 %2502
        %2504 = vrot.lane.b32.xlu0 %v1673, 16
        %v2505 = vpop.permute.xlu0 %2504
        %2506 = vrot.lane.b32.xlu0 %v1675, 16
        %v2507 = vpop.permute.xlu0 %2506
        %2508 = vrot.lane.b32.xlu0 %v1677, 16
        %v2509 = vpop.permute.xlu0 %2508
        %2510 = vrot.lane.b32.xlu0 %v1695, 16
        %v2511 = vpop.permute.xlu0 %2510
        %2512 = vrot.lane.b32.xlu0 %v1697, 16
        %v2513 = vpop.permute.xlu0 %2512
        %2514 = vrot.lane.b32.xlu0 %v1699, 16
        %v2515 = vpop.permute.xlu0 %2514
        %2516 = vrot.lane.b32.xlu0 %v1701, 16
        %v2517 = vpop.permute.xlu0 %2516
        %2518 = vrot.lane.b32.xlu0 %v1703, 16
        %v2519 = vpop.permute.xlu0 %2518
        %2520 = vrot.lane.b32.xlu0 %v1705, 16
        %v2521 = vpop.permute.xlu0 %2520
        %2522 = vrot.lane.b32.xlu0 %v1707, 16
        %v2523 = vpop.permute.xlu0 %2522
        %2524 = vrot.lane.b32.xlu0 %v1709, 16
        %v2525 = vpop.permute.xlu0 %2524
        %2526 = vrot.lane.b32.xlu0 %v1727, 16
        %v2527 = vpop.permute.xlu0 %2526
        %2528 = vrot.lane.b32.xlu0 %v1729, 16
        %v2529 = vpop.permute.xlu0 %2528
        %2530 = vrot.lane.b32.xlu0 %v1731, 16
        %v2531 = vpop.permute.xlu0 %2530
        %2532 = vrot.lane.b32.xlu0 %v1733, 16
        %v2533 = vpop.permute.xlu0 %2532
        %2534 = vrot.lane.b32.xlu0 %v1735, 16
        %v2535 = vpop.permute.xlu0 %2534
        %2536 = vrot.lane.b32.xlu0 %v1737, 16
        %v2537 = vpop.permute.xlu0 %2536
        %2538 = vrot.lane.b32.xlu0 %v1739, 16
        %v2539 = vpop.permute.xlu0 %2538
        %2540 = vrot.lane.b32.xlu0 %v1741, 16
        %v2541 = vpop.permute.xlu0 %2540
        %2542 = vrot.lane.b32.xlu0 %v1759, 16
        %v2543 = vpop.permute.xlu0 %2542
        %2544 = vrot.lane.b32.xlu0 %v1761, 16
        %v2545 = vpop.permute.xlu0 %2544
        %2546 = vrot.lane.b32.xlu0 %v1763, 16
        %v2547 = vpop.permute.xlu0 %2546
        %2548 = vrot.lane.b32.xlu0 %v1765, 16
        %v2549 = vpop.permute.xlu0 %2548
        %2550 = vrot.lane.b32.xlu0 %v1767, 16
        %v2551 = vpop.permute.xlu0 %2550
        %2552 = vrot.lane.b32.xlu0 %v1769, 16
        %v2553 = vpop.permute.xlu0 %2552
        %2554 = vrot.lane.b32.xlu0 %v1771, 16
        %v2555 = vpop.permute.xlu0 %2554
        %2556 = vrot.lane.b32.xlu0 %v1773, 16
        %v2557 = vpop.permute.xlu0 %2556
        %2558 = vrot.lane.b32.xlu0 %v1791, 16
        %v2559 = vpop.permute.xlu0 %2558
        %2560 = vrot.lane.b32.xlu0 %v1793, 16
        %v2561 = vpop.permute.xlu0 %2560
        %2562 = vrot.lane.b32.xlu0 %v1795, 16
        %v2563 = vpop.permute.xlu0 %2562
        %2564 = vrot.lane.b32.xlu0 %v1797, 16
        %v2565 = vpop.permute.xlu0 %2564
        %2566 = vrot.lane.b32.xlu0 %v1799, 16
        %v2567 = vpop.permute.xlu0 %2566
        %2568 = vrot.lane.b32.xlu0 %v1801, 16
        %v2569 = vpop.permute.xlu0 %2568
        %2570 = vrot.lane.b32.xlu0 %v1803, 16
        %v2571 = vpop.permute.xlu0 %2570
        %2572 = vrot.lane.b32.xlu0 %v1805, 16
        %v2573 = vpop.permute.xlu0 %2572
        %2574 = vrot.lane.b32.xlu0 %v1823, 16
        %v2575 = vpop.permute.xlu0 %2574
        %2576 = vrot.lane.b32.xlu0 %v1825, 16
        %v2577 = vpop.permute.xlu0 %2576
        %2578 = vrot.lane.b32.xlu0 %v1827, 16
        %v2579 = vpop.permute.xlu0 %2578
        %2580 = vrot.lane.b32.xlu0 %v1829, 16
        %v2581 = vpop.permute.xlu0 %2580
        %2582 = vrot.lane.b32.xlu0 %v1831, 16
        %v2583 = vpop.permute.xlu0 %2582
        %2584 = vrot.lane.b32.xlu0 %v1833, 16
        %v2585 = vpop.permute.xlu0 %2584
        %2586 = vrot.lane.b32.xlu0 %v1835, 16
        %v2587 = vpop.permute.xlu0 %2586
        %2588 = vrot.lane.b32.xlu0 %v1837, 16
        %v2589 = vpop.permute.xlu0 %2588
        %2590 = vrot.lane.b32.xlu0 %v1855, 16
        %v2591 = vpop.permute.xlu0 %2590
        %2592 = vrot.lane.b32.xlu0 %v1857, 16
        %v2593 = vpop.permute.xlu0 %2592
        %2594 = vrot.lane.b32.xlu0 %v1859, 16
        %v2595 = vpop.permute.xlu0 %2594
        %2596 = vrot.lane.b32.xlu0 %v1861, 16
        %v2597 = vpop.permute.xlu0 %2596
        %2598 = vrot.lane.b32.xlu0 %v1863, 16
        %v2599 = vpop.permute.xlu0 %2598
        %2600 = vrot.lane.b32.xlu0 %v1865, 16
        %v2601 = vpop.permute.xlu0 %2600
        %2602 = vrot.lane.b32.xlu0 %v1867, 16
        %v2603 = vpop.permute.xlu0 %2602
        %2604 = vrot.lane.b32.xlu0 %v1869, 16
        %v2605 = vpop.permute.xlu0 %2604
        %2606 = vrot.lane.b32.xlu0 %v1887, 16
        %v2607 = vpop.permute.xlu0 %2606
        %2608 = vrot.lane.b32.xlu0 %v1889, 16
        %v2609 = vpop.permute.xlu0 %2608
        %2610 = vrot.lane.b32.xlu0 %v1891, 16
        %v2611 = vpop.permute.xlu0 %2610
        %2612 = vrot.lane.b32.xlu0 %v1893, 16
        %v2613 = vpop.permute.xlu0 %2612
        %2614 = vrot.lane.b32.xlu0 %v1895, 16
        %v2615 = vpop.permute.xlu0 %2614
        %2616 = vrot.lane.b32.xlu0 %v1897, 16
        %v2617 = vpop.permute.xlu0 %2616
        %2618 = vrot.lane.b32.xlu0 %v1899, 16
        %v2619 = vpop.permute.xlu0 %2618
        %2620 = vrot.lane.b32.xlu0 %v1901, 16
        %v2621 = vpop.permute.xlu0 %2620
        %2630 = vrot.lane.b32.xlu0 %v1664, 20
        %v2631 = vpop.permute.xlu0 %2630
        %2632 = vrot.lane.b32.xlu0 %v1666, 20
        %v2633 = vpop.permute.xlu0 %2632
        %2634 = vrot.lane.b32.xlu0 %v1668, 20
        %v2635 = vpop.permute.xlu0 %2634
        %2636 = vrot.lane.b32.xlu0 %v1670, 20
        %v2637 = vpop.permute.xlu0 %2636
        %2638 = vrot.lane.b32.xlu0 %v1672, 20
        %v2639 = vpop.permute.xlu0 %2638
        %2640 = vrot.lane.b32.xlu0 %v1674, 20
        %v2641 = vpop.permute.xlu0 %2640
        %2642 = vrot.lane.b32.xlu0 %v1676, 20
        %v2643 = vpop.permute.xlu0 %2642
        %2644 = vrot.lane.b32.xlu0 %v1678, 20
        %v2645 = vpop.permute.xlu0 %2644
        %2646 = vrot.lane.b32.xlu0 %v1696, 20
        %v2647 = vpop.permute.xlu0 %2646
        %2648 = vrot.lane.b32.xlu0 %v1698, 20
        %v2649 = vpop.permute.xlu0 %2648
        %2650 = vrot.lane.b32.xlu0 %v1700, 20
        %v2651 = vpop.permute.xlu0 %2650
        %2652 = vrot.lane.b32.xlu0 %v1702, 20
        %v2653 = vpop.permute.xlu0 %2652
        %2654 = vrot.lane.b32.xlu0 %v1704, 20
        %v2655 = vpop.permute.xlu0 %2654
        %2656 = vrot.lane.b32.xlu0 %v1706, 20
        %v2657 = vpop.permute.xlu0 %2656
        %2658 = vrot.lane.b32.xlu0 %v1708, 20
        %v2659 = vpop.permute.xlu0 %2658
        %2660 = vrot.lane.b32.xlu0 %v1710, 20
        %v2661 = vpop.permute.xlu0 %2660
        %2662 = vrot.lane.b32.xlu0 %v1728, 20
        %v2663 = vpop.permute.xlu0 %2662
        %2664 = vrot.lane.b32.xlu0 %v1730, 20
        %v2665 = vpop.permute.xlu0 %2664
        %2666 = vrot.lane.b32.xlu0 %v1732, 20
        %v2667 = vpop.permute.xlu0 %2666
        %2668 = vrot.lane.b32.xlu0 %v1734, 20
        %v2669 = vpop.permute.xlu0 %2668
        %2670 = vrot.lane.b32.xlu0 %v1736, 20
        %v2671 = vpop.permute.xlu0 %2670
        %2672 = vrot.lane.b32.xlu0 %v1738, 20
        %v2673 = vpop.permute.xlu0 %2672
        %2674 = vrot.lane.b32.xlu0 %v1740, 20
        %v2675 = vpop.permute.xlu0 %2674
        %2676 = vrot.lane.b32.xlu0 %v1742, 20
        %v2677 = vpop.permute.xlu0 %2676
        %2678 = vrot.lane.b32.xlu0 %v1760, 20
        %v2679 = vpop.permute.xlu0 %2678
        %2680 = vrot.lane.b32.xlu0 %v1762, 20
        %v2681 = vpop.permute.xlu0 %2680
        %2682 = vrot.lane.b32.xlu0 %v1764, 20
        %v2683 = vpop.permute.xlu0 %2682
        %2684 = vrot.lane.b32.xlu0 %v1766, 20
        %v2685 = vpop.permute.xlu0 %2684
        %2686 = vrot.lane.b32.xlu0 %v1768, 20
        %v2687 = vpop.permute.xlu0 %2686
        %2688 = vrot.lane.b32.xlu0 %v1770, 20
        %v2689 = vpop.permute.xlu0 %2688
        %2690 = vrot.lane.b32.xlu0 %v1772, 20
        %v2691 = vpop.permute.xlu0 %2690
        %2692 = vrot.lane.b32.xlu0 %v1774, 20
        %v2693 = vpop.permute.xlu0 %2692
        %2694 = vrot.lane.b32.xlu0 %v1792, 20
        %v2695 = vpop.permute.xlu0 %2694
        %2696 = vrot.lane.b32.xlu0 %v1794, 20
        %v2697 = vpop.permute.xlu0 %2696
        %2698 = vrot.lane.b32.xlu0 %v1796, 20
        %v2699 = vpop.permute.xlu0 %2698
        %2700 = vrot.lane.b32.xlu0 %v1798, 20
        %v2701 = vpop.permute.xlu0 %2700
        %2702 = vrot.lane.b32.xlu0 %v1800, 20
        %v2703 = vpop.permute.xlu0 %2702
        %2704 = vrot.lane.b32.xlu0 %v1802, 20
        %v2705 = vpop.permute.xlu0 %2704
        %2706 = vrot.lane.b32.xlu0 %v1804, 20
        %v2707 = vpop.permute.xlu0 %2706
        %2708 = vrot.lane.b32.xlu0 %v1806, 20
        %v2709 = vpop.permute.xlu0 %2708
        %2710 = vrot.lane.b32.xlu0 %v1824, 20
        %v2711 = vpop.permute.xlu0 %2710
        %2712 = vrot.lane.b32.xlu0 %v1826, 20
        %v2713 = vpop.permute.xlu0 %2712
        %2714 = vrot.lane.b32.xlu0 %v1828, 20
        %v2715 = vpop.permute.xlu0 %2714
        %2716 = vrot.lane.b32.xlu0 %v1830, 20
        %v2717 = vpop.permute.xlu0 %2716
        %2718 = vrot.lane.b32.xlu0 %v1832, 20
        %v2719 = vpop.permute.xlu0 %2718
        %2720 = vrot.lane.b32.xlu0 %v1834, 20
        %v2721 = vpop.permute.xlu0 %2720
        %2722 = vrot.lane.b32.xlu0 %v1836, 20
        %v2723 = vpop.permute.xlu0 %2722
        %2724 = vrot.lane.b32.xlu0 %v1838, 20
        %v2725 = vpop.permute.xlu0 %2724
        %2726 = vrot.lane.b32.xlu0 %v1856, 20
        %v2727 = vpop.permute.xlu0 %2726
        %2728 = vrot.lane.b32.xlu0 %v1858, 20
        %v2729 = vpop.permute.xlu0 %2728
        %2730 = vrot.lane.b32.xlu0 %v1860, 20
        %v2731 = vpop.permute.xlu0 %2730
        %2732 = vrot.lane.b32.xlu0 %v1862, 20
        %v2733 = vpop.permute.xlu0 %2732
        %2734 = vrot.lane.b32.xlu0 %v1864, 20
        %v2735 = vpop.permute.xlu0 %2734
        %2736 = vrot.lane.b32.xlu0 %v1866, 20
        %v2737 = vpop.permute.xlu0 %2736
        %2738 = vrot.lane.b32.xlu0 %v1868, 20
        %v2739 = vpop.permute.xlu0 %2738
        %2740 = vrot.lane.b32.xlu0 %v1870, 20
        %v2741 = vpop.permute.xlu0 %2740
        %2742 = vrot.lane.b32.xlu0 %v1888, 20
        %v2743 = vpop.permute.xlu0 %2742
        %2744 = vrot.lane.b32.xlu0 %v1890, 20
        %v2745 = vpop.permute.xlu0 %2744
        %2746 = vrot.lane.b32.xlu0 %v1892, 20
        %v2747 = vpop.permute.xlu0 %2746
        %2748 = vrot.lane.b32.xlu0 %v1894, 20
        %v2749 = vpop.permute.xlu0 %2748
        %2750 = vrot.lane.b32.xlu0 %v1896, 20
        %v2751 = vpop.permute.xlu0 %2750
        %2752 = vrot.lane.b32.xlu0 %v1898, 20
        %v2753 = vpop.permute.xlu0 %2752
        %2754 = vrot.lane.b32.xlu0 %v1900, 20
        %v2755 = vpop.permute.xlu0 %2754
        %2756 = vrot.lane.b32.xlu0 %v1902, 20
        %v2757 = vpop.permute.xlu0 %2756
        %2765 = vrot.lane.b32.xlu0 0, 24
        %v2766 = vpop.permute.xlu0 %2765
        %2767 = vrot.lane.b32.xlu0 %v1680, 24
        %v2768 = vpop.permute.xlu0 %2767
        %2769 = vrot.lane.b32.xlu0 %v1682, 24
        %v2770 = vpop.permute.xlu0 %2769
        %2771 = vrot.lane.b32.xlu0 %v1684, 24
        %v2772 = vpop.permute.xlu0 %2771
        %2773 = vrot.lane.b32.xlu0 %v1686, 24
        %v2774 = vpop.permute.xlu0 %2773
        %2775 = vrot.lane.b32.xlu0 %v1688, 24
        %v2776 = vpop.permute.xlu0 %2775
        %2777 = vrot.lane.b32.xlu0 %v1690, 24
        %v2778 = vpop.permute.xlu0 %2777
        %2779 = vrot.lane.b32.xlu0 %v1692, 24
        %v2780 = vpop.permute.xlu0 %2779
        %2781 = vrot.lane.b32.xlu0 %v1712, 24
        %v2782 = vpop.permute.xlu0 %2781
        %2783 = vrot.lane.b32.xlu0 %v1714, 24
        %v2784 = vpop.permute.xlu0 %2783
        %2785 = vrot.lane.b32.xlu0 %v1716, 24
        %v2786 = vpop.permute.xlu0 %2785
        %2787 = vrot.lane.b32.xlu0 %v1718, 24
        %v2788 = vpop.permute.xlu0 %2787
        %2789 = vrot.lane.b32.xlu0 %v1720, 24
        %v2790 = vpop.permute.xlu0 %2789
        %2791 = vrot.lane.b32.xlu0 %v1722, 24
        %v2792 = vpop.permute.xlu0 %2791
        %2793 = vrot.lane.b32.xlu0 %v1724, 24
        %v2794 = vpop.permute.xlu0 %2793
        %2795 = vrot.lane.b32.xlu0 %v1744, 24
        %v2796 = vpop.permute.xlu0 %2795
        %2797 = vrot.lane.b32.xlu0 %v1746, 24
        %v2798 = vpop.permute.xlu0 %2797
        %2799 = vrot.lane.b32.xlu0 %v1748, 24
        %v2800 = vpop.permute.xlu0 %2799
        %2801 = vrot.lane.b32.xlu0 %v1750, 24
        %v2802 = vpop.permute.xlu0 %2801
        %2803 = vrot.lane.b32.xlu0 %v1752, 24
        %v2804 = vpop.permute.xlu0 %2803
        %2805 = vrot.lane.b32.xlu0 %v1754, 24
        %v2806 = vpop.permute.xlu0 %2805
        %2807 = vrot.lane.b32.xlu0 %v1756, 24
        %v2808 = vpop.permute.xlu0 %2807
        %2809 = vrot.lane.b32.xlu0 %v1776, 24
        %v2810 = vpop.permute.xlu0 %2809
        %2811 = vrot.lane.b32.xlu0 %v1778, 24
        %v2812 = vpop.permute.xlu0 %2811
        %2813 = vrot.lane.b32.xlu0 %v1780, 24
        %v2814 = vpop.permute.xlu0 %2813
        %2815 = vrot.lane.b32.xlu0 %v1782, 24
        %v2816 = vpop.permute.xlu0 %2815
        %2817 = vrot.lane.b32.xlu0 %v1784, 24
        %v2818 = vpop.permute.xlu0 %2817
        %2819 = vrot.lane.b32.xlu0 %v1786, 24
        %v2820 = vpop.permute.xlu0 %2819
        %2821 = vrot.lane.b32.xlu0 %v1788, 24
        %v2822 = vpop.permute.xlu0 %2821
        %2823 = vrot.lane.b32.xlu0 %v1808, 24
        %v2824 = vpop.permute.xlu0 %2823
        %2825 = vrot.lane.b32.xlu0 %v1810, 24
        %v2826 = vpop.permute.xlu0 %2825
        %2827 = vrot.lane.b32.xlu0 %v1812, 24
        %v2828 = vpop.permute.xlu0 %2827
        %2829 = vrot.lane.b32.xlu0 %v1814, 24
        %v2830 = vpop.permute.xlu0 %2829
        %2831 = vrot.lane.b32.xlu0 %v1816, 24
        %v2832 = vpop.permute.xlu0 %2831
        %2833 = vrot.lane.b32.xlu0 %v1818, 24
        %v2834 = vpop.permute.xlu0 %2833
        %2835 = vrot.lane.b32.xlu0 %v1820, 24
        %v2836 = vpop.permute.xlu0 %2835
        %2837 = vrot.lane.b32.xlu0 %v1840, 24
        %v2838 = vpop.permute.xlu0 %2837
        %2839 = vrot.lane.b32.xlu0 %v1842, 24
        %v2840 = vpop.permute.xlu0 %2839
        %2841 = vrot.lane.b32.xlu0 %v1844, 24
        %v2842 = vpop.permute.xlu0 %2841
        %2843 = vrot.lane.b32.xlu0 %v1846, 24
        %v2844 = vpop.permute.xlu0 %2843
        %2845 = vrot.lane.b32.xlu0 %v1848, 24
        %v2846 = vpop.permute.xlu0 %2845
        %2847 = vrot.lane.b32.xlu0 %v1850, 24
        %v2848 = vpop.permute.xlu0 %2847
        %2849 = vrot.lane.b32.xlu0 %v1852, 24
        %v2850 = vpop.permute.xlu0 %2849
        %2851 = vrot.lane.b32.xlu0 %v1872, 24
        %v2852 = vpop.permute.xlu0 %2851
        %2853 = vrot.lane.b32.xlu0 %v1874, 24
        %v2854 = vpop.permute.xlu0 %2853
        %2855 = vrot.lane.b32.xlu0 %v1876, 24
        %v2856 = vpop.permute.xlu0 %2855
        %2857 = vrot.lane.b32.xlu0 %v1878, 24
        %v2858 = vpop.permute.xlu0 %2857
        %2859 = vrot.lane.b32.xlu0 %v1880, 24
        %v2860 = vpop.permute.xlu0 %2859
        %2861 = vrot.lane.b32.xlu0 %v1882, 24
        %v2862 = vpop.permute.xlu0 %2861
        %2863 = vrot.lane.b32.xlu0 %v1884, 24
        %v2864 = vpop.permute.xlu0 %2863
        %2865 = vrot.lane.b32.xlu0 %v1904, 24
        %v2866 = vpop.permute.xlu0 %2865
        %2867 = vrot.lane.b32.xlu0 %v1906, 24
        %v2868 = vpop.permute.xlu0 %2867
        %2869 = vrot.lane.b32.xlu0 %v1908, 24
        %v2870 = vpop.permute.xlu0 %2869
        %2871 = vrot.lane.b32.xlu0 %v1910, 24
        %v2872 = vpop.permute.xlu0 %2871
        %2873 = vrot.lane.b32.xlu0 %v1912, 24
        %v2874 = vpop.permute.xlu0 %2873
        %2875 = vrot.lane.b32.xlu0 %v1914, 24
        %v2876 = vpop.permute.xlu0 %2875
        %2877 = vrot.lane.b32.xlu0 %v1916, 24
        %v2878 = vpop.permute.xlu0 %2877
        %2887 = vrot.lane.b32.xlu0 %v1679, 28
        %v2888 = vpop.permute.xlu0 %2887
        %2889 = vrot.lane.b32.xlu0 %v1681, 28
        %v2890 = vpop.permute.xlu0 %2889
        %2891 = vrot.lane.b32.xlu0 %v1683, 28
        %v2892 = vpop.permute.xlu0 %2891
        %2893 = vrot.lane.b32.xlu0 %v1685, 28
        %v2894 = vpop.permute.xlu0 %2893
        %2895 = vrot.lane.b32.xlu0 %v1687, 28
        %v2896 = vpop.permute.xlu0 %2895
        %2897 = vrot.lane.b32.xlu0 %v1689, 28
        %v2898 = vpop.permute.xlu0 %2897
        %2899 = vrot.lane.b32.xlu0 %v1691, 28
        %v2900 = vpop.permute.xlu0 %2899
        %2901 = vrot.lane.b32.xlu0 %v1693, 28
        %v2902 = vpop.permute.xlu0 %2901
        %2903 = vrot.lane.b32.xlu0 %v1711, 28
        %v2904 = vpop.permute.xlu0 %2903
        %2905 = vrot.lane.b32.xlu0 %v1713, 28
        %v2906 = vpop.permute.xlu0 %2905
        %2907 = vrot.lane.b32.xlu0 %v1715, 28
        %v2908 = vpop.permute.xlu0 %2907
        %2909 = vrot.lane.b32.xlu0 %v1717, 28
        %v2910 = vpop.permute.xlu0 %2909
        %2911 = vrot.lane.b32.xlu0 %v1719, 28
        %v2912 = vpop.permute.xlu0 %2911
        %2913 = vrot.lane.b32.xlu0 %v1721, 28
        %v2914 = vpop.permute.xlu0 %2913
        %2915 = vrot.lane.b32.xlu0 %v1723, 28
        %v2916 = vpop.permute.xlu0 %2915
        %2917 = vrot.lane.b32.xlu0 %v1725, 28
        %v2918 = vpop.permute.xlu0 %2917
        %2919 = vrot.lane.b32.xlu0 %v1743, 28
        %v2920 = vpop.permute.xlu0 %2919
        %2921 = vrot.lane.b32.xlu0 %v1745, 28
        %v2922 = vpop.permute.xlu0 %2921
        %2923 = vrot.lane.b32.xlu0 %v1747, 28
        %v2924 = vpop.permute.xlu0 %2923
        %2925 = vrot.lane.b32.xlu0 %v1749, 28
        %v2926 = vpop.permute.xlu0 %2925
        %2927 = vrot.lane.b32.xlu0 %v1751, 28
        %v2928 = vpop.permute.xlu0 %2927
        %2929 = vrot.lane.b32.xlu0 %v1753, 28
        %v2930 = vpop.permute.xlu0 %2929
        %2931 = vrot.lane.b32.xlu0 %v1755, 28
        %v2932 = vpop.permute.xlu0 %2931
        %2933 = vrot.lane.b32.xlu0 %v1757, 28
        %v2934 = vpop.permute.xlu0 %2933
        %2935 = vrot.lane.b32.xlu0 %v1775, 28
        %v2936 = vpop.permute.xlu0 %2935
        %2937 = vrot.lane.b32.xlu0 %v1777, 28
        %v2938 = vpop.permute.xlu0 %2937
        %2939 = vrot.lane.b32.xlu0 %v1779, 28
        %v2940 = vpop.permute.xlu0 %2939
        %2941 = vrot.lane.b32.xlu0 %v1781, 28
        %v2942 = vpop.permute.xlu0 %2941
        %2943 = vrot.lane.b32.xlu0 %v1783, 28
        %v2944 = vpop.permute.xlu0 %2943
        %2945 = vrot.lane.b32.xlu0 %v1785, 28
        %v2946 = vpop.permute.xlu0 %2945
        %2947 = vrot.lane.b32.xlu0 %v1787, 28
        %v2948 = vpop.permute.xlu0 %2947
        %2949 = vrot.lane.b32.xlu0 %v1789, 28
        %v2950 = vpop.permute.xlu0 %2949
        %2951 = vrot.lane.b32.xlu0 %v1807, 28
        %v2952 = vpop.permute.xlu0 %2951
        %2953 = vrot.lane.b32.xlu0 %v1809, 28
        %v2954 = vpop.permute.xlu0 %2953
        %2955 = vrot.lane.b32.xlu0 %v1811, 28
        %v2956 = vpop.permute.xlu0 %2955
        %2957 = vrot.lane.b32.xlu0 %v1813, 28
        %v2958 = vpop.permute.xlu0 %2957
        %2959 = vrot.lane.b32.xlu0 %v1815, 28
        %v2960 = vpop.permute.xlu0 %2959
        %2961 = vrot.lane.b32.xlu0 %v1817, 28
        %v2962 = vpop.permute.xlu0 %2961
        %2963 = vrot.lane.b32.xlu0 %v1819, 28
        %v2964 = vpop.permute.xlu0 %2963
        %2965 = vrot.lane.b32.xlu0 %v1821, 28
        %v2966 = vpop.permute.xlu0 %2965
        %2967 = vrot.lane.b32.xlu0 %v1839, 28
        %v2968 = vpop.permute.xlu0 %2967
        %2969 = vrot.lane.b32.xlu0 %v1841, 28
        %v2970 = vpop.permute.xlu0 %2969
        %2971 = vrot.lane.b32.xlu0 %v1843, 28
        %v2972 = vpop.permute.xlu0 %2971
        %2973 = vrot.lane.b32.xlu0 %v1845, 28
        %v2974 = vpop.permute.xlu0 %2973
        %2975 = vrot.lane.b32.xlu0 %v1847, 28
        %v2976 = vpop.permute.xlu0 %2975
        %2977 = vrot.lane.b32.xlu0 %v1849, 28
        %v2978 = vpop.permute.xlu0 %2977
        %2979 = vrot.lane.b32.xlu0 %v1851, 28
        %v2980 = vpop.permute.xlu0 %2979
        %2981 = vrot.lane.b32.xlu0 %v1853, 28
        %v2982 = vpop.permute.xlu0 %2981
        %2983 = vrot.lane.b32.xlu0 %v1871, 28
        %v2984 = vpop.permute.xlu0 %2983
        %2985 = vrot.lane.b32.xlu0 %v1873, 28
        %v2986 = vpop.permute.xlu0 %2985
        %2987 = vrot.lane.b32.xlu0 %v1875, 28
        %v2988 = vpop.permute.xlu0 %2987
        %2989 = vrot.lane.b32.xlu0 %v1877, 28
        %v2990 = vpop.permute.xlu0 %2989
        %2991 = vrot.lane.b32.xlu0 %v1879, 28
        %v2992 = vpop.permute.xlu0 %2991
        %2993 = vrot.lane.b32.xlu0 %v1881, 28
        %v2994 = vpop.permute.xlu0 %2993
        %2995 = vrot.lane.b32.xlu0 %v1883, 28
        %v2996 = vpop.permute.xlu0 %2995
        %2997 = vrot.lane.b32.xlu0 %v1885, 28
        %v2998 = vpop.permute.xlu0 %2997
        %2999 = vrot.lane.b32.xlu0 %v1903, 28
        %v3000 = vpop.permute.xlu0 %2999
        %3001 = vrot.lane.b32.xlu0 %v1905, 28
        %v3002 = vpop.permute.xlu0 %3001
        %3003 = vrot.lane.b32.xlu0 %v1907, 28
        %v3004 = vpop.permute.xlu0 %3003
        %3005 = vrot.lane.b32.xlu0 %v1909, 28
        %v3006 = vpop.permute.xlu0 %3005
        %3007 = vrot.lane.b32.xlu0 %v1911, 28
        %v3008 = vpop.permute.xlu0 %3007
        %3009 = vrot.lane.b32.xlu0 %v1913, 28
        %v3010 = vpop.permute.xlu0 %3009
        %3011 = vrot.lane.b32.xlu0 %v1915, 28
        %v3012 = vpop.permute.xlu0 %3011
        %3013 = vrot.lane.b32.xlu0 %v1917, 28
        %v3014 = vpop.permute.xlu0 %3013
        %3016 = vrot.lane.b32.xlu0 %v1680, 32
        %v3017 = vpop.permute.xlu0 %3016
        %3018 = vrot.lane.b32.xlu0 %v1682, 32
        %v3019 = vpop.permute.xlu0 %3018
        %3020 = vrot.lane.b32.xlu0 %v1684, 32
        %v3021 = vpop.permute.xlu0 %3020
        %3022 = vrot.lane.b32.xlu0 %v1686, 32
        %v3023 = vpop.permute.xlu0 %3022
        %3024 = vrot.lane.b32.xlu0 %v1688, 32
        %v3025 = vpop.permute.xlu0 %3024
        %3026 = vrot.lane.b32.xlu0 %v1690, 32
        %v3027 = vpop.permute.xlu0 %3026
        %3028 = vrot.lane.b32.xlu0 %v1692, 32
        %v3029 = vpop.permute.xlu0 %3028
        %3030 = vrot.lane.b32.xlu0 %v1694, 32
        %v3031 = vpop.permute.xlu0 %3030
        %3032 = vrot.lane.b32.xlu0 %v1712, 32
        %v3033 = vpop.permute.xlu0 %3032
        %3034 = vrot.lane.b32.xlu0 %v1714, 32
        %v3035 = vpop.permute.xlu0 %3034
        %3036 = vrot.lane.b32.xlu0 %v1716, 32
        %v3037 = vpop.permute.xlu0 %3036
        %3038 = vrot.lane.b32.xlu0 %v1718, 32
        %v3039 = vpop.permute.xlu0 %3038
        %3040 = vrot.lane.b32.xlu0 %v1720, 32
        %v3041 = vpop.permute.xlu0 %3040
        %3042 = vrot.lane.b32.xlu0 %v1722, 32
        %v3043 = vpop.permute.xlu0 %3042
        %3044 = vrot.lane.b32.xlu0 %v1724, 32
        %v3045 = vpop.permute.xlu0 %3044
        %3046 = vrot.lane.b32.xlu0 %v1726, 32
        %v3047 = vpop.permute.xlu0 %3046
        %3048 = vrot.lane.b32.xlu0 %v1744, 32
        %v3049 = vpop.permute.xlu0 %3048
        %3050 = vrot.lane.b32.xlu0 %v1746, 32
        %v3051 = vpop.permute.xlu0 %3050
        %3052 = vrot.lane.b32.xlu0 %v1748, 32
        %v3053 = vpop.permute.xlu0 %3052
        %3054 = vrot.lane.b32.xlu0 %v1750, 32
        %v3055 = vpop.permute.xlu0 %3054
        %3056 = vrot.lane.b32.xlu0 %v1752, 32
        %v3057 = vpop.permute.xlu0 %3056
        %3058 = vrot.lane.b32.xlu0 %v1754, 32
        %v3059 = vpop.permute.xlu0 %3058
        %3060 = vrot.lane.b32.xlu0 %v1756, 32
        %v3061 = vpop.permute.xlu0 %3060
        %3062 = vrot.lane.b32.xlu0 %v1758, 32
        %v3063 = vpop.permute.xlu0 %3062
        %3064 = vrot.lane.b32.xlu0 %v1776, 32
        %v3065 = vpop.permute.xlu0 %3064
        %3066 = vrot.lane.b32.xlu0 %v1778, 32
        %v3067 = vpop.permute.xlu0 %3066
        %3068 = vrot.lane.b32.xlu0 %v1780, 32
        %v3069 = vpop.permute.xlu0 %3068
        %3070 = vrot.lane.b32.xlu0 %v1782, 32
        %v3071 = vpop.permute.xlu0 %3070
        %3072 = vrot.lane.b32.xlu0 %v1784, 32
        %v3073 = vpop.permute.xlu0 %3072
        %3074 = vrot.lane.b32.xlu0 %v1786, 32
        %v3075 = vpop.permute.xlu0 %3074
        %3076 = vrot.lane.b32.xlu0 %v1788, 32
        %v3077 = vpop.permute.xlu0 %3076
        %3078 = vrot.lane.b32.xlu0 %v1790, 32
        %v3079 = vpop.permute.xlu0 %3078
        %3080 = vrot.lane.b32.xlu0 %v1808, 32
        %v3081 = vpop.permute.xlu0 %3080
        %3082 = vrot.lane.b32.xlu0 %v1810, 32
        %v3083 = vpop.permute.xlu0 %3082
        %3084 = vrot.lane.b32.xlu0 %v1812, 32
        %v3085 = vpop.permute.xlu0 %3084
        %3086 = vrot.lane.b32.xlu0 %v1814, 32
        %v3087 = vpop.permute.xlu0 %3086
        %3088 = vrot.lane.b32.xlu0 %v1816, 32
        %v3089 = vpop.permute.xlu0 %3088
        %3090 = vrot.lane.b32.xlu0 %v1818, 32
        %v3091 = vpop.permute.xlu0 %3090
        %3092 = vrot.lane.b32.xlu0 %v1820, 32
        %v3093 = vpop.permute.xlu0 %3092
        %3094 = vrot.lane.b32.xlu0 %v1822, 32
        %v3095 = vpop.permute.xlu0 %3094
        %3096 = vrot.lane.b32.xlu0 %v1840, 32
        %v3097 = vpop.permute.xlu0 %3096
        %3098 = vrot.lane.b32.xlu0 %v1842, 32
        %v3099 = vpop.permute.xlu0 %3098
        %3100 = vrot.lane.b32.xlu0 %v1844, 32
        %v3101 = vpop.permute.xlu0 %3100
        %3102 = vrot.lane.b32.xlu0 %v1846, 32
        %v3103 = vpop.permute.xlu0 %3102
        %3104 = vrot.lane.b32.xlu0 %v1848, 32
        %v3105 = vpop.permute.xlu0 %3104
        %3106 = vrot.lane.b32.xlu0 %v1850, 32
        %v3107 = vpop.permute.xlu0 %3106
        %3108 = vrot.lane.b32.xlu0 %v1852, 32
        %v3109 = vpop.permute.xlu0 %3108
        %3110 = vrot.lane.b32.xlu0 %v1854, 32
        %v3111 = vpop.permute.xlu0 %3110
        %3112 = vrot.lane.b32.xlu0 %v1872, 32
        %v3113 = vpop.permute.xlu0 %3112
        %3114 = vrot.lane.b32.xlu0 %v1874, 32
        %v3115 = vpop.permute.xlu0 %3114
        %3116 = vrot.lane.b32.xlu0 %v1876, 32
        %v3117 = vpop.permute.xlu0 %3116
        %3118 = vrot.lane.b32.xlu0 %v1878, 32
        %v3119 = vpop.permute.xlu0 %3118
        %3120 = vrot.lane.b32.xlu0 %v1880, 32
        %v3121 = vpop.permute.xlu0 %3120
        %3122 = vrot.lane.b32.xlu0 %v1882, 32
        %v3123 = vpop.permute.xlu0 %3122
        %3124 = vrot.lane.b32.xlu0 %v1884, 32
        %v3125 = vpop.permute.xlu0 %3124
        %3126 = vrot.lane.b32.xlu0 %v1886, 32
        %v3127 = vpop.permute.xlu0 %3126
        %3128 = vrot.lane.b32.xlu0 %v1904, 32
        %v3129 = vpop.permute.xlu0 %3128
        %3130 = vrot.lane.b32.xlu0 %v1906, 32
        %v3131 = vpop.permute.xlu0 %3130
        %3132 = vrot.lane.b32.xlu0 %v1908, 32
        %v3133 = vpop.permute.xlu0 %3132
        %3134 = vrot.lane.b32.xlu0 %v1910, 32
        %v3135 = vpop.permute.xlu0 %3134
        %3136 = vrot.lane.b32.xlu0 %v1912, 32
        %v3137 = vpop.permute.xlu0 %3136
        %3138 = vrot.lane.b32.xlu0 %v1914, 32
        %v3139 = vpop.permute.xlu0 %3138
        %3140 = vrot.lane.b32.xlu0 %v1916, 32
        %v3141 = vpop.permute.xlu0 %3140
        %3142 = vrot.lane.b32.xlu0 %v1918, 32
        %v3143 = vpop.permute.xlu0 %3142
        %vm3144 = vcmask 31744
        %v3147 = vsel %vm3144, 0, %v1977
        %v3149 = vsel %vm3144, 0, %v1979
        %v3152 = vsel %vm3144, %v1680, %v1981
        %v3155 = vsel %vm3144, %v1682, %v1983
        %v3158 = vsel %vm3144, %v1684, %v1985
        %v3161 = vsel %vm3144, %v1686, %v1987
        %v3164 = vsel %vm3144, %v1688, %v1989
        %v3167 = vsel %vm3144, %v1690, %v1991
        %v3170 = vsel %vm3144, %v1692, %v1993
        %v3172 = vsel %vm3144, 0, %v1995
        %v3175 = vsel %vm3144, %v1712, %v1997
        %v3178 = vsel %vm3144, %v1714, %v1999
        %v3181 = vsel %vm3144, %v1716, %v2001
        %v3184 = vsel %vm3144, %v1718, %v2003
        %v3187 = vsel %vm3144, %v1720, %v2005
        %v3190 = vsel %vm3144, %v1722, %v2007
        %v3193 = vsel %vm3144, %v1724, %v2009
        %v3195 = vsel %vm3144, 0, %v2011
        %v3198 = vsel %vm3144, %v1744, %v2013
        %v3201 = vsel %vm3144, %v1746, %v2015
        %v3204 = vsel %vm3144, %v1748, %v2017
        %v3207 = vsel %vm3144, %v1750, %v2019
        %v3210 = vsel %vm3144, %v1752, %v2021
        %v3213 = vsel %vm3144, %v1754, %v2023
        %v3216 = vsel %vm3144, %v1756, %v2025
        %v3218 = vsel %vm3144, 0, %v2027
        %v3221 = vsel %vm3144, %v1776, %v2029
        %v3224 = vsel %vm3144, %v1778, %v2031
        %v3227 = vsel %vm3144, %v1780, %v2033
        %v3230 = vsel %vm3144, %v1782, %v2035
        %v3233 = vsel %vm3144, %v1784, %v2037
        %v3236 = vsel %vm3144, %v1786, %v2039
        %v3239 = vsel %vm3144, %v1788, %v2041
        %v3241 = vsel %vm3144, 0, %v2043
        %v3244 = vsel %vm3144, %v1808, %v2045
        %v3247 = vsel %vm3144, %v1810, %v2047
        %v3250 = vsel %vm3144, %v1812, %v2049
        %v3253 = vsel %vm3144, %v1814, %v2051
        %v3256 = vsel %vm3144, %v1816, %v2053
        %v3259 = vsel %vm3144, %v1818, %v2055
        %v3262 = vsel %vm3144, %v1820, %v2057
        %v3264 = vsel %vm3144, 0, %v2059
        %v3267 = vsel %vm3144, %v1840, %v2061
        %v3270 = vsel %vm3144, %v1842, %v2063
        %v3273 = vsel %vm3144, %v1844, %v2065
        %v3276 = vsel %vm3144, %v1846, %v2067
        %v3279 = vsel %vm3144, %v1848, %v2069
        %v3282 = vsel %vm3144, %v1850, %v2071
        %v3285 = vsel %vm3144, %v1852, %v2073
        %v3287 = vsel %vm3144, 0, %v2075
        %v3290 = vsel %vm3144, %v1872, %v2077
        %v3293 = vsel %vm3144, %v1874, %v2079
        %v3296 = vsel %vm3144, %v1876, %v2081
        %v3299 = vsel %vm3144, %v1878, %v2083
        %v3302 = vsel %vm3144, %v1880, %v2085
        %v3305 = vsel %vm3144, %v1882, %v2087
        %v3308 = vsel %vm3144, %v1884, %v2089
        %vm3309 = vcmask 64512
        %v3311 = vsel %vm3309, %v3147, %v2147
        %v3313 = vsel %vm3309, %v3149, %v2149
        %v3315 = vsel %vm3309, %v3152, %v2151
        %v3317 = vsel %vm3309, %v3155, %v2153
        %v3319 = vsel %vm3309, %v3158, %v2155
        %v3321 = vsel %vm3309, %v3161, %v2157
        %v3323 = vsel %vm3309, %v3164, %v2159
        %v3325 = vsel %vm3309, %v3167, %v2161
        %v3327 = vsel %vm3309, %v3170, %v2163
        %v3329 = vsel %vm3309, %v3172, %v2165
        %v3331 = vsel %vm3309, %v3175, %v2167
        %v3333 = vsel %vm3309, %v3178, %v2169
        %v3335 = vsel %vm3309, %v3181, %v2171
        %v3337 = vsel %vm3309, %v3184, %v2173
        %v3339 = vsel %vm3309, %v3187, %v2175
        %v3341 = vsel %vm3309, %v3190, %v2177
        %v3343 = vsel %vm3309, %v3193, %v2179
        %v3345 = vsel %vm3309, %v3195, %v2181
        %v3347 = vsel %vm3309, %v3198, %v2183
        %v3349 = vsel %vm3309, %v3201, %v2185
        %v3351 = vsel %vm3309, %v3204, %v2187
        %v3353 = vsel %vm3309, %v3207, %v2189
        %v3355 = vsel %vm3309, %v3210, %v2191
        %v3357 = vsel %vm3309, %v3213, %v2193
        %v3359 = vsel %vm3309, %v3216, %v2195
        %v3361 = vsel %vm3309, %v3218, %v2197
        %v3363 = vsel %vm3309, %v3221, %v2199
        %v3365 = vsel %vm3309, %v3224, %v2201
        %v3367 = vsel %vm3309, %v3227, %v2203
        %v3369 = vsel %vm3309, %v3230, %v2205
        %v3371 = vsel %vm3309, %v3233, %v2207
        %v3373 = vsel %vm3309, %v3236, %v2209
        %v3375 = vsel %vm3309, %v3239, %v2211
        %v3377 = vsel %vm3309, %v3241, %v2213
        %v3379 = vsel %vm3309, %v3244, %v2215
        %v3381 = vsel %vm3309, %v3247, %v2217
        %v3383 = vsel %vm3309, %v3250, %v2219
        %v3385 = vsel %vm3309, %v3253, %v2221
        %v3387 = vsel %vm3309, %v3256, %v2223
        %v3389 = vsel %vm3309, %v3259, %v2225
        %v3391 = vsel %vm3309, %v3262, %v2227
        %v3393 = vsel %vm3309, %v3264, %v2229
        %v3395 = vsel %vm3309, %v3267, %v2231
        %v3397 = vsel %vm3309, %v3270, %v2233
        %v3399 = vsel %vm3309, %v3273, %v2235
        %v3401 = vsel %vm3309, %v3276, %v2237
        %v3403 = vsel %vm3309, %v3279, %v2239
        %v3405 = vsel %vm3309, %v3282, %v2241
        %v3407 = vsel %vm3309, %v3285, %v2243
        %v3409 = vsel %vm3309, %v3287, %v2245
        %v3411 = vsel %vm3309, %v3290, %v2247
        %v3413 = vsel %vm3309, %v3293, %v2249
        %v3415 = vsel %vm3309, %v3296, %v2251
        %v3417 = vsel %vm3309, %v3299, %v2253
        %v3419 = vsel %vm3309, %v3302, %v2255
        %v3421 = vsel %vm3309, %v3305, %v2257
        %v3423 = vsel %vm3309, %v3308, %v2259
        %vm3424 = vcmask 97280
        %v3426 = vsel %vm3424, %v3311, %v2317
        %v3428 = vsel %vm3424, %v3311, %v2319
        %v3430 = vsel %vm3424, %v3311, %v2321
        %v3432 = vsel %vm3424, %v3311, %v2323
        %v3434 = vsel %vm3424, %v3311, %v2325
        %v3436 = vsel %vm3424, %v3311, %v2327
        %v3438 = vsel %vm3424, %v3311, %v2329
        %v3440 = vsel %vm3424, %v3311, %v2331
        %v3441 = vsel %vm3424, %v3313, %v2317
        %v3443 = vsel %vm3424, %v3315, %v2333
        %v3445 = vsel %vm3424, %v3317, %v2335
        %v3447 = vsel %vm3424, %v3319, %v2337
        %v3449 = vsel %vm3424, %v3321, %v2339
        %v3451 = vsel %vm3424, %v3323, %v2341
        %v3453 = vsel %vm3424, %v3325, %v2343
        %v3455 = vsel %vm3424, %v3327, %v2345
        %v3456 = vsel %vm3424, %v3329, %v2317
        %v3458 = vsel %vm3424, %v3331, %v2347
        %v3460 = vsel %vm3424, %v3333, %v2349
        %v3462 = vsel %vm3424, %v3335, %v2351
        %v3464 = vsel %vm3424, %v3337, %v2353
        %v3466 = vsel %vm3424, %v3339, %v2355
        %v3468 = vsel %vm3424, %v3341, %v2357
        %v3470 = vsel %vm3424, %v3343, %v2359
        %v3471 = vsel %vm3424, %v3345, %v2317
        %v3473 = vsel %vm3424, %v3347, %v2361
        %v3475 = vsel %vm3424, %v3349, %v2363
        %v3477 = vsel %vm3424, %v3351, %v2365
        %v3479 = vsel %vm3424, %v3353, %v2367
        %v3481 = vsel %vm3424, %v3355, %v2369
        %v3483 = vsel %vm3424, %v3357, %v2371
        %v3485 = vsel %vm3424, %v3359, %v2373
        %v3486 = vsel %vm3424, %v3361, %v2317
        %v3488 = vsel %vm3424, %v3363, %v2375
        %v3490 = vsel %vm3424, %v3365, %v2377
        %v3492 = vsel %vm3424, %v3367, %v2379
        %v3494 = vsel %vm3424, %v3369, %v2381
        %v3496 = vsel %vm3424, %v3371, %v2383
        %v3498 = vsel %vm3424, %v3373, %v2385
        %v3500 = vsel %vm3424, %v3375, %v2387
        %v3501 = vsel %vm3424, %v3377, %v2317
        %v3503 = vsel %vm3424, %v3379, %v2389
        %v3505 = vsel %vm3424, %v3381, %v2391
        %v3507 = vsel %vm3424, %v3383, %v2393
        %v3509 = vsel %vm3424, %v3385, %v2395
        %v3511 = vsel %vm3424, %v3387, %v2397
        %v3513 = vsel %vm3424, %v3389, %v2399
        %v3515 = vsel %vm3424, %v3391, %v2401
        %v3516 = vsel %vm3424, %v3393, %v2317
        %v3518 = vsel %vm3424, %v3395, %v2403
        %v3520 = vsel %vm3424, %v3397, %v2405
        %v3522 = vsel %vm3424, %v3399, %v2407
        %v3524 = vsel %vm3424, %v3401, %v2409
        %v3526 = vsel %vm3424, %v3403, %v2411
        %v3528 = vsel %vm3424, %v3405, %v2413
        %v3530 = vsel %vm3424, %v3407, %v2415
        %v3531 = vsel %vm3424, %v3409, %v2317
        %v3533 = vsel %vm3424, %v3411, %v2417
        %v3535 = vsel %vm3424, %v3413, %v2419
        %v3537 = vsel %vm3424, %v3415, %v2421
        %v3539 = vsel %vm3424, %v3417, %v2423
        %v3541 = vsel %vm3424, %v3419, %v2425
        %v3543 = vsel %vm3424, %v3421, %v2427
        %v3545 = vsel %vm3424, %v3423, %v2429
        %vm3546 = vcmask 130048
        %v3548 = vsel %vm3546, %v3426, %v2495
        %v3550 = vsel %vm3546, %v3428, %v2497
        %v3552 = vsel %vm3546, %v3430, %v2499
        %v3554 = vsel %vm3546, %v3432, %v2501
        %v3556 = vsel %vm3546, %v3434, %v2503
        %v3558 = vsel %vm3546, %v3436, %v2505
        %v3560 = vsel %vm3546, %v3438, %v2507
        %v3562 = vsel %vm3546, %v3440, %v2509
        %v3564 = vsel %vm3546, %v3441, %v2511
        %v3566 = vsel %vm3546, %v3443, %v2513
        %v3568 = vsel %vm3546, %v3445, %v2515
        %v3570 = vsel %vm3546, %v3447, %v2517
        %v3572 = vsel %vm3546, %v3449, %v2519
        %v3574 = vsel %vm3546, %v3451, %v2521
        %v3576 = vsel %vm3546, %v3453, %v2523
        %v3578 = vsel %vm3546, %v3455, %v2525
        %v3580 = vsel %vm3546, %v3456, %v2527
        %v3582 = vsel %vm3546, %v3458, %v2529
        %v3584 = vsel %vm3546, %v3460, %v2531
        %v3586 = vsel %vm3546, %v3462, %v2533
        %v3588 = vsel %vm3546, %v3464, %v2535
        %v3590 = vsel %vm3546, %v3466, %v2537
        %v3592 = vsel %vm3546, %v3468, %v2539
        %v3594 = vsel %vm3546, %v3470, %v2541
        %v3596 = vsel %vm3546, %v3471, %v2543
        %v3598 = vsel %vm3546, %v3473, %v2545
        %v3600 = vsel %vm3546, %v3475, %v2547
        %v3602 = vsel %vm3546, %v3477, %v2549
        %v3604 = vsel %vm3546, %v3479, %v2551
        %v3606 = vsel %vm3546, %v3481, %v2553
        %v3608 = vsel %vm3546, %v3483, %v2555
        %v3610 = vsel %vm3546, %v3485, %v2557
        %v3612 = vsel %vm3546, %v3486, %v2559
        %v3614 = vsel %vm3546, %v3488, %v2561
        %v3616 = vsel %vm3546, %v3490, %v2563
        %v3618 = vsel %vm3546, %v3492, %v2565
        %v3620 = vsel %vm3546, %v3494, %v2567
        %v3622 = vsel %vm3546, %v3496, %v2569
        %v3624 = vsel %vm3546, %v3498, %v2571
        %v3626 = vsel %vm3546, %v3500, %v2573
        %v3628 = vsel %vm3546, %v3501, %v2575
        %v3630 = vsel %vm3546, %v3503, %v2577
        %v3632 = vsel %vm3546, %v3505, %v2579
        %v3634 = vsel %vm3546, %v3507, %v2581
        %v3636 = vsel %vm3546, %v3509, %v2583
        %v3638 = vsel %vm3546, %v3511, %v2585
        %v3640 = vsel %vm3546, %v3513, %v2587
        %v3642 = vsel %vm3546, %v3515, %v2589
        %v3644 = vsel %vm3546, %v3516, %v2591
        %v3646 = vsel %vm3546, %v3518, %v2593
        %v3648 = vsel %vm3546, %v3520, %v2595
        %v3650 = vsel %vm3546, %v3522, %v2597
        %v3652 = vsel %vm3546, %v3524, %v2599
        %v3654 = vsel %vm3546, %v3526, %v2601
        %v3656 = vsel %vm3546, %v3528, %v2603
        %v3658 = vsel %vm3546, %v3530, %v2605
        %v3660 = vsel %vm3546, %v3531, %v2607
        %v3662 = vsel %vm3546, %v3533, %v2609
        %v3664 = vsel %vm3546, %v3535, %v2611
        %v3666 = vsel %vm3546, %v3537, %v2613
        %v3668 = vsel %vm3546, %v3539, %v2615
        %v3670 = vsel %vm3546, %v3541, %v2617
        %v3672 = vsel %vm3546, %v3543, %v2619
        %v3674 = vsel %vm3546, %v3545, %v2621
        %vm3675 = vcmask 162816
        %v3677 = vsel %vm3675, %v3548, %v2631
        %v3679 = vsel %vm3675, %v3550, %v2633
        %v3681 = vsel %vm3675, %v3552, %v2635
        %v3683 = vsel %vm3675, %v3554, %v2637
        %v3685 = vsel %vm3675, %v3556, %v2639
        %v3687 = vsel %vm3675, %v3558, %v2641
        %v3689 = vsel %vm3675, %v3560, %v2643
        %v3691 = vsel %vm3675, %v3562, %v2645
        %v3693 = vsel %vm3675, %v3564, %v2647
        %v3695 = vsel %vm3675, %v3566, %v2649
        %v3697 = vsel %vm3675, %v3568, %v2651
        %v3699 = vsel %vm3675, %v3570, %v2653
        %v3701 = vsel %vm3675, %v3572, %v2655
        %v3703 = vsel %vm3675, %v3574, %v2657
        %v3705 = vsel %vm3675, %v3576, %v2659
        %v3707 = vsel %vm3675, %v3578, %v2661
        %v3709 = vsel %vm3675, %v3580, %v2663
        %v3711 = vsel %vm3675, %v3582, %v2665
        %v3713 = vsel %vm3675, %v3584, %v2667
        %v3715 = vsel %vm3675, %v3586, %v2669
        %v3717 = vsel %vm3675, %v3588, %v2671
        %v3719 = vsel %vm3675, %v3590, %v2673
        %v3721 = vsel %vm3675, %v3592, %v2675
        %v3723 = vsel %vm3675, %v3594, %v2677
        %v3725 = vsel %vm3675, %v3596, %v2679
        %v3727 = vsel %vm3675, %v3598, %v2681
        %v3729 = vsel %vm3675, %v3600, %v2683
        %v3731 = vsel %vm3675, %v3602, %v2685
        %v3733 = vsel %vm3675, %v3604, %v2687
        %v3735 = vsel %vm3675, %v3606, %v2689
        %v3737 = vsel %vm3675, %v3608, %v2691
        %v3739 = vsel %vm3675, %v3610, %v2693
        %v3741 = vsel %vm3675, %v3612, %v2695
        %v3743 = vsel %vm3675, %v3614, %v2697
        %v3745 = vsel %vm3675, %v3616, %v2699
        %v3747 = vsel %vm3675, %v3618, %v2701
        %v3749 = vsel %vm3675, %v3620, %v2703
        %v3751 = vsel %vm3675, %v3622, %v2705
        %v3753 = vsel %vm3675, %v3624, %v2707
        %v3755 = vsel %vm3675, %v3626, %v2709
        %v3757 = vsel %vm3675, %v3628, %v2711
        %v3759 = vsel %vm3675, %v3630, %v2713
        %v3761 = vsel %vm3675, %v3632, %v2715
        %v3763 = vsel %vm3675, %v3634, %v2717
        %v3765 = vsel %vm3675, %v3636, %v2719
        %v3767 = vsel %vm3675, %v3638, %v2721
        %v3769 = vsel %vm3675, %v3640, %v2723
        %v3771 = vsel %vm3675, %v3642, %v2725
        %v3773 = vsel %vm3675, %v3644, %v2727
        %v3775 = vsel %vm3675, %v3646, %v2729
        %v3777 = vsel %vm3675, %v3648, %v2731
        %v3779 = vsel %vm3675, %v3650, %v2733
        %v3781 = vsel %vm3675, %v3652, %v2735
        %v3783 = vsel %vm3675, %v3654, %v2737
        %v3785 = vsel %vm3675, %v3656, %v2739
        %v3787 = vsel %vm3675, %v3658, %v2741
        %v3789 = vsel %vm3675, %v3660, %v2743
        %v3791 = vsel %vm3675, %v3662, %v2745
        %v3793 = vsel %vm3675, %v3664, %v2747
        %v3795 = vsel %vm3675, %v3666, %v2749
        %v3797 = vsel %vm3675, %v3668, %v2751
        %v3799 = vsel %vm3675, %v3670, %v2753
        %v3801 = vsel %vm3675, %v3672, %v2755
        %v3803 = vsel %vm3675, %v3674, %v2757
        %vm3804 = vcmask 195584
        %v3806 = vsel %vm3804, %v3677, %v2766
        %v3808 = vsel %vm3804, %v3679, %v2768
        %v3810 = vsel %vm3804, %v3681, %v2770
        %v3812 = vsel %vm3804, %v3683, %v2772
        %v3814 = vsel %vm3804, %v3685, %v2774
        %v3816 = vsel %vm3804, %v3687, %v2776
        %v3818 = vsel %vm3804, %v3689, %v2778
        %v3820 = vsel %vm3804, %v3691, %v2780
        %v3821 = vsel %vm3804, %v3693, %v2766
        %v3823 = vsel %vm3804, %v3695, %v2782
        %v3825 = vsel %vm3804, %v3697, %v2784
        %v3827 = vsel %vm3804, %v3699, %v2786
        %v3829 = vsel %vm3804, %v3701, %v2788
        %v3831 = vsel %vm3804, %v3703, %v2790
        %v3833 = vsel %vm3804, %v3705, %v2792
        %v3835 = vsel %vm3804, %v3707, %v2794
        %v3836 = vsel %vm3804, %v3709, %v2766
        %v3838 = vsel %vm3804, %v3711, %v2796
        %v3840 = vsel %vm3804, %v3713, %v2798
        %v3842 = vsel %vm3804, %v3715, %v2800
        %v3844 = vsel %vm3804, %v3717, %v2802
        %v3846 = vsel %vm3804, %v3719, %v2804
        %v3848 = vsel %vm3804, %v3721, %v2806
        %v3850 = vsel %vm3804, %v3723, %v2808
        %v3851 = vsel %vm3804, %v3725, %v2766
        %v3853 = vsel %vm3804, %v3727, %v2810
        %v3855 = vsel %vm3804, %v3729, %v2812
        %v3857 = vsel %vm3804, %v3731, %v2814
        %v3859 = vsel %vm3804, %v3733, %v2816
        %v3861 = vsel %vm3804, %v3735, %v2818
        %v3863 = vsel %vm3804, %v3737, %v2820
        %v3865 = vsel %vm3804, %v3739, %v2822
        %v3866 = vsel %vm3804, %v3741, %v2766
        %v3868 = vsel %vm3804, %v3743, %v2824
        %v3870 = vsel %vm3804, %v3745, %v2826
        %v3872 = vsel %vm3804, %v3747, %v2828
        %v3874 = vsel %vm3804, %v3749, %v2830
        %v3876 = vsel %vm3804, %v3751, %v2832
        %v3878 = vsel %vm3804, %v3753, %v2834
        %v3880 = vsel %vm3804, %v3755, %v2836
        %v3881 = vsel %vm3804, %v3757, %v2766
        %v3883 = vsel %vm3804, %v3759, %v2838
        %v3885 = vsel %vm3804, %v3761, %v2840
        %v3887 = vsel %vm3804, %v3763, %v2842
        %v3889 = vsel %vm3804, %v3765, %v2844
        %v3891 = vsel %vm3804, %v3767, %v2846
        %v3893 = vsel %vm3804, %v3769, %v2848
        %v3895 = vsel %vm3804, %v3771, %v2850
        %v3896 = vsel %vm3804, %v3773, %v2766
        %v3898 = vsel %vm3804, %v3775, %v2852
        %v3900 = vsel %vm3804, %v3777, %v2854
        %v3902 = vsel %vm3804, %v3779, %v2856
        %v3904 = vsel %vm3804, %v3781, %v2858
        %v3906 = vsel %vm3804, %v3783, %v2860
        %v3908 = vsel %vm3804, %v3785, %v2862
        %v3910 = vsel %vm3804, %v3787, %v2864
        %v3911 = vsel %vm3804, %v3789, %v2766
        %v3913 = vsel %vm3804, %v3791, %v2866
        %v3915 = vsel %vm3804, %v3793, %v2868
        %v3917 = vsel %vm3804, %v3795, %v2870
        %v3919 = vsel %vm3804, %v3797, %v2872
        %v3921 = vsel %vm3804, %v3799, %v2874
        %v3923 = vsel %vm3804, %v3801, %v2876
        %v3925 = vsel %vm3804, %v3803, %v2878
        %vm3926 = vcmask 228352
        %v3928 = vsel %vm3926, %v3806, %v2888
        %v3930 = vsel %vm3926, %v3808, %v2890
        %v3932 = vsel %vm3926, %v3810, %v2892
        %v3934 = vsel %vm3926, %v3812, %v2894
        %v3936 = vsel %vm3926, %v3814, %v2896
        %v3938 = vsel %vm3926, %v3816, %v2898
        %v3940 = vsel %vm3926, %v3818, %v2900
        %v3942 = vsel %vm3926, %v3820, %v2902
        %v3944 = vsel %vm3926, %v3821, %v2904
        %v3946 = vsel %vm3926, %v3823, %v2906
        %v3948 = vsel %vm3926, %v3825, %v2908
        %v3950 = vsel %vm3926, %v3827, %v2910
        %v3952 = vsel %vm3926, %v3829, %v2912
        %v3954 = vsel %vm3926, %v3831, %v2914
        %v3956 = vsel %vm3926, %v3833, %v2916
        %v3958 = vsel %vm3926, %v3835, %v2918
        %v3960 = vsel %vm3926, %v3836, %v2920
        %v3962 = vsel %vm3926, %v3838, %v2922
        %v3964 = vsel %vm3926, %v3840, %v2924
        %v3966 = vsel %vm3926, %v3842, %v2926
        %v3968 = vsel %vm3926, %v3844, %v2928
        %v3970 = vsel %vm3926, %v3846, %v2930
        %v3972 = vsel %vm3926, %v3848, %v2932
        %v3974 = vsel %vm3926, %v3850, %v2934
        %v3976 = vsel %vm3926, %v3851, %v2936
        %v3978 = vsel %vm3926, %v3853, %v2938
        %v3980 = vsel %vm3926, %v3855, %v2940
        %v3982 = vsel %vm3926, %v3857, %v2942
        %v3984 = vsel %vm3926, %v3859, %v2944
        %v3986 = vsel %vm3926, %v3861, %v2946
        %v3988 = vsel %vm3926, %v3863, %v2948
        %v3990 = vsel %vm3926, %v3865, %v2950
        %v3992 = vsel %vm3926, %v3866, %v2952
        %v3994 = vsel %vm3926, %v3868, %v2954
        %v3996 = vsel %vm3926, %v3870, %v2956
        %v3998 = vsel %vm3926, %v3872, %v2958
        %v4000 = vsel %vm3926, %v3874, %v2960
        %v4002 = vsel %vm3926, %v3876, %v2962
        %v4004 = vsel %vm3926, %v3878, %v2964
        %v4006 = vsel %vm3926, %v3880, %v2966
        %v4008 = vsel %vm3926, %v3881, %v2968
        %v4010 = vsel %vm3926, %v3883, %v2970
        %v4012 = vsel %vm3926, %v3885, %v2972
        %v4014 = vsel %vm3926, %v3887, %v2974
        %v4016 = vsel %vm3926, %v3889, %v2976
        %v4018 = vsel %vm3926, %v3891, %v2978
        %v4020 = vsel %vm3926, %v3893, %v2980
        %v4022 = vsel %vm3926, %v3895, %v2982
        %v4024 = vsel %vm3926, %v3896, %v2984
        %v4026 = vsel %vm3926, %v3898, %v2986
        %v4028 = vsel %vm3926, %v3900, %v2988
        %v4030 = vsel %vm3926, %v3902, %v2990
        %v4032 = vsel %vm3926, %v3904, %v2992
        %v4034 = vsel %vm3926, %v3906, %v2994
        %v4036 = vsel %vm3926, %v3908, %v2996
        %v4038 = vsel %vm3926, %v3910, %v2998
        %v4040 = vsel %vm3926, %v3911, %v3000
        %v4042 = vsel %vm3926, %v3913, %v3002
        %v4044 = vsel %vm3926, %v3915, %v3004
        %v4046 = vsel %vm3926, %v3917, %v3006
        %v4048 = vsel %vm3926, %v3919, %v3008
        %v4050 = vsel %vm3926, %v3921, %v3010
        %v4052 = vsel %vm3926, %v3923, %v3012
        %v4054 = vsel %vm3926, %v3925, %v3014
        %vm4055 = vcmask 261120
        %v4057 = vsel %vm4055, %v3928, %v3017
        %v4059 = vsel %vm4055, %v3930, %v3019
        %v4061 = vsel %vm4055, %v3932, %v3021
        %v4063 = vsel %vm4055, %v3934, %v3023
        %v4065 = vsel %vm4055, %v3936, %v3025
        %v4067 = vsel %vm4055, %v3938, %v3027
        %v4069 = vsel %vm4055, %v3940, %v3029
        %v4071 = vsel %vm4055, %v3942, %v3031
        %v4073 = vsel %vm4055, %v3944, %v3033
        %v4075 = vsel %vm4055, %v3946, %v3035
        %v4077 = vsel %vm4055, %v3948, %v3037
        %v4079 = vsel %vm4055, %v3950, %v3039
        %v4081 = vsel %vm4055, %v3952, %v3041
        %v4083 = vsel %vm4055, %v3954, %v3043
        %v4085 = vsel %vm4055, %v3956, %v3045
        %v4087 = vsel %vm4055, %v3958, %v3047
        %v4089 = vsel %vm4055, %v3960, %v3049
        %v4091 = vsel %vm4055, %v3962, %v3051
        %v4093 = vsel %vm4055, %v3964, %v3053
        %v4095 = vsel %vm4055, %v3966, %v3055
        %v4097 = vsel %vm4055, %v3968, %v3057
        %v4099 = vsel %vm4055, %v3970, %v3059
        %v4101 = vsel %vm4055, %v3972, %v3061
        %v4103 = vsel %vm4055, %v3974, %v3063
        %v4105 = vsel %vm4055, %v3976, %v3065
        %v4107 = vsel %vm4055, %v3978, %v3067
        %v4109 = vsel %vm4055, %v3980, %v3069
        %v4111 = vsel %vm4055, %v3982, %v3071
        %v4113 = vsel %vm4055, %v3984, %v3073
        %v4115 = vsel %vm4055, %v3986, %v3075
        %v4117 = vsel %vm4055, %v3988, %v3077
        %v4119 = vsel %vm4055, %v3990, %v3079
        %v4121 = vsel %vm4055, %v3992, %v3081
        %v4123 = vsel %vm4055, %v3994, %v3083
        %v4125 = vsel %vm4055, %v3996, %v3085
        %v4127 = vsel %vm4055, %v3998, %v3087
        %v4129 = vsel %vm4055, %v4000, %v3089
        %v4131 = vsel %vm4055, %v4002, %v3091
        %v4133 = vsel %vm4055, %v4004, %v3093
        %v4135 = vsel %vm4055, %v4006, %v3095
        %v4137 = vsel %vm4055, %v4008, %v3097
        %v4139 = vsel %vm4055, %v4010, %v3099
        %v4141 = vsel %vm4055, %v4012, %v3101
        %v4143 = vsel %vm4055, %v4014, %v3103
        %v4145 = vsel %vm4055, %v4016, %v3105
        %v4147 = vsel %vm4055, %v4018, %v3107
        %v4149 = vsel %vm4055, %v4020, %v3109
        %v4151 = vsel %vm4055, %v4022, %v3111
        %v4153 = vsel %vm4055, %v4024, %v3113
        %v4155 = vsel %vm4055, %v4026, %v3115
        %v4157 = vsel %vm4055, %v4028, %v3117
        %v4159 = vsel %vm4055, %v4030, %v3119
        %v4161 = vsel %vm4055, %v4032, %v3121
        %v4163 = vsel %vm4055, %v4034, %v3123
        %v4165 = vsel %vm4055, %v4036, %v3125
        %v4167 = vsel %vm4055, %v4038, %v3127
        %v4169 = vsel %vm4055, %v4040, %v3129
        %v4171 = vsel %vm4055, %v4042, %v3131
        %v4173 = vsel %vm4055, %v4044, %v3133
        %v4175 = vsel %vm4055, %v4046, %v3135
        %v4177 = vsel %vm4055, %v4048, %v3137
        %v4179 = vsel %vm4055, %v4050, %v3139
        %v4181 = vsel %vm4055, %v4052, %v3141
        %v4183 = vsel %vm4055, %v4054, %v3143
        %v4184 = vld [vmem:[%s1] sm:$0xf]
        %v4185 = vld [vmem:[%s1 + $0x4] sm:$0xf]
        %v4186 = vld [vmem:[%s1 + $0x8] sm:$0xf]
        %v4187 = vld [vmem:[%s1 + $0xc] sm:$0xf]
        %v4188 = vld [vmem:[%s1 + $0x10] sm:$0x3]
        %v4189 = vld [vmem:[%s2] sm:$0x1]
        %v4191 = vlaneseq
        %v4192 = vshrl.u32 %v4191, 7
        %v4193 = vsub.s32 0, %v4192
        %v4194 = vrot.slane %v4189, %v4193
        %v4260 = vunpack.c.l.b16 %v4057
        %v4261 = vunpack.c.l.b16 %v4059
        %v4262 = vunpack.c.l.b16 %v4061
        %v4263 = vunpack.c.l.b16 %v4063
        %v4264 = vunpack.c.l.b16 %v4065
        %v4265 = vunpack.c.l.b16 %v4067
        %v4266 = vunpack.c.l.b16 %v4069
        %v4267 = vunpack.c.l.b16 %v4071
        %v4268 = vunpack.c.l.b16 %v4073
        %v4269 = vunpack.c.l.b16 %v4075
        %v4270 = vunpack.c.l.b16 %v4077
        %v4271 = vunpack.c.l.b16 %v4079
        %v4272 = vunpack.c.l.b16 %v4081
        %v4273 = vunpack.c.l.b16 %v4083
        %v4274 = vunpack.c.l.b16 %v4085
        %v4275 = vunpack.c.l.b16 %v4087
        %v4276 = vunpack.c.l.b16 %v4089
        %v4277 = vunpack.c.l.b16 %v4091
        %v4278 = vunpack.c.l.b16 %v4093
        %v4279 = vunpack.c.l.b16 %v4095
        %v4280 = vunpack.c.l.b16 %v4097
        %v4281 = vunpack.c.l.b16 %v4099
        %v4282 = vunpack.c.l.b16 %v4101
        %v4283 = vunpack.c.l.b16 %v4103
        %v4284 = vunpack.c.l.b16 %v4105
        %v4285 = vunpack.c.l.b16 %v4107
        %v4286 = vunpack.c.l.b16 %v4109
        %v4287 = vunpack.c.l.b16 %v4111
        %v4288 = vunpack.c.l.b16 %v4113
        %v4289 = vunpack.c.l.b16 %v4115
        %v4290 = vunpack.c.l.b16 %v4117
        %v4291 = vunpack.c.l.b16 %v4119
        %v4292 = vunpack.c.l.b16 %v4121
        %v4293 = vunpack.c.l.b16 %v4123
        %v4294 = vunpack.c.l.b16 %v4125
        %v4295 = vunpack.c.l.b16 %v4127
        %v4296 = vunpack.c.l.b16 %v4129
        %v4297 = vunpack.c.l.b16 %v4131
        %v4298 = vunpack.c.l.b16 %v4133
        %v4299 = vunpack.c.l.b16 %v4135
        %v4300 = vunpack.c.l.b16 %v4137
        %v4301 = vunpack.c.l.b16 %v4139
        %v4302 = vunpack.c.l.b16 %v4141
        %v4303 = vunpack.c.l.b16 %v4143
        %v4304 = vunpack.c.l.b16 %v4145
        %v4305 = vunpack.c.l.b16 %v4147
        %v4306 = vunpack.c.l.b16 %v4149
        %v4307 = vunpack.c.l.b16 %v4151
        %v4308 = vunpack.c.l.b16 %v4153
        %v4309 = vunpack.c.l.b16 %v4155
        %v4310 = vunpack.c.l.b16 %v4157
        %v4311 = vunpack.c.l.b16 %v4159
        %v4312 = vunpack.c.l.b16 %v4161
        %v4313 = vunpack.c.l.b16 %v4163
        %v4314 = vunpack.c.l.b16 %v4165
        %v4315 = vunpack.c.l.b16 %v4167
        %v4316 = vunpack.c.l.b16 %v4169
        %v4317 = vunpack.c.l.b16 %v4171
        %v4318 = vunpack.c.l.b16 %v4173
        %v4319 = vunpack.c.l.b16 %v4175
        %v4320 = vunpack.c.l.b16 %v4177
        %v4321 = vunpack.c.l.b16 %v4179
        %v4322 = vunpack.c.l.b16 %v4181
        %v4323 = vunpack.c.l.b16 %v4183
        %v4324 = vpack.c.b16 %v4261, %v4260
        %v4325 = vpack.c.b16 %v4263, %v4262
        %v4326 = vpack.c.b16 %v4265, %v4264
        %v4327 = vpack.c.b16 %v4267, %v4266
        %v4328 = vpack.c.b16 %v4269, %v4268
        %v4329 = vpack.c.b16 %v4271, %v4270
        %v4330 = vpack.c.b16 %v4273, %v4272
        %v4331 = vpack.c.b16 %v4275, %v4274
        %v4332 = vpack.c.b16 %v4277, %v4276
        %v4333 = vpack.c.b16 %v4279, %v4278
        %v4334 = vpack.c.b16 %v4281, %v4280
        %v4335 = vpack.c.b16 %v4283, %v4282
        %v4336 = vpack.c.b16 %v4285, %v4284
        %v4337 = vpack.c.b16 %v4287, %v4286
        %v4338 = vpack.c.b16 %v4289, %v4288
        %v4339 = vpack.c.b16 %v4291, %v4290
        %v4340 = vpack.c.b16 %v4293, %v4292
        %v4341 = vpack.c.b16 %v4295, %v4294
        %v4342 = vpack.c.b16 %v4297, %v4296
        %v4343 = vpack.c.b16 %v4299, %v4298
        %v4344 = vpack.c.b16 %v4301, %v4300
        %v4345 = vpack.c.b16 %v4303, %v4302
        %v4346 = vpack.c.b16 %v4305, %v4304
        %v4347 = vpack.c.b16 %v4307, %v4306
        %v4348 = vpack.c.b16 %v4309, %v4308
        %v4349 = vpack.c.b16 %v4311, %v4310
        %v4350 = vpack.c.b16 %v4313, %v4312
        %v4351 = vpack.c.b16 %v4315, %v4314
        %v4352 = vpack.c.b16 %v4317, %v4316
        %v4353 = vpack.c.b16 %v4319, %v4318
        %v4354 = vpack.c.b16 %v4321, %v4320
        %v4355 = vpack.c.b16 %v4323, %v4322
        %v4361 = vunpack.c.l.b16 %v4184
        %v4362 = vunpack.c.l.b16 %v4185
        %v4363 = vunpack.c.l.b16 %v4186
        %v4364 = vunpack.c.l.b16 %v4187
        %v4365 = vunpack.c.l.b16 %v4188
        %v4366 = vpack.c.b16 %v4362, %v4361
        %v4367 = vpack.c.b16 %v4364, %v4363
        %v4368 = vpack.c.b16 %v4365, %v4365
        %vm4371 = vcmask 293888
        %v4373 = vsel %vm4371, %v4324, 0
        %v4376 = vsel %vm4371, %v4325, 0
        %v4379 = vsel %vm4371, %v4326, 0
        %v4382 = vsel %vm4371, %v4327, 0
        %v4385 = vsel %vm4371, %v4328, 0
        %v4388 = vsel %vm4371, %v4329, 0
        %v4391 = vsel %vm4371, %v4330, 0
        %v4394 = vsel %vm4371, %v4331, 0
        %v4397 = vsel %vm4371, %v4332, 0
        %v4400 = vsel %vm4371, %v4333, 0
        %v4403 = vsel %vm4371, %v4334, 0
        %v4406 = vsel %vm4371, %v4335, 0
        %v4409 = vsel %vm4371, %v4336, 0
        %v4412 = vsel %vm4371, %v4337, 0
        %v4415 = vsel %vm4371, %v4338, 0
        %v4418 = vsel %vm4371, %v4339, 0
        %v4421 = vsel %vm4371, %v4340, 0
        %v4424 = vsel %vm4371, %v4341, 0
        %v4427 = vsel %vm4371, %v4342, 0
        %v4430 = vsel %vm4371, %v4343, 0
        %v4433 = vsel %vm4371, %v4344, 0
        %v4436 = vsel %vm4371, %v4345, 0
        %v4439 = vsel %vm4371, %v4346, 0
        %v4442 = vsel %vm4371, %v4347, 0
        %v4445 = vsel %vm4371, %v4348, 0
        %v4448 = vsel %vm4371, %v4349, 0
        %v4451 = vsel %vm4371, %v4350, 0
        %v4454 = vsel %vm4371, %v4351, 0
        %v4457 = vsel %vm4371, %v4352, 0
        %v4460 = vsel %vm4371, %v4353, 0
        %v4463 = vsel %vm4371, %v4354, 0
        %v4466 = vsel %vm4371, %v4355, 0
        %vm4468 = vcmask 1041408
        %v4470 = vsel %vm4468, %v4368, 0
        %4472 = vmatprep.subr.bf16.mxu0 0
        %4473 = vmatpush1.bf16.msra.mxu0 %v4366
        %4474 = vmatprep.subr.bf16.mxu0 0
        %4475 = vmatpush1.bf16.msra.mxu0 %v4367
        %4476 = vmatprep.subr.bf16.mxu0 0
        %4477 = vmatpush1.bf16.msra.mxu0 %v4470
        %4478 = vmatprep.subr.bf16.mxu0 0
        %4479 = vmatpush1.bf16.msra.mxu0 0
        %4480 = vmatprep.subr.bf16.mxu0 0
        %4481 = vmatpush1.bf16.msra.mxu0 0
        %4482 = vmatprep.subr.bf16.mxu0 0
        %4483 = vmatpush1.bf16.msra.mxu0 0
        %4484 = vmatprep.subr.bf16.mxu0 0
        %4485 = vmatpush1.bf16.msra.mxu0 0
        %4486 = vmatprep.subr.bf16.mxu0 0
        %4487 = vmatpush1.bf16.msra.mxu0 0
        %4488 = vmatprep.subr.bf16.mxu0 0
        %4489 = vmatpush1.bf16.msra.mxu0 0
        %4490 = vmatprep.subr.bf16.mxu0 0
        %4491 = vmatpush1.bf16.msra.mxu0 0
        %4492 = vmatprep.subr.bf16.mxu0 0
        %4493 = vmatpush1.bf16.msra.mxu0 0
        %4494 = vmatprep.subr.bf16.mxu0 0
        %4495 = vmatpush1.bf16.msra.mxu0 0
        %4496 = vmatprep.subr.bf16.mxu0 0
        %4497 = vmatpush1.bf16.msra.mxu0 0
        %4498 = vmatprep.subr.bf16.mxu0 0
        %4499 = vmatpush1.bf16.msra.mxu0 0
        %4500 = vmatprep.subr.bf16.mxu0 0
        %4501 = vmatpush1.bf16.msra.mxu0 0
        %4502 = vmatprep.subr.bf16.mxu0 0
        %4503 = vmatpush1.bf16.msra.mxu0 0
        %4504 = vmatprep.mubr.bf16.mxu0 0
        %4505 = vmatmul.mubr.bf16.gmra.mrb[0].mxu0 %v4373
        %v4506 = vpop.f32.mrb[0].mxu0
        %v4507 = vadd.f32 %v4194, %v4506
        %v4508 = vpop.f32.mrb[0].mxu0
        %v4509 = vpop.f32.mrb[0].mxu0
        %v4510 = vadd.f32 %v4194, %v4509
        %v4511 = vpop.f32.mrb[0].mxu0
        %4512 = vmatprep.mubr.bf16.mxu0 0
        %4513 = vmatmul.mubr.bf16.gmra.mrb[0].mxu0 %v4376
        %v4514 = vpop.f32.mrb[0].mxu0
        %v4515 = vadd.f32 %v4194, %v4514
        %v4516 = vpop.f32.mrb[0].mxu0
        %v4517 = vpop.f32.mrb[0].mxu0
        %v4518 = vadd.f32 %v4194, %v4517
        %v4519 = vpop.f32.mrb[0].mxu0
        %4520 = vmatprep.mubr.bf16.mxu0 0
        %4521 = vmatmul.mubr.bf16.gmra.mrb[0].mxu0 %v4379
        %v4522 = vpop.f32.mrb[0].mxu0
        %v4523 = vadd.f32 %v4194, %v4522
        %v4524 = vpop.f32.mrb[0].mxu0
        %v4525 = vpop.f32.mrb[0].mxu0
        %v4526 = vadd.f32 %v4194, %v4525
        %v4527 = vpop.f32.mrb[0].mxu0
        %4528 = vmatprep.mubr.bf16.mxu0 0
        %4529 = vmatmul.mubr.bf16.gmra.mrb[0].mxu0 %v4382
        %v4530 = vpop.f32.mrb[0].mxu0
        %v4531 = vadd.f32 %v4194, %v4530
        %v4532 = vpop.f32.mrb[0].mxu0
        %v4533 = vpop.f32.mrb[0].mxu0
        %v4534 = vadd.f32 %v4194, %v4533
        %v4535 = vpop.f32.mrb[0].mxu0
        %4536 = vmatprep.mubr.bf16.mxu0 0
        %4537 = vmatmul.mubr.bf16.gmra.mrb[0].mxu0 %v4385
        %v4538 = vpop.f32.mrb[0].mxu0
        %v4539 = vadd.f32 %v4194, %v4538
        %v4540 = vpop.f32.mrb[0].mxu0
        %v4541 = vpop.f32.mrb[0].mxu0
        %v4542 = vadd.f32 %v4194, %v4541
        %v4543 = vpop.f32.mrb[0].mxu0
        %4544 = vmatprep.mubr.bf16.mxu0 0
        %4545 = vmatmul.mubr.bf16.gmra.mrb[0].mxu0 %v4388
        %v4546 = vpop.f32.mrb[0].mxu0
        %v4547 = vadd.f32 %v4194, %v4546
        %v4548 = vpop.f32.mrb[0].mxu0
        %v4549 = vpop.f32.mrb[0].mxu0
        %v4550 = vadd.f32 %v4194, %v4549
        %v4551 = vpop.f32.mrb[0].mxu0
        %4552 = vmatprep.mubr.bf16.mxu0 0
        %4553 = vmatmul.mubr.bf16.gmra.mrb[0].mxu0 %v4391
        %v4554 = vpop.f32.mrb[0].mxu0
        %v4555 = vadd.f32 %v4194, %v4554
        %v4556 = vpop.f32.mrb[0].mxu0
        %v4557 = vpop.f32.mrb[0].mxu0
        %v4558 = vadd.f32 %v4194, %v4557
        %v4559 = vpop.f32.mrb[0].mxu0
        %4560 = vmatprep.mubr.bf16.mxu0 0
        %4561 = vmatmul.mubr.bf16.gmra.mrb[0].mxu0 %v4394
        %v4562 = vpop.f32.mrb[0].mxu0
        %v4563 = vadd.f32 %v4194, %v4562
        %v4564 = vpop.f32.mrb[0].mxu0
        %v4565 = vpop.f32.mrb[0].mxu0
        %v4566 = vadd.f32 %v4194, %v4565
        %v4567 = vpop.f32.mrb[0].mxu0
        %4568 = vmatprep.mubr.bf16.mxu0 0
        %4569 = vmatmul.mubr.bf16.gmra.mrb[0].mxu0 %v4397
        %v4570 = vpop.f32.mrb[0].mxu0
        %v4571 = vadd.f32 %v4194, %v4570
        %v4572 = vpop.f32.mrb[0].mxu0
        %v4573 = vpop.f32.mrb[0].mxu0
        %v4574 = vadd.f32 %v4194, %v4573
        %v4575 = vpop.f32.mrb[0].mxu0
        %4576 = vmatprep.mubr.bf16.mxu0 0
        %4577 = vmatmul.mubr.bf16.gmra.mrb[0].mxu0 %v4400
        %v4578 = vpop.f32.mrb[0].mxu0
        %v4579 = vadd.f32 %v4194, %v4578
        %v4580 = vpop.f32.mrb[0].mxu0
        %v4581 = vpop.f32.mrb[0].mxu0
        %v4582 = vadd.f32 %v4194, %v4581
        %v4583 = vpop.f32.mrb[0].mxu0
        %4584 = vmatprep.mubr.bf16.mxu0 0
        %4585 = vmatmul.mubr.bf16.gmra.mrb[0].mxu0 %v4403
        %v4586 = vpop.f32.mrb[0].mxu0
        %v4587 = vadd.f32 %v4194, %v4586
        %v4588 = vpop.f32.mrb[0].mxu0
        %v4589 = vpop.f32.mrb[0].mxu0
        %v4590 = vadd.f32 %v4194, %v4589
        %v4591 = vpop.f32.mrb[0].mxu0
        %4592 = vmatprep.mubr.bf16.mxu0 0
        %4593 = vmatmul.mubr.bf16.gmra.mrb[0].mxu0 %v4406
        %v4594 = vpop.f32.mrb[0].mxu0
        %v4595 = vadd.f32 %v4194, %v4594
        %v4596 = vpop.f32.mrb[0].mxu0
        %v4597 = vpop.f32.mrb[0].mxu0
        %v4598 = vadd.f32 %v4194, %v4597
        %v4599 = vpop.f32.mrb[0].mxu0
        %4600 = vmatprep.mubr.bf16.mxu0 0
        %4601 = vmatmul.mubr.bf16.gmra.mrb[0].mxu0 %v4409
        %v4602 = vpop.f32.mrb[0].mxu0
        %v4603 = vadd.f32 %v4194, %v4602
        %v4604 = vpop.f32.mrb[0].mxu0
        %v4605 = vpop.f32.mrb[0].mxu0
        %v4606 = vadd.f32 %v4194, %v4605
        %v4607 = vpop.f32.mrb[0].mxu0
        %4608 = vmatprep.mubr.bf16.mxu0 0
        %4609 = vmatmul.mubr.bf16.gmra.mrb[0].mxu0 %v4412
        %v4610 = vpop.f32.mrb[0].mxu0
        %v4611 = vadd.f32 %v4194, %v4610
        %v4612 = vpop.f32.mrb[0].mxu0
        %v4613 = vpop.f32.mrb[0].mxu0
        %v4614 = vadd.f32 %v4194, %v4613
        %v4615 = vpop.f32.mrb[0].mxu0
        %4616 = vmatprep.mubr.bf16.mxu0 0
        %4617 = vmatmul.mubr.bf16.gmra.mrb[0].mxu0 %v4415
        %v4618 = vpop.f32.mrb[0].mxu0
        %v4619 = vadd.f32 %v4194, %v4618
        %v4620 = vpop.f32.mrb[0].mxu0
        %v4621 = vpop.f32.mrb[0].mxu0
        %v4622 = vadd.f32 %v4194, %v4621
        %v4623 = vpop.f32.mrb[0].mxu0
        %4624 = vmatprep.mubr.bf16.mxu0 0
        %4625 = vmatmul.mubr.bf16.gmra.mrb[0].mxu0 %v4418
        %v4626 = vpop.f32.mrb[0].mxu0
        %v4627 = vadd.f32 %v4194, %v4626
        %v4628 = vpop.f32.mrb[0].mxu0
        %v4629 = vpop.f32.mrb[0].mxu0
        %v4630 = vadd.f32 %v4194, %v4629
        %v4631 = vpop.f32.mrb[0].mxu0
        %4632 = vmatprep.mubr.bf16.mxu0 0
        %4633 = vmatmul.mubr.bf16.gmra.mrb[0].mxu0 %v4421
        %v4634 = vpop.f32.mrb[0].mxu0
        %v4635 = vadd.f32 %v4194, %v4634
        %v4636 = vpop.f32.mrb[0].mxu0
        %v4637 = vpop.f32.mrb[0].mxu0
        %v4638 = vadd.f32 %v4194, %v4637
        %v4639 = vpop.f32.mrb[0].mxu0
        %4640 = vmatprep.mubr.bf16.mxu0 0
        %4641 = vmatmul.mubr.bf16.gmra.mrb[0].mxu0 %v4424
        %v4642 = vpop.f32.mrb[0].mxu0
        %v4643 = vadd.f32 %v4194, %v4642
        %v4644 = vpop.f32.mrb[0].mxu0
        %v4645 = vpop.f32.mrb[0].mxu0
        %v4646 = vadd.f32 %v4194, %v4645
        %v4647 = vpop.f32.mrb[0].mxu0
        %4648 = vmatprep.mubr.bf16.mxu0 0
        %4649 = vmatmul.mubr.bf16.gmra.mrb[0].mxu0 %v4427
        %v4650 = vpop.f32.mrb[0].mxu0
        %v4651 = vadd.f32 %v4194, %v4650
        %v4652 = vpop.f32.mrb[0].mxu0
        %v4653 = vpop.f32.mrb[0].mxu0
        %v4654 = vadd.f32 %v4194, %v4653
        %v4655 = vpop.f32.mrb[0].mxu0
        %4656 = vmatprep.mubr.bf16.mxu0 0
        %4657 = vmatmul.mubr.bf16.gmra.mrb[0].mxu0 %v4430
        %v4658 = vpop.f32.mrb[0].mxu0
        %v4659 = vadd.f32 %v4194, %v4658
        %v4660 = vpop.f32.mrb[0].mxu0
        %v4661 = vpop.f32.mrb[0].mxu0
        %v4662 = vadd.f32 %v4194, %v4661
        %v4663 = vpop.f32.mrb[0].mxu0
        %4664 = vmatprep.mubr.bf16.mxu0 0
        %4665 = vmatmul.mubr.bf16.gmra.mrb[0].mxu0 %v4433
        %v4666 = vpop.f32.mrb[0].mxu0
        %v4667 = vadd.f32 %v4194, %v4666
        %v4668 = vpop.f32.mrb[0].mxu0
        %v4669 = vpop.f32.mrb[0].mxu0
        %v4670 = vadd.f32 %v4194, %v4669
        %v4671 = vpop.f32.mrb[0].mxu0
        %4672 = vmatprep.mubr.bf16.mxu0 0
        %4673 = vmatmul.mubr.bf16.gmra.mrb[0].mxu0 %v4436
        %v4674 = vpop.f32.mrb[0].mxu0
        %v4675 = vadd.f32 %v4194, %v4674
        %v4676 = vpop.f32.mrb[0].mxu0
        %v4677 = vpop.f32.mrb[0].mxu0
        %v4678 = vadd.f32 %v4194, %v4677
        %v4679 = vpop.f32.mrb[0].mxu0
        %4680 = vmatprep.mubr.bf16.mxu0 0
        %4681 = vmatmul.mubr.bf16.gmra.mrb[0].mxu0 %v4439
        %v4682 = vpop.f32.mrb[0].mxu0
        %v4683 = vadd.f32 %v4194, %v4682
        %v4684 = vpop.f32.mrb[0].mxu0
        %v4685 = vpop.f32.mrb[0].mxu0
        %v4686 = vadd.f32 %v4194, %v4685
        %v4687 = vpop.f32.mrb[0].mxu0
        %4688 = vmatprep.mubr.bf16.mxu0 0
        %4689 = vmatmul.mubr.bf16.gmra.mrb[0].mxu0 %v4442
        %v4690 = vpop.f32.mrb[0].mxu0
        %v4691 = vadd.f32 %v4194, %v4690
        %v4692 = vpop.f32.mrb[0].mxu0
        %v4693 = vpop.f32.mrb[0].mxu0
        %v4694 = vadd.f32 %v4194, %v4693
        %v4695 = vpop.f32.mrb[0].mxu0
        %4696 = vmatprep.mubr.bf16.mxu0 0
        %4697 = vmatmul.mubr.bf16.gmra.mrb[0].mxu0 %v4445
        %v4698 = vpop.f32.mrb[0].mxu0
        %v4699 = vadd.f32 %v4194, %v4698
        %v4700 = vpop.f32.mrb[0].mxu0
        %v4701 = vpop.f32.mrb[0].mxu0
        %v4702 = vadd.f32 %v4194, %v4701
        %v4703 = vpop.f32.mrb[0].mxu0
        %4704 = vmatprep.mubr.bf16.mxu0 0
        %4705 = vmatmul.mubr.bf16.gmra.mrb[0].mxu0 %v4448
        %v4706 = vpop.f32.mrb[0].mxu0
        %v4707 = vadd.f32 %v4194, %v4706
        %v4708 = vpop.f32.mrb[0].mxu0
        %v4709 = vpop.f32.mrb[0].mxu0
        %v4710 = vadd.f32 %v4194, %v4709
        %v4711 = vpop.f32.mrb[0].mxu0
        %4712 = vmatprep.mubr.bf16.mxu0 0
        %4713 = vmatmul.mubr.bf16.gmra.mrb[0].mxu0 %v4451
        %v4714 = vpop.f32.mrb[0].mxu0
        %v4715 = vadd.f32 %v4194, %v4714
        %v4716 = vpop.f32.mrb[0].mxu0
        %v4717 = vpop.f32.mrb[0].mxu0
        %v4718 = vadd.f32 %v4194, %v4717
        %v4719 = vpop.f32.mrb[0].mxu0
        %4720 = vmatprep.mubr.bf16.mxu0 0
        %4721 = vmatmul.mubr.bf16.gmra.mrb[0].mxu0 %v4454
        %v4722 = vpop.f32.mrb[0].mxu0
        %v4723 = vadd.f32 %v4194, %v4722
        %v4724 = vpop.f32.mrb[0].mxu0
        %v4725 = vpop.f32.mrb[0].mxu0
        %v4726 = vadd.f32 %v4194, %v4725
        %v4727 = vpop.f32.mrb[0].mxu0
        %4728 = vmatprep.mubr.bf16.mxu0 0
        %4729 = vmatmul.mubr.bf16.gmra.mrb[0].mxu0 %v4457
        %v4730 = vpop.f32.mrb[0].mxu0
        %v4731 = vadd.f32 %v4194, %v4730
        %v4732 = vpop.f32.mrb[0].mxu0
        %v4733 = vpop.f32.mrb[0].mxu0
        %v4734 = vadd.f32 %v4194, %v4733
        %v4735 = vpop.f32.mrb[0].mxu0
        %4736 = vmatprep.mubr.bf16.mxu0 0
        %4737 = vmatmul.mubr.bf16.gmra.mrb[0].mxu0 %v4460
        %v4738 = vpop.f32.mrb[0].mxu0
        %v4739 = vadd.f32 %v4194, %v4738
        %v4740 = vpop.f32.mrb[0].mxu0
        %v4741 = vpop.f32.mrb[0].mxu0
        %v4742 = vadd.f32 %v4194, %v4741
        %v4743 = vpop.f32.mrb[0].mxu0
        %4744 = vmatprep.mubr.bf16.mxu0 0
        %4745 = vmatmul.mubr.bf16.gmra.mrb[0].mxu0 %v4463
        %v4746 = vpop.f32.mrb[0].mxu0
        %v4747 = vadd.f32 %v4194, %v4746
        %v4748 = vpop.f32.mrb[0].mxu0
        %v4749 = vpop.f32.mrb[0].mxu0
        %v4750 = vadd.f32 %v4194, %v4749
        %v4751 = vpop.f32.mrb[0].mxu0
        %4752 = vmatprep.mubr.bf16.mxu0 0
        %4753 = vmatmul.mubr.bf16.gmra.mrb[0].mxu0 %v4466
        %v4754 = vpop.f32.mrb[0].mxu0
        %v4755 = vadd.f32 %v4194, %v4754
        %v4756 = vpop.f32.mrb[0].mxu0
        %v4757 = vpop.f32.mrb[0].mxu0
        %v4758 = vadd.f32 %v4194, %v4757
        %v4759 = vpop.f32.mrb[0].mxu0
        %4760 = vdwg.mxu0
        %vm4761 = vcmp.gt.f32.partialorder %v4507, 0.0
        %vm4762 = vcmp.gt.f32.partialorder %v4510, 0.0
        %vm4763 = vcmp.gt.f32.partialorder %v4515, 0.0
        %vm4764 = vcmp.gt.f32.partialorder %v4518, 0.0
        %vm4765 = vcmp.gt.f32.partialorder %v4523, 0.0
        %vm4766 = vcmp.gt.f32.partialorder %v4526, 0.0
        %vm4767 = vcmp.gt.f32.partialorder %v4531, 0.0
        %vm4768 = vcmp.gt.f32.partialorder %v4534, 0.0
        %vm4769 = vcmp.gt.f32.partialorder %v4539, 0.0
        %vm4770 = vcmp.gt.f32.partialorder %v4542, 0.0
        %vm4771 = vcmp.gt.f32.partialorder %v4547, 0.0
        %vm4772 = vcmp.gt.f32.partialorder %v4550, 0.0
        %vm4773 = vcmp.gt.f32.partialorder %v4555, 0.0
        %vm4774 = vcmp.gt.f32.partialorder %v4558, 0.0
        %vm4775 = vcmp.gt.f32.partialorder %v4563, 0.0
        %vm4776 = vcmp.gt.f32.partialorder %v4566, 0.0
        %vm4777 = vcmp.gt.f32.partialorder %v4571, 0.0
        %vm4778 = vcmp.gt.f32.partialorder %v4574, 0.0
        %vm4779 = vcmp.gt.f32.partialorder %v4579, 0.0
        %vm4780 = vcmp.gt.f32.partialorder %v4582, 0.0
        %vm4781 = vcmp.gt.f32.partialorder %v4587, 0.0
        %vm4782 = vcmp.gt.f32.partialorder %v4590, 0.0
        %vm4783 = vcmp.gt.f32.partialorder %v4595, 0.0
        %vm4784 = vcmp.gt.f32.partialorder %v4598, 0.0
        %vm4785 = vcmp.gt.f32.partialorder %v4603, 0.0
        %vm4786 = vcmp.gt.f32.partialorder %v4606, 0.0
        %vm4787 = vcmp.gt.f32.partialorder %v4611, 0.0
        %vm4788 = vcmp.gt.f32.partialorder %v4614, 0.0
        %vm4789 = vcmp.gt.f32.partialorder %v4619, 0.0
        %vm4790 = vcmp.gt.f32.partialorder %v4622, 0.0
        %vm4791 = vcmp.gt.f32.partialorder %v4627, 0.0
        %vm4792 = vcmp.gt.f32.partialorder %v4630, 0.0
        %vm4793 = vcmp.gt.f32.partialorder %v4635, 0.0
        %vm4794 = vcmp.gt.f32.partialorder %v4638, 0.0
        %vm4795 = vcmp.gt.f32.partialorder %v4643, 0.0
        %vm4796 = vcmp.gt.f32.partialorder %v4646, 0.0
        %vm4797 = vcmp.gt.f32.partialorder %v4651, 0.0
        %vm4798 = vcmp.gt.f32.partialorder %v4654, 0.0
        %vm4799 = vcmp.gt.f32.partialorder %v4659, 0.0
        %vm4800 = vcmp.gt.f32.partialorder %v4662, 0.0
        %vm4801 = vcmp.gt.f32.partialorder %v4667, 0.0
        %vm4802 = vcmp.gt.f32.partialorder %v4670, 0.0
        %vm4803 = vcmp.gt.f32.partialorder %v4675, 0.0
        %vm4804 = vcmp.gt.f32.partialorder %v4678, 0.0
        %vm4805 = vcmp.gt.f32.partialorder %v4683, 0.0
        %vm4806 = vcmp.gt.f32.partialorder %v4686, 0.0
        %vm4807 = vcmp.gt.f32.partialorder %v4691, 0.0
        %vm4808 = vcmp.gt.f32.partialorder %v4694, 0.0
        %vm4809 = vcmp.gt.f32.partialorder %v4699, 0.0
        %vm4810 = vcmp.gt.f32.partialorder %v4702, 0.0
        %vm4811 = vcmp.gt.f32.partialorder %v4707, 0.0
        %vm4812 = vcmp.gt.f32.partialorder %v4710, 0.0
        %vm4813 = vcmp.gt.f32.partialorder %v4715, 0.0
        %vm4814 = vcmp.gt.f32.partialorder %v4718, 0.0
        %vm4815 = vcmp.gt.f32.partialorder %v4723, 0.0
        %vm4816 = vcmp.gt.f32.partialorder %v4726, 0.0
        %vm4817 = vcmp.gt.f32.partialorder %v4731, 0.0
        %vm4818 = vcmp.gt.f32.partialorder %v4734, 0.0
        %vm4819 = vcmp.gt.f32.partialorder %v4739, 0.0
        %vm4820 = vcmp.gt.f32.partialorder %v4742, 0.0
        %vm4821 = vcmp.gt.f32.partialorder %v4747, 0.0
        %vm4822 = vcmp.gt.f32.partialorder %v4750, 0.0
        %vm4823 = vcmp.gt.f32.partialorder %v4755, 0.0
        %vm4824 = vcmp.gt.f32.partialorder %v4758, 0.0
        %v4825 = vmul.f32 %v4507, 0.2
        %v4826 = vmul.f32 %v4510, 0.2
        %v4827 = vmul.f32 %v4515, 0.2
        %v4828 = vmul.f32 %v4518, 0.2
        %v4829 = vmul.f32 %v4523, 0.2
        %v4830 = vmul.f32 %v4526, 0.2
        %v4831 = vmul.f32 %v4531, 0.2
        %v4832 = vmul.f32 %v4534, 0.2
        %v4833 = vmul.f32 %v4539, 0.2
        %v4834 = vmul.f32 %v4542, 0.2
        %v4835 = vmul.f32 %v4547, 0.2
        %v4836 = vmul.f32 %v4550, 0.2
        %v4837 = vmul.f32 %v4555, 0.2
        %v4838 = vmul.f32 %v4558, 0.2
        %v4839 = vmul.f32 %v4563, 0.2
        %v4840 = vmul.f32 %v4566, 0.2
        %v4841 = vmul.f32 %v4571, 0.2
        %v4842 = vmul.f32 %v4574, 0.2
        %v4843 = vmul.f32 %v4579, 0.2
        %v4844 = vmul.f32 %v4582, 0.2
        %v4845 = vmul.f32 %v4587, 0.2
        %v4846 = vmul.f32 %v4590, 0.2
        %v4847 = vmul.f32 %v4595, 0.2
        %v4848 = vmul.f32 %v4598, 0.2
        %v4849 = vmul.f32 %v4603, 0.2
        %v4850 = vmul.f32 %v4606, 0.2
        %v4851 = vmul.f32 %v4611, 0.2
        %v4852 = vmul.f32 %v4614, 0.2
        %v4853 = vmul.f32 %v4619, 0.2
        %v4854 = vmul.f32 %v4622, 0.2
        %v4855 = vmul.f32 %v4627, 0.2
        %v4856 = vmul.f32 %v4630, 0.2
        %v4857 = vmul.f32 %v4635, 0.2
        %v4858 = vmul.f32 %v4638, 0.2
        %v4859 = vmul.f32 %v4643, 0.2
        %v4860 = vmul.f32 %v4646, 0.2
        %v4861 = vmul.f32 %v4651, 0.2
        %v4862 = vmul.f32 %v4654, 0.2
        %v4863 = vmul.f32 %v4659, 0.2
        %v4864 = vmul.f32 %v4662, 0.2
        %v4865 = vmul.f32 %v4667, 0.2
        %v4866 = vmul.f32 %v4670, 0.2
        %v4867 = vmul.f32 %v4675, 0.2
        %v4868 = vmul.f32 %v4678, 0.2
        %v4869 = vmul.f32 %v4683, 0.2
        %v4870 = vmul.f32 %v4686, 0.2
        %v4871 = vmul.f32 %v4691, 0.2
        %v4872 = vmul.f32 %v4694, 0.2
        %v4873 = vmul.f32 %v4699, 0.2
        %v4874 = vmul.f32 %v4702, 0.2
        %v4875 = vmul.f32 %v4707, 0.2
        %v4876 = vmul.f32 %v4710, 0.2
        %v4877 = vmul.f32 %v4715, 0.2
        %v4878 = vmul.f32 %v4718, 0.2
        %v4879 = vmul.f32 %v4723, 0.2
        %v4880 = vmul.f32 %v4726, 0.2
        %v4881 = vmul.f32 %v4731, 0.2
        %v4882 = vmul.f32 %v4734, 0.2
        %v4883 = vmul.f32 %v4739, 0.2
        %v4884 = vmul.f32 %v4742, 0.2
        %v4885 = vmul.f32 %v4747, 0.2
        %v4886 = vmul.f32 %v4750, 0.2
        %v4887 = vmul.f32 %v4755, 0.2
        %v4888 = vmul.f32 %v4758, 0.2
        %v4889 = vsel %vm4761, %v4507, %v4825
        %v4890 = vsel %vm4762, %v4510, %v4826
        %v4891 = vsel %vm4763, %v4515, %v4827
        %v4892 = vsel %vm4764, %v4518, %v4828
        %v4893 = vsel %vm4765, %v4523, %v4829
        %v4894 = vsel %vm4766, %v4526, %v4830
        %v4895 = vsel %vm4767, %v4531, %v4831
        %v4896 = vsel %vm4768, %v4534, %v4832
        %v4897 = vsel %vm4769, %v4539, %v4833
        %v4898 = vsel %vm4770, %v4542, %v4834
        %v4899 = vsel %vm4771, %v4547, %v4835
        %v4900 = vsel %vm4772, %v4550, %v4836
        %v4901 = vsel %vm4773, %v4555, %v4837
        %v4902 = vsel %vm4774, %v4558, %v4838
        %v4903 = vsel %vm4775, %v4563, %v4839
        %v4904 = vsel %vm4776, %v4566, %v4840
        %v4905 = vsel %vm4777, %v4571, %v4841
        %v4906 = vsel %vm4778, %v4574, %v4842
        %v4907 = vsel %vm4779, %v4579, %v4843
        %v4908 = vsel %vm4780, %v4582, %v4844
        %v4909 = vsel %vm4781, %v4587, %v4845
        %v4910 = vsel %vm4782, %v4590, %v4846
        %v4911 = vsel %vm4783, %v4595, %v4847
        %v4912 = vsel %vm4784, %v4598, %v4848
        %v4913 = vsel %vm4785, %v4603, %v4849
        %v4914 = vsel %vm4786, %v4606, %v4850
        %v4915 = vsel %vm4787, %v4611, %v4851
        %v4916 = vsel %vm4788, %v4614, %v4852
        %v4917 = vsel %vm4789, %v4619, %v4853
        %v4918 = vsel %vm4790, %v4622, %v4854
        %v4919 = vsel %vm4791, %v4627, %v4855
        %v4920 = vsel %vm4792, %v4630, %v4856
        %v4921 = vsel %vm4793, %v4635, %v4857
        %v4922 = vsel %vm4794, %v4638, %v4858
        %v4923 = vsel %vm4795, %v4643, %v4859
        %v4924 = vsel %vm4796, %v4646, %v4860
        %v4925 = vsel %vm4797, %v4651, %v4861
        %v4926 = vsel %vm4798, %v4654, %v4862
        %v4927 = vsel %vm4799, %v4659, %v4863
        %v4928 = vsel %vm4800, %v4662, %v4864
        %v4929 = vsel %vm4801, %v4667, %v4865
        %v4930 = vsel %vm4802, %v4670, %v4866
        %v4931 = vsel %vm4803, %v4675, %v4867
        %v4932 = vsel %vm4804, %v4678, %v4868
        %v4933 = vsel %vm4805, %v4683, %v4869
        %v4934 = vsel %vm4806, %v4686, %v4870
        %v4935 = vsel %vm4807, %v4691, %v4871
        %v4936 = vsel %vm4808, %v4694, %v4872
        %v4937 = vsel %vm4809, %v4699, %v4873
        %v4938 = vsel %vm4810, %v4702, %v4874
        %v4939 = vsel %vm4811, %v4707, %v4875
        %v4940 = vsel %vm4812, %v4710, %v4876
        %v4941 = vsel %vm4813, %v4715, %v4877
        %v4942 = vsel %vm4814, %v4718, %v4878
        %v4943 = vsel %vm4815, %v4723, %v4879
        %v4944 = vsel %vm4816, %v4726, %v4880
        %v4945 = vsel %vm4817, %v4731, %v4881
        %v4946 = vsel %vm4818, %v4734, %v4882
        %v4947 = vsel %vm4819, %v4739, %v4883
        %v4948 = vsel %vm4820, %v4742, %v4884
        %v4949 = vsel %vm4821, %v4747, %v4885
        %v4950 = vsel %vm4822, %v4750, %v4886
        %v4951 = vsel %vm4823, %v4755, %v4887
        %v4952 = vsel %vm4824, %v4758, %v4888
        %v4953 = vld [vmem:[%s3] sm:$0x1]
        %v4955 = vlaneseq
        %v4956 = vshrl.u32 %v4955, 7
        %v4957 = vsub.s32 0, %v4956
        %v4958 = vrot.slane %v4953, %v4957
        %v4960 = vmul.f32 %v4889, %v4958
        %v4961 = vmul.f32 %v4890, %v4958
        %v4962 = vmul.f32 %v4891, %v4958
        %v4963 = vmul.f32 %v4892, %v4958
        %v4964 = vmul.f32 %v4893, %v4958
        %v4965 = vmul.f32 %v4894, %v4958
        %v4966 = vmul.f32 %v4895, %v4958
        %v4967 = vmul.f32 %v4896, %v4958
        %v4968 = vmul.f32 %v4897, %v4958
        %v4969 = vmul.f32 %v4898, %v4958
        %v4970 = vmul.f32 %v4899, %v4958
        %v4971 = vmul.f32 %v4900, %v4958
        %v4972 = vmul.f32 %v4901, %v4958
        %v4973 = vmul.f32 %v4902, %v4958
        %v4974 = vmul.f32 %v4903, %v4958
        %v4975 = vmul.f32 %v4904, %v4958
        %v4976 = vmul.f32 %v4905, %v4958
        %v4977 = vmul.f32 %v4906, %v4958
        %v4978 = vmul.f32 %v4907, %v4958
        %v4979 = vmul.f32 %v4908, %v4958
        %v4980 = vmul.f32 %v4909, %v4958
        %v4981 = vmul.f32 %v4910, %v4958
        %v4982 = vmul.f32 %v4911, %v4958
        %v4983 = vmul.f32 %v4912, %v4958
        %v4984 = vmul.f32 %v4913, %v4958
        %v4985 = vmul.f32 %v4914, %v4958
        %v4986 = vmul.f32 %v4915, %v4958
        %v4987 = vmul.f32 %v4916, %v4958
        %v4988 = vmul.f32 %v4917, %v4958
        %v4989 = vmul.f32 %v4918, %v4958
        %v4990 = vmul.f32 %v4919, %v4958
        %v4991 = vmul.f32 %v4920, %v4958
        %v4992 = vmul.f32 %v4921, %v4958
        %v4993 = vmul.f32 %v4922, %v4958
        %v4994 = vmul.f32 %v4923, %v4958
        %v4995 = vmul.f32 %v4924, %v4958
        %v4996 = vmul.f32 %v4925, %v4958
        %v4997 = vmul.f32 %v4926, %v4958
        %v4998 = vmul.f32 %v4927, %v4958
        %v4999 = vmul.f32 %v4928, %v4958
        %v5000 = vmul.f32 %v4929, %v4958
        %v5001 = vmul.f32 %v4930, %v4958
        %v5002 = vmul.f32 %v4931, %v4958
        %v5003 = vmul.f32 %v4932, %v4958
        %v5004 = vmul.f32 %v4933, %v4958
        %v5005 = vmul.f32 %v4934, %v4958
        %v5006 = vmul.f32 %v4935, %v4958
        %v5007 = vmul.f32 %v4936, %v4958
        %v5008 = vmul.f32 %v4937, %v4958
        %v5009 = vmul.f32 %v4938, %v4958
        %v5010 = vmul.f32 %v4939, %v4958
        %v5011 = vmul.f32 %v4940, %v4958
        %v5012 = vmul.f32 %v4941, %v4958
        %v5013 = vmul.f32 %v4942, %v4958
        %v5014 = vmul.f32 %v4943, %v4958
        %v5015 = vmul.f32 %v4944, %v4958
        %v5016 = vmul.f32 %v4945, %v4958
        %v5017 = vmul.f32 %v4946, %v4958
        %v5018 = vmul.f32 %v4947, %v4958
        %v5019 = vmul.f32 %v4948, %v4958
        %v5020 = vmul.f32 %v4949, %v4958
        %v5021 = vmul.f32 %v4950, %v4958
        %v5022 = vmul.f32 %v4951, %v4958
        %v5023 = vmul.f32 %v4952, %v4958
        %v5024 = vld [vmem:[%s4] sm:$0x1]
        %v5026 = vlaneseq
        %v5027 = vshrl.u32 %v5026, 7
        %v5028 = vsub.s32 0, %v5027
        %v5029 = vrot.slane %v5024, %v5028
        %v5031 = vadd.f32 %v4960, %v5029
        %v5032 = vadd.f32 %v4961, %v5029
        %v5033 = vadd.f32 %v4962, %v5029
        %v5034 = vadd.f32 %v4963, %v5029
        %v5035 = vadd.f32 %v4964, %v5029
        %v5036 = vadd.f32 %v4965, %v5029
        %v5037 = vadd.f32 %v4966, %v5029
        %v5038 = vadd.f32 %v4967, %v5029
        %v5039 = vadd.f32 %v4968, %v5029
        %v5040 = vadd.f32 %v4969, %v5029
        %v5041 = vadd.f32 %v4970, %v5029
        %v5042 = vadd.f32 %v4971, %v5029
        %v5043 = vadd.f32 %v4972, %v5029
        %v5044 = vadd.f32 %v4973, %v5029
        %v5045 = vadd.f32 %v4974, %v5029
        %v5046 = vadd.f32 %v4975, %v5029
        %v5047 = vadd.f32 %v4976, %v5029
        %v5048 = vadd.f32 %v4977, %v5029
        %v5049 = vadd.f32 %v4978, %v5029
        %v5050 = vadd.f32 %v4979, %v5029
        %v5051 = vadd.f32 %v4980, %v5029
        %v5052 = vadd.f32 %v4981, %v5029
        %v5053 = vadd.f32 %v4982, %v5029
        %v5054 = vadd.f32 %v4983, %v5029
        %v5055 = vadd.f32 %v4984, %v5029
        %v5056 = vadd.f32 %v4985, %v5029
        %v5057 = vadd.f32 %v4986, %v5029
        %v5058 = vadd.f32 %v4987, %v5029
        %v5059 = vadd.f32 %v4988, %v5029
        %v5060 = vadd.f32 %v4989, %v5029
        %v5061 = vadd.f32 %v4990, %v5029
        %v5062 = vadd.f32 %v4991, %v5029
        %v5063 = vadd.f32 %v4992, %v5029
        %v5064 = vadd.f32 %v4993, %v5029
        %v5065 = vadd.f32 %v4994, %v5029
        %v5066 = vadd.f32 %v4995, %v5029
        %v5067 = vadd.f32 %v4996, %v5029
        %v5068 = vadd.f32 %v4997, %v5029
        %v5069 = vadd.f32 %v4998, %v5029
        %v5070 = vadd.f32 %v4999, %v5029
        %v5071 = vadd.f32 %v5000, %v5029
        %v5072 = vadd.f32 %v5001, %v5029
        %v5073 = vadd.f32 %v5002, %v5029
        %v5074 = vadd.f32 %v5003, %v5029
        %v5075 = vadd.f32 %v5004, %v5029
        %v5076 = vadd.f32 %v5005, %v5029
        %v5077 = vadd.f32 %v5006, %v5029
        %v5078 = vadd.f32 %v5007, %v5029
        %v5079 = vadd.f32 %v5008, %v5029
        %v5080 = vadd.f32 %v5009, %v5029
        %v5081 = vadd.f32 %v5010, %v5029
        %v5082 = vadd.f32 %v5011, %v5029
        %v5083 = vadd.f32 %v5012, %v5029
        %v5084 = vadd.f32 %v5013, %v5029
        %v5085 = vadd.f32 %v5014, %v5029
        %v5086 = vadd.f32 %v5015, %v5029
        %v5087 = vadd.f32 %v5016, %v5029
        %v5088 = vadd.f32 %v5017, %v5029
        %v5089 = vadd.f32 %v5018, %v5029
        %v5090 = vadd.f32 %v5019, %v5029
        %v5091 = vadd.f32 %v5020, %v5029
        %v5092 = vadd.f32 %v5021, %v5029
        %v5093 = vadd.f32 %v5022, %v5029
        %v5094 = vadd.f32 %v5023, %v5029
        %v5095 = vpack.c.bf16 %v5032, %v5031
        %v5096 = vpack.c.bf16 %v5034, %v5033
        %v5097 = vpack.c.bf16 %v5036, %v5035
        %v5098 = vpack.c.bf16 %v5038, %v5037
        %v5099 = vpack.c.bf16 %v5040, %v5039
        %v5100 = vpack.c.bf16 %v5042, %v5041
        %v5101 = vpack.c.bf16 %v5044, %v5043
        %v5102 = vpack.c.bf16 %v5046, %v5045
        %v5103 = vpack.c.bf16 %v5048, %v5047
        %v5104 = vpack.c.bf16 %v5050, %v5049
        %v5105 = vpack.c.bf16 %v5052, %v5051
        %v5106 = vpack.c.bf16 %v5054, %v5053
        %v5107 = vpack.c.bf16 %v5056, %v5055
        %v5108 = vpack.c.bf16 %v5058, %v5057
        %v5109 = vpack.c.bf16 %v5060, %v5059
        %v5110 = vpack.c.bf16 %v5062, %v5061
        %v5111 = vpack.c.bf16 %v5064, %v5063
        %v5112 = vpack.c.bf16 %v5066, %v5065
        %v5113 = vpack.c.bf16 %v5068, %v5067
        %v5114 = vpack.c.bf16 %v5070, %v5069
        %v5115 = vpack.c.bf16 %v5072, %v5071
        %v5116 = vpack.c.bf16 %v5074, %v5073
        %v5117 = vpack.c.bf16 %v5076, %v5075
        %v5118 = vpack.c.bf16 %v5078, %v5077
        %v5119 = vpack.c.bf16 %v5080, %v5079
        %v5120 = vpack.c.bf16 %v5082, %v5081
        %v5121 = vpack.c.bf16 %v5084, %v5083
        %v5122 = vpack.c.bf16 %v5086, %v5085
        %v5123 = vpack.c.bf16 %v5088, %v5087
        %v5124 = vpack.c.bf16 %v5090, %v5089
        %v5125 = vpack.c.bf16 %v5092, %v5091
        %v5126 = vpack.c.bf16 %v5094, %v5093
        %v5159 = vunpack.c.l.b16 %v5095
        %v5160 = vunpack.c.h.b16 %v5095
        %v5161 = vunpack.c.l.b16 %v5096
        %v5162 = vunpack.c.h.b16 %v5096
        %v5163 = vunpack.c.l.b16 %v5097
        %v5164 = vunpack.c.h.b16 %v5097
        %v5165 = vunpack.c.l.b16 %v5098
        %v5166 = vunpack.c.h.b16 %v5098
        %v5167 = vunpack.c.l.b16 %v5099
        %v5168 = vunpack.c.h.b16 %v5099
        %v5169 = vunpack.c.l.b16 %v5100
        %v5170 = vunpack.c.h.b16 %v5100
        %v5171 = vunpack.c.l.b16 %v5101
        %v5172 = vunpack.c.h.b16 %v5101
        %v5173 = vunpack.c.l.b16 %v5102
        %v5174 = vunpack.c.h.b16 %v5102
        %v5175 = vunpack.c.l.b16 %v5103
        %v5176 = vunpack.c.h.b16 %v5103
        %v5177 = vunpack.c.l.b16 %v5104
        %v5178 = vunpack.c.h.b16 %v5104
        %v5179 = vunpack.c.l.b16 %v5105
        %v5180 = vunpack.c.h.b16 %v5105
        %v5181 = vunpack.c.l.b16 %v5106
        %v5182 = vunpack.c.h.b16 %v5106
        %v5183 = vunpack.c.l.b16 %v5107
        %v5184 = vunpack.c.h.b16 %v5107
        %v5185 = vunpack.c.l.b16 %v5108
        %v5186 = vunpack.c.h.b16 %v5108
        %v5187 = vunpack.c.l.b16 %v5109
        %v5188 = vunpack.c.h.b16 %v5109
        %v5189 = vunpack.c.l.b16 %v5110
        %v5190 = vunpack.c.h.b16 %v5110
        %v5191 = vunpack.c.l.b16 %v5111
        %v5192 = vunpack.c.h.b16 %v5111
        %v5193 = vunpack.c.l.b16 %v5112
        %v5194 = vunpack.c.h.b16 %v5112
        %v5195 = vunpack.c.l.b16 %v5113
        %v5196 = vunpack.c.h.b16 %v5113
        %v5197 = vunpack.c.l.b16 %v5114
        %v5198 = vunpack.c.h.b16 %v5114
        %v5199 = vunpack.c.l.b16 %v5115
        %v5200 = vunpack.c.h.b16 %v5115
        %v5201 = vunpack.c.l.b16 %v5116
        %v5202 = vunpack.c.h.b16 %v5116
        %v5203 = vunpack.c.l.b16 %v5117
        %v5204 = vunpack.c.h.b16 %v5117
        %v5205 = vunpack.c.l.b16 %v5118
        %v5206 = vunpack.c.h.b16 %v5118
        %v5207 = vunpack.c.l.b16 %v5119
        %v5208 = vunpack.c.h.b16 %v5119
        %v5209 = vunpack.c.l.b16 %v5120
        %v5210 = vunpack.c.h.b16 %v5120
        %v5211 = vunpack.c.l.b16 %v5121
        %v5212 = vunpack.c.h.b16 %v5121
        %v5213 = vunpack.c.l.b16 %v5122
        %v5214 = vunpack.c.h.b16 %v5122
        %v5215 = vunpack.c.l.b16 %v5123
        %v5216 = vunpack.c.h.b16 %v5123
        %v5217 = vunpack.c.l.b16 %v5124
        %v5218 = vunpack.c.h.b16 %v5124
        %v5219 = vunpack.c.l.b16 %v5125
        %v5220 = vunpack.c.h.b16 %v5125
        %v5221 = vunpack.c.l.b16 %v5126
        %v5222 = vunpack.c.h.b16 %v5126
        %v5223 = vpack.c.b16 %v5159, %v5159
        %v5224 = vpack.c.b16 %v5160, %v5160
        %v5225 = vpack.c.b16 %v5161, %v5161
        %v5226 = vpack.c.b16 %v5162, %v5162
        %v5227 = vpack.c.b16 %v5163, %v5163
        %v5228 = vpack.c.b16 %v5164, %v5164
        %v5229 = vpack.c.b16 %v5165, %v5165
        %v5230 = vpack.c.b16 %v5166, %v5166
        %v5231 = vpack.c.b16 %v5167, %v5167
        %v5232 = vpack.c.b16 %v5168, %v5168
        %v5233 = vpack.c.b16 %v5169, %v5169
        %v5234 = vpack.c.b16 %v5170, %v5170
        %v5235 = vpack.c.b16 %v5171, %v5171
        %v5236 = vpack.c.b16 %v5172, %v5172
        %v5237 = vpack.c.b16 %v5173, %v5173
        %v5238 = vpack.c.b16 %v5174, %v5174
        %v5239 = vpack.c.b16 %v5175, %v5175
        %v5240 = vpack.c.b16 %v5176, %v5176
        %v5241 = vpack.c.b16 %v5177, %v5177
        %v5242 = vpack.c.b16 %v5178, %v5178
        %v5243 = vpack.c.b16 %v5179, %v5179
        %v5244 = vpack.c.b16 %v5180, %v5180
        %v5245 = vpack.c.b16 %v5181, %v5181
        %v5246 = vpack.c.b16 %v5182, %v5182
        %v5247 = vpack.c.b16 %v5183, %v5183
        %v5248 = vpack.c.b16 %v5184, %v5184
        %v5249 = vpack.c.b16 %v5185, %v5185
        %v5250 = vpack.c.b16 %v5186, %v5186
        %v5251 = vpack.c.b16 %v5187, %v5187
        %v5252 = vpack.c.b16 %v5188, %v5188
        %v5253 = vpack.c.b16 %v5189, %v5189
        %v5254 = vpack.c.b16 %v5190, %v5190
        %v5255 = vpack.c.b16 %v5191, %v5191
        %v5256 = vpack.c.b16 %v5192, %v5192
        %v5257 = vpack.c.b16 %v5193, %v5193
        %v5258 = vpack.c.b16 %v5194, %v5194
        %v5259 = vpack.c.b16 %v5195, %v5195
        %v5260 = vpack.c.b16 %v5196, %v5196
        %v5261 = vpack.c.b16 %v5197, %v5197
        %v5262 = vpack.c.b16 %v5198, %v5198
        %v5263 = vpack.c.b16 %v5199, %v5199
        %v5264 = vpack.c.b16 %v5200, %v5200
        %v5265 = vpack.c.b16 %v5201, %v5201
        %v5266 = vpack.c.b16 %v5202, %v5202
        %v5267 = vpack.c.b16 %v5203, %v5203
        %v5268 = vpack.c.b16 %v5204, %v5204
        %v5269 = vpack.c.b16 %v5205, %v5205
        %v5270 = vpack.c.b16 %v5206, %v5206
        %v5271 = vpack.c.b16 %v5207, %v5207
        %v5272 = vpack.c.b16 %v5208, %v5208
        %v5273 = vpack.c.b16 %v5209, %v5209
        %v5274 = vpack.c.b16 %v5210, %v5210
        %v5275 = vpack.c.b16 %v5211, %v5211
        %v5276 = vpack.c.b16 %v5212, %v5212
        %v5277 = vpack.c.b16 %v5213, %v5213
        %v5278 = vpack.c.b16 %v5214, %v5214
        %v5279 = vpack.c.b16 %v5215, %v5215
        %v5280 = vpack.c.b16 %v5216, %v5216
        %v5281 = vpack.c.b16 %v5217, %v5217
        %v5282 = vpack.c.b16 %v5218, %v5218
        %v5283 = vpack.c.b16 %v5219, %v5219
        %v5284 = vpack.c.b16 %v5220, %v5220
        %v5285 = vpack.c.b16 %v5221, %v5221
        %5286 = vrot.lane.b32.xlu0 0, 16
        %v5287 = vpop.permute.xlu0 %5286
        %5288 = vrot.lane.b32.xlu0 %v5231, 16
        %v5289 = vpop.permute.xlu0 %5288
        %5290 = vrot.lane.b32.xlu0 %v5233, 16
        %v5291 = vpop.permute.xlu0 %5290
        %5292 = vrot.lane.b32.xlu0 %v5235, 16
        %v5293 = vpop.permute.xlu0 %5292
        %5294 = vrot.lane.b32.xlu0 %v5237, 16
        %v5295 = vpop.permute.xlu0 %5294
        %5296 = vrot.lane.b32.xlu0 %v5247, 16
        %v5297 = vpop.permute.xlu0 %5296
        %5298 = vrot.lane.b32.xlu0 %v5249, 16
        %v5299 = vpop.permute.xlu0 %5298
        %5300 = vrot.lane.b32.xlu0 %v5251, 16
        %v5301 = vpop.permute.xlu0 %5300
        %5302 = vrot.lane.b32.xlu0 %v5253, 16
        %v5303 = vpop.permute.xlu0 %5302
        %5304 = vrot.lane.b32.xlu0 %v5263, 16
        %v5305 = vpop.permute.xlu0 %5304
        %5306 = vrot.lane.b32.xlu0 %v5265, 16
        %v5307 = vpop.permute.xlu0 %5306
        %5308 = vrot.lane.b32.xlu0 %v5267, 16
        %v5309 = vpop.permute.xlu0 %5308
        %5310 = vrot.lane.b32.xlu0 %v5269, 16
        %v5311 = vpop.permute.xlu0 %5310
        %5312 = vrot.lane.b32.xlu0 0, 32
        %v5313 = vpop.permute.xlu0 %5312
        %5314 = vrot.lane.b32.xlu0 %v5232, 32
        %v5315 = vpop.permute.xlu0 %5314
        %5316 = vrot.lane.b32.xlu0 %v5234, 32
        %v5317 = vpop.permute.xlu0 %5316
        %5318 = vrot.lane.b32.xlu0 %v5236, 32
        %v5319 = vpop.permute.xlu0 %5318
        %5320 = vrot.lane.b32.xlu0 %v5238, 32
        %v5321 = vpop.permute.xlu0 %5320
        %5322 = vrot.lane.b32.xlu0 %v5248, 32
        %v5323 = vpop.permute.xlu0 %5322
        %5324 = vrot.lane.b32.xlu0 %v5250, 32
        %v5325 = vpop.permute.xlu0 %5324
        %5326 = vrot.lane.b32.xlu0 %v5252, 32
        %v5327 = vpop.permute.xlu0 %5326
        %5328 = vrot.lane.b32.xlu0 %v5254, 32
        %v5329 = vpop.permute.xlu0 %5328
        %5330 = vrot.lane.b32.xlu0 %v5264, 32
        %v5331 = vpop.permute.xlu0 %5330
        %5332 = vrot.lane.b32.xlu0 %v5266, 32
        %v5333 = vpop.permute.xlu0 %5332
        %5334 = vrot.lane.b32.xlu0 %v5268, 32
        %v5335 = vpop.permute.xlu0 %5334
        %5336 = vrot.lane.b32.xlu0 %v5270, 32
        %v5337 = vpop.permute.xlu0 %5336
        %5338 = vrot.lane.b32.xlu0 0, 48
        %v5339 = vpop.permute.xlu0 %5338
        %5340 = vrot.lane.b32.xlu0 %v5224, 48
        %v5341 = vpop.permute.xlu0 %5340
        %5342 = vrot.lane.b32.xlu0 %v5226, 48
        %v5343 = vpop.permute.xlu0 %5342
        %5344 = vrot.lane.b32.xlu0 %v5228, 48
        %v5345 = vpop.permute.xlu0 %5344
        %5346 = vrot.lane.b32.xlu0 %v5240, 48
        %v5347 = vpop.permute.xlu0 %5346
        %5348 = vrot.lane.b32.xlu0 %v5242, 48
        %v5349 = vpop.permute.xlu0 %5348
        %5350 = vrot.lane.b32.xlu0 %v5244, 48
        %v5351 = vpop.permute.xlu0 %5350
        %5352 = vrot.lane.b32.xlu0 %v5256, 48
        %v5353 = vpop.permute.xlu0 %5352
        %5354 = vrot.lane.b32.xlu0 %v5258, 48
        %v5355 = vpop.permute.xlu0 %5354
        %5356 = vrot.lane.b32.xlu0 %v5260, 48
        %v5357 = vpop.permute.xlu0 %5356
        %5358 = vrot.lane.b32.xlu0 %v5272, 48
        %v5359 = vpop.permute.xlu0 %5358
        %5360 = vrot.lane.b32.xlu0 %v5274, 48
        %v5361 = vpop.permute.xlu0 %5360
        %5362 = vrot.lane.b32.xlu0 %v5276, 48
        %v5363 = vpop.permute.xlu0 %5362
        %5364 = vrot.lane.b32.xlu0 %v5223, 64
        %v5365 = vpop.permute.xlu0 %5364
        %5366 = vrot.lane.b32.xlu0 %v5225, 64
        %v5367 = vpop.permute.xlu0 %5366
        %5368 = vrot.lane.b32.xlu0 %v5227, 64
        %v5369 = vpop.permute.xlu0 %5368
        %5370 = vrot.lane.b32.xlu0 %v5229, 64
        %v5371 = vpop.permute.xlu0 %5370
        %5372 = vrot.lane.b32.xlu0 %v5239, 64
        %v5373 = vpop.permute.xlu0 %5372
        %5374 = vrot.lane.b32.xlu0 %v5241, 64
        %v5375 = vpop.permute.xlu0 %5374
        %5376 = vrot.lane.b32.xlu0 %v5243, 64
        %v5377 = vpop.permute.xlu0 %5376
        %5378 = vrot.lane.b32.xlu0 %v5245, 64
        %v5379 = vpop.permute.xlu0 %5378
        %5380 = vrot.lane.b32.xlu0 %v5255, 64
        %v5381 = vpop.permute.xlu0 %5380
        %5382 = vrot.lane.b32.xlu0 %v5257, 64
        %v5383 = vpop.permute.xlu0 %5382
        %5384 = vrot.lane.b32.xlu0 %v5259, 64
        %v5385 = vpop.permute.xlu0 %5384
        %5386 = vrot.lane.b32.xlu0 %v5261, 64
        %v5387 = vpop.permute.xlu0 %5386
        %5388 = vrot.lane.b32.xlu0 %v5271, 64
        %v5389 = vpop.permute.xlu0 %5388
        %5390 = vrot.lane.b32.xlu0 %v5273, 64
        %v5391 = vpop.permute.xlu0 %5390
        %5392 = vrot.lane.b32.xlu0 %v5275, 64
        %v5393 = vpop.permute.xlu0 %5392
        %5394 = vrot.lane.b32.xlu0 %v5277, 64
        %v5395 = vpop.permute.xlu0 %5394
        %5396 = vrot.lane.b32.xlu0 %v5224, 80
        %v5397 = vpop.permute.xlu0 %5396
        %5398 = vrot.lane.b32.xlu0 %v5226, 80
        %v5399 = vpop.permute.xlu0 %5398
        %5400 = vrot.lane.b32.xlu0 %v5228, 80
        %v5401 = vpop.permute.xlu0 %5400
        %5402 = vrot.lane.b32.xlu0 %v5230, 80
        %v5403 = vpop.permute.xlu0 %5402
        %5404 = vrot.lane.b32.xlu0 %v5240, 80
        %v5405 = vpop.permute.xlu0 %5404
        %5406 = vrot.lane.b32.xlu0 %v5242, 80
        %v5407 = vpop.permute.xlu0 %5406
        %5408 = vrot.lane.b32.xlu0 %v5244, 80
        %v5409 = vpop.permute.xlu0 %5408
        %5410 = vrot.lane.b32.xlu0 %v5246, 80
        %v5411 = vpop.permute.xlu0 %5410
        %5412 = vrot.lane.b32.xlu0 %v5256, 80
        %v5413 = vpop.permute.xlu0 %5412
        %5414 = vrot.lane.b32.xlu0 %v5258, 80
        %v5415 = vpop.permute.xlu0 %5414
        %5416 = vrot.lane.b32.xlu0 %v5260, 80
        %v5417 = vpop.permute.xlu0 %5416
        %5418 = vrot.lane.b32.xlu0 %v5262, 80
        %v5419 = vpop.permute.xlu0 %5418
        %5420 = vrot.lane.b32.xlu0 %v5272, 80
        %v5421 = vpop.permute.xlu0 %5420
        %5422 = vrot.lane.b32.xlu0 %v5274, 80
        %v5423 = vpop.permute.xlu0 %5422
        %5424 = vrot.lane.b32.xlu0 %v5276, 80
        %v5425 = vpop.permute.xlu0 %5424
        %5426 = vrot.lane.b32.xlu0 %v5278, 80
        %v5427 = vpop.permute.xlu0 %5426
        %5428 = vrot.lane.b32.xlu0 0, 96
        %v5429 = vpop.permute.xlu0 %5428
        %5430 = vrot.lane.b32.xlu0 %v5232, 96
        %v5431 = vpop.permute.xlu0 %5430
        %5432 = vrot.lane.b32.xlu0 %v5234, 96
        %v5433 = vpop.permute.xlu0 %5432
        %5434 = vrot.lane.b32.xlu0 %v5236, 96
        %v5435 = vpop.permute.xlu0 %5434
        %5436 = vrot.lane.b32.xlu0 %v5248, 96
        %v5437 = vpop.permute.xlu0 %5436
        %5438 = vrot.lane.b32.xlu0 %v5250, 96
        %v5439 = vpop.permute.xlu0 %5438
        %5440 = vrot.lane.b32.xlu0 %v5252, 96
        %v5441 = vpop.permute.xlu0 %5440
        %5442 = vrot.lane.b32.xlu0 %v5264, 96
        %v5443 = vpop.permute.xlu0 %5442
        %5444 = vrot.lane.b32.xlu0 %v5266, 96
        %v5445 = vpop.permute.xlu0 %5444
        %5446 = vrot.lane.b32.xlu0 %v5268, 96
        %v5447 = vpop.permute.xlu0 %5446
        %5448 = vrot.lane.b32.xlu0 %v5280, 96
        %v5449 = vpop.permute.xlu0 %5448
        %5450 = vrot.lane.b32.xlu0 %v5282, 96
        %v5451 = vpop.permute.xlu0 %5450
        %5452 = vrot.lane.b32.xlu0 %v5284, 96
        %v5453 = vpop.permute.xlu0 %5452
        %5454 = vrot.lane.b32.xlu0 %v5231, 112
        %v5455 = vpop.permute.xlu0 %5454
        %5456 = vrot.lane.b32.xlu0 %v5233, 112
        %v5457 = vpop.permute.xlu0 %5456
        %5458 = vrot.lane.b32.xlu0 %v5235, 112
        %v5459 = vpop.permute.xlu0 %5458
        %5460 = vrot.lane.b32.xlu0 %v5237, 112
        %v5461 = vpop.permute.xlu0 %5460
        %5462 = vrot.lane.b32.xlu0 %v5247, 112
        %v5463 = vpop.permute.xlu0 %5462
        %5464 = vrot.lane.b32.xlu0 %v5249, 112
        %v5465 = vpop.permute.xlu0 %5464
        %5466 = vrot.lane.b32.xlu0 %v5251, 112
        %v5467 = vpop.permute.xlu0 %5466
        %5468 = vrot.lane.b32.xlu0 %v5253, 112
        %v5469 = vpop.permute.xlu0 %5468
        %5470 = vrot.lane.b32.xlu0 %v5263, 112
        %v5471 = vpop.permute.xlu0 %5470
        %5472 = vrot.lane.b32.xlu0 %v5265, 112
        %v5473 = vpop.permute.xlu0 %5472
        %5474 = vrot.lane.b32.xlu0 %v5267, 112
        %v5475 = vpop.permute.xlu0 %5474
        %5476 = vrot.lane.b32.xlu0 %v5269, 112
        %v5477 = vpop.permute.xlu0 %5476
        %5478 = vrot.lane.b32.xlu0 %v5279, 112
        %v5479 = vpop.permute.xlu0 %5478
        %5480 = vrot.lane.b32.xlu0 %v5281, 112
        %v5481 = vpop.permute.xlu0 %5480
        %5482 = vrot.lane.b32.xlu0 %v5283, 112
        %v5483 = vpop.permute.xlu0 %5482
        %5484 = vrot.lane.b32.xlu0 %v5285, 112
        %v5485 = vpop.permute.xlu0 %5484
        %v5487 = vsel %vm3546, 0, %v5287
        %v5489 = vsel %vm3546, 0, %v5289
        %v5492 = vsel %vm3546, %v5232, %v5291
        %v5495 = vsel %vm3546, %v5234, %v5293
        %v5498 = vsel %vm3546, %v5236, %v5295
        %v5500 = vsel %vm3546, 0, %v5297
        %v5503 = vsel %vm3546, %v5248, %v5299
        %v5506 = vsel %vm3546, %v5250, %v5301
        %v5509 = vsel %vm3546, %v5252, %v5303
        %v5511 = vsel %vm3546, 0, %v5305
        %v5514 = vsel %vm3546, %v5264, %v5307
        %v5517 = vsel %vm3546, %v5266, %v5309
        %v5520 = vsel %vm3546, %v5268, %v5311
        %v5522 = vsel %vm4055, %v5487, %v5313
        %v5524 = vsel %vm4055, %v5489, %v5315
        %v5526 = vsel %vm4055, %v5492, %v5317
        %v5528 = vsel %vm4055, %v5495, %v5319
        %v5530 = vsel %vm4055, %v5498, %v5321
        %v5532 = vsel %vm4055, %v5500, %v5323
        %v5534 = vsel %vm4055, %v5503, %v5325
        %v5536 = vsel %vm4055, %v5506, %v5327
        %v5538 = vsel %vm4055, %v5509, %v5329
        %v5540 = vsel %vm4055, %v5511, %v5331
        %v5542 = vsel %vm4055, %v5514, %v5333
        %v5544 = vsel %vm4055, %v5517, %v5335
        %v5546 = vsel %vm4055, %v5520, %v5337
        %vm5547 = vcmask 392192
        %v5549 = vsel %vm5547, %v5522, %v5339
        %v5551 = vsel %vm5547, %v5522, %v5341
        %v5553 = vsel %vm5547, %v5522, %v5343
        %v5555 = vsel %vm5547, %v5522, %v5345
        %v5556 = vsel %vm5547, %v5524, %v5339
        %v5558 = vsel %vm5547, %v5526, %v5347
        %v5560 = vsel %vm5547, %v5528, %v5349
        %v5562 = vsel %vm5547, %v5530, %v5351
        %v5563 = vsel %vm5547, %v5532, %v5339
        %v5565 = vsel %vm5547, %v5534, %v5353
        %v5567 = vsel %vm5547, %v5536, %v5355
        %v5569 = vsel %vm5547, %v5538, %v5357
        %v5570 = vsel %vm5547, %v5540, %v5339
        %v5572 = vsel %vm5547, %v5542, %v5359
        %v5574 = vsel %vm5547, %v5544, %v5361
        %v5576 = vsel %vm5547, %v5546, %v5363
        %vm5577 = vcmask 523264
        %v5579 = vsel %vm5577, %v5549, %v5365
        %v5581 = vsel %vm5577, %v5551, %v5367
        %v5583 = vsel %vm5577, %v5553, %v5369
        %v5585 = vsel %vm5577, %v5555, %v5371
        %v5587 = vsel %vm5577, %v5556, %v5373
        %v5589 = vsel %vm5577, %v5558, %v5375
        %v5591 = vsel %vm5577, %v5560, %v5377
        %v5593 = vsel %vm5577, %v5562, %v5379
        %v5595 = vsel %vm5577, %v5563, %v5381
        %v5597 = vsel %vm5577, %v5565, %v5383
        %v5599 = vsel %vm5577, %v5567, %v5385
        %v5601 = vsel %vm5577, %v5569, %v5387
        %v5603 = vsel %vm5577, %v5570, %v5389
        %v5605 = vsel %vm5577, %v5572, %v5391
        %v5607 = vsel %vm5577, %v5574, %v5393
        %v5609 = vsel %vm5577, %v5576, %v5395
        %vm5610 = vcmask 654336
        %v5612 = vsel %vm5610, %v5579, %v5397
        %v5614 = vsel %vm5610, %v5581, %v5399
        %v5616 = vsel %vm5610, %v5583, %v5401
        %v5618 = vsel %vm5610, %v5585, %v5403
        %v5620 = vsel %vm5610, %v5587, %v5405
        %v5622 = vsel %vm5610, %v5589, %v5407
        %v5624 = vsel %vm5610, %v5591, %v5409
        %v5626 = vsel %vm5610, %v5593, %v5411
        %v5628 = vsel %vm5610, %v5595, %v5413
        %v5630 = vsel %vm5610, %v5597, %v5415
        %v5632 = vsel %vm5610, %v5599, %v5417
        %v5634 = vsel %vm5610, %v5601, %v5419
        %v5636 = vsel %vm5610, %v5603, %v5421
        %v5638 = vsel %vm5610, %v5605, %v5423
        %v5640 = vsel %vm5610, %v5607, %v5425
        %v5642 = vsel %vm5610, %v5609, %v5427
        %vm5643 = vcmask 785408
        %v5645 = vsel %vm5643, %v5612, %v5429
        %v5647 = vsel %vm5643, %v5614, %v5431
        %v5649 = vsel %vm5643, %v5616, %v5433
        %v5651 = vsel %vm5643, %v5618, %v5435
        %v5652 = vsel %vm5643, %v5620, %v5429
        %v5654 = vsel %vm5643, %v5622, %v5437
        %v5656 = vsel %vm5643, %v5624, %v5439
        %v5658 = vsel %vm5643, %v5626, %v5441
        %v5659 = vsel %vm5643, %v5628, %v5429
        %v5661 = vsel %vm5643, %v5630, %v5443
        %v5663 = vsel %vm5643, %v5632, %v5445
        %v5665 = vsel %vm5643, %v5634, %v5447
        %v5666 = vsel %vm5643, %v5636, %v5429
        %v5668 = vsel %vm5643, %v5638, %v5449
        %v5670 = vsel %vm5643, %v5640, %v5451
        %v5672 = vsel %vm5643, %v5642, %v5453
        %vm5673 = vcmask 916480
        %v5675 = vsel %vm5673, %v5645, %v5455
        %v5677 = vsel %vm5673, %v5647, %v5457
        %v5679 = vsel %vm5673, %v5649, %v5459
        %v5681 = vsel %vm5673, %v5651, %v5461
        %v5683 = vsel %vm5673, %v5652, %v5463
        %v5685 = vsel %vm5673, %v5654, %v5465
        %v5687 = vsel %vm5673, %v5656, %v5467
        %v5689 = vsel %vm5673, %v5658, %v5469
        %v5691 = vsel %vm5673, %v5659, %v5471
        %v5693 = vsel %vm5673, %v5661, %v5473
        %v5695 = vsel %vm5673, %v5663, %v5475
        %v5697 = vsel %vm5673, %v5665, %v5477
        %v5699 = vsel %vm5673, %v5666, %v5479
        %v5701 = vsel %vm5673, %v5668, %v5481
        %v5703 = vsel %vm5673, %v5670, %v5483
        %v5705 = vsel %vm5673, %v5672, %v5485
        %v5722 = vunpack.c.l.b16 %v5675
        %v5723 = vunpack.c.l.b16 %v5677
        %v5724 = vunpack.c.l.b16 %v5679
        %v5725 = vunpack.c.l.b16 %v5681
        %v5726 = vunpack.c.l.b16 %v5683
        %v5727 = vunpack.c.l.b16 %v5685
        %v5728 = vunpack.c.l.b16 %v5687
        %v5729 = vunpack.c.l.b16 %v5689
        %v5730 = vunpack.c.l.b16 %v5691
        %v5731 = vunpack.c.l.b16 %v5693
        %v5732 = vunpack.c.l.b16 %v5695
        %v5733 = vunpack.c.l.b16 %v5697
        %v5734 = vunpack.c.l.b16 %v5699
        %v5735 = vunpack.c.l.b16 %v5701
        %v5736 = vunpack.c.l.b16 %v5703
        %v5737 = vunpack.c.l.b16 %v5705
        %v5738 = vld [vmem:[%s5] sm:$0xf]
        %v5739 = vld [vmem:[%s5 + $0x4] sm:$0xf]
        %v5740 = vld [vmem:[%s5 + $0x8] sm:$0xf]
        %v5741 = vld [vmem:[%s5 + $0xc] sm:$0xf]
        %v5742 = vld [vmem:[%s5 + $0x10] sm:$0xf]
        %v5743 = vld [vmem:[%s5 + $0x14] sm:$0xf]
        %v5744 = vld [vmem:[%s5 + $0x18] sm:$0xf]
        %v5745 = vld [vmem:[%s5 + $0x1c] sm:$0xf]
        %v5746 = vld [vmem:[%s5 + $0x20] sm:$0xf]
        %v5747 = vld [vmem:[%s5 + $0x24] sm:$0xf]
        %v5748 = vld [vmem:[%s5 + $0x28] sm:$0xf]
        %v5749 = vld [vmem:[%s5 + $0x2c] sm:$0xf]
        %v5750 = vld [vmem:[%s5 + $0x30] sm:$0xf]
        %v5751 = vld [vmem:[%s5 + $0x34] sm:$0xf]
        %v5752 = vld [vmem:[%s5 + $0x38] sm:$0xf]
        %v5753 = vld [vmem:[%s5 + $0x3c] sm:$0xf]
        %v5754 = vld [vmem:[%s5 + $0x40] sm:$0xf]
        %v5755 = vld [vmem:[%s5 + $0x44] sm:$0xf]
        %v5756 = vld [vmem:[%s6] sm:$0x1]
        %v5758 = vlaneseq
        %v5759 = vshrl.u32 %v5758, 7
        %v5760 = vsub.s32 0, %v5759
        %v5761 = vrot.slane %v5756, %v5760
        %v5763 = vpack.c.b16 %v5723, %v5722
        %v5764 = vpack.c.b16 %v5170, %v5168
        %v5765 = vpack.c.b16 %v5725, %v5724
        %v5766 = vpack.c.b16 %v5174, %v5172
        %v5767 = vpack.c.b16 %v5727, %v5726
        %v5768 = vpack.c.b16 %v5186, %v5184
        %v5769 = vpack.c.b16 %v5729, %v5728
        %v5770 = vpack.c.b16 %v5190, %v5188
        %v5771 = vpack.c.b16 %v5731, %v5730
        %v5772 = vpack.c.b16 %v5202, %v5200
        %v5773 = vpack.c.b16 %v5733, %v5732
        %v5774 = vpack.c.b16 %v5206, %v5204
        %v5775 = vpack.c.b16 %v5735, %v5734
        %v5776 = vpack.c.b16 %v5218, %v5216
        %v5777 = vpack.c.b16 %v5737, %v5736
        %v5778 = vpack.c.b16 %v5222, %v5220
        %v5805 = vunpack.c.l.b16 %v5738
        %v5806 = vunpack.c.l.b16 %v5739
        %v5807 = vunpack.c.l.b16 %v5740
        %v5808 = vunpack.c.l.b16 %v5741
        %v5809 = vunpack.c.l.b16 %v5742
        %v5810 = vunpack.c.l.b16 %v5743
        %v5811 = vunpack.c.l.b16 %v5744
        %v5812 = vunpack.c.l.b16 %v5745
        %v5813 = vunpack.c.l.b16 %v5746
        %v5814 = vunpack.c.l.b16 %v5747
        %v5815 = vunpack.c.l.b16 %v5748
        %v5816 = vunpack.c.l.b16 %v5749
        %v5817 = vunpack.c.l.b16 %v5750
        %v5818 = vunpack.c.l.b16 %v5751
        %v5819 = vunpack.c.l.b16 %v5752
        %v5820 = vunpack.c.l.b16 %v5753
        %v5821 = vunpack.c.l.b16 %v5754
        %v5822 = vunpack.c.l.b16 %v5755
        %v5823 = vpack.c.b16 %v5806, %v5805
        %v5824 = vpack.c.b16 %v5808, %v5807
        %v5825 = vpack.c.b16 %v5810, %v5809
        %v5826 = vpack.c.b16 %v5812, %v5811
        %v5827 = vpack.c.b16 %v5814, %v5813
        %v5828 = vpack.c.b16 %v5816, %v5815
        %v5829 = vpack.c.b16 %v5818, %v5817
        %v5830 = vpack.c.b16 %v5820, %v5819
        %v5831 = vpack.c.b16 %v5822, %v5821
        %v5842 = vsel %vm3546, %v5764, 0
        %v5845 = vsel %vm3546, %v5766, 0
        %v5848 = vsel %vm3546, %v5768, 0
        %v5851 = vsel %vm3546, %v5770, 0
        %v5854 = vsel %vm3546, %v5772, 0
        %v5857 = vsel %vm3546, %v5774, 0
        %v5860 = vsel %vm3546, %v5776, 0
        %v5863 = vsel %vm3546, %v5778, 0
        %5865 = vmatprep.subr.bf16.mxu0 0
        %5866 = vmatpush1.bf16.msra.mxu0 %v5823
        %5867 = vmatprep.subr.bf16.mxu0 0
        %5868 = vmatpush1.bf16.msra.mxu0 %v5824
        %5869 = vmatprep.subr.bf16.mxu0 0
        %5870 = vmatpush1.bf16.msra.mxu0 %v5825
        %5871 = vmatprep.subr.bf16.mxu0 0
        %5872 = vmatpush1.bf16.msra.mxu0 %v5826
        %5873 = vmatprep.subr.bf16.mxu0 0
        %5874 = vmatpush1.bf16.msra.mxu0 %v5827
        %5875 = vmatprep.subr.bf16.mxu0 0
        %5876 = vmatpush1.bf16.msra.mxu0 %v5828
        %5877 = vmatprep.subr.bf16.mxu0 0
        %5878 = vmatpush1.bf16.msra.mxu0 %v5829
        %5879 = vmatprep.subr.bf16.mxu0 0
        %5880 = vmatpush1.bf16.msra.mxu0 %v5830
        %5881 = vmatprep.subr.bf16.mxu0 0
        %5882 = vmatpush1.bf16.msra.mxu0 %v5831
        %5883 = vmatprep.subr.bf16.mxu0 0
        %5884 = vmatpush1.bf16.msra.mxu0 0
        %5885 = vmatprep.subr.bf16.mxu0 0
        %5886 = vmatpush1.bf16.msra.mxu0 0
        %5887 = vmatprep.subr.bf16.mxu0 0
        %5888 = vmatpush1.bf16.msra.mxu0 0
        %5889 = vmatprep.subr.bf16.mxu0 0
        %5890 = vmatpush1.bf16.msra.mxu0 0
        %5891 = vmatprep.subr.bf16.mxu0 0
        %5892 = vmatpush1.bf16.msra.mxu0 0
        %5893 = vmatprep.subr.bf16.mxu0 0
        %5894 = vmatpush1.bf16.msra.mxu0 0
        %5895 = vmatprep.subr.bf16.mxu0 0
        %5896 = vmatpush1.bf16.msra.mxu0 0
        %5897 = vmatprep.mubr.bf16.mxu0 %v5842
        %5898 = vmatmul.mubr.bf16.gmra.mrb[0].mxu0 %v5763
        %v5899 = vpop.f32.mrb[0].mxu0
        %v5900 = vadd.f32 %v5761, %v5899
        %v5901 = vpop.f32.mrb[0].mxu0
        %v5902 = vpop.f32.mrb[0].mxu0
        %v5903 = vadd.f32 %v5761, %v5902
        %v5904 = vpop.f32.mrb[0].mxu0
        %5905 = vmatprep.mubr.bf16.mxu0 %v5845
        %5906 = vmatmul.mubr.bf16.gmra.mrb[0].mxu0 %v5765
        %v5907 = vpop.f32.mrb[0].mxu0
        %v5908 = vadd.f32 %v5761, %v5907
        %v5909 = vpop.f32.mrb[0].mxu0
        %v5910 = vpop.f32.mrb[0].mxu0
        %v5911 = vadd.f32 %v5761, %v5910
        %v5912 = vpop.f32.mrb[0].mxu0
        %5913 = vmatprep.mubr.bf16.mxu0 %v5848
        %5914 = vmatmul.mubr.bf16.gmra.mrb[0].mxu0 %v5767
        %v5915 = vpop.f32.mrb[0].mxu0
        %v5916 = vadd.f32 %v5761, %v5915
        %v5917 = vpop.f32.mrb[0].mxu0
        %v5918 = vpop.f32.mrb[0].mxu0
        %v5919 = vadd.f32 %v5761, %v5918
        %v5920 = vpop.f32.mrb[0].mxu0
        %5921 = vmatprep.mubr.bf16.mxu0 %v5851
        %5922 = vmatmul.mubr.bf16.gmra.mrb[0].mxu0 %v5769
        %v5923 = vpop.f32.mrb[0].mxu0
        %v5924 = vadd.f32 %v5761, %v5923
        %v5925 = vpop.f32.mrb[0].mxu0
        %v5926 = vpop.f32.mrb[0].mxu0
        %v5927 = vadd.f32 %v5761, %v5926
        %v5928 = vpop.f32.mrb[0].mxu0
        %5929 = vmatprep.mubr.bf16.mxu0 %v5854
        %5930 = vmatmul.mubr.bf16.gmra.mrb[0].mxu0 %v5771
        %v5931 = vpop.f32.mrb[0].mxu0
        %v5932 = vadd.f32 %v5761, %v5931
        %v5933 = vpop.f32.mrb[0].mxu0
        %v5934 = vpop.f32.mrb[0].mxu0
        %v5935 = vadd.f32 %v5761, %v5934
        %v5936 = vpop.f32.mrb[0].mxu0
        %5937 = vmatprep.mubr.bf16.mxu0 %v5857
        %5938 = vmatmul.mubr.bf16.gmra.mrb[0].mxu0 %v5773
        %v5939 = vpop.f32.mrb[0].mxu0
        %v5940 = vadd.f32 %v5761, %v5939
        %v5941 = vpop.f32.mrb[0].mxu0
        %v5942 = vpop.f32.mrb[0].mxu0
        %v5943 = vadd.f32 %v5761, %v5942
        %v5944 = vpop.f32.mrb[0].mxu0
        %5945 = vmatprep.mubr.bf16.mxu0 %v5860
        %5946 = vmatmul.mubr.bf16.gmra.mrb[0].mxu0 %v5775
        %v5947 = vpop.f32.mrb[0].mxu0
        %v5948 = vadd.f32 %v5761, %v5947
        %v5949 = vpop.f32.mrb[0].mxu0
        %v5950 = vpop.f32.mrb[0].mxu0
        %v5951 = vadd.f32 %v5761, %v5950
        %v5952 = vpop.f32.mrb[0].mxu0
        %5953 = vmatprep.mubr.bf16.mxu0 %v5863
        %5954 = vmatmul.mubr.bf16.gmra.mrb[0].mxu0 %v5777
        %v5955 = vpop.f32.mrb[0].mxu0
        %v5956 = vadd.f32 %v5761, %v5955
        %v5957 = vpop.f32.mrb[0].mxu0
        %v5958 = vpop.f32.mrb[0].mxu0
        %v5959 = vadd.f32 %v5761, %v5958
        %v5960 = vpop.f32.mrb[0].mxu0
        %5961 = vdwg.mxu0
        %vm5962 = vcmp.gt.f32.partialorder %v5900, 0.0
        %vm5963 = vcmp.gt.f32.partialorder %v5903, 0.0
        %vm5964 = vcmp.gt.f32.partialorder %v5908, 0.0
        %vm5965 = vcmp.gt.f32.partialorder %v5911, 0.0
        %vm5966 = vcmp.gt.f32.partialorder %v5916, 0.0
        %vm5967 = vcmp.gt.f32.partialorder %v5919, 0.0
        %vm5968 = vcmp.gt.f32.partialorder %v5924, 0.0
        %vm5969 = vcmp.gt.f32.partialorder %v5927, 0.0
        %vm5970 = vcmp.gt.f32.partialorder %v5932, 0.0
        %vm5971 = vcmp.gt.f32.partialorder %v5935, 0.0
        %vm5972 = vcmp.gt.f32.partialorder %v5940, 0.0
        %vm5973 = vcmp.gt.f32.partialorder %v5943, 0.0
        %vm5974 = vcmp.gt.f32.partialorder %v5948, 0.0
        %vm5975 = vcmp.gt.f32.partialorder %v5951, 0.0
        %vm5976 = vcmp.gt.f32.partialorder %v5956, 0.0
        %vm5977 = vcmp.gt.f32.partialorder %v5959, 0.0
        %v5978 = vmul.f32 %v5900, 0.2
        %v5979 = vmul.f32 %v5903, 0.2
        %v5980 = vmul.f32 %v5908, 0.2
        %v5981 = vmul.f32 %v5911, 0.2
        %v5982 = vmul.f32 %v5916, 0.2
        %v5983 = vmul.f32 %v5919, 0.2
        %v5984 = vmul.f32 %v5924, 0.2
        %v5985 = vmul.f32 %v5927, 0.2
        %v5986 = vmul.f32 %v5932, 0.2
        %v5987 = vmul.f32 %v5935, 0.2
        %v5988 = vmul.f32 %v5940, 0.2
        %v5989 = vmul.f32 %v5943, 0.2
        %v5990 = vmul.f32 %v5948, 0.2
        %v5991 = vmul.f32 %v5951, 0.2
        %v5992 = vmul.f32 %v5956, 0.2
        %v5993 = vmul.f32 %v5959, 0.2
        %v5994 = vsel %vm5962, %v5900, %v5978
        %v5995 = vsel %vm5963, %v5903, %v5979
        %v5996 = vsel %vm5964, %v5908, %v5980
        %v5997 = vsel %vm5965, %v5911, %v5981
        %v5998 = vsel %vm5966, %v5916, %v5982
        %v5999 = vsel %vm5967, %v5919, %v5983
        %v6000 = vsel %vm5968, %v5924, %v5984
        %v6001 = vsel %vm5969, %v5927, %v5985
        %v6002 = vsel %vm5970, %v5932, %v5986
        %v6003 = vsel %vm5971, %v5935, %v5987
        %v6004 = vsel %vm5972, %v5940, %v5988
        %v6005 = vsel %vm5973, %v5943, %v5989
        %v6006 = vsel %vm5974, %v5948, %v5990
        %v6007 = vsel %vm5975, %v5951, %v5991
        %v6008 = vsel %vm5976, %v5956, %v5992
        %v6009 = vsel %vm5977, %v5959, %v5993
        %v6010 = vld [vmem:[%s7] sm:$0x1]
        %v6012 = vlaneseq
        %v6013 = vshrl.u32 %v6012, 7
        %v6014 = vsub.s32 0, %v6013
        %v6015 = vrot.slane %v6010, %v6014
        %v6017 = vmul.f32 %v5994, %v6015
        %v6018 = vmul.f32 %v5995, %v6015
        %v6019 = vmul.f32 %v5996, %v6015
        %v6020 = vmul.f32 %v5997, %v6015
        %v6021 = vmul.f32 %v5998, %v6015
        %v6022 = vmul.f32 %v5999, %v6015
        %v6023 = vmul.f32 %v6000, %v6015
        %v6024 = vmul.f32 %v6001, %v6015
        %v6025 = vmul.f32 %v6002, %v6015
        %v6026 = vmul.f32 %v6003, %v6015
        %v6027 = vmul.f32 %v6004, %v6015
        %v6028 = vmul.f32 %v6005, %v6015
        %v6029 = vmul.f32 %v6006, %v6015
        %v6030 = vmul.f32 %v6007, %v6015
        %v6031 = vmul.f32 %v6008, %v6015
        %v6032 = vmul.f32 %v6009, %v6015
        %v6033 = vld [vmem:[%s8] sm:$0x1]
        %v6035 = vlaneseq
        %v6036 = vshrl.u32 %v6035, 7
        %v6037 = vsub.s32 0, %v6036
        %v6038 = vrot.slane %v6033, %v6037
        %v6040 = vadd.f32 %v6017, %v6038
        %v6041 = vadd.f32 %v6018, %v6038
        %v6042 = vadd.f32 %v6019, %v6038
        %v6043 = vadd.f32 %v6020, %v6038
        %v6044 = vadd.f32 %v6021, %v6038
        %v6045 = vadd.f32 %v6022, %v6038
        %v6046 = vadd.f32 %v6023, %v6038
        %v6047 = vadd.f32 %v6024, %v6038
        %v6048 = vadd.f32 %v6025, %v6038
        %v6049 = vadd.f32 %v6026, %v6038
        %v6050 = vadd.f32 %v6027, %v6038
        %v6051 = vadd.f32 %v6028, %v6038
        %v6052 = vadd.f32 %v6029, %v6038
        %v6053 = vadd.f32 %v6030, %v6038
        %v6054 = vadd.f32 %v6031, %v6038
        %v6055 = vadd.f32 %v6032, %v6038
        %v6056 = vpack.c.bf16 %v6041, %v6040
        %v6057 = vpack.c.bf16 %v6043, %v6042
        %v6058 = vpack.c.bf16 %v6045, %v6044
        %v6059 = vpack.c.bf16 %v6047, %v6046
        %v6060 = vpack.c.bf16 %v6049, %v6048
        %v6061 = vpack.c.bf16 %v6051, %v6050
        %v6062 = vpack.c.bf16 %v6053, %v6052
        %v6063 = vpack.c.bf16 %v6055, %v6054
        %v6072 = vunpack.c.l.b16 %v6056
        %v6073 = vunpack.c.h.b16 %v6056
        %v6074 = vunpack.c.l.b16 %v6057
        %v6075 = vunpack.c.h.b16 %v6057
        %v6076 = vunpack.c.l.b16 %v6058
        %v6077 = vunpack.c.h.b16 %v6058
        %v6078 = vunpack.c.l.b16 %v6059
        %v6079 = vunpack.c.h.b16 %v6059
        %v6080 = vunpack.c.l.b16 %v6060
        %v6081 = vunpack.c.h.b16 %v6060
        %v6082 = vunpack.c.l.b16 %v6061
        %v6083 = vunpack.c.h.b16 %v6061
        %v6084 = vunpack.c.l.b16 %v6062
        %v6085 = vunpack.c.h.b16 %v6062
        %v6086 = vunpack.c.l.b16 %v6063
        %v6087 = vunpack.c.h.b16 %v6063
        %v6088 = vpack.c.b16 %v6072, %v6072
        %v6089 = vpack.c.b16 %v6073, %v6073
        %v6090 = vpack.c.b16 %v6074, %v6074
        %v6091 = vpack.c.b16 %v6075, %v6075
        %v6092 = vpack.c.b16 %v6076, %v6076
        %v6093 = vpack.c.b16 %v6077, %v6077
        %v6094 = vpack.c.b16 %v6078, %v6078
        %v6095 = vpack.c.b16 %v6079, %v6079
        %v6096 = vpack.c.b16 %v6080, %v6080
        %v6097 = vpack.c.b16 %v6081, %v6081
        %v6098 = vpack.c.b16 %v6082, %v6082
        %v6099 = vpack.c.b16 %v6083, %v6083
        %v6100 = vpack.c.b16 %v6084, %v6084
        %v6101 = vpack.c.b16 %v6085, %v6085
        %v6102 = vpack.c.b16 %v6086, %v6086
        %6103 = vrot.lane.b32.xlu0 %v6092, 32
        %v6104 = vpop.permute.xlu0 %6103
        %6105 = vrot.lane.b32.xlu0 %v6094, 32
        %v6106 = vpop.permute.xlu0 %6105
        %6107 = vrot.lane.b32.xlu0 0, 64
        %v6108 = vpop.permute.xlu0 %6107
        %6109 = vrot.lane.b32.xlu0 %v6093, 64
        %v6110 = vpop.permute.xlu0 %6109
        %6111 = vrot.lane.b32.xlu0 %v6095, 64
        %v6112 = vpop.permute.xlu0 %6111
        %6113 = vrot.lane.b32.xlu0 %v6089, 96
        %v6114 = vpop.permute.xlu0 %6113
        %6115 = vrot.lane.b32.xlu0 %v6097, 96
        %v6116 = vpop.permute.xlu0 %6115
        %6117 = vrot.lane.b32.xlu0 %v6089, 32
        %v6118 = vpop.permute.xlu0 %6117
        %6119 = vrot.lane.b32.xlu0 %v6091, 32
        %v6120 = vpop.permute.xlu0 %6119
        %6121 = vrot.lane.b32.xlu0 %v6097, 32
        %v6122 = vpop.permute.xlu0 %6121
        %6123 = vrot.lane.b32.xlu0 %v6099, 32
        %v6124 = vpop.permute.xlu0 %6123
        %6125 = vrot.lane.b32.xlu0 %v6101, 64
        %v6126 = vpop.permute.xlu0 %6125
        %6127 = vrot.lane.b32.xlu0 %v6092, 96
        %v6128 = vpop.permute.xlu0 %6127
        %6129 = vrot.lane.b32.xlu0 %v6094, 96
        %v6130 = vpop.permute.xlu0 %6129
        %6131 = vrot.lane.b32.xlu0 %v6100, 96
        %v6132 = vpop.permute.xlu0 %6131
        %6133 = vrot.lane.b32.xlu0 %v6102, 96
        %v6134 = vpop.permute.xlu0 %6133
        %v6135 = vsel %vm4055, 0, %v5313
        %v6137 = vsel %vm4055, 0, %v6104
        %v6140 = vsel %vm4055, %v6093, %v6106
        %v6142 = vsel %vm5577, %v6135, %v6108
        %v6144 = vsel %vm5577, %v6137, %v6110
        %v6146 = vsel %vm5577, %v6140, %v6112
        %v6147 = vsel %vm5643, %v6142, %v5429
        %v6149 = vsel %vm5643, %v6142, %v6114
        %v6150 = vsel %vm5643, %v6144, %v5429
        %v6152 = vsel %vm5643, %v6146, %v6116
        %v6155 = vsel %vm4055, %v6088, %v6118
        %v6158 = vsel %vm4055, %v6090, %v6120
        %v6161 = vsel %vm4055, %v6096, %v6122
        %v6164 = vsel %vm4055, %v6098, %v6124
        %v6165 = vsel %vm5577, %v6155, %v6108
        %v6166 = vsel %vm5577, %v6158, %v6110
        %v6167 = vsel %vm5577, %v6161, %v6108
        %v6169 = vsel %vm5577, %v6164, %v6126
        %v6171 = vsel %vm5643, %v6165, %v6128
        %v6173 = vsel %vm5643, %v6166, %v6130
        %v6175 = vsel %vm5643, %v6167, %v6132
        %v6177 = vsel %vm5643, %v6169, %v6134
        %v6186 = vunpack.c.l.b16 %v6147
        %v6187 = vunpack.c.l.b16 %v6171
        %v6188 = vunpack.c.l.b16 %v6149
        %v6189 = vunpack.c.l.b16 %v6173
        %v6190 = vunpack.c.l.b16 %v6150
        %v6191 = vunpack.c.l.b16 %v6175
        %v6192 = vunpack.c.l.b16 %v6152
        %v6193 = vunpack.c.l.b16 %v6177
        %v6194 = vld [vmem:[%s9] sm:$0xf]
        %v6195 = vld [vmem:[%s9 + $0x4] sm:$0xf]
        %v6196 = vld [vmem:[%s9 + $0x8] sm:$0xf]
        %v6197 = vld [vmem:[%s9 + $0xc] sm:$0xf]
        %v6198 = vld [vmem:[%s9 + $0x10] sm:$0xf]
        %v6199 = vld [vmem:[%s9 + $0x14] sm:$0xf]
        %v6200 = vld [vmem:[%s9 + $0x18] sm:$0xf]
        %v6201 = vld [vmem:[%s9 + $0x1c] sm:$0xf]
        %v6202 = vld [vmem:[%s9 + $0x20] sm:$0xf]
        %v6203 = vld [vmem:[%s9 + $0x24] sm:$0xf]
        %v6204 = vld [vmem:[%s9 + $0x28] sm:$0xf]
        %v6205 = vld [vmem:[%s9 + $0x2c] sm:$0xf]
        %v6206 = vld [vmem:[%s9 + $0x30] sm:$0xf]
        %v6207 = vld [vmem:[%s9 + $0x34] sm:$0xf]
        %v6208 = vld [vmem:[%s9 + $0x38] sm:$0xf]
        %v6209 = vld [vmem:[%s9 + $0x3c] sm:$0xf]
        %v6210 = vld [vmem:[%s9 + $0x40] sm:$0xf]
        %v6211 = vld [vmem:[%s9 + $0x44] sm:$0xf]
        %v6212 = vld [vmem:[%s9 + $0x48] sm:$0xf]
        %v6213 = vld [vmem:[%s9 + $0x4c] sm:$0xf]
        %v6214 = vld [vmem:[%s9 + $0x50] sm:$0xf]
        %v6215 = vld [vmem:[%s9 + $0x54] sm:$0xf]
        %v6216 = vld [vmem:[%s9 + $0x58] sm:$0xf]
        %v6217 = vld [vmem:[%s9 + $0x5c] sm:$0xf]
        %v6218 = vld [vmem:[%s9 + $0x60] sm:$0xf]
        %v6219 = vld [vmem:[%s9 + $0x64] sm:$0xf]
        %v6220 = vld [vmem:[%s9 + $0x68] sm:$0xf]
        %v6221 = vld [vmem:[%s9 + $0x6c] sm:$0xf]
        %v6222 = vld [vmem:[%s9 + $0x70] sm:$0xf]
        %v6223 = vld [vmem:[%s9 + $0x74] sm:$0xf]
        %v6224 = vld [vmem:[%s9 + $0x78] sm:$0xf]
        %v6225 = vld [vmem:[%s9 + $0x7c] sm:$0xf]
        %v6226 = vld [vmem:[%s9 + $0x80] sm:$0xf]
        %v6227 = vld [vmem:[%s9 + $0x84] sm:$0xf]
        %v6228 = vld [vmem:[%s9 + $0x88] sm:$0xf]
        %v6229 = vld [vmem:[%s9 + $0x8c] sm:$0xf]
        %v6230 = vld [vmem:[%s10] sm:$0x1]
        %v6232 = vlaneseq
        %v6233 = vshrl.u32 %v6232, 7
        %v6234 = vsub.s32 0, %v6233
        %v6235 = vrot.slane %v6230, %v6234
        %v6237 = vpack.c.b16 %v6188, %v6186
        %v6238 = vpack.c.b16 %v6189, %v6187
        %v6239 = vpack.c.b16 %v6079, %v6077
        %v6240 = vpack.c.b16 %v6192, %v6190
        %v6241 = vpack.c.b16 %v6193, %v6191
        %v6242 = vpack.c.b16 %v6087, %v6085
        %v6283 = vunpack.c.l.b16 %v6194
        %v6284 = vunpack.c.l.b16 %v6195
        %v6285 = vunpack.c.l.b16 %v6196
        %v6286 = vunpack.c.l.b16 %v6197
        %v6287 = vunpack.c.l.b16 %v6198
        %v6288 = vunpack.c.l.b16 %v6199
        %v6289 = vunpack.c.l.b16 %v6200
        %v6290 = vunpack.c.l.b16 %v6201
        %v6291 = vunpack.c.l.b16 %v6202
        %v6292 = vunpack.c.l.b16 %v6203
        %v6293 = vunpack.c.l.b16 %v6204
        %v6294 = vunpack.c.l.b16 %v6205
        %v6295 = vunpack.c.l.b16 %v6206
        %v6296 = vunpack.c.l.b16 %v6207
        %v6297 = vunpack.c.l.b16 %v6208
        %v6298 = vunpack.c.l.b16 %v6209
        %v6299 = vunpack.c.l.b16 %v6210
        %v6300 = vunpack.c.l.b16 %v6211
        %v6301 = vunpack.c.l.b16 %v6212
        %v6302 = vunpack.c.l.b16 %v6213
        %v6303 = vunpack.c.l.b16 %v6214
        %v6304 = vunpack.c.l.b16 %v6215
        %v6305 = vunpack.c.l.b16 %v6216
        %v6306 = vunpack.c.l.b16 %v6217
        %v6307 = vunpack.c.l.b16 %v6218
        %v6308 = vunpack.c.l.b16 %v6219
        %v6309 = vunpack.c.l.b16 %v6220
        %v6310 = vunpack.c.l.b16 %v6221
        %v6311 = vunpack.c.l.b16 %v6222
        %v6312 = vunpack.c.l.b16 %v6223
        %v6313 = vunpack.c.l.b16 %v6224
        %v6314 = vunpack.c.l.b16 %v6225
        %v6315 = vunpack.c.l.b16 %v6226
        %v6316 = vunpack.c.l.b16 %v6227
        %v6317 = vunpack.c.l.b16 %v6228
        %v6318 = vunpack.c.l.b16 %v6229
        %v6319 = vpack.c.b16 %v6284, %v6283
        %v6320 = vpack.c.b16 %v6286, %v6285
        %v6321 = vpack.c.b16 %v6288, %v6287
        %v6322 = vpack.c.b16 %v6290, %v6289
        %v6323 = vpack.c.b16 %v6292, %v6291
        %v6324 = vpack.c.b16 %v6294, %v6293
        %v6325 = vpack.c.b16 %v6296, %v6295
        %v6326 = vpack.c.b16 %v6298, %v6297
        %v6327 = vpack.c.b16 %v6300, %v6299
        %v6328 = vpack.c.b16 %v6302, %v6301
        %v6329 = vpack.c.b16 %v6304, %v6303
        %v6330 = vpack.c.b16 %v6306, %v6305
        %v6331 = vpack.c.b16 %v6308, %v6307
        %v6332 = vpack.c.b16 %v6310, %v6309
        %v6333 = vpack.c.b16 %v6312, %v6311
        %v6334 = vpack.c.b16 %v6314, %v6313
        %v6335 = vpack.c.b16 %v6316, %v6315
        %v6336 = vpack.c.b16 %v6318, %v6317
        %v6356 = vsel %vm4055, %v6239, 0
        %v6359 = vsel %vm4055, %v6242, 0
        %6361 = vmatprep.subr.bf16.mxu0 0
        %6362 = vmatpush1.bf16.msra.mxu0 %v6319
        %6363 = vmatprep.subr.bf16.mxu0 0
        %6364 = vmatpush1.bf16.msra.mxu0 %v6320
        %6365 = vmatprep.subr.bf16.mxu0 0
        %6366 = vmatpush1.bf16.msra.mxu0 %v6321
        %6367 = vmatprep.subr.bf16.mxu0 0
        %6368 = vmatpush1.bf16.msra.mxu0 %v6322
        %6369 = vmatprep.subr.bf16.mxu0 0
        %6370 = vmatpush1.bf16.msra.mxu0 %v6323
        %6371 = vmatprep.subr.bf16.mxu0 0
        %6372 = vmatpush1.bf16.msra.mxu0 %v6324
        %6373 = vmatprep.subr.bf16.mxu0 0
        %6374 = vmatpush1.bf16.msra.mxu0 %v6325
        %6375 = vmatprep.subr.bf16.mxu0 0
        %6376 = vmatpush1.bf16.msra.mxu0 %v6326
        %6377 = vmatprep.subr.bf16.mxu0 0
        %6378 = vmatpush1.bf16.msra.mxu0 %v6327
        %6379 = vmatprep.subr.bf16.mxu0 0
        %6380 = vmatpush1.bf16.msra.mxu0 %v6328
        %6381 = vmatprep.subr.bf16.mxu0 0
        %6382 = vmatpush1.bf16.msra.mxu0 %v6329
        %6383 = vmatprep.subr.bf16.mxu0 0
        %6384 = vmatpush1.bf16.msra.mxu0 %v6330
        %6385 = vmatprep.subr.bf16.mxu0 0
        %6386 = vmatpush1.bf16.msra.mxu0 %v6331
        %6387 = vmatprep.subr.bf16.mxu0 0
        %6388 = vmatpush1.bf16.msra.mxu0 %v6332
        %6389 = vmatprep.subr.bf16.mxu0 0
        %6390 = vmatpush1.bf16.msra.mxu0 %v6333
        %6391 = vmatprep.subr.bf16.mxu0 0
        %6392 = vmatpush1.bf16.msra.mxu0 %v6334
        %6393 = vmatprep.mubr.bf16.mxu0 %v6238
        %6394 = vmatmul.mubr.bf16.gmra.mrb[0].mxu0 %v6237
        %v6395 = vpop.f32.mrb[0].mxu0
        %v6396 = vadd.f32 %v6235, %v6395
        %v6397 = vpop.f32.mrb[0].mxu0
        %v6398 = vpop.f32.mrb[0].mxu0
        %v6399 = vadd.f32 %v6235, %v6398
        %v6400 = vpop.f32.mrb[0].mxu0
        %6401 = vmatprep.mubr.bf16.mxu0 %v6241
        %6402 = vmatmul.mubr.bf16.gmra.mrb[0].mxu0 %v6240
        %v6403 = vpop.f32.mrb[0].mxu0
        %v6404 = vadd.f32 %v6235, %v6403
        %v6405 = vpop.f32.mrb[0].mxu0
        %v6406 = vpop.f32.mrb[0].mxu0
        %v6407 = vadd.f32 %v6235, %v6406
        %v6408 = vpop.f32.mrb[0].mxu0
        %6409 = vdwg.mxu0
        %6410 = vmatprep.subr.bf16.mxu0 0
        %6411 = vmatpush1.bf16.msra.mxu0 %v6335
        %6412 = vmatprep.subr.bf16.mxu0 0
        %6413 = vmatpush1.bf16.msra.mxu0 %v6336
        %6414 = vmatprep.subr.bf16.mxu0 0
        %6415 = vmatpush1.bf16.msra.mxu0 0
        %6416 = vmatprep.subr.bf16.mxu0 0
        %6417 = vmatpush1.bf16.msra.mxu0 0
        %6418 = vmatprep.subr.bf16.mxu0 0
        %6419 = vmatpush1.bf16.msra.mxu0 0
        %6420 = vmatprep.subr.bf16.mxu0 0
        %6421 = vmatpush1.bf16.msra.mxu0 0
        %6422 = vmatprep.subr.bf16.mxu0 0
        %6423 = vmatpush1.bf16.msra.mxu0 0
        %6424 = vmatprep.subr.bf16.mxu0 0
        %6425 = vmatpush1.bf16.msra.mxu0 0
        %6426 = vmatprep.subr.bf16.mxu0 0
        %6427 = vmatpush1.bf16.msra.mxu0 0
        %6428 = vmatprep.subr.bf16.mxu0 0
        %6429 = vmatpush1.bf16.msra.mxu0 0
        %6430 = vmatprep.subr.bf16.mxu0 0
        %6431 = vmatpush1.bf16.msra.mxu0 0
        %6432 = vmatprep.subr.bf16.mxu0 0
        %6433 = vmatpush1.bf16.msra.mxu0 0
        %6434 = vmatprep.subr.bf16.mxu0 0
        %6435 = vmatpush1.bf16.msra.mxu0 0
        %6436 = vmatprep.subr.bf16.mxu0 0
        %6437 = vmatpush1.bf16.msra.mxu0 0
        %6438 = vmatprep.subr.bf16.mxu0 0
        %6439 = vmatpush1.bf16.msra.mxu0 0
        %6440 = vmatprep.subr.bf16.mxu0 0
        %6441 = vmatpush1.bf16.msra.mxu0 0
        %6442 = vmatprep.mubr.bf16.mxu0 0
        %6443 = vmatmul.mubr.bf16.gmra.mrb[0].mxu0 %v6356
        %v6444 = vpop.f32.mrb[0].mxu0
        %v6445 = vadd.f32 %v6396, %v6444
        %v6446 = vpop.f32.mrb[0].mxu0
        %v6447 = vpop.f32.mrb[0].mxu0
        %v6448 = vadd.f32 %v6399, %v6447
        %v6449 = vpop.f32.mrb[0].mxu0
        %6450 = vmatprep.mubr.bf16.mxu0 0
        %6451 = vmatmul.mubr.bf16.gmra.mrb[0].mxu0 %v6359
        %v6452 = vpop.f32.mrb[0].mxu0
        %v6453 = vadd.f32 %v6404, %v6452
        %v6454 = vpop.f32.mrb[0].mxu0
        %v6455 = vpop.f32.mrb[0].mxu0
        %v6456 = vadd.f32 %v6407, %v6455
        %v6457 = vpop.f32.mrb[0].mxu0
        %6458 = vdwg.mxu0
        %vm6459 = vcmp.gt.f32.partialorder %v6445, 0.0
        %vm6460 = vcmp.gt.f32.partialorder %v6448, 0.0
        %vm6461 = vcmp.gt.f32.partialorder %v6453, 0.0
        %vm6462 = vcmp.gt.f32.partialorder %v6456, 0.0
        %v6463 = vmul.f32 %v6445, 0.2
        %v6464 = vmul.f32 %v6448, 0.2
        %v6465 = vmul.f32 %v6453, 0.2
        %v6466 = vmul.f32 %v6456, 0.2
        %v6467 = vsel %vm6459, %v6445, %v6463
        %v6468 = vsel %vm6460, %v6448, %v6464
        %v6469 = vsel %vm6461, %v6453, %v6465
        %v6470 = vsel %vm6462, %v6456, %v6466
        %v6471 = vld [vmem:[%s11] sm:$0x1]
        %v6473 = vlaneseq
        %v6474 = vshrl.u32 %v6473, 7
        %v6475 = vsub.s32 0, %v6474
        %v6476 = vrot.slane %v6471, %v6475
        %v6478 = vmul.f32 %v6467, %v6476
        %v6479 = vmul.f32 %v6468, %v6476
        %v6480 = vmul.f32 %v6469, %v6476
        %v6481 = vmul.f32 %v6470, %v6476
        %v6482 = vld [vmem:[%s12] sm:$0x1]
        %v6484 = vlaneseq
        %v6485 = vshrl.u32 %v6484, 7
        %v6486 = vsub.s32 0, %v6485
        %v6487 = vrot.slane %v6482, %v6486
        %v6489 = vadd.f32 %v6478, %v6487
        %v6490 = vadd.f32 %v6479, %v6487
        %v6491 = vadd.f32 %v6480, %v6487
        %v6492 = vadd.f32 %v6481, %v6487
        %v6493 = vpack.c.bf16 %v6490, %v6489
        %v6494 = vpack.c.bf16 %v6492, %v6491
        %v6497 = vunpack.c.l.b16 %v6493
        %v6498 = vunpack.c.h.b16 %v6493
        %v6499 = vunpack.c.l.b16 %v6494
        %v6500 = vunpack.c.h.b16 %v6494
        %v6501 = vpack.c.b16 %v6497, %v6497
        %v6502 = vpack.c.b16 %v6498, %v6498
        %v6503 = vpack.c.b16 %v6499, %v6499
        %v6504 = vpack.c.b16 %v6500, %v6500
        %6505 = vrot.lane.b32.xlu0 %v6502, 64
        %v6506 = vpop.permute.xlu0 %6505
        %6507 = vrot.lane.b32.xlu0 %v6503, 64
        %v6508 = vpop.permute.xlu0 %6507
        %v6509 = vsel %vm5577, 0, %v6108
        %v6513 = vsel %vm5577, %v6501, %v6506
        %v6516 = vsel %vm5577, 0, %v6508
        %v6518 = vld [vmem:[%s13] sm:$0xf]
        %v6519 = vld [vmem:[%s13 + $0x4] sm:$0xf]
        %v6520 = vld [vmem:[%s13 + $0x8] sm:$0xf]
        %v6521 = vld [vmem:[%s13 + $0xc] sm:$0xf]
        %v6522 = vld [vmem:[%s13 + $0x10] sm:$0xf]
        %v6523 = vld [vmem:[%s13 + $0x14] sm:$0xf]
        %v6524 = vld [vmem:[%s13 + $0x18] sm:$0xf]
        %v6525 = vld [vmem:[%s13 + $0x1c] sm:$0xf]
        %v6526 = vld [vmem:[%s13 + $0x20] sm:$0xf]
        %v6527 = vld [vmem:[%s13 + $0x24] sm:$0xf]
        %v6528 = vld [vmem:[%s13 + $0x28] sm:$0xf]
        %v6529 = vld [vmem:[%s13 + $0x2c] sm:$0xf]
        %v6530 = vld [vmem:[%s13 + $0x30] sm:$0xf]
        %v6531 = vld [vmem:[%s13 + $0x34] sm:$0xf]
        %v6532 = vld [vmem:[%s13 + $0x38] sm:$0xf]
        %v6533 = vld [vmem:[%s13 + $0x3c] sm:$0xf]
        %v6534 = vld [vmem:[%s13 + $0x40] sm:$0xf]
        %v6535 = vld [vmem:[%s13 + $0x44] sm:$0xf]
        %v6536 = vld [vmem:[%s13 + $0x48] sm:$0xf]
        %v6537 = vld [vmem:[%s13 + $0x4c] sm:$0xf]
        %v6538 = vld [vmem:[%s13 + $0x50] sm:$0xf]
        %v6539 = vld [vmem:[%s13 + $0x54] sm:$0xf]
        %v6540 = vld [vmem:[%s13 + $0x58] sm:$0xf]
        %v6541 = vld [vmem:[%s13 + $0x5c] sm:$0xf]
        %v6542 = vld [vmem:[%s13 + $0x60] sm:$0xf]
        %v6543 = vld [vmem:[%s13 + $0x64] sm:$0xf]
        %v6544 = vld [vmem:[%s13 + $0x68] sm:$0xf]
        %v6545 = vld [vmem:[%s13 + $0x6c] sm:$0xf]
        %v6546 = vld [vmem:[%s13 + $0x70] sm:$0xf]
        %v6547 = vld [vmem:[%s13 + $0x74] sm:$0xf]
        %v6548 = vld [vmem:[%s13 + $0x78] sm:$0xf]
        %v6549 = vld [vmem:[%s13 + $0x7c] sm:$0xf]
        %v6550 = vld [vmem:[%s13 + $0x80] sm:$0xf]
        %v6551 = vld [vmem:[%s13 + $0x84] sm:$0xf]
        %v6552 = vld [vmem:[%s13 + $0x88] sm:$0xf]
        %v6553 = vld [vmem:[%s13 + $0x8c] sm:$0xf]
        %v6554 = vld [vmem:[%s13 + $0x90] sm:$0xf]
        %v6555 = vld [vmem:[%s13 + $0x94] sm:$0xf]
        %v6556 = vld [vmem:[%s13 + $0x98] sm:$0xf]
        %v6557 = vld [vmem:[%s13 + $0x9c] sm:$0xf]
        %v6558 = vld [vmem:[%s13 + $0xa0] sm:$0xf]
        %v6559 = vld [vmem:[%s13 + $0xa4] sm:$0xf]
        %v6560 = vld [vmem:[%s13 + $0xa8] sm:$0xf]
        %v6561 = vld [vmem:[%s13 + $0xac] sm:$0xf]
        %v6562 = vld [vmem:[%s13 + $0xb0] sm:$0xf]
        %v6563 = vld [vmem:[%s13 + $0xb4] sm:$0xf]
        %v6564 = vld [vmem:[%s13 + $0xb8] sm:$0xf]
        %v6565 = vld [vmem:[%s13 + $0xbc] sm:$0xf]
        %v6566 = vld [vmem:[%s13 + $0xc0] sm:$0xf]
        %v6567 = vld [vmem:[%s13 + $0xc4] sm:$0xf]
        %v6568 = vld [vmem:[%s13 + $0xc8] sm:$0xf]
        %v6569 = vld [vmem:[%s13 + $0xcc] sm:$0xf]
        %v6570 = vld [vmem:[%s13 + $0xd0] sm:$0xf]
        %v6571 = vld [vmem:[%s13 + $0xd4] sm:$0xf]
        %v6572 = vld [vmem:[%s13 + $0xd8] sm:$0xf]
        %v6573 = vld [vmem:[%s13 + $0xdc] sm:$0xf]
        %v6574 = vld [vmem:[%s13 + $0xe0] sm:$0xf]
        %v6575 = vld [vmem:[%s13 + $0xe4] sm:$0xf]
        %v6576 = vld [vmem:[%s13 + $0xe8] sm:$0xf]
        %v6577 = vld [vmem:[%s13 + $0xec] sm:$0xf]
        %v6578 = vld [vmem:[%s13 + $0xf0] sm:$0xf]
        %v6579 = vld [vmem:[%s13 + $0xf4] sm:$0xf]
        %v6580 = vld [vmem:[%s13 + $0xf8] sm:$0xf]
        %v6581 = vld [vmem:[%s13 + $0xfc] sm:$0xf]
        %v6582 = vld [vmem:[%s13 + $0x100] sm:$0xf]
        %v6583 = vld [vmem:[%s13 + $0x104] sm:$0xf]
        %v6584 = vld [vmem:[%s13 + $0x108] sm:$0xf]
        %v6585 = vld [vmem:[%s13 + $0x10c] sm:$0xf]
        %v6586 = vld [vmem:[%s13 + $0x110] sm:$0xf]
        %v6587 = vld [vmem:[%s13 + $0x114] sm:$0xf]
        %v6588 = vld [vmem:[%s13 + $0x118] sm:$0xf]
        %v6589 = vld [vmem:[%s13 + $0x11c] sm:$0xf]
        %v6590 = vld [vmem:[%s14] sm:$0x1]
        %v6592 = vlaneseq
        %v6593 = vshrl.u32 %v6592, 7
        %v6594 = vsub.s32 0, %v6593
        %v6595 = vrot.slane %v6590, %v6594
        %v6669 = vunpack.c.l.b16 %v6518
        %v6670 = vunpack.c.l.b16 %v6519
        %v6671 = vunpack.c.l.b16 %v6520
        %v6672 = vunpack.c.l.b16 %v6521
        %v6673 = vunpack.c.l.b16 %v6522
        %v6674 = vunpack.c.l.b16 %v6523
        %v6675 = vunpack.c.l.b16 %v6524
        %v6676 = vunpack.c.l.b16 %v6525
        %v6677 = vunpack.c.l.b16 %v6526
        %v6678 = vunpack.c.l.b16 %v6527
        %v6679 = vunpack.c.l.b16 %v6528
        %v6680 = vunpack.c.l.b16 %v6529
        %v6681 = vunpack.c.l.b16 %v6530
        %v6682 = vunpack.c.l.b16 %v6531
        %v6683 = vunpack.c.l.b16 %v6532
        %v6684 = vunpack.c.l.b16 %v6533
        %v6685 = vunpack.c.l.b16 %v6534
        %v6686 = vunpack.c.l.b16 %v6535
        %v6687 = vunpack.c.l.b16 %v6536
        %v6688 = vunpack.c.l.b16 %v6537
        %v6689 = vunpack.c.l.b16 %v6538
        %v6690 = vunpack.c.l.b16 %v6539
        %v6691 = vunpack.c.l.b16 %v6540
        %v6692 = vunpack.c.l.b16 %v6541
        %v6693 = vunpack.c.l.b16 %v6542
        %v6694 = vunpack.c.l.b16 %v6543
        %v6695 = vunpack.c.l.b16 %v6544
        %v6696 = vunpack.c.l.b16 %v6545
        %v6697 = vunpack.c.l.b16 %v6546
        %v6698 = vunpack.c.l.b16 %v6547
        %v6699 = vunpack.c.l.b16 %v6548
        %v6700 = vunpack.c.l.b16 %v6549
        %v6701 = vunpack.c.l.b16 %v6550
        %v6702 = vunpack.c.l.b16 %v6551
        %v6703 = vunpack.c.l.b16 %v6552
        %v6704 = vunpack.c.l.b16 %v6553
        %v6705 = vunpack.c.l.b16 %v6554
        %v6706 = vunpack.c.l.b16 %v6555
        %v6707 = vunpack.c.l.b16 %v6556
        %v6708 = vunpack.c.l.b16 %v6557
        %v6709 = vunpack.c.l.b16 %v6558
        %v6710 = vunpack.c.l.b16 %v6559
        %v6711 = vunpack.c.l.b16 %v6560
        %v6712 = vunpack.c.l.b16 %v6561
        %v6713 = vunpack.c.l.b16 %v6562
        %v6714 = vunpack.c.l.b16 %v6563
        %v6715 = vunpack.c.l.b16 %v6564
        %v6716 = vunpack.c.l.b16 %v6565
        %v6717 = vunpack.c.l.b16 %v6566
        %v6718 = vunpack.c.l.b16 %v6567
        %v6719 = vunpack.c.l.b16 %v6568
        %v6720 = vunpack.c.l.b16 %v6569
        %v6721 = vunpack.c.l.b16 %v6570
        %v6722 = vunpack.c.l.b16 %v6571
        %v6723 = vunpack.c.l.b16 %v6572
        %v6724 = vunpack.c.l.b16 %v6573
        %v6725 = vunpack.c.l.b16 %v6574
        %v6726 = vunpack.c.l.b16 %v6575
        %v6727 = vunpack.c.l.b16 %v6576
        %v6728 = vunpack.c.l.b16 %v6577
        %v6729 = vunpack.c.l.b16 %v6578
        %v6730 = vunpack.c.l.b16 %v6579
        %v6731 = vunpack.c.l.b16 %v6580
        %v6732 = vunpack.c.l.b16 %v6581
        %v6733 = vunpack.c.l.b16 %v6582
        %v6734 = vunpack.c.l.b16 %v6583
        %v6735 = vunpack.c.l.b16 %v6584
        %v6736 = vunpack.c.l.b16 %v6585
        %v6737 = vunpack.c.l.b16 %v6586
        %v6738 = vunpack.c.l.b16 %v6587
        %v6739 = vunpack.c.l.b16 %v6588
        %v6740 = vunpack.c.l.b16 %v6589
        %v6741 = vpack.c.b16 %v6670, %v6669
        %v6742 = vpack.c.b16 %v6672, %v6671
        %v6743 = vpack.c.b16 %v6674, %v6673
        %v6744 = vpack.c.b16 %v6676, %v6675
        %v6745 = vpack.c.b16 %v6678, %v6677
        %v6746 = vpack.c.b16 %v6680, %v6679
        %v6747 = vpack.c.b16 %v6682, %v6681
        %v6748 = vpack.c.b16 %v6684, %v6683
        %v6749 = vpack.c.b16 %v6686, %v6685
        %v6750 = vpack.c.b16 %v6688, %v6687
        %v6751 = vpack.c.b16 %v6690, %v6689
        %v6752 = vpack.c.b16 %v6692, %v6691
        %v6753 = vpack.c.b16 %v6694, %v6693
        %v6754 = vpack.c.b16 %v6696, %v6695
        %v6755 = vpack.c.b16 %v6698, %v6697
        %v6756 = vpack.c.b16 %v6700, %v6699
        %v6757 = vpack.c.b16 %v6702, %v6701
        %v6758 = vpack.c.b16 %v6704, %v6703
        %v6759 = vpack.c.b16 %v6706, %v6705
        %v6760 = vpack.c.b16 %v6708, %v6707
        %v6761 = vpack.c.b16 %v6710, %v6709
        %v6762 = vpack.c.b16 %v6712, %v6711
        %v6763 = vpack.c.b16 %v6714, %v6713
        %v6764 = vpack.c.b16 %v6716, %v6715
        %v6765 = vpack.c.b16 %v6718, %v6717
        %v6766 = vpack.c.b16 %v6720, %v6719
        %v6767 = vpack.c.b16 %v6722, %v6721
        %v6768 = vpack.c.b16 %v6724, %v6723
        %v6769 = vpack.c.b16 %v6726, %v6725
        %v6770 = vpack.c.b16 %v6728, %v6727
        %v6771 = vpack.c.b16 %v6730, %v6729
        %v6772 = vpack.c.b16 %v6732, %v6731
        %v6773 = vpack.c.b16 %v6734, %v6733
        %v6774 = vpack.c.b16 %v6736, %v6735
        %v6775 = vpack.c.b16 %v6738, %v6737
        %v6776 = vpack.c.b16 %v6740, %v6739
        %v6814 = vsel %vm5577, %v6504, 0
        %6816 = vmatprep.subr.bf16.mxu0 0
        %6817 = vmatpush1.bf16.msra.mxu0 %v6741
        %6818 = vmatprep.subr.bf16.mxu0 0
        %6819 = vmatpush1.bf16.msra.mxu0 %v6742
        %6820 = vmatprep.subr.bf16.mxu0 0
        %6821 = vmatpush1.bf16.msra.mxu0 %v6743
        %6822 = vmatprep.subr.bf16.mxu0 0
        %6823 = vmatpush1.bf16.msra.mxu0 %v6744
        %6824 = vmatprep.subr.bf16.mxu0 0
        %6825 = vmatpush1.bf16.msra.mxu0 %v6745
        %6826 = vmatprep.subr.bf16.mxu0 0
        %6827 = vmatpush1.bf16.msra.mxu0 %v6746
        %6828 = vmatprep.subr.bf16.mxu0 0
        %6829 = vmatpush1.bf16.msra.mxu0 %v6747
        %6830 = vmatprep.subr.bf16.mxu0 0
        %6831 = vmatpush1.bf16.msra.mxu0 %v6748
        %6832 = vmatprep.subr.bf16.mxu0 0
        %6833 = vmatpush1.bf16.msra.mxu0 %v6749
        %6834 = vmatprep.subr.bf16.mxu0 0
        %6835 = vmatpush1.bf16.msra.mxu0 %v6750
        %6836 = vmatprep.subr.bf16.mxu0 0
        %6837 = vmatpush1.bf16.msra.mxu0 %v6751
        %6838 = vmatprep.subr.bf16.mxu0 0
        %6839 = vmatpush1.bf16.msra.mxu0 %v6752
        %6840 = vmatprep.subr.bf16.mxu0 0
        %6841 = vmatpush1.bf16.msra.mxu0 %v6753
        %6842 = vmatprep.subr.bf16.mxu0 0
        %6843 = vmatpush1.bf16.msra.mxu0 %v6754
        %6844 = vmatprep.subr.bf16.mxu0 0
        %6845 = vmatpush1.bf16.msra.mxu0 %v6755
        %6846 = vmatprep.subr.bf16.mxu0 0
        %6847 = vmatpush1.bf16.msra.mxu0 %v6756
        %6848 = vmatprep.mubr.bf16.mxu0 %v6509
        %6849 = vmatmul.mubr.bf16.gmra.mrb[0].mxu0 %v6509
        %v6850 = vpop.f32.mrb[0].mxu0
        %v6851 = vadd.f32 %v6595, %v6850
        %v6852 = vpop.f32.mrb[0].mxu0
        %v6853 = vpop.f32.mrb[0].mxu0
        %v6854 = vpop.f32.mrb[0].mxu0
        %6855 = vdwg.mxu0
        %6856 = vmatprep.subr.bf16.mxu0 0
        %6857 = vmatpush1.bf16.msra.mxu0 %v6757
        %6858 = vmatprep.subr.bf16.mxu0 0
        %6859 = vmatpush1.bf16.msra.mxu0 %v6758
        %6860 = vmatprep.subr.bf16.mxu0 0
        %6861 = vmatpush1.bf16.msra.mxu0 %v6759
        %6862 = vmatprep.subr.bf16.mxu0 0
        %6863 = vmatpush1.bf16.msra.mxu0 %v6760
        %6864 = vmatprep.subr.bf16.mxu0 0
        %6865 = vmatpush1.bf16.msra.mxu0 %v6761
        %6866 = vmatprep.subr.bf16.mxu0 0
        %6867 = vmatpush1.bf16.msra.mxu0 %v6762
        %6868 = vmatprep.subr.bf16.mxu0 0
        %6869 = vmatpush1.bf16.msra.mxu0 %v6763
        %6870 = vmatprep.subr.bf16.mxu0 0
        %6871 = vmatpush1.bf16.msra.mxu0 %v6764
        %6872 = vmatprep.subr.bf16.mxu0 0
        %6873 = vmatpush1.bf16.msra.mxu0 %v6765
        %6874 = vmatprep.subr.bf16.mxu0 0
        %6875 = vmatpush1.bf16.msra.mxu0 %v6766
        %6876 = vmatprep.subr.bf16.mxu0 0
        %6877 = vmatpush1.bf16.msra.mxu0 %v6767
        %6878 = vmatprep.subr.bf16.mxu0 0
        %6879 = vmatpush1.bf16.msra.mxu0 %v6768
        %6880 = vmatprep.subr.bf16.mxu0 0
        %6881 = vmatpush1.bf16.msra.mxu0 %v6769
        %6882 = vmatprep.subr.bf16.mxu0 0
        %6883 = vmatpush1.bf16.msra.mxu0 %v6770
        %6884 = vmatprep.subr.bf16.mxu0 0
        %6885 = vmatpush1.bf16.msra.mxu0 %v6771
        %6886 = vmatprep.subr.bf16.mxu0 0
        %6887 = vmatpush1.bf16.msra.mxu0 %v6772
        %6888 = vmatprep.mubr.bf16.mxu0 %v6516
        %6889 = vmatmul.mubr.bf16.gmra.mrb[0].mxu0 %v6513
        %v6890 = vpop.f32.mrb[0].mxu0
        %v6891 = vadd.f32 %v6851, %v6890
        %v6892 = vpop.f32.mrb[0].mxu0
        %v6893 = vpop.f32.mrb[0].mxu0
        %v6894 = vpop.f32.mrb[0].mxu0
        %6895 = vdwg.mxu0
        %6896 = vmatprep.subr.bf16.mxu0 0
        %6897 = vmatpush1.bf16.msra.mxu0 %v6773
        %6898 = vmatprep.subr.bf16.mxu0 0
        %6899 = vmatpush1.bf16.msra.mxu0 %v6774
        %6900 = vmatprep.subr.bf16.mxu0 0
        %6901 = vmatpush1.bf16.msra.mxu0 %v6775
        %6902 = vmatprep.subr.bf16.mxu0 0
        %6903 = vmatpush1.bf16.msra.mxu0 %v6776
        %6904 = vmatprep.subr.bf16.mxu0 0
        %6905 = vmatpush1.bf16.msra.mxu0 0
        %6906 = vmatprep.subr.bf16.mxu0 0
        %6907 = vmatpush1.bf16.msra.mxu0 0
        %6908 = vmatprep.subr.bf16.mxu0 0
        %6909 = vmatpush1.bf16.msra.mxu0 0
        %6910 = vmatprep.subr.bf16.mxu0 0
        %6911 = vmatpush1.bf16.msra.mxu0 0
        %6912 = vmatprep.subr.bf16.mxu0 0
        %6913 = vmatpush1.bf16.msra.mxu0 0
        %6914 = vmatprep.subr.bf16.mxu0 0
        %6915 = vmatpush1.bf16.msra.mxu0 0
        %6916 = vmatprep.subr.bf16.mxu0 0
        %6917 = vmatpush1.bf16.msra.mxu0 0
        %6918 = vmatprep.subr.bf16.mxu0 0
        %6919 = vmatpush1.bf16.msra.mxu0 0
        %6920 = vmatprep.subr.bf16.mxu0 0
        %6921 = vmatpush1.bf16.msra.mxu0 0
        %6922 = vmatprep.subr.bf16.mxu0 0
        %6923 = vmatpush1.bf16.msra.mxu0 0
        %6924 = vmatprep.subr.bf16.mxu0 0
        %6925 = vmatpush1.bf16.msra.mxu0 0
        %6926 = vmatprep.subr.bf16.mxu0 0
        %6927 = vmatpush1.bf16.msra.mxu0 0
        %6928 = vmatprep.mubr.bf16.mxu0 0
        %6929 = vmatmul.mubr.bf16.gmra.mrb[0].mxu0 %v6814
        %v6930 = vpop.f32.mrb[0].mxu0
        %v6931 = vadd.f32 %v6891, %v6930
        %v6932 = vpop.f32.mrb[0].mxu0
        %v6933 = vpop.f32.mrb[0].mxu0
        %v6934 = vpop.f32.mrb[0].mxu0
        %6935 = vdwg.mxu0
        %vm6936 = vcmp.gt.f32.partialorder %v6931, 0.0
        %v6937 = vmul.f32 %v6931, 0.2
        %v6938 = vsel %vm6936, %v6931, %v6937
        %v6939 = vld [vmem:[%s15] sm:$0x1]
        %v6941 = vlaneseq
        %v6942 = vshrl.u32 %v6941, 7
        %v6943 = vsub.s32 0, %v6942
        %v6944 = vrot.slane %v6939, %v6943
        %v6946 = vmul.f32 %v6938, %v6944
        %v6947 = vld [vmem:[%s16] sm:$0x1]
        %v6949 = vlaneseq
        %v6950 = vshrl.u32 %v6949, 7
        %v6951 = vsub.s32 0, %v6950
        %v6952 = vrot.slane %v6947, %v6951
        %v6954 = vadd.f32 %v6946, %v6952
        %v6955 = vpack.c.bf16 %v6954, %v6954
        %v6956 = vld [vmem:[%s17] sm:$0xf]
        %v6957 = vld [vmem:[%s17 + $0x4] sm:$0xf]
        %v6958 = vld [vmem:[%s17 + $0x8] sm:$0xf]
        %v6959 = vld [vmem:[%s17 + $0xc] sm:$0xf]
        %v6960 = vld [vmem:[%s17 + $0x10] sm:$0xf]
        %v6961 = vld [vmem:[%s17 + $0x14] sm:$0xf]
        %v6962 = vld [vmem:[%s17 + $0x18] sm:$0xf]
        %v6963 = vld [vmem:[%s17 + $0x1c] sm:$0xf]
        %v6964 = vld [vmem:[%s17 + $0x20] sm:$0xf]
        %v6965 = vld [vmem:[%s17 + $0x24] sm:$0xf]
        %v6966 = vld [vmem:[%s17 + $0x28] sm:$0xf]
        %v6967 = vld [vmem:[%s17 + $0x2c] sm:$0xf]
        %v6968 = vld [vmem:[%s17 + $0x30] sm:$0xf]
        %v6969 = vld [vmem:[%s17 + $0x34] sm:$0xf]
        %v6970 = vld [vmem:[%s17 + $0x38] sm:$0xf]
        %v6971 = vld [vmem:[%s17 + $0x3c] sm:$0xf]
        %v6972 = vld [vmem:[%s18] sm:$0x1]
        %v6974 = vlaneseq
        %v6975 = vshrl.u32 %v6974, 7
        %v6976 = vsub.s32 0, %v6975
        %v6977 = vrot.slane %v6972, %v6976
        %v6995 = vunpack.c.l.b16 %v6956
        %v6996 = vunpack.c.l.b16 %v6957
        %v6997 = vunpack.c.l.b16 %v6958
        %v6998 = vunpack.c.l.b16 %v6959
        %v6999 = vunpack.c.l.b16 %v6960
        %v7000 = vunpack.c.l.b16 %v6961
        %v7001 = vunpack.c.l.b16 %v6962
        %v7002 = vunpack.c.l.b16 %v6963
        %v7003 = vunpack.c.l.b16 %v6964
        %v7004 = vunpack.c.l.b16 %v6965
        %v7005 = vunpack.c.l.b16 %v6966
        %v7006 = vunpack.c.l.b16 %v6967
        %v7007 = vunpack.c.l.b16 %v6968
        %v7008 = vunpack.c.l.b16 %v6969
        %v7009 = vunpack.c.l.b16 %v6970
        %v7010 = vunpack.c.l.b16 %v6971
        %v7011 = vpack.c.b16 %v6996, %v6995
        %v7012 = vpack.c.b16 %v6998, %v6997
        %v7013 = vpack.c.b16 %v7000, %v6999
        %v7014 = vpack.c.b16 %v7002, %v7001
        %v7015 = vpack.c.b16 %v7004, %v7003
        %v7016 = vpack.c.b16 %v7006, %v7005
        %v7017 = vpack.c.b16 %v7008, %v7007
        %v7018 = vpack.c.b16 %v7010, %v7009
        %7027 = vmatprep.subr.bf16.mxu0 0
        %7028 = vmatpush1.bf16.msra.mxu0 %v7011
        %7029 = vmatprep.subr.bf16.mxu0 0
        %7030 = vmatpush1.bf16.msra.mxu0 %v7012
        %7031 = vmatprep.subr.bf16.mxu0 0
        %7032 = vmatpush1.bf16.msra.mxu0 %v7013
        %7033 = vmatprep.subr.bf16.mxu0 0
        %7034 = vmatpush1.bf16.msra.mxu0 %v7014
        %7035 = vmatprep.subr.bf16.mxu0 0
        %7036 = vmatpush1.bf16.msra.mxu0 %v7015
        %7037 = vmatprep.subr.bf16.mxu0 0
        %7038 = vmatpush1.bf16.msra.mxu0 %v7016
        %7039 = vmatprep.subr.bf16.mxu0 0
        %7040 = vmatpush1.bf16.msra.mxu0 %v7017
        %7041 = vmatprep.subr.bf16.mxu0 0
        %7042 = vmatpush1.bf16.msra.mxu0 %v7018
        %7043 = vmatprep.subr.bf16.mxu0 0
        %7044 = vmatpush1.bf16.msra.mxu0 0
        %7045 = vmatprep.subr.bf16.mxu0 0
        %7046 = vmatpush1.bf16.msra.mxu0 0
        %7047 = vmatprep.subr.bf16.mxu0 0
        %7048 = vmatpush1.bf16.msra.mxu0 0
        %7049 = vmatprep.subr.bf16.mxu0 0
        %7050 = vmatpush1.bf16.msra.mxu0 0
        %7051 = vmatprep.subr.bf16.mxu0 0
        %7052 = vmatpush1.bf16.msra.mxu0 0
        %7053 = vmatprep.subr.bf16.mxu0 0
        %7054 = vmatpush1.bf16.msra.mxu0 0
        %7055 = vmatprep.subr.bf16.mxu0 0
        %7056 = vmatpush1.bf16.msra.mxu0 0
        %7057 = vmatprep.subr.bf16.mxu0 0
        %7058 = vmatpush1.bf16.msra.mxu0 0
        %7059 = vmatprep.mubr.bf16.mxu0 0
        %7060 = vmatmul.mubr.bf16.gmra.mrb[0].mxu0 %v6955
        %v7061 = vpop.f32.mrb[0].mxu0
        %v7062 = vadd.f32 %v6977, %v7061
        %v7063 = vpop.f32.mrb[0].mxu0
        %v7064 = vpop.f32.mrb[0].mxu0
        %v7065 = vpop.f32.mrb[0].mxu0
        %7066 = vdwg.mxu0
        %v7067 = vlaneseq
        %v7068 = vand.u32 %v7067, 127
        %vm7069 = vcmp.ge.s32.totalorder %v7068, 1
        %vm7070 = vcmp.lt.s32.totalorder %v7068, 11
        %vm7071 = vmand %vm7069, %vm7070
        %v7072 = vsel %vm7071, %v7062, -1e+30
        %7073 = vmax.xlane.f32.xlu0 %v7072
        %v7074 = vpop.xlane.xlu0 %7073
        %v7075 = vsub.f32 %v7072, %v7074
        %v7076 = vmul.f32 %v7075, 1.442695
        %v7077 = vpow.pop %v7076
        %v7078 = vsel %vm7071, %v7077, 0.0
        %7079 = vadd.xlane.f32.xlu0 %v7078
        %v7080 = vpop.xlane.xlu0 %7079
        %v7081 = vrcp.pop %v7080
        %v7082 = vmul.f32 %v7078, %v7081
        %v7083 = vsel %vm7071, %v7082, %v7062
        %7084 = vst [vmem:[%s1661] sm:$0xff] %v7083
        %p7085 = scmp.lt.s32.totalorder %s30, 1
        %s7086 = scalar_select %p7085, %s30, 1
        %s7087 = smul.addr %s7086, 8
        %s7088 = scalar_lea.vmem %s19, %s7087
        // Predicated region
        $region138: #{discriminator_forward.1} parent=132 // pred_check
          %p7089 = pneg %p452
        $region139: #{discriminator_forward.1} parent=132 // pred_check_branch
          %7091 = sbr.rel (%p7089) target = $region141
        $region140: #{discriminator_forward.1} parent=132 // pred_region
          _
        $region141: #{discriminator_forward.1} parent=132 // pred_fallthru
          _
      $region133: #{discriminator_forward.1} parent=5 // pred_fallthru
        _
      %p7092 = scmp.le.s32.totalorder 2, %s25
      // Predicated region
      $region142: #{discriminator_forward.1} parent=5 // pred_check
        %p7093 = pneg %p7092
      $region143: #{discriminator_forward.1} parent=5 // pred_check_branch
        %7095 = sbr.rel (%p7093) target = $region145
      $region144: #{discriminator_forward.1} parent=5 // pred_region
        %s7096 = ssub.s32 %s25, 2
        // Predicated region
        $region146: #{discriminator_forward.1} parent=144 // pred_check
          %p7097 = pneg %p458
        $region147: #{discriminator_forward.1} parent=144 // pred_check_branch
          %7099 = sbr.rel (%p7097) target = $region149
        $region148: #{discriminator_forward.1} parent=144 // pred_region
          %p7100 = scmp.lt.s32.totalorder %s31, 1
          %s7101 = scalar_select %p7100, %s31, 1
          %s7102 = smul.addr %s7101, 8
          %s7103 = scalar_lea.vmem %s19, %s7102
        $region149: #{discriminator_forward.1} parent=144 // pred_fallthru
          _
      $region145: #{discriminator_forward.1} parent=5 // pred_fallthru
        _
    $region6: #{discriminator_forward.1} parent=1 // loop_footer
      %s29 = sadd.s32 1, %s25
    $region7: #{discriminator_forward.1} parent=1 // loop_footer_branch
      %24 = sbr.rel target = $region3
    $region8: #{discriminator_forward.1} parent=1 // loop_exit
      _

</llo_original>
